<compile_context>
chip_gen: v6e
topology: v6e:2x2x1
jax: 0.10.0
libtpu: 0.0.40
codegen_flags: <defaults>
</compile_context>

<pallas_src>
import jax
import jax.numpy as jnp
from jax import lax
from jax.experimental import pallas as pl
from jax.experimental.pallas import tpu as pltpu


def make_kernel(batch, seq_len, hidden, embed, nl_enc, nl_dec):
    H = hidden
    H2 = 2 * H
    H3 = 3 * H

    # --- flat parameter layout (4 refs per GRU layer, 4 for the MLP head) ---
    n_params = 4 * (nl_enc + nl_dec) + 4
    enc_base = lambda l: 4 * l
    dec_base = lambda l: 4 * (nl_enc + l)
    fc_base = 4 * (nl_enc + nl_dec)

    def _gru_gates(gi, gh, h):
        """PyTorch GRU update from pre-activation gate slabs gi, gh (B, 3H)."""
        rz = jax.nn.sigmoid(gi[:, :H2] + gh[:, :H2])
        r, z = rz[:, :H], rz[:, H:]
        n = jnp.tanh(gi[:, H2:] + r * gh[:, H2:])
        return (1.0 - z) * n + z * h

    def _std_cell(params, base, x, h):
        """GRU cell with D == H input: two fused (H, 3H) dots."""
        wih = params[base][...]       # (H, 3H)
        whh = params[base + 1][...]   # (H, 3H)
        bih = params[base + 2][...]   # (1, 3H)
        bhh = params[base + 3][...]   # (1, 3H)
        gi = jnp.dot(x, wih, preferred_element_type=jnp.float32) + bih
        gh = jnp.dot(h, whh, preferred_element_type=jnp.float32) + bhh
        return _gru_gates(gi, gh, h)

    def _enc0_cell(params, x0, x1, h):
        """Encoder layer-0 cell (D == 2): input projection on the VPU, one dot."""
        wx = params[0][...]           # (2, 3H)
        whh = params[1][...]          # (H, 3H)
        bih = params[2][...]          # (1, 3H)
        bhh = params[3][...]          # (1, 3H)
        gi = x0 * wx[0:1, :] + x1 * wx[1:2, :] + bih                  # VPU, (B, 3H)
        gh = jnp.dot(h, whh, preferred_element_type=jnp.float32) + bhh
        return _gru_gates(gi, gh, h)

    def kernel(traj_x_ref, traj_y_ref, *refs):
        params = refs[:n_params]
        out_ref = refs[n_params]

        # ----------------- encoder GRU (fully unrolled) -----------------
        h_enc = [jnp.zeros((batch, H), jnp.float32) for _ in range(nl_enc)]
        for t in range(seq_len):
            x0 = traj_x_ref[t]                        # (B, 1), static offset
            x1 = traj_y_ref[t]                        # (B, 1)
            h_enc[0] = _enc0_cell(params, x0, x1, h_enc[0])
            inp = h_enc[0]
            for l in range(1, nl_enc):
                h_enc[l] = _std_cell(params, enc_base(l), inp, h_enc[l])
                inp = h_enc[l]
        # For a batch_first GRU, x_enc[:, -1] of the top layer == final hidden.
        ctx = h_enc[-1]                               # (B, H)

        # --------------- autoregressive decoder (fully unrolled) --------
        lane = lax.broadcasted_iota(jnp.int32, (batch, 2), 1)
        prev = jnp.where(lane == 0, 1.0, 0.0).astype(jnp.float32)   # [[1,0],...]
        hid = [ctx for _ in range(nl_dec)]            # tile(ctx[None], (nl,1,1))
        x = ctx
        outs = []
        for _t in range(seq_len):
            inp = x
            for l in range(nl_dec):
                hid[l] = _std_cell(params, dec_base(l), inp, hid[l])
                inp = hid[l]
            # control head (MLP) applied as residual update of the previous step
            fc1_w = params[fc_base][...]              # (H, E)
            fc1_b = params[fc_base + 1][...]          # (1, E)
            fc2_w = params[fc_base + 2][...]          # (E, 2)
            fc2_b = params[fc_base + 3][...]          # (1, 2)
            e = jax.nn.relu(
                jnp.dot(inp, fc1_w, preferred_element_type=jnp.float32) + fc1_b)
            ctrl = jnp.dot(e, fc2_w, preferred_element_type=jnp.float32) + fc2_b
            prev = prev + ctrl
            outs.append(prev)                         # outputs[:, t, :] = prev_step
            x = hid[-1]                               # x = hidden[-1]

        # single store at the end instead of T masked per-step stores
        out_ref[...] = jnp.concatenate(outs, axis=1)  # (B, 2*T)

    return kernel, n_params


def init_torch_params(key, hidden=32, embed=16, nl_enc=2, nl_dec=2, in_dim=2):
    """Deterministic synthetic parameters in PyTorch layout (weight (3H, D), bias (3H,))."""
    keys = iter(jax.random.split(key, 64))

    def rand(shape, scale=0.15):
        return (scale * jax.random.normal(next(keys), shape)).astype(jnp.float32)

    enc = []
    for l in range(nl_enc):
        d = in_dim if l == 0 else hidden
        enc.append((rand((3 * hidden, d)), rand((3 * hidden, hidden)),
                    rand((3 * hidden,)), rand((3 * hidden,))))
    dec = []
    for _ in range(nl_dec):
        dec.append((rand((3 * hidden, hidden)), rand((3 * hidden, hidden)),
                    rand((3 * hidden,)), rand((3 * hidden,))))
    fc = (rand((embed, hidden)), rand((embed,)), rand((2, embed)), rand((2,)))
    return enc, dec, fc


def _prep_gru_layer(wih, whh, bih, bhh):
    """PyTorch GRU weights -> kernel layout: transposed (D, 3H) / (H, 3H) + row biases."""
    return [wih.T.astype(jnp.float32), whh.T.astype(jnp.float32),
            bih[None, :].astype(jnp.float32), bhh[None, :].astype(jnp.float32)]


def future_seq2seq_control(traj, enc, dec, fc, hidden=32, embed=16):
    """Returns (outputs, x_in) like the PyTorch module."""
    B, T, _ = traj.shape
    nl_enc, nl_dec = len(enc), len(dec)

    traj_tm = jnp.transpose(traj.astype(jnp.float32), (1, 0, 2))    # (T, B, 2)
    traj_x = traj_tm[:, :, 0:1]                                     # (T, B, 1)
    traj_y = traj_tm[:, :, 1:2]                                     # (T, B, 1)

    flat = []
    for (wih, whh, bih, bhh) in enc:
        flat.extend(_prep_gru_layer(wih, whh, bih, bhh))
    for (wih, whh, bih, bhh) in dec:
        flat.extend(_prep_gru_layer(wih, whh, bih, bhh))
    fc1_w, fc1_b, fc2_w, fc2_b = fc
    flat.extend([fc1_w.T.astype(jnp.float32), fc1_b[None, :].astype(jnp.float32),
                 fc2_w.T.astype(jnp.float32), fc2_b[None, :].astype(jnp.float32)])

    kernel, n_params = make_kernel(B, T, hidden, embed, nl_enc, nl_dec)
    assert n_params == len(flat)

    out_flat = pl.pallas_call(
        kernel,
        out_shape=jax.ShapeDtypeStruct((B, 2 * T), jnp.float32),
        in_specs=[pl.BlockSpec(memory_space=pltpu.MemorySpace.VMEM)] * (2 + len(flat)),
        out_specs=pl.BlockSpec(memory_space=pltpu.MemorySpace.VMEM),
    )(traj_x, traj_y, *flat)

    outputs = out_flat.reshape(B, T, 2)               # (B, T, 2), batch_first
    return outputs, traj


if __name__ == "__main__":
    B, T, H, E = 2, 8, 32, 16
    key = jax.random.PRNGKey(0)
    k_traj, k_params = jax.random.split(key)

    traj = jax.random.normal(k_traj, (B, T, 2), jnp.float32)        # (batch, seq, xy)
    enc, dec, fc = init_torch_params(k_params, hidden=H, embed=E)

    outputs, x_in = jax.jit(
        lambda tr: future_seq2seq_control(tr, enc, dec, fc, hidden=H, embed=E)
    )(traj)
    jax.block_until_ready(outputs)

    assert outputs.shape == (B, T, 2) and outputs.dtype == jnp.float32
    assert x_in.shape == traj.shape
    assert bool(jnp.all(jnp.isfinite(outputs)))
    print("KERNEL_OK")
</pallas_src>

<mosaic_0001>
module attributes {stable_mosaic.version = 11 : i64} {
  func.func @kernel(%arg0: memref<8x2x1xf32, #tpu.memory_space<vmem>>, %arg1: memref<8x2x1xf32, #tpu.memory_space<vmem>>, %arg2: memref<2x96xf32, #tpu.memory_space<vmem>>, %arg3: memref<32x96xf32, #tpu.memory_space<vmem>>, %arg4: memref<1x96xf32, #tpu.memory_space<vmem>>, %arg5: memref<1x96xf32, #tpu.memory_space<vmem>>, %arg6: memref<32x96xf32, #tpu.memory_space<vmem>>, %arg7: memref<32x96xf32, #tpu.memory_space<vmem>>, %arg8: memref<1x96xf32, #tpu.memory_space<vmem>>, %arg9: memref<1x96xf32, #tpu.memory_space<vmem>>, %arg10: memref<32x96xf32, #tpu.memory_space<vmem>>, %arg11: memref<32x96xf32, #tpu.memory_space<vmem>>, %arg12: memref<1x96xf32, #tpu.memory_space<vmem>>, %arg13: memref<1x96xf32, #tpu.memory_space<vmem>>, %arg14: memref<32x96xf32, #tpu.memory_space<vmem>>, %arg15: memref<32x96xf32, #tpu.memory_space<vmem>>, %arg16: memref<1x96xf32, #tpu.memory_space<vmem>>, %arg17: memref<1x96xf32, #tpu.memory_space<vmem>>, %arg18: memref<32x16xf32, #tpu.memory_space<vmem>>, %arg19: memref<1x16xf32, #tpu.memory_space<vmem>>, %arg20: memref<16x2xf32, #tpu.memory_space<vmem>>, %arg21: memref<1x2xf32, #tpu.memory_space<vmem>>, %arg22: memref<2x16xf32, #tpu.memory_space<vmem>>) attributes {dimension_semantics = [], scalar_prefetch = 0 : i64, scratch_operands = 0 : i64, tpu.core_type = #tpu.core_type<tc>} {
    %cst = arith.constant 0.000000e+00 : f32
    %0 = vector.broadcast %cst : f32 to vector<2x32xf32>
    %cst_0 = arith.constant 0.000000e+00 : f32
    %1 = vector.broadcast %cst_0 : f32 to vector<2x32xf32>
    %c0 = arith.constant 0 : index
    %c0_1 = arith.constant 0 : index
    %c0_2 = arith.constant 0 : index
    %2 = vector.load %arg0[%c0, %c0_1, %c0_2] : memref<8x2x1xf32, #tpu.memory_space<vmem>>, vector<1x2x1xf32>
    %3 = vector.shape_cast %2 : vector<1x2x1xf32> to vector<2x1xf32>
    %c0_3 = arith.constant 0 : index
    %c0_4 = arith.constant 0 : index
    %c0_5 = arith.constant 0 : index
    %4 = vector.load %arg1[%c0_3, %c0_4, %c0_5] : memref<8x2x1xf32, #tpu.memory_space<vmem>>, vector<1x2x1xf32>
    %5 = vector.shape_cast %4 : vector<1x2x1xf32> to vector<2x1xf32>
    %c0_6 = arith.constant 0 : index
    %c0_7 = arith.constant 0 : index
    %6 = vector.load %arg2[%c0_6, %c0_7] : memref<2x96xf32, #tpu.memory_space<vmem>>, vector<2x96xf32>
    %c0_8 = arith.constant 0 : index
    %c0_9 = arith.constant 0 : index
    %7 = vector.load %arg3[%c0_8, %c0_9] : memref<32x96xf32, #tpu.memory_space<vmem>>, vector<32x96xf32>
    %c0_10 = arith.constant 0 : index
    %c0_11 = arith.constant 0 : index
    %8 = vector.load %arg4[%c0_10, %c0_11] : memref<1x96xf32, #tpu.memory_space<vmem>>, vector<1x96xf32>
    %c0_12 = arith.constant 0 : index
    %c0_13 = arith.constant 0 : index
    %9 = vector.load %arg5[%c0_12, %c0_13] : memref<1x96xf32, #tpu.memory_space<vmem>>, vector<1x96xf32>
    %10 = vector.extract_strided_slice %6 {offsets = [0, 0], sizes = [1, 96], strides = [1, 1]} : vector<2x96xf32> to vector<1x96xf32>
    %11 = vector.broadcast %3 : vector<2x1xf32> to vector<2x96xf32>
    %12 = vector.broadcast %10 : vector<1x96xf32> to vector<2x96xf32>
    %13 = arith.mulf %11, %12 : vector<2x96xf32>
    %14 = vector.extract_strided_slice %6 {offsets = [1, 0], sizes = [1, 96], strides = [1, 1]} : vector<2x96xf32> to vector<1x96xf32>
    %15 = vector.broadcast %5 : vector<2x1xf32> to vector<2x96xf32>
    %16 = vector.broadcast %14 : vector<1x96xf32> to vector<2x96xf32>
    %17 = arith.mulf %15, %16 : vector<2x96xf32>
    %18 = arith.addf %13, %17 : vector<2x96xf32>
    %19 = vector.broadcast %8 : vector<1x96xf32> to vector<2x96xf32>
    %20 = arith.addf %18, %19 : vector<2x96xf32>
    %cst_14 = arith.constant dense<0.000000e+00> : vector<2x96xf32>
    %21 = tpu.matmul %0, %7, %cst_14 {dimension_numbers = #tpu.dot_dimension_numbers<[1], [0], [0], [1], [0, 0, 1, 1], [], []>} : vector<2x32xf32>, vector<32x96xf32>, vector<2x96xf32> -> vector<2x96xf32>
    %22 = vector.broadcast %9 : vector<1x96xf32> to vector<2x96xf32>
    %23 = arith.addf %21, %22 : vector<2x96xf32>
    %24 = vector.extract_strided_slice %20 {offsets = [0, 0], sizes = [2, 64], strides = [1, 1]} : vector<2x96xf32> to vector<2x64xf32>
    %25 = vector.extract_strided_slice %23 {offsets = [0, 0], sizes = [2, 64], strides = [1, 1]} : vector<2x96xf32> to vector<2x64xf32>
    %26 = arith.addf %24, %25 : vector<2x64xf32>
    %27 = arith.negf %26 : vector<2x64xf32>
    %28 = math.exp %27 : vector<2x64xf32>
    %cst_15 = arith.constant 1.000000e+00 : f32
    %29 = vector.broadcast %cst_15 : f32 to vector<2x64xf32>
    %30 = arith.addf %29, %28 : vector<2x64xf32>
    %31 = arith.divf %29, %30 : vector<2x64xf32>
    %32 = vector.extract_strided_slice %31 {offsets = [0, 0], sizes = [2, 32], strides = [1, 1]} : vector<2x64xf32> to vector<2x32xf32>
    %33 = vector.extract_strided_slice %31 {offsets = [0, 32], sizes = [2, 32], strides = [1, 1]} : vector<2x64xf32> to vector<2x32xf32>
    %34 = vector.extract_strided_slice %20 {offsets = [0, 64], sizes = [2, 32], strides = [1, 1]} : vector<2x96xf32> to vector<2x32xf32>
    %35 = vector.extract_strided_slice %23 {offsets = [0, 64], sizes = [2, 32], strides = [1, 1]} : vector<2x96xf32> to vector<2x32xf32>
    %36 = arith.mulf %32, %35 : vector<2x32xf32>
    %37 = arith.addf %34, %36 : vector<2x32xf32>
    %38 = math.tanh %37 : vector<2x32xf32>
    %cst_16 = arith.constant 1.000000e+00 : f32
    %39 = vector.broadcast %cst_16 : f32 to vector<2x32xf32>
    %40 = arith.subf %39, %33 : vector<2x32xf32>
    %41 = arith.mulf %40, %38 : vector<2x32xf32>
    %42 = arith.mulf %33, %0 : vector<2x32xf32>
    %43 = arith.addf %41, %42 : vector<2x32xf32>
    %c0_17 = arith.constant 0 : index
    %c0_18 = arith.constant 0 : index
    %44 = vector.load %arg6[%c0_17, %c0_18] : memref<32x96xf32, #tpu.memory_space<vmem>>, vector<32x96xf32>
    %c0_19 = arith.constant 0 : index
    %c0_20 = arith.constant 0 : index
    %45 = vector.load %arg7[%c0_19, %c0_20] : memref<32x96xf32, #tpu.memory_space<vmem>>, vector<32x96xf32>
    %c0_21 = arith.constant 0 : index
    %c0_22 = arith.constant 0 : index
    %46 = vector.load %arg8[%c0_21, %c0_22] : memref<1x96xf32, #tpu.memory_space<vmem>>, vector<1x96xf32>
    %c0_23 = arith.constant 0 : index
    %c0_24 = arith.constant 0 : index
    %47 = vector.load %arg9[%c0_23, %c0_24] : memref<1x96xf32, #tpu.memory_space<vmem>>, vector<1x96xf32>
    %cst_25 = arith.constant dense<0.000000e+00> : vector<2x96xf32>
    %48 = tpu.matmul %43, %44, %cst_25 {dimension_numbers = #tpu.dot_dimension_numbers<[1], [0], [0], [1], [0, 0, 1, 1], [], []>} : vector<2x32xf32>, vector<32x96xf32>, vector<2x96xf32> -> vector<2x96xf32>
    %49 = vector.broadcast %46 : vector<1x96xf32> to vector<2x96xf32>
    %50 = arith.addf %48, %49 : vector<2x96xf32>
    %cst_26 = arith.constant dense<0.000000e+00> : vector<2x96xf32>
    %51 = tpu.matmul %1, %45, %cst_26 {dimension_numbers = #tpu.dot_dimension_numbers<[1], [0], [0], [1], [0, 0, 1, 1], [], []>} : vector<2x32xf32>, vector<32x96xf32>, vector<2x96xf32> -> vector<2x96xf32>
    %52 = vector.broadcast %47 : vector<1x96xf32> to vector<2x96xf32>
    %53 = arith.addf %51, %52 : vector<2x96xf32>
    %54 = vector.extract_strided_slice %50 {offsets = [0, 0], sizes = [2, 64], strides = [1, 1]} : vector<2x96xf32> to vector<2x64xf32>
    %55 = vector.extract_strided_slice %53 {offsets = [0, 0], sizes = [2, 64], strides = [1, 1]} : vector<2x96xf32> to vector<2x64xf32>
    %56 = arith.addf %54, %55 : vector<2x64xf32>
    %57 = arith.negf %56 : vector<2x64xf32>
    %58 = math.exp %57 : vector<2x64xf32>
    %cst_27 = arith.constant 1.000000e+00 : f32
    %59 = vector.broadcast %cst_27 : f32 to vector<2x64xf32>
    %60 = arith.addf %59, %58 : vector<2x64xf32>
    %61 = arith.divf %59, %60 : vector<2x64xf32>
    %62 = vector.extract_strided_slice %61 {offsets = [0, 0], sizes = [2, 32], strides = [1, 1]} : vector<2x64xf32> to vector<2x32xf32>
    %63 = vector.extract_strided_slice %61 {offsets = [0, 32], sizes = [2, 32], strides = [1, 1]} : vector<2x64xf32> to vector<2x32xf32>
    %64 = vector.extract_strided_slice %50 {offsets = [0, 64], sizes = [2, 32], strides = [1, 1]} : vector<2x96xf32> to vector<2x32xf32>
    %65 = vector.extract_strided_slice %53 {offsets = [0, 64], sizes = [2, 32], strides = [1, 1]} : vector<2x96xf32> to vector<2x32xf32>
    %66 = arith.mulf %62, %65 : vector<2x32xf32>
    %67 = arith.addf %64, %66 : vector<2x32xf32>
    %68 = math.tanh %67 : vector<2x32xf32>
    %cst_28 = arith.constant 1.000000e+00 : f32
    %69 = vector.broadcast %cst_28 : f32 to vector<2x32xf32>
    %70 = arith.subf %69, %63 : vector<2x32xf32>
    %71 = arith.mulf %70, %68 : vector<2x32xf32>
    %72 = arith.mulf %63, %1 : vector<2x32xf32>
    %73 = arith.addf %71, %72 : vector<2x32xf32>
    %c1 = arith.constant 1 : index
    %c0_29 = arith.constant 0 : index
    %c0_30 = arith.constant 0 : index
    %74 = vector.load %arg0[%c1, %c0_29, %c0_30] : memref<8x2x1xf32, #tpu.memory_space<vmem>>, vector<1x2x1xf32>
    %75 = vector.shape_cast %74 : vector<1x2x1xf32> to vector<2x1xf32>
    %c1_31 = arith.constant 1 : index
    %c0_32 = arith.constant 0 : index
    %c0_33 = arith.constant 0 : index
    %76 = vector.load %arg1[%c1_31, %c0_32, %c0_33] : memref<8x2x1xf32, #tpu.memory_space<vmem>>, vector<1x2x1xf32>
    %77 = vector.shape_cast %76 : vector<1x2x1xf32> to vector<2x1xf32>
    %c0_34 = arith.constant 0 : index
    %c0_35 = arith.constant 0 : index
    %78 = vector.load %arg2[%c0_34, %c0_35] : memref<2x96xf32, #tpu.memory_space<vmem>>, vector<2x96xf32>
    %c0_36 = arith.constant 0 : index
    %c0_37 = arith.constant 0 : index
    %79 = vector.load %arg3[%c0_36, %c0_37] : memref<32x96xf32, #tpu.memory_space<vmem>>, vector<32x96xf32>
    %c0_38 = arith.constant 0 : index
    %c0_39 = arith.constant 0 : index
    %80 = vector.load %arg4[%c0_38, %c0_39] : memref<1x96xf32, #tpu.memory_space<vmem>>, vector<1x96xf32>
    %c0_40 = arith.constant 0 : index
    %c0_41 = arith.constant 0 : index
    %81 = vector.load %arg5[%c0_40, %c0_41] : memref<1x96xf32, #tpu.memory_space<vmem>>, vector<1x96xf32>
    %82 = vector.extract_strided_slice %78 {offsets = [0, 0], sizes = [1, 96], strides = [1, 1]} : vector<2x96xf32> to vector<1x96xf32>
    %83 = vector.broadcast %75 : vector<2x1xf32> to vector<2x96xf32>
    %84 = vector.broadcast %82 : vector<1x96xf32> to vector<2x96xf32>
    %85 = arith.mulf %83, %84 : vector<2x96xf32>
    %86 = vector.extract_strided_slice %78 {offsets = [1, 0], sizes = [1, 96], strides = [1, 1]} : vector<2x96xf32> to vector<1x96xf32>
    %87 = vector.broadcast %77 : vector<2x1xf32> to vector<2x96xf32>
    %88 = vector.broadcast %86 : vector<1x96xf32> to vector<2x96xf32>
    %89 = arith.mulf %87, %88 : vector<2x96xf32>
    %90 = arith.addf %85, %89 : vector<2x96xf32>
    %91 = vector.broadcast %80 : vector<1x96xf32> to vector<2x96xf32>
    %92 = arith.addf %90, %91 : vector<2x96xf32>
    %cst_42 = arith.constant dense<0.000000e+00> : vector<2x96xf32>
    %93 = tpu.matmul %43, %79, %cst_42 {dimension_numbers = #tpu.dot_dimension_numbers<[1], [0], [0], [1], [0, 0, 1, 1], [], []>} : vector<2x32xf32>, vector<32x96xf32>, vector<2x96xf32> -> vector<2x96xf32>
    %94 = vector.broadcast %81 : vector<1x96xf32> to vector<2x96xf32>
    %95 = arith.addf %93, %94 : vector<2x96xf32>
    %96 = vector.extract_strided_slice %92 {offsets = [0, 0], sizes = [2, 64], strides = [1, 1]} : vector<2x96xf32> to vector<2x64xf32>
    %97 = vector.extract_strided_slice %95 {offsets = [0, 0], sizes = [2, 64], strides = [1, 1]} : vector<2x96xf32> to vector<2x64xf32>
    %98 = arith.addf %96, %97 : vector<2x64xf32>
    %99 = arith.negf %98 : vector<2x64xf32>
    %100 = math.exp %99 : vector<2x64xf32>
    %cst_43 = arith.constant 1.000000e+00 : f32
    %101 = vector.broadcast %cst_43 : f32 to vector<2x64xf32>
    %102 = arith.addf %101, %100 : vector<2x64xf32>
    %103 = arith.divf %101, %102 : vector<2x64xf32>
    %104 = vector.extract_strided_slice %103 {offsets = [0, 0], sizes = [2, 32], strides = [1, 1]} : vector<2x64xf32> to vector<2x32xf32>
    %105 = vector.extract_strided_slice %103 {offsets = [0, 32], sizes = [2, 32], strides = [1, 1]} : vector<2x64xf32> to vector<2x32xf32>
    %106 = vector.extract_strided_slice %92 {offsets = [0, 64], sizes = [2, 32], strides = [1, 1]} : vector<2x96xf32> to vector<2x32xf32>
    %107 = vector.extract_strided_slice %95 {offsets = [0, 64], sizes = [2, 32], strides = [1, 1]} : vector<2x96xf32> to vector<2x32xf32>
    %108 = arith.mulf %104, %107 : vector<2x32xf32>
    %109 = arith.addf %106, %108 : vector<2x32xf32>
    %110 = math.tanh %109 : vector<2x32xf32>
    %cst_44 = arith.constant 1.000000e+00 : f32
    %111 = vector.broadcast %cst_44 : f32 to vector<2x32xf32>
    %112 = arith.subf %111, %105 : vector<2x32xf32>
    %113 = arith.mulf %112, %110 : vector<2x32xf32>
    %114 = arith.mulf %105, %43 : vector<2x32xf32>
    %115 = arith.addf %113, %114 : vector<2x32xf32>
    %c0_45 = arith.constant 0 : index
    %c0_46 = arith.constant 0 : index
    %116 = vector.load %arg6[%c0_45, %c0_46] : memref<32x96xf32, #tpu.memory_space<vmem>>, vector<32x96xf32>
    %c0_47 = arith.constant 0 : index
    %c0_48 = arith.constant 0 : index
    %117 = vector.load %arg7[%c0_47, %c0_48] : memref<32x96xf32, #tpu.memory_space<vmem>>, vector<32x96xf32>
    %c0_49 = arith.constant 0 : index
    %c0_50 = arith.constant 0 : index
    %118 = vector.load %arg8[%c0_49, %c0_50] : memref<1x96xf32, #tpu.memory_space<vmem>>, vector<1x96xf32>
    %c0_51 = arith.constant 0 : index
    %c0_52 = arith.constant 0 : index
    %119 = vector.load %arg9[%c0_51, %c0_52] : memref<1x96xf32, #tpu.memory_space<vmem>>, vector<1x96xf32>
    %cst_53 = arith.constant dense<0.000000e+00> : vector<2x96xf32>
    %120 = tpu.matmul %115, %116, %cst_53 {dimension_numbers = #tpu.dot_dimension_numbers<[1], [0], [0], [1], [0, 0, 1, 1], [], []>} : vector<2x32xf32>, vector<32x96xf32>, vector<2x96xf32> -> vector<2x96xf32>
    %121 = vector.broadcast %118 : vector<1x96xf32> to vector<2x96xf32>
    %122 = arith.addf %120, %121 : vector<2x96xf32>
    %cst_54 = arith.constant dense<0.000000e+00> : vector<2x96xf32>
    %123 = tpu.matmul %73, %117, %cst_54 {dimension_numbers = #tpu.dot_dimension_numbers<[1], [0], [0], [1], [0, 0, 1, 1], [], []>} : vector<2x32xf32>, vector<32x96xf32>, vector<2x96xf32> -> vector<2x96xf32>
    %124 = vector.broadcast %119 : vector<1x96xf32> to vector<2x96xf32>
    %125 = arith.addf %123, %124 : vector<2x96xf32>
    %126 = vector.extract_strided_slice %122 {offsets = [0, 0], sizes = [2, 64], strides = [1, 1]} : vector<2x96xf32> to vector<2x64xf32>
    %127 = vector.extract_strided_slice %125 {offsets = [0, 0], sizes = [2, 64], strides = [1, 1]} : vector<2x96xf32> to vector<2x64xf32>
    %128 = arith.addf %126, %127 : vector<2x64xf32>
    %129 = arith.negf %128 : vector<2x64xf32>
    %130 = math.exp %129 : vector<2x64xf32>
    %cst_55 = arith.constant 1.000000e+00 : f32
    %131 = vector.broadcast %cst_55 : f32 to vector<2x64xf32>
    %132 = arith.addf %131, %130 : vector<2x64xf32>
    %133 = arith.divf %131, %132 : vector<2x64xf32>
    %134 = vector.extract_strided_slice %133 {offsets = [0, 0], sizes = [2, 32], strides = [1, 1]} : vector<2x64xf32> to vector<2x32xf32>
    %135 = vector.extract_strided_slice %133 {offsets = [0, 32], sizes = [2, 32], strides = [1, 1]} : vector<2x64xf32> to vector<2x32xf32>
    %136 = vector.extract_strided_slice %122 {offsets = [0, 64], sizes = [2, 32], strides = [1, 1]} : vector<2x96xf32> to vector<2x32xf32>
    %137 = vector.extract_strided_slice %125 {offsets = [0, 64], sizes = [2, 32], strides = [1, 1]} : vector<2x96xf32> to vector<2x32xf32>
    %138 = arith.mulf %134, %137 : vector<2x32xf32>
    %139 = arith.addf %136, %138 : vector<2x32xf32>
    %140 = math.tanh %139 : vector<2x32xf32>
    %cst_56 = arith.constant 1.000000e+00 : f32
    %141 = vector.broadcast %cst_56 : f32 to vector<2x32xf32>
    %142 = arith.subf %141, %135 : vector<2x32xf32>
    %143 = arith.mulf %142, %140 : vector<2x32xf32>
    %144 = arith.mulf %135, %73 : vector<2x32xf32>
    %145 = arith.addf %143, %144 : vector<2x32xf32>
    %c2 = arith.constant 2 : index
    %c0_57 = arith.constant 0 : index
    %c0_58 = arith.constant 0 : index
    %146 = vector.load %arg0[%c2, %c0_57, %c0_58] : memref<8x2x1xf32, #tpu.memory_space<vmem>>, vector<1x2x1xf32>
    %147 = vector.shape_cast %146 : vector<1x2x1xf32> to vector<2x1xf32>
    %c2_59 = arith.constant 2 : index
    %c0_60 = arith.constant 0 : index
    %c0_61 = arith.constant 0 : index
    %148 = vector.load %arg1[%c2_59, %c0_60, %c0_61] : memref<8x2x1xf32, #tpu.memory_space<vmem>>, vector<1x2x1xf32>
    %149 = vector.shape_cast %148 : vector<1x2x1xf32> to vector<2x1xf32>
    %c0_62 = arith.constant 0 : index
    %c0_63 = arith.constant 0 : index
    %150 = vector.load %arg2[%c0_62, %c0_63] : memref<2x96xf32, #tpu.memory_space<vmem>>, vector<2x96xf32>
    %c0_64 = arith.constant 0 : index
    %c0_65 = arith.constant 0 : index
    %151 = vector.load %arg3[%c0_64, %c0_65] : memref<32x96xf32, #tpu.memory_space<vmem>>, vector<32x96xf32>
    %c0_66 = arith.constant 0 : index
    %c0_67 = arith.constant 0 : index
    %152 = vector.load %arg4[%c0_66, %c0_67] : memref<1x96xf32, #tpu.memory_space<vmem>>, vector<1x96xf32>
    %c0_68 = arith.constant 0 : index
    %c0_69 = arith.constant 0 : index
    %153 = vector.load %arg5[%c0_68, %c0_69] : memref<1x96xf32, #tpu.memory_space<vmem>>, vector<1x96xf32>
    %154 = vector.extract_strided_slice %150 {offsets = [0, 0], sizes = [1, 96], strides = [1, 1]} : vector<2x96xf32> to vector<1x96xf32>
    %155 = vector.broadcast %147 : vector<2x1xf32> to vector<2x96xf32>
    %156 = vector.broadcast %154 : vector<1x96xf32> to vector<2x96xf32>
    %157 = arith.mulf %155, %156 : vector<2x96xf32>
    %158 = vector.extract_strided_slice %150 {offsets = [1, 0], sizes = [1, 96], strides = [1, 1]} : vector<2x96xf32> to vector<1x96xf32>
    %159 = vector.broadcast %149 : vector<2x1xf32> to vector<2x96xf32>
    %160 = vector.broadcast %158 : vector<1x96xf32> to vector<2x96xf32>
    %161 = arith.mulf %159, %160 : vector<2x96xf32>
    %162 = arith.addf %157, %161 : vector<2x96xf32>
    %163 = vector.broadcast %152 : vector<1x96xf32> to vector<2x96xf32>
    %164 = arith.addf %162, %163 : vector<2x96xf32>
    %cst_70 = arith.constant dense<0.000000e+00> : vector<2x96xf32>
    %165 = tpu.matmul %115, %151, %cst_70 {dimension_numbers = #tpu.dot_dimension_numbers<[1], [0], [0], [1], [0, 0, 1, 1], [], []>} : vector<2x32xf32>, vector<32x96xf32>, vector<2x96xf32> -> vector<2x96xf32>
    %166 = vector.broadcast %153 : vector<1x96xf32> to vector<2x96xf32>
    %167 = arith.addf %165, %166 : vector<2x96xf32>
    %168 = vector.extract_strided_slice %164 {offsets = [0, 0], sizes = [2, 64], strides = [1, 1]} : vector<2x96xf32> to vector<2x64xf32>
    %169 = vector.extract_strided_slice %167 {offsets = [0, 0], sizes = [2, 64], strides = [1, 1]} : vector<2x96xf32> to vector<2x64xf32>
    %170 = arith.addf %168, %169 : vector<2x64xf32>
    %171 = arith.negf %170 : vector<2x64xf32>
    %172 = math.exp %171 : vector<2x64xf32>
    %cst_71 = arith.constant 1.000000e+00 : f32
    %173 = vector.broadcast %cst_71 : f32 to vector<2x64xf32>
    %174 = arith.addf %173, %172 : vector<2x64xf32>
    %175 = arith.divf %173, %174 : vector<2x64xf32>
    %176 = vector.extract_strided_slice %175 {offsets = [0, 0], sizes = [2, 32], strides = [1, 1]} : vector<2x64xf32> to vector<2x32xf32>
    %177 = vector.extract_strided_slice %175 {offsets = [0, 32], sizes = [2, 32], strides = [1, 1]} : vector<2x64xf32> to vector<2x32xf32>
    %178 = vector.extract_strided_slice %164 {offsets = [0, 64], sizes = [2, 32], strides = [1, 1]} : vector<2x96xf32> to vector<2x32xf32>
    %179 = vector.extract_strided_slice %167 {offsets = [0, 64], sizes = [2, 32], strides = [1, 1]} : vector<2x96xf32> to vector<2x32xf32>
    %180 = arith.mulf %176, %179 : vector<2x32xf32>
    %181 = arith.addf %178, %180 : vector<2x32xf32>
    %182 = math.tanh %181 : vector<2x32xf32>
    %cst_72 = arith.constant 1.000000e+00 : f32
    %183 = vector.broadcast %cst_72 : f32 to vector<2x32xf32>
    %184 = arith.subf %183, %177 : vector<2x32xf32>
    %185 = arith.mulf %184, %182 : vector<2x32xf32>
    %186 = arith.mulf %177, %115 : vector<2x32xf32>
    %187 = arith.addf %185, %186 : vector<2x32xf32>
    %c0_73 = arith.constant 0 : index
    %c0_74 = arith.constant 0 : index
    %188 = vector.load %arg6[%c0_73, %c0_74] : memref<32x96xf32, #tpu.memory_space<vmem>>, vector<32x96xf32>
    %c0_75 = arith.constant 0 : index
    %c0_76 = arith.constant 0 : index
    %189 = vector.load %arg7[%c0_75, %c0_76] : memref<32x96xf32, #tpu.memory_space<vmem>>, vector<32x96xf32>
    %c0_77 = arith.constant 0 : index
    %c0_78 = arith.constant 0 : index
    %190 = vector.load %arg8[%c0_77, %c0_78] : memref<1x96xf32, #tpu.memory_space<vmem>>, vector<1x96xf32>
    %c0_79 = arith.constant 0 : index
    %c0_80 = arith.constant 0 : index
    %191 = vector.load %arg9[%c0_79, %c0_80] : memref<1x96xf32, #tpu.memory_space<vmem>>, vector<1x96xf32>
    %cst_81 = arith.constant dense<0.000000e+00> : vector<2x96xf32>
    %192 = tpu.matmul %187, %188, %cst_81 {dimension_numbers = #tpu.dot_dimension_numbers<[1], [0], [0], [1], [0, 0, 1, 1], [], []>} : vector<2x32xf32>, vector<32x96xf32>, vector<2x96xf32> -> vector<2x96xf32>
    %193 = vector.broadcast %190 : vector<1x96xf32> to vector<2x96xf32>
    %194 = arith.addf %192, %193 : vector<2x96xf32>
    %cst_82 = arith.constant dense<0.000000e+00> : vector<2x96xf32>
    %195 = tpu.matmul %145, %189, %cst_82 {dimension_numbers = #tpu.dot_dimension_numbers<[1], [0], [0], [1], [0, 0, 1, 1], [], []>} : vector<2x32xf32>, vector<32x96xf32>, vector<2x96xf32> -> vector<2x96xf32>
    %196 = vector.broadcast %191 : vector<1x96xf32> to vector<2x96xf32>
    %197 = arith.addf %195, %196 : vector<2x96xf32>
    %198 = vector.extract_strided_slice %194 {offsets = [0, 0], sizes = [2, 64], strides = [1, 1]} : vector<2x96xf32> to vector<2x64xf32>
    %199 = vector.extract_strided_slice %197 {offsets = [0, 0], sizes = [2, 64], strides = [1, 1]} : vector<2x96xf32> to vector<2x64xf32>
    %200 = arith.addf %198, %199 : vector<2x64xf32>
    %201 = arith.negf %200 : vector<2x64xf32>
    %202 = math.exp %201 : vector<2x64xf32>
    %cst_83 = arith.constant 1.000000e+00 : f32
    %203 = vector.broadcast %cst_83 : f32 to vector<2x64xf32>
    %204 = arith.addf %203, %202 : vector<2x64xf32>
    %205 = arith.divf %203, %204 : vector<2x64xf32>
    %206 = vector.extract_strided_slice %205 {offsets = [0, 0], sizes = [2, 32], strides = [1, 1]} : vector<2x64xf32> to vector<2x32xf32>
    %207 = vector.extract_strided_slice %205 {offsets = [0, 32], sizes = [2, 32], strides = [1, 1]} : vector<2x64xf32> to vector<2x32xf32>
    %208 = vector.extract_strided_slice %194 {offsets = [0, 64], sizes = [2, 32], strides = [1, 1]} : vector<2x96xf32> to vector<2x32xf32>
    %209 = vector.extract_strided_slice %197 {offsets = [0, 64], sizes = [2, 32], strides = [1, 1]} : vector<2x96xf32> to vector<2x32xf32>
    %210 = arith.mulf %206, %209 : vector<2x32xf32>
    %211 = arith.addf %208, %210 : vector<2x32xf32>
    %212 = math.tanh %211 : vector<2x32xf32>
    %cst_84 = arith.constant 1.000000e+00 : f32
    %213 = vector.broadcast %cst_84 : f32 to vector<2x32xf32>
    %214 = arith.subf %213, %207 : vector<2x32xf32>
    %215 = arith.mulf %214, %212 : vector<2x32xf32>
    %216 = arith.mulf %207, %145 : vector<2x32xf32>
    %217 = arith.addf %215, %216 : vector<2x32xf32>
    %c3 = arith.constant 3 : index
    %c0_85 = arith.constant 0 : index
    %c0_86 = arith.constant 0 : index
    %218 = vector.load %arg0[%c3, %c0_85, %c0_86] : memref<8x2x1xf32, #tpu.memory_space<vmem>>, vector<1x2x1xf32>
    %219 = vector.shape_cast %218 : vector<1x2x1xf32> to vector<2x1xf32>
    %c3_87 = arith.constant 3 : index
    %c0_88 = arith.constant 0 : index
    %c0_89 = arith.constant 0 : index
    %220 = vector.load %arg1[%c3_87, %c0_88, %c0_89] : memref<8x2x1xf32, #tpu.memory_space<vmem>>, vector<1x2x1xf32>
    %221 = vector.shape_cast %220 : vector<1x2x1xf32> to vector<2x1xf32>
    %c0_90 = arith.constant 0 : index
    %c0_91 = arith.constant 0 : index
    %222 = vector.load %arg2[%c0_90, %c0_91] : memref<2x96xf32, #tpu.memory_space<vmem>>, vector<2x96xf32>
    %c0_92 = arith.constant 0 : index
    %c0_93 = arith.constant 0 : index
    %223 = vector.load %arg3[%c0_92, %c0_93] : memref<32x96xf32, #tpu.memory_space<vmem>>, vector<32x96xf32>
    %c0_94 = arith.constant 0 : index
    %c0_95 = arith.constant 0 : index
    %224 = vector.load %arg4[%c0_94, %c0_95] : memref<1x96xf32, #tpu.memory_space<vmem>>, vector<1x96xf32>
    %c0_96 = arith.constant 0 : index
    %c0_97 = arith.constant 0 : index
    %225 = vector.load %arg5[%c0_96, %c0_97] : memref<1x96xf32, #tpu.memory_space<vmem>>, vector<1x96xf32>
    %226 = vector.extract_strided_slice %222 {offsets = [0, 0], sizes = [1, 96], strides = [1, 1]} : vector<2x96xf32> to vector<1x96xf32>
    %227 = vector.broadcast %219 : vector<2x1xf32> to vector<2x96xf32>
    %228 = vector.broadcast %226 : vector<1x96xf32> to vector<2x96xf32>
    %229 = arith.mulf %227, %228 : vector<2x96xf32>
    %230 = vector.extract_strided_slice %222 {offsets = [1, 0], sizes = [1, 96], strides = [1, 1]} : vector<2x96xf32> to vector<1x96xf32>
    %231 = vector.broadcast %221 : vector<2x1xf32> to vector<2x96xf32>
    %232 = vector.broadcast %230 : vector<1x96xf32> to vector<2x96xf32>
    %233 = arith.mulf %231, %232 : vector<2x96xf32>
    %234 = arith.addf %229, %233 : vector<2x96xf32>
    %235 = vector.broadcast %224 : vector<1x96xf32> to vector<2x96xf32>
    %236 = arith.addf %234, %235 : vector<2x96xf32>
    %cst_98 = arith.constant dense<0.000000e+00> : vector<2x96xf32>
    %237 = tpu.matmul %187, %223, %cst_98 {dimension_numbers = #tpu.dot_dimension_numbers<[1], [0], [0], [1], [0, 0, 1, 1], [], []>} : vector<2x32xf32>, vector<32x96xf32>, vector<2x96xf32> -> vector<2x96xf32>
    %238 = vector.broadcast %225 : vector<1x96xf32> to vector<2x96xf32>
    %239 = arith.addf %237, %238 : vector<2x96xf32>
    %240 = vector.extract_strided_slice %236 {offsets = [0, 0], sizes = [2, 64], strides = [1, 1]} : vector<2x96xf32> to vector<2x64xf32>
    %241 = vector.extract_strided_slice %239 {offsets = [0, 0], sizes = [2, 64], strides = [1, 1]} : vector<2x96xf32> to vector<2x64xf32>
    %242 = arith.addf %240, %241 : vector<2x64xf32>
    %243 = arith.negf %242 : vector<2x64xf32>
    %244 = math.exp %243 : vector<2x64xf32>
    %cst_99 = arith.constant 1.000000e+00 : f32
    %245 = vector.broadcast %cst_99 : f32 to vector<2x64xf32>
    %246 = arith.addf %245, %244 : vector<2x64xf32>
    %247 = arith.divf %245, %246 : vector<2x64xf32>
    %248 = vector.extract_strided_slice %247 {offsets = [0, 0], sizes = [2, 32], strides = [1, 1]} : vector<2x64xf32> to vector<2x32xf32>
    %249 = vector.extract_strided_slice %247 {offsets = [0, 32], sizes = [2, 32], strides = [1, 1]} : vector<2x64xf32> to vector<2x32xf32>
    %250 = vector.extract_strided_slice %236 {offsets = [0, 64], sizes = [2, 32], strides = [1, 1]} : vector<2x96xf32> to vector<2x32xf32>
    %251 = vector.extract_strided_slice %239 {offsets = [0, 64], sizes = [2, 32], strides = [1, 1]} : vector<2x96xf32> to vector<2x32xf32>
    %252 = arith.mulf %248, %251 : vector<2x32xf32>
    %253 = arith.addf %250, %252 : vector<2x32xf32>
    %254 = math.tanh %253 : vector<2x32xf32>
    %cst_100 = arith.constant 1.000000e+00 : f32
    %255 = vector.broadcast %cst_100 : f32 to vector<2x32xf32>
    %256 = arith.subf %255, %249 : vector<2x32xf32>
    %257 = arith.mulf %256, %254 : vector<2x32xf32>
    %258 = arith.mulf %249, %187 : vector<2x32xf32>
    %259 = arith.addf %257, %258 : vector<2x32xf32>
    %c0_101 = arith.constant 0 : index
    %c0_102 = arith.constant 0 : index
    %260 = vector.load %arg6[%c0_101, %c0_102] : memref<32x96xf32, #tpu.memory_space<vmem>>, vector<32x96xf32>
    %c0_103 = arith.constant 0 : index
    %c0_104 = arith.constant 0 : index
    %261 = vector.load %arg7[%c0_103, %c0_104] : memref<32x96xf32, #tpu.memory_space<vmem>>, vector<32x96xf32>
    %c0_105 = arith.constant 0 : index
    %c0_106 = arith.constant 0 : index
    %262 = vector.load %arg8[%c0_105, %c0_106] : memref<1x96xf32, #tpu.memory_space<vmem>>, vector<1x96xf32>
    %c0_107 = arith.constant 0 : index
    %c0_108 = arith.constant 0 : index
    %263 = vector.load %arg9[%c0_107, %c0_108] : memref<1x96xf32, #tpu.memory_space<vmem>>, vector<1x96xf32>
    %cst_109 = arith.constant dense<0.000000e+00> : vector<2x96xf32>
    %264 = tpu.matmul %259, %260, %cst_109 {dimension_numbers = #tpu.dot_dimension_numbers<[1], [0], [0], [1], [0, 0, 1, 1], [], []>} : vector<2x32xf32>, vector<32x96xf32>, vector<2x96xf32> -> vector<2x96xf32>
    %265 = vector.broadcast %262 : vector<1x96xf32> to vector<2x96xf32>
    %266 = arith.addf %264, %265 : vector<2x96xf32>
    %cst_110 = arith.constant dense<0.000000e+00> : vector<2x96xf32>
    %267 = tpu.matmul %217, %261, %cst_110 {dimension_numbers = #tpu.dot_dimension_numbers<[1], [0], [0], [1], [0, 0, 1, 1], [], []>} : vector<2x32xf32>, vector<32x96xf32>, vector<2x96xf32> -> vector<2x96xf32>
    %268 = vector.broadcast %263 : vector<1x96xf32> to vector<2x96xf32>
    %269 = arith.addf %267, %268 : vector<2x96xf32>
    %270 = vector.extract_strided_slice %266 {offsets = [0, 0], sizes = [2, 64], strides = [1, 1]} : vector<2x96xf32> to vector<2x64xf32>
    %271 = vector.extract_strided_slice %269 {offsets = [0, 0], sizes = [2, 64], strides = [1, 1]} : vector<2x96xf32> to vector<2x64xf32>
    %272 = arith.addf %270, %271 : vector<2x64xf32>
    %273 = arith.negf %272 : vector<2x64xf32>
    %274 = math.exp %273 : vector<2x64xf32>
    %cst_111 = arith.constant 1.000000e+00 : f32
    %275 = vector.broadcast %cst_111 : f32 to vector<2x64xf32>
    %276 = arith.addf %275, %274 : vector<2x64xf32>
    %277 = arith.divf %275, %276 : vector<2x64xf32>
    %278 = vector.extract_strided_slice %277 {offsets = [0, 0], sizes = [2, 32], strides = [1, 1]} : vector<2x64xf32> to vector<2x32xf32>
    %279 = vector.extract_strided_slice %277 {offsets = [0, 32], sizes = [2, 32], strides = [1, 1]} : vector<2x64xf32> to vector<2x32xf32>
    %280 = vector.extract_strided_slice %266 {offsets = [0, 64], sizes = [2, 32], strides = [1, 1]} : vector<2x96xf32> to vector<2x32xf32>
    %281 = vector.extract_strided_slice %269 {offsets = [0, 64], sizes = [2, 32], strides = [1, 1]} : vector<2x96xf32> to vector<2x32xf32>
    %282 = arith.mulf %278, %281 : vector<2x32xf32>
    %283 = arith.addf %280, %282 : vector<2x32xf32>
    %284 = math.tanh %283 : vector<2x32xf32>
    %cst_112 = arith.constant 1.000000e+00 : f32
    %285 = vector.broadcast %cst_112 : f32 to vector<2x32xf32>
    %286 = arith.subf %285, %279 : vector<2x32xf32>
    %287 = arith.mulf %286, %284 : vector<2x32xf32>
    %288 = arith.mulf %279, %217 : vector<2x32xf32>
    %289 = arith.addf %287, %288 : vector<2x32xf32>
    %c4 = arith.constant 4 : index
    %c0_113 = arith.constant 0 : index
    %c0_114 = arith.constant 0 : index
    %290 = vector.load %arg0[%c4, %c0_113, %c0_114] : memref<8x2x1xf32, #tpu.memory_space<vmem>>, vector<1x2x1xf32>
    %291 = vector.shape_cast %290 : vector<1x2x1xf32> to vector<2x1xf32>
    %c4_115 = arith.constant 4 : index
    %c0_116 = arith.constant 0 : index
    %c0_117 = arith.constant 0 : index
    %292 = vector.load %arg1[%c4_115, %c0_116, %c0_117] : memref<8x2x1xf32, #tpu.memory_space<vmem>>, vector<1x2x1xf32>
    %293 = vector.shape_cast %292 : vector<1x2x1xf32> to vector<2x1xf32>
    %c0_118 = arith.constant 0 : index
    %c0_119 = arith.constant 0 : index
    %294 = vector.load %arg2[%c0_118, %c0_119] : memref<2x96xf32, #tpu.memory_space<vmem>>, vector<2x96xf32>
    %c0_120 = arith.constant 0 : index
    %c0_121 = arith.constant 0 : index
    %295 = vector.load %arg3[%c0_120, %c0_121] : memref<32x96xf32, #tpu.memory_space<vmem>>, vector<32x96xf32>
    %c0_122 = arith.constant 0 : index
    %c0_123 = arith.constant 0 : index
    %296 = vector.load %arg4[%c0_122, %c0_123] : memref<1x96xf32, #tpu.memory_space<vmem>>, vector<1x96xf32>
    %c0_124 = arith.constant 0 : index
    %c0_125 = arith.constant 0 : index
    %297 = vector.load %arg5[%c0_124, %c0_125] : memref<1x96xf32, #tpu.memory_space<vmem>>, vector<1x96xf32>
    %298 = vector.extract_strided_slice %294 {offsets = [0, 0], sizes = [1, 96], strides = [1, 1]} : vector<2x96xf32> to vector<1x96xf32>
    %299 = vector.broadcast %291 : vector<2x1xf32> to vector<2x96xf32>
    %300 = vector.broadcast %298 : vector<1x96xf32> to vector<2x96xf32>
    %301 = arith.mulf %299, %300 : vector<2x96xf32>
    %302 = vector.extract_strided_slice %294 {offsets = [1, 0], sizes = [1, 96], strides = [1, 1]} : vector<2x96xf32> to vector<1x96xf32>
    %303 = vector.broadcast %293 : vector<2x1xf32> to vector<2x96xf32>
    %304 = vector.broadcast %302 : vector<1x96xf32> to vector<2x96xf32>
    %305 = arith.mulf %303, %304 : vector<2x96xf32>
    %306 = arith.addf %301, %305 : vector<2x96xf32>
    %307 = vector.broadcast %296 : vector<1x96xf32> to vector<2x96xf32>
    %308 = arith.addf %306, %307 : vector<2x96xf32>
    %cst_126 = arith.constant dense<0.000000e+00> : vector<2x96xf32>
    %309 = tpu.matmul %259, %295, %cst_126 {dimension_numbers = #tpu.dot_dimension_numbers<[1], [0], [0], [1], [0, 0, 1, 1], [], []>} : vector<2x32xf32>, vector<32x96xf32>, vector<2x96xf32> -> vector<2x96xf32>
    %310 = vector.broadcast %297 : vector<1x96xf32> to vector<2x96xf32>
    %311 = arith.addf %309, %310 : vector<2x96xf32>
    %312 = vector.extract_strided_slice %308 {offsets = [0, 0], sizes = [2, 64], strides = [1, 1]} : vector<2x96xf32> to vector<2x64xf32>
    %313 = vector.extract_strided_slice %311 {offsets = [0, 0], sizes = [2, 64], strides = [1, 1]} : vector<2x96xf32> to vector<2x64xf32>
    %314 = arith.addf %312, %313 : vector<2x64xf32>
    %315 = arith.negf %314 : vector<2x64xf32>
    %316 = math.exp %315 : vector<2x64xf32>
    %cst_127 = arith.constant 1.000000e+00 : f32
    %317 = vector.broadcast %cst_127 : f32 to vector<2x64xf32>
    %318 = arith.addf %317, %316 : vector<2x64xf32>
    %319 = arith.divf %317, %318 : vector<2x64xf32>
    %320 = vector.extract_strided_slice %319 {offsets = [0, 0], sizes = [2, 32], strides = [1, 1]} : vector<2x64xf32> to vector<2x32xf32>
    %321 = vector.extract_strided_slice %319 {offsets = [0, 32], sizes = [2, 32], strides = [1, 1]} : vector<2x64xf32> to vector<2x32xf32>
    %322 = vector.extract_strided_slice %308 {offsets = [0, 64], sizes = [2, 32], strides = [1, 1]} : vector<2x96xf32> to vector<2x32xf32>
    %323 = vector.extract_strided_slice %311 {offsets = [0, 64], sizes = [2, 32], strides = [1, 1]} : vector<2x96xf32> to vector<2x32xf32>
    %324 = arith.mulf %320, %323 : vector<2x32xf32>
    %325 = arith.addf %322, %324 : vector<2x32xf32>
    %326 = math.tanh %325 : vector<2x32xf32>
    %cst_128 = arith.constant 1.000000e+00 : f32
    %327 = vector.broadcast %cst_128 : f32 to vector<2x32xf32>
    %328 = arith.subf %327, %321 : vector<2x32xf32>
    %329 = arith.mulf %328, %326 : vector<2x32xf32>
    %330 = arith.mulf %321, %259 : vector<2x32xf32>
    %331 = arith.addf %329, %330 : vector<2x32xf32>
    %c0_129 = arith.constant 0 : index
    %c0_130 = arith.constant 0 : index
    %332 = vector.load %arg6[%c0_129, %c0_130] : memref<32x96xf32, #tpu.memory_space<vmem>>, vector<32x96xf32>
    %c0_131 = arith.constant 0 : index
    %c0_132 = arith.constant 0 : index
    %333 = vector.load %arg7[%c0_131, %c0_132] : memref<32x96xf32, #tpu.memory_space<vmem>>, vector<32x96xf32>
    %c0_133 = arith.constant 0 : index
    %c0_134 = arith.constant 0 : index
    %334 = vector.load %arg8[%c0_133, %c0_134] : memref<1x96xf32, #tpu.memory_space<vmem>>, vector<1x96xf32>
    %c0_135 = arith.constant 0 : index
    %c0_136 = arith.constant 0 : index
    %335 = vector.load %arg9[%c0_135, %c0_136] : memref<1x96xf32, #tpu.memory_space<vmem>>, vector<1x96xf32>
    %cst_137 = arith.constant dense<0.000000e+00> : vector<2x96xf32>
    %336 = tpu.matmul %331, %332, %cst_137 {dimension_numbers = #tpu.dot_dimension_numbers<[1], [0], [0], [1], [0, 0, 1, 1], [], []>} : vector<2x32xf32>, vector<32x96xf32>, vector<2x96xf32> -> vector<2x96xf32>
    %337 = vector.broadcast %334 : vector<1x96xf32> to vector<2x96xf32>
    %338 = arith.addf %336, %337 : vector<2x96xf32>
    %cst_138 = arith.constant dense<0.000000e+00> : vector<2x96xf32>
    %339 = tpu.matmul %289, %333, %cst_138 {dimension_numbers = #tpu.dot_dimension_numbers<[1], [0], [0], [1], [0, 0, 1, 1], [], []>} : vector<2x32xf32>, vector<32x96xf32>, vector<2x96xf32> -> vector<2x96xf32>
    %340 = vector.broadcast %335 : vector<1x96xf32> to vector<2x96xf32>
    %341 = arith.addf %339, %340 : vector<2x96xf32>
    %342 = vector.extract_strided_slice %338 {offsets = [0, 0], sizes = [2, 64], strides = [1, 1]} : vector<2x96xf32> to vector<2x64xf32>
    %343 = vector.extract_strided_slice %341 {offsets = [0, 0], sizes = [2, 64], strides = [1, 1]} : vector<2x96xf32> to vector<2x64xf32>
    %344 = arith.addf %342, %343 : vector<2x64xf32>
    %345 = arith.negf %344 : vector<2x64xf32>
    %346 = math.exp %345 : vector<2x64xf32>
    %cst_139 = arith.constant 1.000000e+00 : f32
    %347 = vector.broadcast %cst_139 : f32 to vector<2x64xf32>
    %348 = arith.addf %347, %346 : vector<2x64xf32>
    %349 = arith.divf %347, %348 : vector<2x64xf32>
    %350 = vector.extract_strided_slice %349 {offsets = [0, 0], sizes = [2, 32], strides = [1, 1]} : vector<2x64xf32> to vector<2x32xf32>
    %351 = vector.extract_strided_slice %349 {offsets = [0, 32], sizes = [2, 32], strides = [1, 1]} : vector<2x64xf32> to vector<2x32xf32>
    %352 = vector.extract_strided_slice %338 {offsets = [0, 64], sizes = [2, 32], strides = [1, 1]} : vector<2x96xf32> to vector<2x32xf32>
    %353 = vector.extract_strided_slice %341 {offsets = [0, 64], sizes = [2, 32], strides = [1, 1]} : vector<2x96xf32> to vector<2x32xf32>
    %354 = arith.mulf %350, %353 : vector<2x32xf32>
    %355 = arith.addf %352, %354 : vector<2x32xf32>
    %356 = math.tanh %355 : vector<2x32xf32>
    %cst_140 = arith.constant 1.000000e+00 : f32
    %357 = vector.broadcast %cst_140 : f32 to vector<2x32xf32>
    %358 = arith.subf %357, %351 : vector<2x32xf32>
    %359 = arith.mulf %358, %356 : vector<2x32xf32>
    %360 = arith.mulf %351, %289 : vector<2x32xf32>
    %361 = arith.addf %359, %360 : vector<2x32xf32>
    %c5 = arith.constant 5 : index
    %c0_141 = arith.constant 0 : index
    %c0_142 = arith.constant 0 : index
    %362 = vector.load %arg0[%c5, %c0_141, %c0_142] : memref<8x2x1xf32, #tpu.memory_space<vmem>>, vector<1x2x1xf32>
    %363 = vector.shape_cast %362 : vector<1x2x1xf32> to vector<2x1xf32>
    %c5_143 = arith.constant 5 : index
    %c0_144 = arith.constant 0 : index
    %c0_145 = arith.constant 0 : index
    %364 = vector.load %arg1[%c5_143, %c0_144, %c0_145] : memref<8x2x1xf32, #tpu.memory_space<vmem>>, vector<1x2x1xf32>
    %365 = vector.shape_cast %364 : vector<1x2x1xf32> to vector<2x1xf32>
    %c0_146 = arith.constant 0 : index
    %c0_147 = arith.constant 0 : index
    %366 = vector.load %arg2[%c0_146, %c0_147] : memref<2x96xf32, #tpu.memory_space<vmem>>, vector<2x96xf32>
    %c0_148 = arith.constant 0 : index
    %c0_149 = arith.constant 0 : index
    %367 = vector.load %arg3[%c0_148, %c0_149] : memref<32x96xf32, #tpu.memory_space<vmem>>, vector<32x96xf32>
    %c0_150 = arith.constant 0 : index
    %c0_151 = arith.constant 0 : index
    %368 = vector.load %arg4[%c0_150, %c0_151] : memref<1x96xf32, #tpu.memory_space<vmem>>, vector<1x96xf32>
    %c0_152 = arith.constant 0 : index
    %c0_153 = arith.constant 0 : index
    %369 = vector.load %arg5[%c0_152, %c0_153] : memref<1x96xf32, #tpu.memory_space<vmem>>, vector<1x96xf32>
    %370 = vector.extract_strided_slice %366 {offsets = [0, 0], sizes = [1, 96], strides = [1, 1]} : vector<2x96xf32> to vector<1x96xf32>
    %371 = vector.broadcast %363 : vector<2x1xf32> to vector<2x96xf32>
    %372 = vector.broadcast %370 : vector<1x96xf32> to vector<2x96xf32>
    %373 = arith.mulf %371, %372 : vector<2x96xf32>
    %374 = vector.extract_strided_slice %366 {offsets = [1, 0], sizes = [1, 96], strides = [1, 1]} : vector<2x96xf32> to vector<1x96xf32>
    %375 = vector.broadcast %365 : vector<2x1xf32> to vector<2x96xf32>
    %376 = vector.broadcast %374 : vector<1x96xf32> to vector<2x96xf32>
    %377 = arith.mulf %375, %376 : vector<2x96xf32>
    %378 = arith.addf %373, %377 : vector<2x96xf32>
    %379 = vector.broadcast %368 : vector<1x96xf32> to vector<2x96xf32>
    %380 = arith.addf %378, %379 : vector<2x96xf32>
    %cst_154 = arith.constant dense<0.000000e+00> : vector<2x96xf32>
    %381 = tpu.matmul %331, %367, %cst_154 {dimension_numbers = #tpu.dot_dimension_numbers<[1], [0], [0], [1], [0, 0, 1, 1], [], []>} : vector<2x32xf32>, vector<32x96xf32>, vector<2x96xf32> -> vector<2x96xf32>
    %382 = vector.broadcast %369 : vector<1x96xf32> to vector<2x96xf32>
    %383 = arith.addf %381, %382 : vector<2x96xf32>
    %384 = vector.extract_strided_slice %380 {offsets = [0, 0], sizes = [2, 64], strides = [1, 1]} : vector<2x96xf32> to vector<2x64xf32>
    %385 = vector.extract_strided_slice %383 {offsets = [0, 0], sizes = [2, 64], strides = [1, 1]} : vector<2x96xf32> to vector<2x64xf32>
    %386 = arith.addf %384, %385 : vector<2x64xf32>
    %387 = arith.negf %386 : vector<2x64xf32>
    %388 = math.exp %387 : vector<2x64xf32>
    %cst_155 = arith.constant 1.000000e+00 : f32
    %389 = vector.broadcast %cst_155 : f32 to vector<2x64xf32>
    %390 = arith.addf %389, %388 : vector<2x64xf32>
    %391 = arith.divf %389, %390 : vector<2x64xf32>
    %392 = vector.extract_strided_slice %391 {offsets = [0, 0], sizes = [2, 32], strides = [1, 1]} : vector<2x64xf32> to vector<2x32xf32>
    %393 = vector.extract_strided_slice %391 {offsets = [0, 32], sizes = [2, 32], strides = [1, 1]} : vector<2x64xf32> to vector<2x32xf32>
    %394 = vector.extract_strided_slice %380 {offsets = [0, 64], sizes = [2, 32], strides = [1, 1]} : vector<2x96xf32> to vector<2x32xf32>
    %395 = vector.extract_strided_slice %383 {offsets = [0, 64], sizes = [2, 32], strides = [1, 1]} : vector<2x96xf32> to vector<2x32xf32>
    %396 = arith.mulf %392, %395 : vector<2x32xf32>
    %397 = arith.addf %394, %396 : vector<2x32xf32>
    %398 = math.tanh %397 : vector<2x32xf32>
    %cst_156 = arith.constant 1.000000e+00 : f32
    %399 = vector.broadcast %cst_156 : f32 to vector<2x32xf32>
    %400 = arith.subf %399, %393 : vector<2x32xf32>
    %401 = arith.mulf %400, %398 : vector<2x32xf32>
    %402 = arith.mulf %393, %331 : vector<2x32xf32>
    %403 = arith.addf %401, %402 : vector<2x32xf32>
    %c0_157 = arith.constant 0 : index
    %c0_158 = arith.constant 0 : index
    %404 = vector.load %arg6[%c0_157, %c0_158] : memref<32x96xf32, #tpu.memory_space<vmem>>, vector<32x96xf32>
    %c0_159 = arith.constant 0 : index
    %c0_160 = arith.constant 0 : index
    %405 = vector.load %arg7[%c0_159, %c0_160] : memref<32x96xf32, #tpu.memory_space<vmem>>, vector<32x96xf32>
    %c0_161 = arith.constant 0 : index
    %c0_162 = arith.constant 0 : index
    %406 = vector.load %arg8[%c0_161, %c0_162] : memref<1x96xf32, #tpu.memory_space<vmem>>, vector<1x96xf32>
    %c0_163 = arith.constant 0 : index
    %c0_164 = arith.constant 0 : index
    %407 = vector.load %arg9[%c0_163, %c0_164] : memref<1x96xf32, #tpu.memory_space<vmem>>, vector<1x96xf32>
    %cst_165 = arith.constant dense<0.000000e+00> : vector<2x96xf32>
    %408 = tpu.matmul %403, %404, %cst_165 {dimension_numbers = #tpu.dot_dimension_numbers<[1], [0], [0], [1], [0, 0, 1, 1], [], []>} : vector<2x32xf32>, vector<32x96xf32>, vector<2x96xf32> -> vector<2x96xf32>
    %409 = vector.broadcast %406 : vector<1x96xf32> to vector<2x96xf32>
    %410 = arith.addf %408, %409 : vector<2x96xf32>
    %cst_166 = arith.constant dense<0.000000e+00> : vector<2x96xf32>
    %411 = tpu.matmul %361, %405, %cst_166 {dimension_numbers = #tpu.dot_dimension_numbers<[1], [0], [0], [1], [0, 0, 1, 1], [], []>} : vector<2x32xf32>, vector<32x96xf32>, vector<2x96xf32> -> vector<2x96xf32>
    %412 = vector.broadcast %407 : vector<1x96xf32> to vector<2x96xf32>
    %413 = arith.addf %411, %412 : vector<2x96xf32>
    %414 = vector.extract_strided_slice %410 {offsets = [0, 0], sizes = [2, 64], strides = [1, 1]} : vector<2x96xf32> to vector<2x64xf32>
    %415 = vector.extract_strided_slice %413 {offsets = [0, 0], sizes = [2, 64], strides = [1, 1]} : vector<2x96xf32> to vector<2x64xf32>
    %416 = arith.addf %414, %415 : vector<2x64xf32>
    %417 = arith.negf %416 : vector<2x64xf32>
    %418 = math.exp %417 : vector<2x64xf32>
    %cst_167 = arith.constant 1.000000e+00 : f32
    %419 = vector.broadcast %cst_167 : f32 to vector<2x64xf32>
    %420 = arith.addf %419, %418 : vector<2x64xf32>
    %421 = arith.divf %419, %420 : vector<2x64xf32>
    %422 = vector.extract_strided_slice %421 {offsets = [0, 0], sizes = [2, 32], strides = [1, 1]} : vector<2x64xf32> to vector<2x32xf32>
    %423 = vector.extract_strided_slice %421 {offsets = [0, 32], sizes = [2, 32], strides = [1, 1]} : vector<2x64xf32> to vector<2x32xf32>
    %424 = vector.extract_strided_slice %410 {offsets = [0, 64], sizes = [2, 32], strides = [1, 1]} : vector<2x96xf32> to vector<2x32xf32>
    %425 = vector.extract_strided_slice %413 {offsets = [0, 64], sizes = [2, 32], strides = [1, 1]} : vector<2x96xf32> to vector<2x32xf32>
    %426 = arith.mulf %422, %425 : vector<2x32xf32>
    %427 = arith.addf %424, %426 : vector<2x32xf32>
    %428 = math.tanh %427 : vector<2x32xf32>
    %cst_168 = arith.constant 1.000000e+00 : f32
    %429 = vector.broadcast %cst_168 : f32 to vector<2x32xf32>
    %430 = arith.subf %429, %423 : vector<2x32xf32>
    %431 = arith.mulf %430, %428 : vector<2x32xf32>
    %432 = arith.mulf %423, %361 : vector<2x32xf32>
    %433 = arith.addf %431, %432 : vector<2x32xf32>
    %c6 = arith.constant 6 : index
    %c0_169 = arith.constant 0 : index
    %c0_170 = arith.constant 0 : index
    %434 = vector.load %arg0[%c6, %c0_169, %c0_170] : memref<8x2x1xf32, #tpu.memory_space<vmem>>, vector<1x2x1xf32>
    %435 = vector.shape_cast %434 : vector<1x2x1xf32> to vector<2x1xf32>
    %c6_171 = arith.constant 6 : index
    %c0_172 = arith.constant 0 : index
    %c0_173 = arith.constant 0 : index
    %436 = vector.load %arg1[%c6_171, %c0_172, %c0_173] : memref<8x2x1xf32, #tpu.memory_space<vmem>>, vector<1x2x1xf32>
    %437 = vector.shape_cast %436 : vector<1x2x1xf32> to vector<2x1xf32>
    %c0_174 = arith.constant 0 : index
    %c0_175 = arith.constant 0 : index
    %438 = vector.load %arg2[%c0_174, %c0_175] : memref<2x96xf32, #tpu.memory_space<vmem>>, vector<2x96xf32>
    %c0_176 = arith.constant 0 : index
    %c0_177 = arith.constant 0 : index
    %439 = vector.load %arg3[%c0_176, %c0_177] : memref<32x96xf32, #tpu.memory_space<vmem>>, vector<32x96xf32>
    %c0_178 = arith.constant 0 : index
    %c0_179 = arith.constant 0 : index
    %440 = vector.load %arg4[%c0_178, %c0_179] : memref<1x96xf32, #tpu.memory_space<vmem>>, vector<1x96xf32>
    %c0_180 = arith.constant 0 : index
    %c0_181 = arith.constant 0 : index
    %441 = vector.load %arg5[%c0_180, %c0_181] : memref<1x96xf32, #tpu.memory_space<vmem>>, vector<1x96xf32>
    %442 = vector.extract_strided_slice %438 {offsets = [0, 0], sizes = [1, 96], strides = [1, 1]} : vector<2x96xf32> to vector<1x96xf32>
    %443 = vector.broadcast %435 : vector<2x1xf32> to vector<2x96xf32>
    %444 = vector.broadcast %442 : vector<1x96xf32> to vector<2x96xf32>
    %445 = arith.mulf %443, %444 : vector<2x96xf32>
    %446 = vector.extract_strided_slice %438 {offsets = [1, 0], sizes = [1, 96], strides = [1, 1]} : vector<2x96xf32> to vector<1x96xf32>
    %447 = vector.broadcast %437 : vector<2x1xf32> to vector<2x96xf32>
    %448 = vector.broadcast %446 : vector<1x96xf32> to vector<2x96xf32>
    %449 = arith.mulf %447, %448 : vector<2x96xf32>
    %450 = arith.addf %445, %449 : vector<2x96xf32>
    %451 = vector.broadcast %440 : vector<1x96xf32> to vector<2x96xf32>
    %452 = arith.addf %450, %451 : vector<2x96xf32>
    %cst_182 = arith.constant dense<0.000000e+00> : vector<2x96xf32>
    %453 = tpu.matmul %403, %439, %cst_182 {dimension_numbers = #tpu.dot_dimension_numbers<[1], [0], [0], [1], [0, 0, 1, 1], [], []>} : vector<2x32xf32>, vector<32x96xf32>, vector<2x96xf32> -> vector<2x96xf32>
    %454 = vector.broadcast %441 : vector<1x96xf32> to vector<2x96xf32>
    %455 = arith.addf %453, %454 : vector<2x96xf32>
    %456 = vector.extract_strided_slice %452 {offsets = [0, 0], sizes = [2, 64], strides = [1, 1]} : vector<2x96xf32> to vector<2x64xf32>
    %457 = vector.extract_strided_slice %455 {offsets = [0, 0], sizes = [2, 64], strides = [1, 1]} : vector<2x96xf32> to vector<2x64xf32>
    %458 = arith.addf %456, %457 : vector<2x64xf32>
    %459 = arith.negf %458 : vector<2x64xf32>
    %460 = math.exp %459 : vector<2x64xf32>
    %cst_183 = arith.constant 1.000000e+00 : f32
    %461 = vector.broadcast %cst_183 : f32 to vector<2x64xf32>
    %462 = arith.addf %461, %460 : vector<2x64xf32>
    %463 = arith.divf %461, %462 : vector<2x64xf32>
    %464 = vector.extract_strided_slice %463 {offsets = [0, 0], sizes = [2, 32], strides = [1, 1]} : vector<2x64xf32> to vector<2x32xf32>
    %465 = vector.extract_strided_slice %463 {offsets = [0, 32], sizes = [2, 32], strides = [1, 1]} : vector<2x64xf32> to vector<2x32xf32>
    %466 = vector.extract_strided_slice %452 {offsets = [0, 64], sizes = [2, 32], strides = [1, 1]} : vector<2x96xf32> to vector<2x32xf32>
    %467 = vector.extract_strided_slice %455 {offsets = [0, 64], sizes = [2, 32], strides = [1, 1]} : vector<2x96xf32> to vector<2x32xf32>
    %468 = arith.mulf %464, %467 : vector<2x32xf32>
    %469 = arith.addf %466, %468 : vector<2x32xf32>
    %470 = math.tanh %469 : vector<2x32xf32>
    %cst_184 = arith.constant 1.000000e+00 : f32
    %471 = vector.broadcast %cst_184 : f32 to vector<2x32xf32>
    %472 = arith.subf %471, %465 : vector<2x32xf32>
    %473 = arith.mulf %472, %470 : vector<2x32xf32>
    %474 = arith.mulf %465, %403 : vector<2x32xf32>
    %475 = arith.addf %473, %474 : vector<2x32xf32>
    %c0_185 = arith.constant 0 : index
    %c0_186 = arith.constant 0 : index
    %476 = vector.load %arg6[%c0_185, %c0_186] : memref<32x96xf32, #tpu.memory_space<vmem>>, vector<32x96xf32>
    %c0_187 = arith.constant 0 : index
    %c0_188 = arith.constant 0 : index
    %477 = vector.load %arg7[%c0_187, %c0_188] : memref<32x96xf32, #tpu.memory_space<vmem>>, vector<32x96xf32>
    %c0_189 = arith.constant 0 : index
    %c0_190 = arith.constant 0 : index
    %478 = vector.load %arg8[%c0_189, %c0_190] : memref<1x96xf32, #tpu.memory_space<vmem>>, vector<1x96xf32>
    %c0_191 = arith.constant 0 : index
    %c0_192 = arith.constant 0 : index
    %479 = vector.load %arg9[%c0_191, %c0_192] : memref<1x96xf32, #tpu.memory_space<vmem>>, vector<1x96xf32>
    %cst_193 = arith.constant dense<0.000000e+00> : vector<2x96xf32>
    %480 = tpu.matmul %475, %476, %cst_193 {dimension_numbers = #tpu.dot_dimension_numbers<[1], [0], [0], [1], [0, 0, 1, 1], [], []>} : vector<2x32xf32>, vector<32x96xf32>, vector<2x96xf32> -> vector<2x96xf32>
    %481 = vector.broadcast %478 : vector<1x96xf32> to vector<2x96xf32>
    %482 = arith.addf %480, %481 : vector<2x96xf32>
    %cst_194 = arith.constant dense<0.000000e+00> : vector<2x96xf32>
    %483 = tpu.matmul %433, %477, %cst_194 {dimension_numbers = #tpu.dot_dimension_numbers<[1], [0], [0], [1], [0, 0, 1, 1], [], []>} : vector<2x32xf32>, vector<32x96xf32>, vector<2x96xf32> -> vector<2x96xf32>
    %484 = vector.broadcast %479 : vector<1x96xf32> to vector<2x96xf32>
    %485 = arith.addf %483, %484 : vector<2x96xf32>
    %486 = vector.extract_strided_slice %482 {offsets = [0, 0], sizes = [2, 64], strides = [1, 1]} : vector<2x96xf32> to vector<2x64xf32>
    %487 = vector.extract_strided_slice %485 {offsets = [0, 0], sizes = [2, 64], strides = [1, 1]} : vector<2x96xf32> to vector<2x64xf32>
    %488 = arith.addf %486, %487 : vector<2x64xf32>
    %489 = arith.negf %488 : vector<2x64xf32>
    %490 = math.exp %489 : vector<2x64xf32>
    %cst_195 = arith.constant 1.000000e+00 : f32
    %491 = vector.broadcast %cst_195 : f32 to vector<2x64xf32>
    %492 = arith.addf %491, %490 : vector<2x64xf32>
    %493 = arith.divf %491, %492 : vector<2x64xf32>
    %494 = vector.extract_strided_slice %493 {offsets = [0, 0], sizes = [2, 32], strides = [1, 1]} : vector<2x64xf32> to vector<2x32xf32>
    %495 = vector.extract_strided_slice %493 {offsets = [0, 32], sizes = [2, 32], strides = [1, 1]} : vector<2x64xf32> to vector<2x32xf32>
    %496 = vector.extract_strided_slice %482 {offsets = [0, 64], sizes = [2, 32], strides = [1, 1]} : vector<2x96xf32> to vector<2x32xf32>
    %497 = vector.extract_strided_slice %485 {offsets = [0, 64], sizes = [2, 32], strides = [1, 1]} : vector<2x96xf32> to vector<2x32xf32>
    %498 = arith.mulf %494, %497 : vector<2x32xf32>
    %499 = arith.addf %496, %498 : vector<2x32xf32>
    %500 = math.tanh %499 : vector<2x32xf32>
    %cst_196 = arith.constant 1.000000e+00 : f32
    %501 = vector.broadcast %cst_196 : f32 to vector<2x32xf32>
    %502 = arith.subf %501, %495 : vector<2x32xf32>
    %503 = arith.mulf %502, %500 : vector<2x32xf32>
    %504 = arith.mulf %495, %433 : vector<2x32xf32>
    %505 = arith.addf %503, %504 : vector<2x32xf32>
    %c7 = arith.constant 7 : index
    %c0_197 = arith.constant 0 : index
    %c0_198 = arith.constant 0 : index
    %506 = vector.load %arg0[%c7, %c0_197, %c0_198] : memref<8x2x1xf32, #tpu.memory_space<vmem>>, vector<1x2x1xf32>
    %507 = vector.shape_cast %506 : vector<1x2x1xf32> to vector<2x1xf32>
    %c7_199 = arith.constant 7 : index
    %c0_200 = arith.constant 0 : index
    %c0_201 = arith.constant 0 : index
    %508 = vector.load %arg1[%c7_199, %c0_200, %c0_201] : memref<8x2x1xf32, #tpu.memory_space<vmem>>, vector<1x2x1xf32>
    %509 = vector.shape_cast %508 : vector<1x2x1xf32> to vector<2x1xf32>
    %c0_202 = arith.constant 0 : index
    %c0_203 = arith.constant 0 : index
    %510 = vector.load %arg2[%c0_202, %c0_203] : memref<2x96xf32, #tpu.memory_space<vmem>>, vector<2x96xf32>
    %c0_204 = arith.constant 0 : index
    %c0_205 = arith.constant 0 : index
    %511 = vector.load %arg3[%c0_204, %c0_205] : memref<32x96xf32, #tpu.memory_space<vmem>>, vector<32x96xf32>
    %c0_206 = arith.constant 0 : index
    %c0_207 = arith.constant 0 : index
    %512 = vector.load %arg4[%c0_206, %c0_207] : memref<1x96xf32, #tpu.memory_space<vmem>>, vector<1x96xf32>
    %c0_208 = arith.constant 0 : index
    %c0_209 = arith.constant 0 : index
    %513 = vector.load %arg5[%c0_208, %c0_209] : memref<1x96xf32, #tpu.memory_space<vmem>>, vector<1x96xf32>
    %514 = vector.extract_strided_slice %510 {offsets = [0, 0], sizes = [1, 96], strides = [1, 1]} : vector<2x96xf32> to vector<1x96xf32>
    %515 = vector.broadcast %507 : vector<2x1xf32> to vector<2x96xf32>
    %516 = vector.broadcast %514 : vector<1x96xf32> to vector<2x96xf32>
    %517 = arith.mulf %515, %516 : vector<2x96xf32>
    %518 = vector.extract_strided_slice %510 {offsets = [1, 0], sizes = [1, 96], strides = [1, 1]} : vector<2x96xf32> to vector<1x96xf32>
    %519 = vector.broadcast %509 : vector<2x1xf32> to vector<2x96xf32>
    %520 = vector.broadcast %518 : vector<1x96xf32> to vector<2x96xf32>
    %521 = arith.mulf %519, %520 : vector<2x96xf32>
    %522 = arith.addf %517, %521 : vector<2x96xf32>
    %523 = vector.broadcast %512 : vector<1x96xf32> to vector<2x96xf32>
    %524 = arith.addf %522, %523 : vector<2x96xf32>
    %cst_210 = arith.constant dense<0.000000e+00> : vector<2x96xf32>
    %525 = tpu.matmul %475, %511, %cst_210 {dimension_numbers = #tpu.dot_dimension_numbers<[1], [0], [0], [1], [0, 0, 1, 1], [], []>} : vector<2x32xf32>, vector<32x96xf32>, vector<2x96xf32> -> vector<2x96xf32>
    %526 = vector.broadcast %513 : vector<1x96xf32> to vector<2x96xf32>
    %527 = arith.addf %525, %526 : vector<2x96xf32>
    %528 = vector.extract_strided_slice %524 {offsets = [0, 0], sizes = [2, 64], strides = [1, 1]} : vector<2x96xf32> to vector<2x64xf32>
    %529 = vector.extract_strided_slice %527 {offsets = [0, 0], sizes = [2, 64], strides = [1, 1]} : vector<2x96xf32> to vector<2x64xf32>
    %530 = arith.addf %528, %529 : vector<2x64xf32>
    %531 = arith.negf %530 : vector<2x64xf32>
    %532 = math.exp %531 : vector<2x64xf32>
    %cst_211 = arith.constant 1.000000e+00 : f32
    %533 = vector.broadcast %cst_211 : f32 to vector<2x64xf32>
    %534 = arith.addf %533, %532 : vector<2x64xf32>
    %535 = arith.divf %533, %534 : vector<2x64xf32>
    %536 = vector.extract_strided_slice %535 {offsets = [0, 0], sizes = [2, 32], strides = [1, 1]} : vector<2x64xf32> to vector<2x32xf32>
    %537 = vector.extract_strided_slice %535 {offsets = [0, 32], sizes = [2, 32], strides = [1, 1]} : vector<2x64xf32> to vector<2x32xf32>
    %538 = vector.extract_strided_slice %524 {offsets = [0, 64], sizes = [2, 32], strides = [1, 1]} : vector<2x96xf32> to vector<2x32xf32>
    %539 = vector.extract_strided_slice %527 {offsets = [0, 64], sizes = [2, 32], strides = [1, 1]} : vector<2x96xf32> to vector<2x32xf32>
    %540 = arith.mulf %536, %539 : vector<2x32xf32>
    %541 = arith.addf %538, %540 : vector<2x32xf32>
    %542 = math.tanh %541 : vector<2x32xf32>
    %cst_212 = arith.constant 1.000000e+00 : f32
    %543 = vector.broadcast %cst_212 : f32 to vector<2x32xf32>
    %544 = arith.subf %543, %537 : vector<2x32xf32>
    %545 = arith.mulf %544, %542 : vector<2x32xf32>
    %546 = arith.mulf %537, %475 : vector<2x32xf32>
    %547 = arith.addf %545, %546 : vector<2x32xf32>
    %c0_213 = arith.constant 0 : index
    %c0_214 = arith.constant 0 : index
    %548 = vector.load %arg6[%c0_213, %c0_214] : memref<32x96xf32, #tpu.memory_space<vmem>>, vector<32x96xf32>
    %c0_215 = arith.constant 0 : index
    %c0_216 = arith.constant 0 : index
    %549 = vector.load %arg7[%c0_215, %c0_216] : memref<32x96xf32, #tpu.memory_space<vmem>>, vector<32x96xf32>
    %c0_217 = arith.constant 0 : index
    %c0_218 = arith.constant 0 : index
    %550 = vector.load %arg8[%c0_217, %c0_218] : memref<1x96xf32, #tpu.memory_space<vmem>>, vector<1x96xf32>
    %c0_219 = arith.constant 0 : index
    %c0_220 = arith.constant 0 : index
    %551 = vector.load %arg9[%c0_219, %c0_220] : memref<1x96xf32, #tpu.memory_space<vmem>>, vector<1x96xf32>
    %cst_221 = arith.constant dense<0.000000e+00> : vector<2x96xf32>
    %552 = tpu.matmul %547, %548, %cst_221 {dimension_numbers = #tpu.dot_dimension_numbers<[1], [0], [0], [1], [0, 0, 1, 1], [], []>} : vector<2x32xf32>, vector<32x96xf32>, vector<2x96xf32> -> vector<2x96xf32>
    %553 = vector.broadcast %550 : vector<1x96xf32> to vector<2x96xf32>
    %554 = arith.addf %552, %553 : vector<2x96xf32>
    %cst_222 = arith.constant dense<0.000000e+00> : vector<2x96xf32>
    %555 = tpu.matmul %505, %549, %cst_222 {dimension_numbers = #tpu.dot_dimension_numbers<[1], [0], [0], [1], [0, 0, 1, 1], [], []>} : vector<2x32xf32>, vector<32x96xf32>, vector<2x96xf32> -> vector<2x96xf32>
    %556 = vector.broadcast %551 : vector<1x96xf32> to vector<2x96xf32>
    %557 = arith.addf %555, %556 : vector<2x96xf32>
    %558 = vector.extract_strided_slice %554 {offsets = [0, 0], sizes = [2, 64], strides = [1, 1]} : vector<2x96xf32> to vector<2x64xf32>
    %559 = vector.extract_strided_slice %557 {offsets = [0, 0], sizes = [2, 64], strides = [1, 1]} : vector<2x96xf32> to vector<2x64xf32>
    %560 = arith.addf %558, %559 : vector<2x64xf32>
    %561 = arith.negf %560 : vector<2x64xf32>
    %562 = math.exp %561 : vector<2x64xf32>
    %cst_223 = arith.constant 1.000000e+00 : f32
    %563 = vector.broadcast %cst_223 : f32 to vector<2x64xf32>
    %564 = arith.addf %563, %562 : vector<2x64xf32>
    %565 = arith.divf %563, %564 : vector<2x64xf32>
    %566 = vector.extract_strided_slice %565 {offsets = [0, 0], sizes = [2, 32], strides = [1, 1]} : vector<2x64xf32> to vector<2x32xf32>
    %567 = vector.extract_strided_slice %565 {offsets = [0, 32], sizes = [2, 32], strides = [1, 1]} : vector<2x64xf32> to vector<2x32xf32>
    %568 = vector.extract_strided_slice %554 {offsets = [0, 64], sizes = [2, 32], strides = [1, 1]} : vector<2x96xf32> to vector<2x32xf32>
    %569 = vector.extract_strided_slice %557 {offsets = [0, 64], sizes = [2, 32], strides = [1, 1]} : vector<2x96xf32> to vector<2x32xf32>
    %570 = arith.mulf %566, %569 : vector<2x32xf32>
    %571 = arith.addf %568, %570 : vector<2x32xf32>
    %572 = math.tanh %571 : vector<2x32xf32>
    %cst_224 = arith.constant 1.000000e+00 : f32
    %573 = vector.broadcast %cst_224 : f32 to vector<2x32xf32>
    %574 = arith.subf %573, %567 : vector<2x32xf32>
    %575 = arith.mulf %574, %572 : vector<2x32xf32>
    %576 = arith.mulf %567, %505 : vector<2x32xf32>
    %577 = arith.addf %575, %576 : vector<2x32xf32>
    %578 = tpu.iota {dimensions = array<i32: 1>} : vector<2x2xi32>
    %c0_i32 = arith.constant 0 : i32
    %579 = vector.broadcast %c0_i32 : i32 to vector<2x2xi32>
    %580 = arith.cmpi eq, %578, %579 : vector<2x2xi32>
    %cst_225 = arith.constant 1.000000e+00 : f32
    %cst_226 = arith.constant 0.000000e+00 : f32
    %581 = vector.broadcast %cst_225 : f32 to vector<2x2xf32>
    %582 = vector.broadcast %cst_226 : f32 to vector<2x2xf32>
    %583 = arith.select %580, %581, %582 : vector<2x2xi1>, vector<2x2xf32>
    %c0_227 = arith.constant 0 : index
    %c0_228 = arith.constant 0 : index
    %584 = vector.load %arg10[%c0_227, %c0_228] : memref<32x96xf32, #tpu.memory_space<vmem>>, vector<32x96xf32>
    %c0_229 = arith.constant 0 : index
    %c0_230 = arith.constant 0 : index
    %585 = vector.load %arg11[%c0_229, %c0_230] : memref<32x96xf32, #tpu.memory_space<vmem>>, vector<32x96xf32>
    %c0_231 = arith.constant 0 : index
    %c0_232 = arith.constant 0 : index
    %586 = vector.load %arg12[%c0_231, %c0_232] : memref<1x96xf32, #tpu.memory_space<vmem>>, vector<1x96xf32>
    %c0_233 = arith.constant 0 : index
    %c0_234 = arith.constant 0 : index
    %587 = vector.load %arg13[%c0_233, %c0_234] : memref<1x96xf32, #tpu.memory_space<vmem>>, vector<1x96xf32>
    %cst_235 = arith.constant dense<0.000000e+00> : vector<2x96xf32>
    %588 = tpu.matmul %577, %584, %cst_235 {dimension_numbers = #tpu.dot_dimension_numbers<[1], [0], [0], [1], [0, 0, 1, 1], [], []>} : vector<2x32xf32>, vector<32x96xf32>, vector<2x96xf32> -> vector<2x96xf32>
    %589 = vector.broadcast %586 : vector<1x96xf32> to vector<2x96xf32>
    %590 = arith.addf %588, %589 : vector<2x96xf32>
    %cst_236 = arith.constant dense<0.000000e+00> : vector<2x96xf32>
    %591 = tpu.matmul %577, %585, %cst_236 {dimension_numbers = #tpu.dot_dimension_numbers<[1], [0], [0], [1], [0, 0, 1, 1], [], []>} : vector<2x32xf32>, vector<32x96xf32>, vector<2x96xf32> -> vector<2x96xf32>
    %592 = vector.broadcast %587 : vector<1x96xf32> to vector<2x96xf32>
    %593 = arith.addf %591, %592 : vector<2x96xf32>
    %594 = vector.extract_strided_slice %590 {offsets = [0, 0], sizes = [2, 64], strides = [1, 1]} : vector<2x96xf32> to vector<2x64xf32>
    %595 = vector.extract_strided_slice %593 {offsets = [0, 0], sizes = [2, 64], strides = [1, 1]} : vector<2x96xf32> to vector<2x64xf32>
    %596 = arith.addf %594, %595 : vector<2x64xf32>
    %597 = arith.negf %596 : vector<2x64xf32>
    %598 = math.exp %597 : vector<2x64xf32>
    %cst_237 = arith.constant 1.000000e+00 : f32
    %599 = vector.broadcast %cst_237 : f32 to vector<2x64xf32>
    %600 = arith.addf %599, %598 : vector<2x64xf32>
    %601 = arith.divf %599, %600 : vector<2x64xf32>
    %602 = vector.extract_strided_slice %601 {offsets = [0, 0], sizes = [2, 32], strides = [1, 1]} : vector<2x64xf32> to vector<2x32xf32>
    %603 = vector.extract_strided_slice %601 {offsets = [0, 32], sizes = [2, 32], strides = [1, 1]} : vector<2x64xf32> to vector<2x32xf32>
    %604 = vector.extract_strided_slice %590 {offsets = [0, 64], sizes = [2, 32], strides = [1, 1]} : vector<2x96xf32> to vector<2x32xf32>
    %605 = vector.extract_strided_slice %593 {offsets = [0, 64], sizes = [2, 32], strides = [1, 1]} : vector<2x96xf32> to vector<2x32xf32>
    %606 = arith.mulf %602, %605 : vector<2x32xf32>
    %607 = arith.addf %604, %606 : vector<2x32xf32>
    %608 = math.tanh %607 : vector<2x32xf32>
    %cst_238 = arith.constant 1.000000e+00 : f32
    %609 = vector.broadcast %cst_238 : f32 to vector<2x32xf32>
    %610 = arith.subf %609, %603 : vector<2x32xf32>
    %611 = arith.mulf %610, %608 : vector<2x32xf32>
    %612 = arith.mulf %603, %577 : vector<2x32xf32>
    %613 = arith.addf %611, %612 : vector<2x32xf32>
    %c0_239 = arith.constant 0 : index
    %c0_240 = arith.constant 0 : index
    %614 = vector.load %arg14[%c0_239, %c0_240] : memref<32x96xf32, #tpu.memory_space<vmem>>, vector<32x96xf32>
    %c0_241 = arith.constant 0 : index
    %c0_242 = arith.constant 0 : index
    %615 = vector.load %arg15[%c0_241, %c0_242] : memref<32x96xf32, #tpu.memory_space<vmem>>, vector<32x96xf32>
    %c0_243 = arith.constant 0 : index
    %c0_244 = arith.constant 0 : index
    %616 = vector.load %arg16[%c0_243, %c0_244] : memref<1x96xf32, #tpu.memory_space<vmem>>, vector<1x96xf32>
    %c0_245 = arith.constant 0 : index
    %c0_246 = arith.constant 0 : index
    %617 = vector.load %arg17[%c0_245, %c0_246] : memref<1x96xf32, #tpu.memory_space<vmem>>, vector<1x96xf32>
    %cst_247 = arith.constant dense<0.000000e+00> : vector<2x96xf32>
    %618 = tpu.matmul %613, %614, %cst_247 {dimension_numbers = #tpu.dot_dimension_numbers<[1], [0], [0], [1], [0, 0, 1, 1], [], []>} : vector<2x32xf32>, vector<32x96xf32>, vector<2x96xf32> -> vector<2x96xf32>
    %619 = vector.broadcast %616 : vector<1x96xf32> to vector<2x96xf32>
    %620 = arith.addf %618, %619 : vector<2x96xf32>
    %cst_248 = arith.constant dense<0.000000e+00> : vector<2x96xf32>
    %621 = tpu.matmul %577, %615, %cst_248 {dimension_numbers = #tpu.dot_dimension_numbers<[1], [0], [0], [1], [0, 0, 1, 1], [], []>} : vector<2x32xf32>, vector<32x96xf32>, vector<2x96xf32> -> vector<2x96xf32>
    %622 = vector.broadcast %617 : vector<1x96xf32> to vector<2x96xf32>
    %623 = arith.addf %621, %622 : vector<2x96xf32>
    %624 = vector.extract_strided_slice %620 {offsets = [0, 0], sizes = [2, 64], strides = [1, 1]} : vector<2x96xf32> to vector<2x64xf32>
    %625 = vector.extract_strided_slice %623 {offsets = [0, 0], sizes = [2, 64], strides = [1, 1]} : vector<2x96xf32> to vector<2x64xf32>
    %626 = arith.addf %624, %625 : vector<2x64xf32>
    %627 = arith.negf %626 : vector<2x64xf32>
    %628 = math.exp %627 : vector<2x64xf32>
    %cst_249 = arith.constant 1.000000e+00 : f32
    %629 = vector.broadcast %cst_249 : f32 to vector<2x64xf32>
    %630 = arith.addf %629, %628 : vector<2x64xf32>
    %631 = arith.divf %629, %630 : vector<2x64xf32>
    %632 = vector.extract_strided_slice %631 {offsets = [0, 0], sizes = [2, 32], strides = [1, 1]} : vector<2x64xf32> to vector<2x32xf32>
    %633 = vector.extract_strided_slice %631 {offsets = [0, 32], sizes = [2, 32], strides = [1, 1]} : vector<2x64xf32> to vector<2x32xf32>
    %634 = vector.extract_strided_slice %620 {offsets = [0, 64], sizes = [2, 32], strides = [1, 1]} : vector<2x96xf32> to vector<2x32xf32>
    %635 = vector.extract_strided_slice %623 {offsets = [0, 64], sizes = [2, 32], strides = [1, 1]} : vector<2x96xf32> to vector<2x32xf32>
    %636 = arith.mulf %632, %635 : vector<2x32xf32>
    %637 = arith.addf %634, %636 : vector<2x32xf32>
    %638 = math.tanh %637 : vector<2x32xf32>
    %cst_250 = arith.constant 1.000000e+00 : f32
    %639 = vector.broadcast %cst_250 : f32 to vector<2x32xf32>
    %640 = arith.subf %639, %633 : vector<2x32xf32>
    %641 = arith.mulf %640, %638 : vector<2x32xf32>
    %642 = arith.mulf %633, %577 : vector<2x32xf32>
    %643 = arith.addf %641, %642 : vector<2x32xf32>
    %c0_251 = arith.constant 0 : index
    %c0_252 = arith.constant 0 : index
    %644 = vector.load %arg18[%c0_251, %c0_252] : memref<32x16xf32, #tpu.memory_space<vmem>>, vector<32x16xf32>
    %c0_253 = arith.constant 0 : index
    %c0_254 = arith.constant 0 : index
    %645 = vector.load %arg19[%c0_253, %c0_254] : memref<1x16xf32, #tpu.memory_space<vmem>>, vector<1x16xf32>
    %c0_255 = arith.constant 0 : index
    %c0_256 = arith.constant 0 : index
    %646 = vector.load %arg20[%c0_255, %c0_256] : memref<16x2xf32, #tpu.memory_space<vmem>>, vector<16x2xf32>
    %c0_257 = arith.constant 0 : index
    %c0_258 = arith.constant 0 : index
    %647 = vector.load %arg21[%c0_257, %c0_258] : memref<1x2xf32, #tpu.memory_space<vmem>>, vector<1x2xf32>
    %cst_259 = arith.constant dense<0.000000e+00> : vector<2x16xf32>
    %648 = tpu.matmul %643, %644, %cst_259 {dimension_numbers = #tpu.dot_dimension_numbers<[1], [0], [0], [1], [0, 0, 1, 1], [], []>} : vector<2x32xf32>, vector<32x16xf32>, vector<2x16xf32> -> vector<2x16xf32>
    %649 = vector.broadcast %645 : vector<1x16xf32> to vector<2x16xf32>
    %650 = arith.addf %648, %649 : vector<2x16xf32>
    %cst_260 = arith.constant 0.000000e+00 : f32
    %651 = vector.broadcast %cst_260 : f32 to vector<2x16xf32>
    %652 = arith.maximumf %650, %651 : vector<2x16xf32>
    %cst_261 = arith.constant dense<0.000000e+00> : vector<2x2xf32>
    %653 = tpu.matmul %652, %646, %cst_261 {dimension_numbers = #tpu.dot_dimension_numbers<[1], [0], [0], [1], [0, 0, 1, 1], [], []>} : vector<2x16xf32>, vector<16x2xf32>, vector<2x2xf32> -> vector<2x2xf32>
    %654 = vector.broadcast %647 : vector<1x2xf32> to vector<2x2xf32>
    %655 = arith.addf %653, %654 : vector<2x2xf32>
    %656 = arith.addf %583, %655 : vector<2x2xf32>
    %c0_262 = arith.constant 0 : index
    %c0_263 = arith.constant 0 : index
    %657 = vector.load %arg10[%c0_262, %c0_263] : memref<32x96xf32, #tpu.memory_space<vmem>>, vector<32x96xf32>
    %c0_264 = arith.constant 0 : index
    %c0_265 = arith.constant 0 : index
    %658 = vector.load %arg11[%c0_264, %c0_265] : memref<32x96xf32, #tpu.memory_space<vmem>>, vector<32x96xf32>
    %c0_266 = arith.constant 0 : index
    %c0_267 = arith.constant 0 : index
    %659 = vector.load %arg12[%c0_266, %c0_267] : memref<1x96xf32, #tpu.memory_space<vmem>>, vector<1x96xf32>
    %c0_268 = arith.constant 0 : index
    %c0_269 = arith.constant 0 : index
    %660 = vector.load %arg13[%c0_268, %c0_269] : memref<1x96xf32, #tpu.memory_space<vmem>>, vector<1x96xf32>
    %cst_270 = arith.constant dense<0.000000e+00> : vector<2x96xf32>
    %661 = tpu.matmul %643, %657, %cst_270 {dimension_numbers = #tpu.dot_dimension_numbers<[1], [0], [0], [1], [0, 0, 1, 1], [], []>} : vector<2x32xf32>, vector<32x96xf32>, vector<2x96xf32> -> vector<2x96xf32>
    %662 = vector.broadcast %659 : vector<1x96xf32> to vector<2x96xf32>
    %663 = arith.addf %661, %662 : vector<2x96xf32>
    %cst_271 = arith.constant dense<0.000000e+00> : vector<2x96xf32>
    %664 = tpu.matmul %613, %658, %cst_271 {dimension_numbers = #tpu.dot_dimension_numbers<[1], [0], [0], [1], [0, 0, 1, 1], [], []>} : vector<2x32xf32>, vector<32x96xf32>, vector<2x96xf32> -> vector<2x96xf32>
    %665 = vector.broadcast %660 : vector<1x96xf32> to vector<2x96xf32>
    %666 = arith.addf %664, %665 : vector<2x96xf32>
    %667 = vector.extract_strided_slice %663 {offsets = [0, 0], sizes = [2, 64], strides = [1, 1]} : vector<2x96xf32> to vector<2x64xf32>
    %668 = vector.extract_strided_slice %666 {offsets = [0, 0], sizes = [2, 64], strides = [1, 1]} : vector<2x96xf32> to vector<2x64xf32>
    %669 = arith.addf %667, %668 : vector<2x64xf32>
    %670 = arith.negf %669 : vector<2x64xf32>
    %671 = math.exp %670 : vector<2x64xf32>
    %cst_272 = arith.constant 1.000000e+00 : f32
    %672 = vector.broadcast %cst_272 : f32 to vector<2x64xf32>
    %673 = arith.addf %672, %671 : vector<2x64xf32>
    %674 = arith.divf %672, %673 : vector<2x64xf32>
    %675 = vector.extract_strided_slice %674 {offsets = [0, 0], sizes = [2, 32], strides = [1, 1]} : vector<2x64xf32> to vector<2x32xf32>
    %676 = vector.extract_strided_slice %674 {offsets = [0, 32], sizes = [2, 32], strides = [1, 1]} : vector<2x64xf32> to vector<2x32xf32>
    %677 = vector.extract_strided_slice %663 {offsets = [0, 64], sizes = [2, 32], strides = [1, 1]} : vector<2x96xf32> to vector<2x32xf32>
    %678 = vector.extract_strided_slice %666 {offsets = [0, 64], sizes = [2, 32], strides = [1, 1]} : vector<2x96xf32> to vector<2x32xf32>
    %679 = arith.mulf %675, %678 : vector<2x32xf32>
    %680 = arith.addf %677, %679 : vector<2x32xf32>
    %681 = math.tanh %680 : vector<2x32xf32>
    %cst_273 = arith.constant 1.000000e+00 : f32
    %682 = vector.broadcast %cst_273 : f32 to vector<2x32xf32>
    %683 = arith.subf %682, %676 : vector<2x32xf32>
    %684 = arith.mulf %683, %681 : vector<2x32xf32>
    %685 = arith.mulf %676, %613 : vector<2x32xf32>
    %686 = arith.addf %684, %685 : vector<2x32xf32>
    %c0_274 = arith.constant 0 : index
    %c0_275 = arith.constant 0 : index
    %687 = vector.load %arg14[%c0_274, %c0_275] : memref<32x96xf32, #tpu.memory_space<vmem>>, vector<32x96xf32>
    %c0_276 = arith.constant 0 : index
    %c0_277 = arith.constant 0 : index
    %688 = vector.load %arg15[%c0_276, %c0_277] : memref<32x96xf32, #tpu.memory_space<vmem>>, vector<32x96xf32>
    %c0_278 = arith.constant 0 : index
    %c0_279 = arith.constant 0 : index
    %689 = vector.load %arg16[%c0_278, %c0_279] : memref<1x96xf32, #tpu.memory_space<vmem>>, vector<1x96xf32>
    %c0_280 = arith.constant 0 : index
    %c0_281 = arith.constant 0 : index
    %690 = vector.load %arg17[%c0_280, %c0_281] : memref<1x96xf32, #tpu.memory_space<vmem>>, vector<1x96xf32>
    %cst_282 = arith.constant dense<0.000000e+00> : vector<2x96xf32>
    %691 = tpu.matmul %686, %687, %cst_282 {dimension_numbers = #tpu.dot_dimension_numbers<[1], [0], [0], [1], [0, 0, 1, 1], [], []>} : vector<2x32xf32>, vector<32x96xf32>, vector<2x96xf32> -> vector<2x96xf32>
    %692 = vector.broadcast %689 : vector<1x96xf32> to vector<2x96xf32>
    %693 = arith.addf %691, %692 : vector<2x96xf32>
    %cst_283 = arith.constant dense<0.000000e+00> : vector<2x96xf32>
    %694 = tpu.matmul %643, %688, %cst_283 {dimension_numbers = #tpu.dot_dimension_numbers<[1], [0], [0], [1], [0, 0, 1, 1], [], []>} : vector<2x32xf32>, vector<32x96xf32>, vector<2x96xf32> -> vector<2x96xf32>
    %695 = vector.broadcast %690 : vector<1x96xf32> to vector<2x96xf32>
    %696 = arith.addf %694, %695 : vector<2x96xf32>
    %697 = vector.extract_strided_slice %693 {offsets = [0, 0], sizes = [2, 64], strides = [1, 1]} : vector<2x96xf32> to vector<2x64xf32>
    %698 = vector.extract_strided_slice %696 {offsets = [0, 0], sizes = [2, 64], strides = [1, 1]} : vector<2x96xf32> to vector<2x64xf32>
    %699 = arith.addf %697, %698 : vector<2x64xf32>
    %700 = arith.negf %699 : vector<2x64xf32>
    %701 = math.exp %700 : vector<2x64xf32>
    %cst_284 = arith.constant 1.000000e+00 : f32
    %702 = vector.broadcast %cst_284 : f32 to vector<2x64xf32>
    %703 = arith.addf %702, %701 : vector<2x64xf32>
    %704 = arith.divf %702, %703 : vector<2x64xf32>
    %705 = vector.extract_strided_slice %704 {offsets = [0, 0], sizes = [2, 32], strides = [1, 1]} : vector<2x64xf32> to vector<2x32xf32>
    %706 = vector.extract_strided_slice %704 {offsets = [0, 32], sizes = [2, 32], strides = [1, 1]} : vector<2x64xf32> to vector<2x32xf32>
    %707 = vector.extract_strided_slice %693 {offsets = [0, 64], sizes = [2, 32], strides = [1, 1]} : vector<2x96xf32> to vector<2x32xf32>
    %708 = vector.extract_strided_slice %696 {offsets = [0, 64], sizes = [2, 32], strides = [1, 1]} : vector<2x96xf32> to vector<2x32xf32>
    %709 = arith.mulf %705, %708 : vector<2x32xf32>
    %710 = arith.addf %707, %709 : vector<2x32xf32>
    %711 = math.tanh %710 : vector<2x32xf32>
    %cst_285 = arith.constant 1.000000e+00 : f32
    %712 = vector.broadcast %cst_285 : f32 to vector<2x32xf32>
    %713 = arith.subf %712, %706 : vector<2x32xf32>
    %714 = arith.mulf %713, %711 : vector<2x32xf32>
    %715 = arith.mulf %706, %643 : vector<2x32xf32>
    %716 = arith.addf %714, %715 : vector<2x32xf32>
    %c0_286 = arith.constant 0 : index
    %c0_287 = arith.constant 0 : index
    %717 = vector.load %arg18[%c0_286, %c0_287] : memref<32x16xf32, #tpu.memory_space<vmem>>, vector<32x16xf32>
    %c0_288 = arith.constant 0 : index
    %c0_289 = arith.constant 0 : index
    %718 = vector.load %arg19[%c0_288, %c0_289] : memref<1x16xf32, #tpu.memory_space<vmem>>, vector<1x16xf32>
    %c0_290 = arith.constant 0 : index
    %c0_291 = arith.constant 0 : index
    %719 = vector.load %arg20[%c0_290, %c0_291] : memref<16x2xf32, #tpu.memory_space<vmem>>, vector<16x2xf32>
    %c0_292 = arith.constant 0 : index
    %c0_293 = arith.constant 0 : index
    %720 = vector.load %arg21[%c0_292, %c0_293] : memref<1x2xf32, #tpu.memory_space<vmem>>, vector<1x2xf32>
    %cst_294 = arith.constant dense<0.000000e+00> : vector<2x16xf32>
    %721 = tpu.matmul %716, %717, %cst_294 {dimension_numbers = #tpu.dot_dimension_numbers<[1], [0], [0], [1], [0, 0, 1, 1], [], []>} : vector<2x32xf32>, vector<32x16xf32>, vector<2x16xf32> -> vector<2x16xf32>
    %722 = vector.broadcast %718 : vector<1x16xf32> to vector<2x16xf32>
    %723 = arith.addf %721, %722 : vector<2x16xf32>
    %cst_295 = arith.constant 0.000000e+00 : f32
    %724 = vector.broadcast %cst_295 : f32 to vector<2x16xf32>
    %725 = arith.maximumf %723, %724 : vector<2x16xf32>
    %cst_296 = arith.constant dense<0.000000e+00> : vector<2x2xf32>
    %726 = tpu.matmul %725, %719, %cst_296 {dimension_numbers = #tpu.dot_dimension_numbers<[1], [0], [0], [1], [0, 0, 1, 1], [], []>} : vector<2x16xf32>, vector<16x2xf32>, vector<2x2xf32> -> vector<2x2xf32>
    %727 = vector.broadcast %720 : vector<1x2xf32> to vector<2x2xf32>
    %728 = arith.addf %726, %727 : vector<2x2xf32>
    %729 = arith.addf %656, %728 : vector<2x2xf32>
    %c0_297 = arith.constant 0 : index
    %c0_298 = arith.constant 0 : index
    %730 = vector.load %arg10[%c0_297, %c0_298] : memref<32x96xf32, #tpu.memory_space<vmem>>, vector<32x96xf32>
    %c0_299 = arith.constant 0 : index
    %c0_300 = arith.constant 0 : index
    %731 = vector.load %arg11[%c0_299, %c0_300] : memref<32x96xf32, #tpu.memory_space<vmem>>, vector<32x96xf32>
    %c0_301 = arith.constant 0 : index
    %c0_302 = arith.constant 0 : index
    %732 = vector.load %arg12[%c0_301, %c0_302] : memref<1x96xf32, #tpu.memory_space<vmem>>, vector<1x96xf32>
    %c0_303 = arith.constant 0 : index
    %c0_304 = arith.constant 0 : index
    %733 = vector.load %arg13[%c0_303, %c0_304] : memref<1x96xf32, #tpu.memory_space<vmem>>, vector<1x96xf32>
    %cst_305 = arith.constant dense<0.000000e+00> : vector<2x96xf32>
    %734 = tpu.matmul %716, %730, %cst_305 {dimension_numbers = #tpu.dot_dimension_numbers<[1], [0], [0], [1], [0, 0, 1, 1], [], []>} : vector<2x32xf32>, vector<32x96xf32>, vector<2x96xf32> -> vector<2x96xf32>
    %735 = vector.broadcast %732 : vector<1x96xf32> to vector<2x96xf32>
    %736 = arith.addf %734, %735 : vector<2x96xf32>
    %cst_306 = arith.constant dense<0.000000e+00> : vector<2x96xf32>
    %737 = tpu.matmul %686, %731, %cst_306 {dimension_numbers = #tpu.dot_dimension_numbers<[1], [0], [0], [1], [0, 0, 1, 1], [], []>} : vector<2x32xf32>, vector<32x96xf32>, vector<2x96xf32> -> vector<2x96xf32>
    %738 = vector.broadcast %733 : vector<1x96xf32> to vector<2x96xf32>
    %739 = arith.addf %737, %738 : vector<2x96xf32>
    %740 = vector.extract_strided_slice %736 {offsets = [0, 0], sizes = [2, 64], strides = [1, 1]} : vector<2x96xf32> to vector<2x64xf32>
    %741 = vector.extract_strided_slice %739 {offsets = [0, 0], sizes = [2, 64], strides = [1, 1]} : vector<2x96xf32> to vector<2x64xf32>
    %742 = arith.addf %740, %741 : vector<2x64xf32>
    %743 = arith.negf %742 : vector<2x64xf32>
    %744 = math.exp %743 : vector<2x64xf32>
    %cst_307 = arith.constant 1.000000e+00 : f32
    %745 = vector.broadcast %cst_307 : f32 to vector<2x64xf32>
    %746 = arith.addf %745, %744 : vector<2x64xf32>
    %747 = arith.divf %745, %746 : vector<2x64xf32>
    %748 = vector.extract_strided_slice %747 {offsets = [0, 0], sizes = [2, 32], strides = [1, 1]} : vector<2x64xf32> to vector<2x32xf32>
    %749 = vector.extract_strided_slice %747 {offsets = [0, 32], sizes = [2, 32], strides = [1, 1]} : vector<2x64xf32> to vector<2x32xf32>
    %750 = vector.extract_strided_slice %736 {offsets = [0, 64], sizes = [2, 32], strides = [1, 1]} : vector<2x96xf32> to vector<2x32xf32>
    %751 = vector.extract_strided_slice %739 {offsets = [0, 64], sizes = [2, 32], strides = [1, 1]} : vector<2x96xf32> to vector<2x32xf32>
    %752 = arith.mulf %748, %751 : vector<2x32xf32>
    %753 = arith.addf %750, %752 : vector<2x32xf32>
    %754 = math.tanh %753 : vector<2x32xf32>
    %cst_308 = arith.constant 1.000000e+00 : f32
    %755 = vector.broadcast %cst_308 : f32 to vector<2x32xf32>
    %756 = arith.subf %755, %749 : vector<2x32xf32>
    %757 = arith.mulf %756, %754 : vector<2x32xf32>
    %758 = arith.mulf %749, %686 : vector<2x32xf32>
    %759 = arith.addf %757, %758 : vector<2x32xf32>
    %c0_309 = arith.constant 0 : index
    %c0_310 = arith.constant 0 : index
    %760 = vector.load %arg14[%c0_309, %c0_310] : memref<32x96xf32, #tpu.memory_space<vmem>>, vector<32x96xf32>
    %c0_311 = arith.constant 0 : index
    %c0_312 = arith.constant 0 : index
    %761 = vector.load %arg15[%c0_311, %c0_312] : memref<32x96xf32, #tpu.memory_space<vmem>>, vector<32x96xf32>
    %c0_313 = arith.constant 0 : index
    %c0_314 = arith.constant 0 : index
    %762 = vector.load %arg16[%c0_313, %c0_314] : memref<1x96xf32, #tpu.memory_space<vmem>>, vector<1x96xf32>
    %c0_315 = arith.constant 0 : index
    %c0_316 = arith.constant 0 : index
    %763 = vector.load %arg17[%c0_315, %c0_316] : memref<1x96xf32, #tpu.memory_space<vmem>>, vector<1x96xf32>
    %cst_317 = arith.constant dense<0.000000e+00> : vector<2x96xf32>
    %764 = tpu.matmul %759, %760, %cst_317 {dimension_numbers = #tpu.dot_dimension_numbers<[1], [0], [0], [1], [0, 0, 1, 1], [], []>} : vector<2x32xf32>, vector<32x96xf32>, vector<2x96xf32> -> vector<2x96xf32>
    %765 = vector.broadcast %762 : vector<1x96xf32> to vector<2x96xf32>
    %766 = arith.addf %764, %765 : vector<2x96xf32>
    %cst_318 = arith.constant dense<0.000000e+00> : vector<2x96xf32>
    %767 = tpu.matmul %716, %761, %cst_318 {dimension_numbers = #tpu.dot_dimension_numbers<[1], [0], [0], [1], [0, 0, 1, 1], [], []>} : vector<2x32xf32>, vector<32x96xf32>, vector<2x96xf32> -> vector<2x96xf32>
    %768 = vector.broadcast %763 : vector<1x96xf32> to vector<2x96xf32>
    %769 = arith.addf %767, %768 : vector<2x96xf32>
    %770 = vector.extract_strided_slice %766 {offsets = [0, 0], sizes = [2, 64], strides = [1, 1]} : vector<2x96xf32> to vector<2x64xf32>
    %771 = vector.extract_strided_slice %769 {offsets = [0, 0], sizes = [2, 64], strides = [1, 1]} : vector<2x96xf32> to vector<2x64xf32>
    %772 = arith.addf %770, %771 : vector<2x64xf32>
    %773 = arith.negf %772 : vector<2x64xf32>
    %774 = math.exp %773 : vector<2x64xf32>
    %cst_319 = arith.constant 1.000000e+00 : f32
    %775 = vector.broadcast %cst_319 : f32 to vector<2x64xf32>
    %776 = arith.addf %775, %774 : vector<2x64xf32>
    %777 = arith.divf %775, %776 : vector<2x64xf32>
    %778 = vector.extract_strided_slice %777 {offsets = [0, 0], sizes = [2, 32], strides = [1, 1]} : vector<2x64xf32> to vector<2x32xf32>
    %779 = vector.extract_strided_slice %777 {offsets = [0, 32], sizes = [2, 32], strides = [1, 1]} : vector<2x64xf32> to vector<2x32xf32>
    %780 = vector.extract_strided_slice %766 {offsets = [0, 64], sizes = [2, 32], strides = [1, 1]} : vector<2x96xf32> to vector<2x32xf32>
    %781 = vector.extract_strided_slice %769 {offsets = [0, 64], sizes = [2, 32], strides = [1, 1]} : vector<2x96xf32> to vector<2x32xf32>
    %782 = arith.mulf %778, %781 : vector<2x32xf32>
    %783 = arith.addf %780, %782 : vector<2x32xf32>
    %784 = math.tanh %783 : vector<2x32xf32>
    %cst_320 = arith.constant 1.000000e+00 : f32
    %785 = vector.broadcast %cst_320 : f32 to vector<2x32xf32>
    %786 = arith.subf %785, %779 : vector<2x32xf32>
    %787 = arith.mulf %786, %784 : vector<2x32xf32>
    %788 = arith.mulf %779, %716 : vector<2x32xf32>
    %789 = arith.addf %787, %788 : vector<2x32xf32>
    %c0_321 = arith.constant 0 : index
    %c0_322 = arith.constant 0 : index
    %790 = vector.load %arg18[%c0_321, %c0_322] : memref<32x16xf32, #tpu.memory_space<vmem>>, vector<32x16xf32>
    %c0_323 = arith.constant 0 : index
    %c0_324 = arith.constant 0 : index
    %791 = vector.load %arg19[%c0_323, %c0_324] : memref<1x16xf32, #tpu.memory_space<vmem>>, vector<1x16xf32>
    %c0_325 = arith.constant 0 : index
    %c0_326 = arith.constant 0 : index
    %792 = vector.load %arg20[%c0_325, %c0_326] : memref<16x2xf32, #tpu.memory_space<vmem>>, vector<16x2xf32>
    %c0_327 = arith.constant 0 : index
    %c0_328 = arith.constant 0 : index
    %793 = vector.load %arg21[%c0_327, %c0_328] : memref<1x2xf32, #tpu.memory_space<vmem>>, vector<1x2xf32>
    %cst_329 = arith.constant dense<0.000000e+00> : vector<2x16xf32>
    %794 = tpu.matmul %789, %790, %cst_329 {dimension_numbers = #tpu.dot_dimension_numbers<[1], [0], [0], [1], [0, 0, 1, 1], [], []>} : vector<2x32xf32>, vector<32x16xf32>, vector<2x16xf32> -> vector<2x16xf32>
    %795 = vector.broadcast %791 : vector<1x16xf32> to vector<2x16xf32>
    %796 = arith.addf %794, %795 : vector<2x16xf32>
    %cst_330 = arith.constant 0.000000e+00 : f32
    %797 = vector.broadcast %cst_330 : f32 to vector<2x16xf32>
    %798 = arith.maximumf %796, %797 : vector<2x16xf32>
    %cst_331 = arith.constant dense<0.000000e+00> : vector<2x2xf32>
    %799 = tpu.matmul %798, %792, %cst_331 {dimension_numbers = #tpu.dot_dimension_numbers<[1], [0], [0], [1], [0, 0, 1, 1], [], []>} : vector<2x16xf32>, vector<16x2xf32>, vector<2x2xf32> -> vector<2x2xf32>
    %800 = vector.broadcast %793 : vector<1x2xf32> to vector<2x2xf32>
    %801 = arith.addf %799, %800 : vector<2x2xf32>
    %802 = arith.addf %729, %801 : vector<2x2xf32>
    %c0_332 = arith.constant 0 : index
    %c0_333 = arith.constant 0 : index
    %803 = vector.load %arg10[%c0_332, %c0_333] : memref<32x96xf32, #tpu.memory_space<vmem>>, vector<32x96xf32>
    %c0_334 = arith.constant 0 : index
    %c0_335 = arith.constant 0 : index
    %804 = vector.load %arg11[%c0_334, %c0_335] : memref<32x96xf32, #tpu.memory_space<vmem>>, vector<32x96xf32>
    %c0_336 = arith.constant 0 : index
    %c0_337 = arith.constant 0 : index
    %805 = vector.load %arg12[%c0_336, %c0_337] : memref<1x96xf32, #tpu.memory_space<vmem>>, vector<1x96xf32>
    %c0_338 = arith.constant 0 : index
    %c0_339 = arith.constant 0 : index
    %806 = vector.load %arg13[%c0_338, %c0_339] : memref<1x96xf32, #tpu.memory_space<vmem>>, vector<1x96xf32>
    %cst_340 = arith.constant dense<0.000000e+00> : vector<2x96xf32>
    %807 = tpu.matmul %789, %803, %cst_340 {dimension_numbers = #tpu.dot_dimension_numbers<[1], [0], [0], [1], [0, 0, 1, 1], [], []>} : vector<2x32xf32>, vector<32x96xf32>, vector<2x96xf32> -> vector<2x96xf32>
    %808 = vector.broadcast %805 : vector<1x96xf32> to vector<2x96xf32>
    %809 = arith.addf %807, %808 : vector<2x96xf32>
    %cst_341 = arith.constant dense<0.000000e+00> : vector<2x96xf32>
    %810 = tpu.matmul %759, %804, %cst_341 {dimension_numbers = #tpu.dot_dimension_numbers<[1], [0], [0], [1], [0, 0, 1, 1], [], []>} : vector<2x32xf32>, vector<32x96xf32>, vector<2x96xf32> -> vector<2x96xf32>
    %811 = vector.broadcast %806 : vector<1x96xf32> to vector<2x96xf32>
    %812 = arith.addf %810, %811 : vector<2x96xf32>
    %813 = vector.extract_strided_slice %809 {offsets = [0, 0], sizes = [2, 64], strides = [1, 1]} : vector<2x96xf32> to vector<2x64xf32>
    %814 = vector.extract_strided_slice %812 {offsets = [0, 0], sizes = [2, 64], strides = [1, 1]} : vector<2x96xf32> to vector<2x64xf32>
    %815 = arith.addf %813, %814 : vector<2x64xf32>
    %816 = arith.negf %815 : vector<2x64xf32>
    %817 = math.exp %816 : vector<2x64xf32>
    %cst_342 = arith.constant 1.000000e+00 : f32
    %818 = vector.broadcast %cst_342 : f32 to vector<2x64xf32>
    %819 = arith.addf %818, %817 : vector<2x64xf32>
    %820 = arith.divf %818, %819 : vector<2x64xf32>
    %821 = vector.extract_strided_slice %820 {offsets = [0, 0], sizes = [2, 32], strides = [1, 1]} : vector<2x64xf32> to vector<2x32xf32>
    %822 = vector.extract_strided_slice %820 {offsets = [0, 32], sizes = [2, 32], strides = [1, 1]} : vector<2x64xf32> to vector<2x32xf32>
    %823 = vector.extract_strided_slice %809 {offsets = [0, 64], sizes = [2, 32], strides = [1, 1]} : vector<2x96xf32> to vector<2x32xf32>
    %824 = vector.extract_strided_slice %812 {offsets = [0, 64], sizes = [2, 32], strides = [1, 1]} : vector<2x96xf32> to vector<2x32xf32>
    %825 = arith.mulf %821, %824 : vector<2x32xf32>
    %826 = arith.addf %823, %825 : vector<2x32xf32>
    %827 = math.tanh %826 : vector<2x32xf32>
    %cst_343 = arith.constant 1.000000e+00 : f32
    %828 = vector.broadcast %cst_343 : f32 to vector<2x32xf32>
    %829 = arith.subf %828, %822 : vector<2x32xf32>
    %830 = arith.mulf %829, %827 : vector<2x32xf32>
    %831 = arith.mulf %822, %759 : vector<2x32xf32>
    %832 = arith.addf %830, %831 : vector<2x32xf32>
    %c0_344 = arith.constant 0 : index
    %c0_345 = arith.constant 0 : index
    %833 = vector.load %arg14[%c0_344, %c0_345] : memref<32x96xf32, #tpu.memory_space<vmem>>, vector<32x96xf32>
    %c0_346 = arith.constant 0 : index
    %c0_347 = arith.constant 0 : index
    %834 = vector.load %arg15[%c0_346, %c0_347] : memref<32x96xf32, #tpu.memory_space<vmem>>, vector<32x96xf32>
    %c0_348 = arith.constant 0 : index
    %c0_349 = arith.constant 0 : index
    %835 = vector.load %arg16[%c0_348, %c0_349] : memref<1x96xf32, #tpu.memory_space<vmem>>, vector<1x96xf32>
    %c0_350 = arith.constant 0 : index
    %c0_351 = arith.constant 0 : index
    %836 = vector.load %arg17[%c0_350, %c0_351] : memref<1x96xf32, #tpu.memory_space<vmem>>, vector<1x96xf32>
    %cst_352 = arith.constant dense<0.000000e+00> : vector<2x96xf32>
    %837 = tpu.matmul %832, %833, %cst_352 {dimension_numbers = #tpu.dot_dimension_numbers<[1], [0], [0], [1], [0, 0, 1, 1], [], []>} : vector<2x32xf32>, vector<32x96xf32>, vector<2x96xf32> -> vector<2x96xf32>
    %838 = vector.broadcast %835 : vector<1x96xf32> to vector<2x96xf32>
    %839 = arith.addf %837, %838 : vector<2x96xf32>
    %cst_353 = arith.constant dense<0.000000e+00> : vector<2x96xf32>
    %840 = tpu.matmul %789, %834, %cst_353 {dimension_numbers = #tpu.dot_dimension_numbers<[1], [0], [0], [1], [0, 0, 1, 1], [], []>} : vector<2x32xf32>, vector<32x96xf32>, vector<2x96xf32> -> vector<2x96xf32>
    %841 = vector.broadcast %836 : vector<1x96xf32> to vector<2x96xf32>
    %842 = arith.addf %840, %841 : vector<2x96xf32>
    %843 = vector.extract_strided_slice %839 {offsets = [0, 0], sizes = [2, 64], strides = [1, 1]} : vector<2x96xf32> to vector<2x64xf32>
    %844 = vector.extract_strided_slice %842 {offsets = [0, 0], sizes = [2, 64], strides = [1, 1]} : vector<2x96xf32> to vector<2x64xf32>
    %845 = arith.addf %843, %844 : vector<2x64xf32>
    %846 = arith.negf %845 : vector<2x64xf32>
    %847 = math.exp %846 : vector<2x64xf32>
    %cst_354 = arith.constant 1.000000e+00 : f32
    %848 = vector.broadcast %cst_354 : f32 to vector<2x64xf32>
    %849 = arith.addf %848, %847 : vector<2x64xf32>
    %850 = arith.divf %848, %849 : vector<2x64xf32>
    %851 = vector.extract_strided_slice %850 {offsets = [0, 0], sizes = [2, 32], strides = [1, 1]} : vector<2x64xf32> to vector<2x32xf32>
    %852 = vector.extract_strided_slice %850 {offsets = [0, 32], sizes = [2, 32], strides = [1, 1]} : vector<2x64xf32> to vector<2x32xf32>
    %853 = vector.extract_strided_slice %839 {offsets = [0, 64], sizes = [2, 32], strides = [1, 1]} : vector<2x96xf32> to vector<2x32xf32>
    %854 = vector.extract_strided_slice %842 {offsets = [0, 64], sizes = [2, 32], strides = [1, 1]} : vector<2x96xf32> to vector<2x32xf32>
    %855 = arith.mulf %851, %854 : vector<2x32xf32>
    %856 = arith.addf %853, %855 : vector<2x32xf32>
    %857 = math.tanh %856 : vector<2x32xf32>
    %cst_355 = arith.constant 1.000000e+00 : f32
    %858 = vector.broadcast %cst_355 : f32 to vector<2x32xf32>
    %859 = arith.subf %858, %852 : vector<2x32xf32>
    %860 = arith.mulf %859, %857 : vector<2x32xf32>
    %861 = arith.mulf %852, %789 : vector<2x32xf32>
    %862 = arith.addf %860, %861 : vector<2x32xf32>
    %c0_356 = arith.constant 0 : index
    %c0_357 = arith.constant 0 : index
    %863 = vector.load %arg18[%c0_356, %c0_357] : memref<32x16xf32, #tpu.memory_space<vmem>>, vector<32x16xf32>
    %c0_358 = arith.constant 0 : index
    %c0_359 = arith.constant 0 : index
    %864 = vector.load %arg19[%c0_358, %c0_359] : memref<1x16xf32, #tpu.memory_space<vmem>>, vector<1x16xf32>
    %c0_360 = arith.constant 0 : index
    %c0_361 = arith.constant 0 : index
    %865 = vector.load %arg20[%c0_360, %c0_361] : memref<16x2xf32, #tpu.memory_space<vmem>>, vector<16x2xf32>
    %c0_362 = arith.constant 0 : index
    %c0_363 = arith.constant 0 : index
    %866 = vector.load %arg21[%c0_362, %c0_363] : memref<1x2xf32, #tpu.memory_space<vmem>>, vector<1x2xf32>
    %cst_364 = arith.constant dense<0.000000e+00> : vector<2x16xf32>
    %867 = tpu.matmul %862, %863, %cst_364 {dimension_numbers = #tpu.dot_dimension_numbers<[1], [0], [0], [1], [0, 0, 1, 1], [], []>} : vector<2x32xf32>, vector<32x16xf32>, vector<2x16xf32> -> vector<2x16xf32>
    %868 = vector.broadcast %864 : vector<1x16xf32> to vector<2x16xf32>
    %869 = arith.addf %867, %868 : vector<2x16xf32>
    %cst_365 = arith.constant 0.000000e+00 : f32
    %870 = vector.broadcast %cst_365 : f32 to vector<2x16xf32>
    %871 = arith.maximumf %869, %870 : vector<2x16xf32>
    %cst_366 = arith.constant dense<0.000000e+00> : vector<2x2xf32>
    %872 = tpu.matmul %871, %865, %cst_366 {dimension_numbers = #tpu.dot_dimension_numbers<[1], [0], [0], [1], [0, 0, 1, 1], [], []>} : vector<2x16xf32>, vector<16x2xf32>, vector<2x2xf32> -> vector<2x2xf32>
    %873 = vector.broadcast %866 : vector<1x2xf32> to vector<2x2xf32>
    %874 = arith.addf %872, %873 : vector<2x2xf32>
    %875 = arith.addf %802, %874 : vector<2x2xf32>
    %c0_367 = arith.constant 0 : index
    %c0_368 = arith.constant 0 : index
    %876 = vector.load %arg10[%c0_367, %c0_368] : memref<32x96xf32, #tpu.memory_space<vmem>>, vector<32x96xf32>
    %c0_369 = arith.constant 0 : index
    %c0_370 = arith.constant 0 : index
    %877 = vector.load %arg11[%c0_369, %c0_370] : memref<32x96xf32, #tpu.memory_space<vmem>>, vector<32x96xf32>
    %c0_371 = arith.constant 0 : index
    %c0_372 = arith.constant 0 : index
    %878 = vector.load %arg12[%c0_371, %c0_372] : memref<1x96xf32, #tpu.memory_space<vmem>>, vector<1x96xf32>
    %c0_373 = arith.constant 0 : index
    %c0_374 = arith.constant 0 : index
    %879 = vector.load %arg13[%c0_373, %c0_374] : memref<1x96xf32, #tpu.memory_space<vmem>>, vector<1x96xf32>
    %cst_375 = arith.constant dense<0.000000e+00> : vector<2x96xf32>
    %880 = tpu.matmul %862, %876, %cst_375 {dimension_numbers = #tpu.dot_dimension_numbers<[1], [0], [0], [1], [0, 0, 1, 1], [], []>} : vector<2x32xf32>, vector<32x96xf32>, vector<2x96xf32> -> vector<2x96xf32>
    %881 = vector.broadcast %878 : vector<1x96xf32> to vector<2x96xf32>
    %882 = arith.addf %880, %881 : vector<2x96xf32>
    %cst_376 = arith.constant dense<0.000000e+00> : vector<2x96xf32>
    %883 = tpu.matmul %832, %877, %cst_376 {dimension_numbers = #tpu.dot_dimension_numbers<[1], [0], [0], [1], [0, 0, 1, 1], [], []>} : vector<2x32xf32>, vector<32x96xf32>, vector<2x96xf32> -> vector<2x96xf32>
    %884 = vector.broadcast %879 : vector<1x96xf32> to vector<2x96xf32>
    %885 = arith.addf %883, %884 : vector<2x96xf32>
    %886 = vector.extract_strided_slice %882 {offsets = [0, 0], sizes = [2, 64], strides = [1, 1]} : vector<2x96xf32> to vector<2x64xf32>
    %887 = vector.extract_strided_slice %885 {offsets = [0, 0], sizes = [2, 64], strides = [1, 1]} : vector<2x96xf32> to vector<2x64xf32>
    %888 = arith.addf %886, %887 : vector<2x64xf32>
    %889 = arith.negf %888 : vector<2x64xf32>
    %890 = math.exp %889 : vector<2x64xf32>
    %cst_377 = arith.constant 1.000000e+00 : f32
    %891 = vector.broadcast %cst_377 : f32 to vector<2x64xf32>
    %892 = arith.addf %891, %890 : vector<2x64xf32>
    %893 = arith.divf %891, %892 : vector<2x64xf32>
    %894 = vector.extract_strided_slice %893 {offsets = [0, 0], sizes = [2, 32], strides = [1, 1]} : vector<2x64xf32> to vector<2x32xf32>
    %895 = vector.extract_strided_slice %893 {offsets = [0, 32], sizes = [2, 32], strides = [1, 1]} : vector<2x64xf32> to vector<2x32xf32>
    %896 = vector.extract_strided_slice %882 {offsets = [0, 64], sizes = [2, 32], strides = [1, 1]} : vector<2x96xf32> to vector<2x32xf32>
    %897 = vector.extract_strided_slice %885 {offsets = [0, 64], sizes = [2, 32], strides = [1, 1]} : vector<2x96xf32> to vector<2x32xf32>
    %898 = arith.mulf %894, %897 : vector<2x32xf32>
    %899 = arith.addf %896, %898 : vector<2x32xf32>
    %900 = math.tanh %899 : vector<2x32xf32>
    %cst_378 = arith.constant 1.000000e+00 : f32
    %901 = vector.broadcast %cst_378 : f32 to vector<2x32xf32>
    %902 = arith.subf %901, %895 : vector<2x32xf32>
    %903 = arith.mulf %902, %900 : vector<2x32xf32>
    %904 = arith.mulf %895, %832 : vector<2x32xf32>
    %905 = arith.addf %903, %904 : vector<2x32xf32>
    %c0_379 = arith.constant 0 : index
    %c0_380 = arith.constant 0 : index
    %906 = vector.load %arg14[%c0_379, %c0_380] : memref<32x96xf32, #tpu.memory_space<vmem>>, vector<32x96xf32>
    %c0_381 = arith.constant 0 : index
    %c0_382 = arith.constant 0 : index
    %907 = vector.load %arg15[%c0_381, %c0_382] : memref<32x96xf32, #tpu.memory_space<vmem>>, vector<32x96xf32>
    %c0_383 = arith.constant 0 : index
    %c0_384 = arith.constant 0 : index
    %908 = vector.load %arg16[%c0_383, %c0_384] : memref<1x96xf32, #tpu.memory_space<vmem>>, vector<1x96xf32>
    %c0_385 = arith.constant 0 : index
    %c0_386 = arith.constant 0 : index
    %909 = vector.load %arg17[%c0_385, %c0_386] : memref<1x96xf32, #tpu.memory_space<vmem>>, vector<1x96xf32>
    %cst_387 = arith.constant dense<0.000000e+00> : vector<2x96xf32>
    %910 = tpu.matmul %905, %906, %cst_387 {dimension_numbers = #tpu.dot_dimension_numbers<[1], [0], [0], [1], [0, 0, 1, 1], [], []>} : vector<2x32xf32>, vector<32x96xf32>, vector<2x96xf32> -> vector<2x96xf32>
    %911 = vector.broadcast %908 : vector<1x96xf32> to vector<2x96xf32>
    %912 = arith.addf %910, %911 : vector<2x96xf32>
    %cst_388 = arith.constant dense<0.000000e+00> : vector<2x96xf32>
    %913 = tpu.matmul %862, %907, %cst_388 {dimension_numbers = #tpu.dot_dimension_numbers<[1], [0], [0], [1], [0, 0, 1, 1], [], []>} : vector<2x32xf32>, vector<32x96xf32>, vector<2x96xf32> -> vector<2x96xf32>
    %914 = vector.broadcast %909 : vector<1x96xf32> to vector<2x96xf32>
    %915 = arith.addf %913, %914 : vector<2x96xf32>
    %916 = vector.extract_strided_slice %912 {offsets = [0, 0], sizes = [2, 64], strides = [1, 1]} : vector<2x96xf32> to vector<2x64xf32>
    %917 = vector.extract_strided_slice %915 {offsets = [0, 0], sizes = [2, 64], strides = [1, 1]} : vector<2x96xf32> to vector<2x64xf32>
    %918 = arith.addf %916, %917 : vector<2x64xf32>
    %919 = arith.negf %918 : vector<2x64xf32>
    %920 = math.exp %919 : vector<2x64xf32>
    %cst_389 = arith.constant 1.000000e+00 : f32
    %921 = vector.broadcast %cst_389 : f32 to vector<2x64xf32>
    %922 = arith.addf %921, %920 : vector<2x64xf32>
    %923 = arith.divf %921, %922 : vector<2x64xf32>
    %924 = vector.extract_strided_slice %923 {offsets = [0, 0], sizes = [2, 32], strides = [1, 1]} : vector<2x64xf32> to vector<2x32xf32>
    %925 = vector.extract_strided_slice %923 {offsets = [0, 32], sizes = [2, 32], strides = [1, 1]} : vector<2x64xf32> to vector<2x32xf32>
    %926 = vector.extract_strided_slice %912 {offsets = [0, 64], sizes = [2, 32], strides = [1, 1]} : vector<2x96xf32> to vector<2x32xf32>
    %927 = vector.extract_strided_slice %915 {offsets = [0, 64], sizes = [2, 32], strides = [1, 1]} : vector<2x96xf32> to vector<2x32xf32>
    %928 = arith.mulf %924, %927 : vector<2x32xf32>
    %929 = arith.addf %926, %928 : vector<2x32xf32>
    %930 = math.tanh %929 : vector<2x32xf32>
    %cst_390 = arith.constant 1.000000e+00 : f32
    %931 = vector.broadcast %cst_390 : f32 to vector<2x32xf32>
    %932 = arith.subf %931, %925 : vector<2x32xf32>
    %933 = arith.mulf %932, %930 : vector<2x32xf32>
    %934 = arith.mulf %925, %862 : vector<2x32xf32>
    %935 = arith.addf %933, %934 : vector<2x32xf32>
    %c0_391 = arith.constant 0 : index
    %c0_392 = arith.constant 0 : index
    %936 = vector.load %arg18[%c0_391, %c0_392] : memref<32x16xf32, #tpu.memory_space<vmem>>, vector<32x16xf32>
    %c0_393 = arith.constant 0 : index
    %c0_394 = arith.constant 0 : index
    %937 = vector.load %arg19[%c0_393, %c0_394] : memref<1x16xf32, #tpu.memory_space<vmem>>, vector<1x16xf32>
    %c0_395 = arith.constant 0 : index
    %c0_396 = arith.constant 0 : index
    %938 = vector.load %arg20[%c0_395, %c0_396] : memref<16x2xf32, #tpu.memory_space<vmem>>, vector<16x2xf32>
    %c0_397 = arith.constant 0 : index
    %c0_398 = arith.constant 0 : index
    %939 = vector.load %arg21[%c0_397, %c0_398] : memref<1x2xf32, #tpu.memory_space<vmem>>, vector<1x2xf32>
    %cst_399 = arith.constant dense<0.000000e+00> : vector<2x16xf32>
    %940 = tpu.matmul %935, %936, %cst_399 {dimension_numbers = #tpu.dot_dimension_numbers<[1], [0], [0], [1], [0, 0, 1, 1], [], []>} : vector<2x32xf32>, vector<32x16xf32>, vector<2x16xf32> -> vector<2x16xf32>
    %941 = vector.broadcast %937 : vector<1x16xf32> to vector<2x16xf32>
    %942 = arith.addf %940, %941 : vector<2x16xf32>
    %cst_400 = arith.constant 0.000000e+00 : f32
    %943 = vector.broadcast %cst_400 : f32 to vector<2x16xf32>
    %944 = arith.maximumf %942, %943 : vector<2x16xf32>
    %cst_401 = arith.constant dense<0.000000e+00> : vector<2x2xf32>
    %945 = tpu.matmul %944, %938, %cst_401 {dimension_numbers = #tpu.dot_dimension_numbers<[1], [0], [0], [1], [0, 0, 1, 1], [], []>} : vector<2x16xf32>, vector<16x2xf32>, vector<2x2xf32> -> vector<2x2xf32>
    %946 = vector.broadcast %939 : vector<1x2xf32> to vector<2x2xf32>
    %947 = arith.addf %945, %946 : vector<2x2xf32>
    %948 = arith.addf %875, %947 : vector<2x2xf32>
    %c0_402 = arith.constant 0 : index
    %c0_403 = arith.constant 0 : index
    %949 = vector.load %arg10[%c0_402, %c0_403] : memref<32x96xf32, #tpu.memory_space<vmem>>, vector<32x96xf32>
    %c0_404 = arith.constant 0 : index
    %c0_405 = arith.constant 0 : index
    %950 = vector.load %arg11[%c0_404, %c0_405] : memref<32x96xf32, #tpu.memory_space<vmem>>, vector<32x96xf32>
    %c0_406 = arith.constant 0 : index
    %c0_407 = arith.constant 0 : index
    %951 = vector.load %arg12[%c0_406, %c0_407] : memref<1x96xf32, #tpu.memory_space<vmem>>, vector<1x96xf32>
    %c0_408 = arith.constant 0 : index
    %c0_409 = arith.constant 0 : index
    %952 = vector.load %arg13[%c0_408, %c0_409] : memref<1x96xf32, #tpu.memory_space<vmem>>, vector<1x96xf32>
    %cst_410 = arith.constant dense<0.000000e+00> : vector<2x96xf32>
    %953 = tpu.matmul %935, %949, %cst_410 {dimension_numbers = #tpu.dot_dimension_numbers<[1], [0], [0], [1], [0, 0, 1, 1], [], []>} : vector<2x32xf32>, vector<32x96xf32>, vector<2x96xf32> -> vector<2x96xf32>
    %954 = vector.broadcast %951 : vector<1x96xf32> to vector<2x96xf32>
    %955 = arith.addf %953, %954 : vector<2x96xf32>
    %cst_411 = arith.constant dense<0.000000e+00> : vector<2x96xf32>
    %956 = tpu.matmul %905, %950, %cst_411 {dimension_numbers = #tpu.dot_dimension_numbers<[1], [0], [0], [1], [0, 0, 1, 1], [], []>} : vector<2x32xf32>, vector<32x96xf32>, vector<2x96xf32> -> vector<2x96xf32>
    %957 = vector.broadcast %952 : vector<1x96xf32> to vector<2x96xf32>
    %958 = arith.addf %956, %957 : vector<2x96xf32>
    %959 = vector.extract_strided_slice %955 {offsets = [0, 0], sizes = [2, 64], strides = [1, 1]} : vector<2x96xf32> to vector<2x64xf32>
    %960 = vector.extract_strided_slice %958 {offsets = [0, 0], sizes = [2, 64], strides = [1, 1]} : vector<2x96xf32> to vector<2x64xf32>
    %961 = arith.addf %959, %960 : vector<2x64xf32>
    %962 = arith.negf %961 : vector<2x64xf32>
    %963 = math.exp %962 : vector<2x64xf32>
    %cst_412 = arith.constant 1.000000e+00 : f32
    %964 = vector.broadcast %cst_412 : f32 to vector<2x64xf32>
    %965 = arith.addf %964, %963 : vector<2x64xf32>
    %966 = arith.divf %964, %965 : vector<2x64xf32>
    %967 = vector.extract_strided_slice %966 {offsets = [0, 0], sizes = [2, 32], strides = [1, 1]} : vector<2x64xf32> to vector<2x32xf32>
    %968 = vector.extract_strided_slice %966 {offsets = [0, 32], sizes = [2, 32], strides = [1, 1]} : vector<2x64xf32> to vector<2x32xf32>
    %969 = vector.extract_strided_slice %955 {offsets = [0, 64], sizes = [2, 32], strides = [1, 1]} : vector<2x96xf32> to vector<2x32xf32>
    %970 = vector.extract_strided_slice %958 {offsets = [0, 64], sizes = [2, 32], strides = [1, 1]} : vector<2x96xf32> to vector<2x32xf32>
    %971 = arith.mulf %967, %970 : vector<2x32xf32>
    %972 = arith.addf %969, %971 : vector<2x32xf32>
    %973 = math.tanh %972 : vector<2x32xf32>
    %cst_413 = arith.constant 1.000000e+00 : f32
    %974 = vector.broadcast %cst_413 : f32 to vector<2x32xf32>
    %975 = arith.subf %974, %968 : vector<2x32xf32>
    %976 = arith.mulf %975, %973 : vector<2x32xf32>
    %977 = arith.mulf %968, %905 : vector<2x32xf32>
    %978 = arith.addf %976, %977 : vector<2x32xf32>
    %c0_414 = arith.constant 0 : index
    %c0_415 = arith.constant 0 : index
    %979 = vector.load %arg14[%c0_414, %c0_415] : memref<32x96xf32, #tpu.memory_space<vmem>>, vector<32x96xf32>
    %c0_416 = arith.constant 0 : index
    %c0_417 = arith.constant 0 : index
    %980 = vector.load %arg15[%c0_416, %c0_417] : memref<32x96xf32, #tpu.memory_space<vmem>>, vector<32x96xf32>
    %c0_418 = arith.constant 0 : index
    %c0_419 = arith.constant 0 : index
    %981 = vector.load %arg16[%c0_418, %c0_419] : memref<1x96xf32, #tpu.memory_space<vmem>>, vector<1x96xf32>
    %c0_420 = arith.constant 0 : index
    %c0_421 = arith.constant 0 : index
    %982 = vector.load %arg17[%c0_420, %c0_421] : memref<1x96xf32, #tpu.memory_space<vmem>>, vector<1x96xf32>
    %cst_422 = arith.constant dense<0.000000e+00> : vector<2x96xf32>
    %983 = tpu.matmul %978, %979, %cst_422 {dimension_numbers = #tpu.dot_dimension_numbers<[1], [0], [0], [1], [0, 0, 1, 1], [], []>} : vector<2x32xf32>, vector<32x96xf32>, vector<2x96xf32> -> vector<2x96xf32>
    %984 = vector.broadcast %981 : vector<1x96xf32> to vector<2x96xf32>
    %985 = arith.addf %983, %984 : vector<2x96xf32>
    %cst_423 = arith.constant dense<0.000000e+00> : vector<2x96xf32>
    %986 = tpu.matmul %935, %980, %cst_423 {dimension_numbers = #tpu.dot_dimension_numbers<[1], [0], [0], [1], [0, 0, 1, 1], [], []>} : vector<2x32xf32>, vector<32x96xf32>, vector<2x96xf32> -> vector<2x96xf32>
    %987 = vector.broadcast %982 : vector<1x96xf32> to vector<2x96xf32>
    %988 = arith.addf %986, %987 : vector<2x96xf32>
    %989 = vector.extract_strided_slice %985 {offsets = [0, 0], sizes = [2, 64], strides = [1, 1]} : vector<2x96xf32> to vector<2x64xf32>
    %990 = vector.extract_strided_slice %988 {offsets = [0, 0], sizes = [2, 64], strides = [1, 1]} : vector<2x96xf32> to vector<2x64xf32>
    %991 = arith.addf %989, %990 : vector<2x64xf32>
    %992 = arith.negf %991 : vector<2x64xf32>
    %993 = math.exp %992 : vector<2x64xf32>
    %cst_424 = arith.constant 1.000000e+00 : f32
    %994 = vector.broadcast %cst_424 : f32 to vector<2x64xf32>
    %995 = arith.addf %994, %993 : vector<2x64xf32>
    %996 = arith.divf %994, %995 : vector<2x64xf32>
    %997 = vector.extract_strided_slice %996 {offsets = [0, 0], sizes = [2, 32], strides = [1, 1]} : vector<2x64xf32> to vector<2x32xf32>
    %998 = vector.extract_strided_slice %996 {offsets = [0, 32], sizes = [2, 32], strides = [1, 1]} : vector<2x64xf32> to vector<2x32xf32>
    %999 = vector.extract_strided_slice %985 {offsets = [0, 64], sizes = [2, 32], strides = [1, 1]} : vector<2x96xf32> to vector<2x32xf32>
    %1000 = vector.extract_strided_slice %988 {offsets = [0, 64], sizes = [2, 32], strides = [1, 1]} : vector<2x96xf32> to vector<2x32xf32>
    %1001 = arith.mulf %997, %1000 : vector<2x32xf32>
    %1002 = arith.addf %999, %1001 : vector<2x32xf32>
    %1003 = math.tanh %1002 : vector<2x32xf32>
    %cst_425 = arith.constant 1.000000e+00 : f32
    %1004 = vector.broadcast %cst_425 : f32 to vector<2x32xf32>
    %1005 = arith.subf %1004, %998 : vector<2x32xf32>
    %1006 = arith.mulf %1005, %1003 : vector<2x32xf32>
    %1007 = arith.mulf %998, %935 : vector<2x32xf32>
    %1008 = arith.addf %1006, %1007 : vector<2x32xf32>
    %c0_426 = arith.constant 0 : index
    %c0_427 = arith.constant 0 : index
    %1009 = vector.load %arg18[%c0_426, %c0_427] : memref<32x16xf32, #tpu.memory_space<vmem>>, vector<32x16xf32>
    %c0_428 = arith.constant 0 : index
    %c0_429 = arith.constant 0 : index
    %1010 = vector.load %arg19[%c0_428, %c0_429] : memref<1x16xf32, #tpu.memory_space<vmem>>, vector<1x16xf32>
    %c0_430 = arith.constant 0 : index
    %c0_431 = arith.constant 0 : index
    %1011 = vector.load %arg20[%c0_430, %c0_431] : memref<16x2xf32, #tpu.memory_space<vmem>>, vector<16x2xf32>
    %c0_432 = arith.constant 0 : index
    %c0_433 = arith.constant 0 : index
    %1012 = vector.load %arg21[%c0_432, %c0_433] : memref<1x2xf32, #tpu.memory_space<vmem>>, vector<1x2xf32>
    %cst_434 = arith.constant dense<0.000000e+00> : vector<2x16xf32>
    %1013 = tpu.matmul %1008, %1009, %cst_434 {dimension_numbers = #tpu.dot_dimension_numbers<[1], [0], [0], [1], [0, 0, 1, 1], [], []>} : vector<2x32xf32>, vector<32x16xf32>, vector<2x16xf32> -> vector<2x16xf32>
    %1014 = vector.broadcast %1010 : vector<1x16xf32> to vector<2x16xf32>
    %1015 = arith.addf %1013, %1014 : vector<2x16xf32>
    %cst_435 = arith.constant 0.000000e+00 : f32
    %1016 = vector.broadcast %cst_435 : f32 to vector<2x16xf32>
    %1017 = arith.maximumf %1015, %1016 : vector<2x16xf32>
    %cst_436 = arith.constant dense<0.000000e+00> : vector<2x2xf32>
    %1018 = tpu.matmul %1017, %1011, %cst_436 {dimension_numbers = #tpu.dot_dimension_numbers<[1], [0], [0], [1], [0, 0, 1, 1], [], []>} : vector<2x16xf32>, vector<16x2xf32>, vector<2x2xf32> -> vector<2x2xf32>
    %1019 = vector.broadcast %1012 : vector<1x2xf32> to vector<2x2xf32>
    %1020 = arith.addf %1018, %1019 : vector<2x2xf32>
    %1021 = arith.addf %948, %1020 : vector<2x2xf32>
    %c0_437 = arith.constant 0 : index
    %c0_438 = arith.constant 0 : index
    %1022 = vector.load %arg10[%c0_437, %c0_438] : memref<32x96xf32, #tpu.memory_space<vmem>>, vector<32x96xf32>
    %c0_439 = arith.constant 0 : index
    %c0_440 = arith.constant 0 : index
    %1023 = vector.load %arg11[%c0_439, %c0_440] : memref<32x96xf32, #tpu.memory_space<vmem>>, vector<32x96xf32>
    %c0_441 = arith.constant 0 : index
    %c0_442 = arith.constant 0 : index
    %1024 = vector.load %arg12[%c0_441, %c0_442] : memref<1x96xf32, #tpu.memory_space<vmem>>, vector<1x96xf32>
    %c0_443 = arith.constant 0 : index
    %c0_444 = arith.constant 0 : index
    %1025 = vector.load %arg13[%c0_443, %c0_444] : memref<1x96xf32, #tpu.memory_space<vmem>>, vector<1x96xf32>
    %cst_445 = arith.constant dense<0.000000e+00> : vector<2x96xf32>
    %1026 = tpu.matmul %1008, %1022, %cst_445 {dimension_numbers = #tpu.dot_dimension_numbers<[1], [0], [0], [1], [0, 0, 1, 1], [], []>} : vector<2x32xf32>, vector<32x96xf32>, vector<2x96xf32> -> vector<2x96xf32>
    %1027 = vector.broadcast %1024 : vector<1x96xf32> to vector<2x96xf32>
    %1028 = arith.addf %1026, %1027 : vector<2x96xf32>
    %cst_446 = arith.constant dense<0.000000e+00> : vector<2x96xf32>
    %1029 = tpu.matmul %978, %1023, %cst_446 {dimension_numbers = #tpu.dot_dimension_numbers<[1], [0], [0], [1], [0, 0, 1, 1], [], []>} : vector<2x32xf32>, vector<32x96xf32>, vector<2x96xf32> -> vector<2x96xf32>
    %1030 = vector.broadcast %1025 : vector<1x96xf32> to vector<2x96xf32>
    %1031 = arith.addf %1029, %1030 : vector<2x96xf32>
    %1032 = vector.extract_strided_slice %1028 {offsets = [0, 0], sizes = [2, 64], strides = [1, 1]} : vector<2x96xf32> to vector<2x64xf32>
    %1033 = vector.extract_strided_slice %1031 {offsets = [0, 0], sizes = [2, 64], strides = [1, 1]} : vector<2x96xf32> to vector<2x64xf32>
    %1034 = arith.addf %1032, %1033 : vector<2x64xf32>
    %1035 = arith.negf %1034 : vector<2x64xf32>
    %1036 = math.exp %1035 : vector<2x64xf32>
    %cst_447 = arith.constant 1.000000e+00 : f32
    %1037 = vector.broadcast %cst_447 : f32 to vector<2x64xf32>
    %1038 = arith.addf %1037, %1036 : vector<2x64xf32>
    %1039 = arith.divf %1037, %1038 : vector<2x64xf32>
    %1040 = vector.extract_strided_slice %1039 {offsets = [0, 0], sizes = [2, 32], strides = [1, 1]} : vector<2x64xf32> to vector<2x32xf32>
    %1041 = vector.extract_strided_slice %1039 {offsets = [0, 32], sizes = [2, 32], strides = [1, 1]} : vector<2x64xf32> to vector<2x32xf32>
    %1042 = vector.extract_strided_slice %1028 {offsets = [0, 64], sizes = [2, 32], strides = [1, 1]} : vector<2x96xf32> to vector<2x32xf32>
    %1043 = vector.extract_strided_slice %1031 {offsets = [0, 64], sizes = [2, 32], strides = [1, 1]} : vector<2x96xf32> to vector<2x32xf32>
    %1044 = arith.mulf %1040, %1043 : vector<2x32xf32>
    %1045 = arith.addf %1042, %1044 : vector<2x32xf32>
    %1046 = math.tanh %1045 : vector<2x32xf32>
    %cst_448 = arith.constant 1.000000e+00 : f32
    %1047 = vector.broadcast %cst_448 : f32 to vector<2x32xf32>
    %1048 = arith.subf %1047, %1041 : vector<2x32xf32>
    %1049 = arith.mulf %1048, %1046 : vector<2x32xf32>
    %1050 = arith.mulf %1041, %978 : vector<2x32xf32>
    %1051 = arith.addf %1049, %1050 : vector<2x32xf32>
    %c0_449 = arith.constant 0 : index
    %c0_450 = arith.constant 0 : index
    %1052 = vector.load %arg14[%c0_449, %c0_450] : memref<32x96xf32, #tpu.memory_space<vmem>>, vector<32x96xf32>
    %c0_451 = arith.constant 0 : index
    %c0_452 = arith.constant 0 : index
    %1053 = vector.load %arg15[%c0_451, %c0_452] : memref<32x96xf32, #tpu.memory_space<vmem>>, vector<32x96xf32>
    %c0_453 = arith.constant 0 : index
    %c0_454 = arith.constant 0 : index
    %1054 = vector.load %arg16[%c0_453, %c0_454] : memref<1x96xf32, #tpu.memory_space<vmem>>, vector<1x96xf32>
    %c0_455 = arith.constant 0 : index
    %c0_456 = arith.constant 0 : index
    %1055 = vector.load %arg17[%c0_455, %c0_456] : memref<1x96xf32, #tpu.memory_space<vmem>>, vector<1x96xf32>
    %cst_457 = arith.constant dense<0.000000e+00> : vector<2x96xf32>
    %1056 = tpu.matmul %1051, %1052, %cst_457 {dimension_numbers = #tpu.dot_dimension_numbers<[1], [0], [0], [1], [0, 0, 1, 1], [], []>} : vector<2x32xf32>, vector<32x96xf32>, vector<2x96xf32> -> vector<2x96xf32>
    %1057 = vector.broadcast %1054 : vector<1x96xf32> to vector<2x96xf32>
    %1058 = arith.addf %1056, %1057 : vector<2x96xf32>
    %cst_458 = arith.constant dense<0.000000e+00> : vector<2x96xf32>
    %1059 = tpu.matmul %1008, %1053, %cst_458 {dimension_numbers = #tpu.dot_dimension_numbers<[1], [0], [0], [1], [0, 0, 1, 1], [], []>} : vector<2x32xf32>, vector<32x96xf32>, vector<2x96xf32> -> vector<2x96xf32>
    %1060 = vector.broadcast %1055 : vector<1x96xf32> to vector<2x96xf32>
    %1061 = arith.addf %1059, %1060 : vector<2x96xf32>
    %1062 = vector.extract_strided_slice %1058 {offsets = [0, 0], sizes = [2, 64], strides = [1, 1]} : vector<2x96xf32> to vector<2x64xf32>
    %1063 = vector.extract_strided_slice %1061 {offsets = [0, 0], sizes = [2, 64], strides = [1, 1]} : vector<2x96xf32> to vector<2x64xf32>
    %1064 = arith.addf %1062, %1063 : vector<2x64xf32>
    %1065 = arith.negf %1064 : vector<2x64xf32>
    %1066 = math.exp %1065 : vector<2x64xf32>
    %cst_459 = arith.constant 1.000000e+00 : f32
    %1067 = vector.broadcast %cst_459 : f32 to vector<2x64xf32>
    %1068 = arith.addf %1067, %1066 : vector<2x64xf32>
    %1069 = arith.divf %1067, %1068 : vector<2x64xf32>
    %1070 = vector.extract_strided_slice %1069 {offsets = [0, 0], sizes = [2, 32], strides = [1, 1]} : vector<2x64xf32> to vector<2x32xf32>
    %1071 = vector.extract_strided_slice %1069 {offsets = [0, 32], sizes = [2, 32], strides = [1, 1]} : vector<2x64xf32> to vector<2x32xf32>
    %1072 = vector.extract_strided_slice %1058 {offsets = [0, 64], sizes = [2, 32], strides = [1, 1]} : vector<2x96xf32> to vector<2x32xf32>
    %1073 = vector.extract_strided_slice %1061 {offsets = [0, 64], sizes = [2, 32], strides = [1, 1]} : vector<2x96xf32> to vector<2x32xf32>
    %1074 = arith.mulf %1070, %1073 : vector<2x32xf32>
    %1075 = arith.addf %1072, %1074 : vector<2x32xf32>
    %1076 = math.tanh %1075 : vector<2x32xf32>
    %cst_460 = arith.constant 1.000000e+00 : f32
    %1077 = vector.broadcast %cst_460 : f32 to vector<2x32xf32>
    %1078 = arith.subf %1077, %1071 : vector<2x32xf32>
    %1079 = arith.mulf %1078, %1076 : vector<2x32xf32>
    %1080 = arith.mulf %1071, %1008 : vector<2x32xf32>
    %1081 = arith.addf %1079, %1080 : vector<2x32xf32>
    %c0_461 = arith.constant 0 : index
    %c0_462 = arith.constant 0 : index
    %1082 = vector.load %arg18[%c0_461, %c0_462] : memref<32x16xf32, #tpu.memory_space<vmem>>, vector<32x16xf32>
    %c0_463 = arith.constant 0 : index
    %c0_464 = arith.constant 0 : index
    %1083 = vector.load %arg19[%c0_463, %c0_464] : memref<1x16xf32, #tpu.memory_space<vmem>>, vector<1x16xf32>
    %c0_465 = arith.constant 0 : index
    %c0_466 = arith.constant 0 : index
    %1084 = vector.load %arg20[%c0_465, %c0_466] : memref<16x2xf32, #tpu.memory_space<vmem>>, vector<16x2xf32>
    %c0_467 = arith.constant 0 : index
    %c0_468 = arith.constant 0 : index
    %1085 = vector.load %arg21[%c0_467, %c0_468] : memref<1x2xf32, #tpu.memory_space<vmem>>, vector<1x2xf32>
    %cst_469 = arith.constant dense<0.000000e+00> : vector<2x16xf32>
    %1086 = tpu.matmul %1081, %1082, %cst_469 {dimension_numbers = #tpu.dot_dimension_numbers<[1], [0], [0], [1], [0, 0, 1, 1], [], []>} : vector<2x32xf32>, vector<32x16xf32>, vector<2x16xf32> -> vector<2x16xf32>
    %1087 = vector.broadcast %1083 : vector<1x16xf32> to vector<2x16xf32>
    %1088 = arith.addf %1086, %1087 : vector<2x16xf32>
    %cst_470 = arith.constant 0.000000e+00 : f32
    %1089 = vector.broadcast %cst_470 : f32 to vector<2x16xf32>
    %1090 = arith.maximumf %1088, %1089 : vector<2x16xf32>
    %cst_471 = arith.constant dense<0.000000e+00> : vector<2x2xf32>
    %1091 = tpu.matmul %1090, %1084, %cst_471 {dimension_numbers = #tpu.dot_dimension_numbers<[1], [0], [0], [1], [0, 0, 1, 1], [], []>} : vector<2x16xf32>, vector<16x2xf32>, vector<2x2xf32> -> vector<2x2xf32>
    %1092 = vector.broadcast %1085 : vector<1x2xf32> to vector<2x2xf32>
    %1093 = arith.addf %1091, %1092 : vector<2x2xf32>
    %1094 = arith.addf %1021, %1093 : vector<2x2xf32>
    %c0_472 = arith.constant 0 : index
    %c0_473 = arith.constant 0 : index
    %1095 = vector.load %arg10[%c0_472, %c0_473] : memref<32x96xf32, #tpu.memory_space<vmem>>, vector<32x96xf32>
    %c0_474 = arith.constant 0 : index
    %c0_475 = arith.constant 0 : index
    %1096 = vector.load %arg11[%c0_474, %c0_475] : memref<32x96xf32, #tpu.memory_space<vmem>>, vector<32x96xf32>
    %c0_476 = arith.constant 0 : index
    %c0_477 = arith.constant 0 : index
    %1097 = vector.load %arg12[%c0_476, %c0_477] : memref<1x96xf32, #tpu.memory_space<vmem>>, vector<1x96xf32>
    %c0_478 = arith.constant 0 : index
    %c0_479 = arith.constant 0 : index
    %1098 = vector.load %arg13[%c0_478, %c0_479] : memref<1x96xf32, #tpu.memory_space<vmem>>, vector<1x96xf32>
    %cst_480 = arith.constant dense<0.000000e+00> : vector<2x96xf32>
    %1099 = tpu.matmul %1081, %1095, %cst_480 {dimension_numbers = #tpu.dot_dimension_numbers<[1], [0], [0], [1], [0, 0, 1, 1], [], []>} : vector<2x32xf32>, vector<32x96xf32>, vector<2x96xf32> -> vector<2x96xf32>
    %1100 = vector.broadcast %1097 : vector<1x96xf32> to vector<2x96xf32>
    %1101 = arith.addf %1099, %1100 : vector<2x96xf32>
    %cst_481 = arith.constant dense<0.000000e+00> : vector<2x96xf32>
    %1102 = tpu.matmul %1051, %1096, %cst_481 {dimension_numbers = #tpu.dot_dimension_numbers<[1], [0], [0], [1], [0, 0, 1, 1], [], []>} : vector<2x32xf32>, vector<32x96xf32>, vector<2x96xf32> -> vector<2x96xf32>
    %1103 = vector.broadcast %1098 : vector<1x96xf32> to vector<2x96xf32>
    %1104 = arith.addf %1102, %1103 : vector<2x96xf32>
    %1105 = vector.extract_strided_slice %1101 {offsets = [0, 0], sizes = [2, 64], strides = [1, 1]} : vector<2x96xf32> to vector<2x64xf32>
    %1106 = vector.extract_strided_slice %1104 {offsets = [0, 0], sizes = [2, 64], strides = [1, 1]} : vector<2x96xf32> to vector<2x64xf32>
    %1107 = arith.addf %1105, %1106 : vector<2x64xf32>
    %1108 = arith.negf %1107 : vector<2x64xf32>
    %1109 = math.exp %1108 : vector<2x64xf32>
    %cst_482 = arith.constant 1.000000e+00 : f32
    %1110 = vector.broadcast %cst_482 : f32 to vector<2x64xf32>
    %1111 = arith.addf %1110, %1109 : vector<2x64xf32>
    %1112 = arith.divf %1110, %1111 : vector<2x64xf32>
    %1113 = vector.extract_strided_slice %1112 {offsets = [0, 0], sizes = [2, 32], strides = [1, 1]} : vector<2x64xf32> to vector<2x32xf32>
    %1114 = vector.extract_strided_slice %1112 {offsets = [0, 32], sizes = [2, 32], strides = [1, 1]} : vector<2x64xf32> to vector<2x32xf32>
    %1115 = vector.extract_strided_slice %1101 {offsets = [0, 64], sizes = [2, 32], strides = [1, 1]} : vector<2x96xf32> to vector<2x32xf32>
    %1116 = vector.extract_strided_slice %1104 {offsets = [0, 64], sizes = [2, 32], strides = [1, 1]} : vector<2x96xf32> to vector<2x32xf32>
    %1117 = arith.mulf %1113, %1116 : vector<2x32xf32>
    %1118 = arith.addf %1115, %1117 : vector<2x32xf32>
    %1119 = math.tanh %1118 : vector<2x32xf32>
    %cst_483 = arith.constant 1.000000e+00 : f32
    %1120 = vector.broadcast %cst_483 : f32 to vector<2x32xf32>
    %1121 = arith.subf %1120, %1114 : vector<2x32xf32>
    %1122 = arith.mulf %1121, %1119 : vector<2x32xf32>
    %1123 = arith.mulf %1114, %1051 : vector<2x32xf32>
    %1124 = arith.addf %1122, %1123 : vector<2x32xf32>
    %c0_484 = arith.constant 0 : index
    %c0_485 = arith.constant 0 : index
    %1125 = vector.load %arg14[%c0_484, %c0_485] : memref<32x96xf32, #tpu.memory_space<vmem>>, vector<32x96xf32>
    %c0_486 = arith.constant 0 : index
    %c0_487 = arith.constant 0 : index
    %1126 = vector.load %arg15[%c0_486, %c0_487] : memref<32x96xf32, #tpu.memory_space<vmem>>, vector<32x96xf32>
    %c0_488 = arith.constant 0 : index
    %c0_489 = arith.constant 0 : index
    %1127 = vector.load %arg16[%c0_488, %c0_489] : memref<1x96xf32, #tpu.memory_space<vmem>>, vector<1x96xf32>
    %c0_490 = arith.constant 0 : index
    %c0_491 = arith.constant 0 : index
    %1128 = vector.load %arg17[%c0_490, %c0_491] : memref<1x96xf32, #tpu.memory_space<vmem>>, vector<1x96xf32>
    %cst_492 = arith.constant dense<0.000000e+00> : vector<2x96xf32>
    %1129 = tpu.matmul %1124, %1125, %cst_492 {dimension_numbers = #tpu.dot_dimension_numbers<[1], [0], [0], [1], [0, 0, 1, 1], [], []>} : vector<2x32xf32>, vector<32x96xf32>, vector<2x96xf32> -> vector<2x96xf32>
    %1130 = vector.broadcast %1127 : vector<1x96xf32> to vector<2x96xf32>
    %1131 = arith.addf %1129, %1130 : vector<2x96xf32>
    %cst_493 = arith.constant dense<0.000000e+00> : vector<2x96xf32>
    %1132 = tpu.matmul %1081, %1126, %cst_493 {dimension_numbers = #tpu.dot_dimension_numbers<[1], [0], [0], [1], [0, 0, 1, 1], [], []>} : vector<2x32xf32>, vector<32x96xf32>, vector<2x96xf32> -> vector<2x96xf32>
    %1133 = vector.broadcast %1128 : vector<1x96xf32> to vector<2x96xf32>
    %1134 = arith.addf %1132, %1133 : vector<2x96xf32>
    %1135 = vector.extract_strided_slice %1131 {offsets = [0, 0], sizes = [2, 64], strides = [1, 1]} : vector<2x96xf32> to vector<2x64xf32>
    %1136 = vector.extract_strided_slice %1134 {offsets = [0, 0], sizes = [2, 64], strides = [1, 1]} : vector<2x96xf32> to vector<2x64xf32>
    %1137 = arith.addf %1135, %1136 : vector<2x64xf32>
    %1138 = arith.negf %1137 : vector<2x64xf32>
    %1139 = math.exp %1138 : vector<2x64xf32>
    %cst_494 = arith.constant 1.000000e+00 : f32
    %1140 = vector.broadcast %cst_494 : f32 to vector<2x64xf32>
    %1141 = arith.addf %1140, %1139 : vector<2x64xf32>
    %1142 = arith.divf %1140, %1141 : vector<2x64xf32>
    %1143 = vector.extract_strided_slice %1142 {offsets = [0, 0], sizes = [2, 32], strides = [1, 1]} : vector<2x64xf32> to vector<2x32xf32>
    %1144 = vector.extract_strided_slice %1142 {offsets = [0, 32], sizes = [2, 32], strides = [1, 1]} : vector<2x64xf32> to vector<2x32xf32>
    %1145 = vector.extract_strided_slice %1131 {offsets = [0, 64], sizes = [2, 32], strides = [1, 1]} : vector<2x96xf32> to vector<2x32xf32>
    %1146 = vector.extract_strided_slice %1134 {offsets = [0, 64], sizes = [2, 32], strides = [1, 1]} : vector<2x96xf32> to vector<2x32xf32>
    %1147 = arith.mulf %1143, %1146 : vector<2x32xf32>
    %1148 = arith.addf %1145, %1147 : vector<2x32xf32>
    %1149 = math.tanh %1148 : vector<2x32xf32>
    %cst_495 = arith.constant 1.000000e+00 : f32
    %1150 = vector.broadcast %cst_495 : f32 to vector<2x32xf32>
    %1151 = arith.subf %1150, %1144 : vector<2x32xf32>
    %1152 = arith.mulf %1151, %1149 : vector<2x32xf32>
    %1153 = arith.mulf %1144, %1081 : vector<2x32xf32>
    %1154 = arith.addf %1152, %1153 : vector<2x32xf32>
    %c0_496 = arith.constant 0 : index
    %c0_497 = arith.constant 0 : index
    %1155 = vector.load %arg18[%c0_496, %c0_497] : memref<32x16xf32, #tpu.memory_space<vmem>>, vector<32x16xf32>
    %c0_498 = arith.constant 0 : index
    %c0_499 = arith.constant 0 : index
    %1156 = vector.load %arg19[%c0_498, %c0_499] : memref<1x16xf32, #tpu.memory_space<vmem>>, vector<1x16xf32>
    %c0_500 = arith.constant 0 : index
    %c0_501 = arith.constant 0 : index
    %1157 = vector.load %arg20[%c0_500, %c0_501] : memref<16x2xf32, #tpu.memory_space<vmem>>, vector<16x2xf32>
    %c0_502 = arith.constant 0 : index
    %c0_503 = arith.constant 0 : index
    %1158 = vector.load %arg21[%c0_502, %c0_503] : memref<1x2xf32, #tpu.memory_space<vmem>>, vector<1x2xf32>
    %cst_504 = arith.constant dense<0.000000e+00> : vector<2x16xf32>
    %1159 = tpu.matmul %1154, %1155, %cst_504 {dimension_numbers = #tpu.dot_dimension_numbers<[1], [0], [0], [1], [0, 0, 1, 1], [], []>} : vector<2x32xf32>, vector<32x16xf32>, vector<2x16xf32> -> vector<2x16xf32>
    %1160 = vector.broadcast %1156 : vector<1x16xf32> to vector<2x16xf32>
    %1161 = arith.addf %1159, %1160 : vector<2x16xf32>
    %cst_505 = arith.constant 0.000000e+00 : f32
    %1162 = vector.broadcast %cst_505 : f32 to vector<2x16xf32>
    %1163 = arith.maximumf %1161, %1162 : vector<2x16xf32>
    %cst_506 = arith.constant dense<0.000000e+00> : vector<2x2xf32>
    %1164 = tpu.matmul %1163, %1157, %cst_506 {dimension_numbers = #tpu.dot_dimension_numbers<[1], [0], [0], [1], [0, 0, 1, 1], [], []>} : vector<2x16xf32>, vector<16x2xf32>, vector<2x2xf32> -> vector<2x2xf32>
    %1165 = vector.broadcast %1158 : vector<1x2xf32> to vector<2x2xf32>
    %1166 = arith.addf %1164, %1165 : vector<2x2xf32>
    %1167 = arith.addf %1094, %1166 : vector<2x2xf32>
    %1168 = tpu.concatenate %656, %729, %802, %875, %948, %1021, %1094, %1167 in 1 : vector<2x2xf32>, vector<2x2xf32>, vector<2x2xf32>, vector<2x2xf32>, vector<2x2xf32>, vector<2x2xf32>, vector<2x2xf32>, vector<2x2xf32> -> vector<2x16xf32>
    %c0_507 = arith.constant 0 : index
    %c0_508 = arith.constant 0 : index
    %1169 = vector.load %arg22[%c0_507, %c0_508] : memref<2x16xf32, #tpu.memory_space<vmem>>, vector<2x16xf32>
    tpu.vector_store %arg22[%c0_507, %c0_508], %1168 {strides = array<i32>} : memref<2x16xf32, #tpu.memory_space<vmem>>, vector<2x16xf32>,
    return
  }
}

</mosaic_0001>

<llo_original>
// kernel: _lambda_.1
$region0: #{_lambda_.1}
  #allocation0 [shape = 'u32[]', space=smem, size = 0x4, offset = 0x4, fixed_abs, tag = 'smem constant byte address 0x4 - core index']
  #allocation1 [shape = 'u32[144,128]{1,0:T(1,128)}', space=vmem, size = 0x12000, scoped, tag = 'internal scratch']
  %s0 = inlined_call_operand.vmem [shape: f32[8,2,1], index: 0, kind: input, shape index: {}]
  %s1 = inlined_call_operand.vmem [shape: f32[8,2,1], index: 1, kind: input, shape index: {}]
  %s2 = inlined_call_operand.hbm [shape: f32[2,96], index: 2, kind: input, shape index: {}]
  %s3 = inlined_call_operand.hbm [shape: f32[32,96], index: 3, kind: input, shape index: {}]
  %s4 = inlined_call_operand.hbm [shape: f32[1,96], index: 4, kind: input, shape index: {}]
  %s5 = inlined_call_operand.hbm [shape: f32[1,96], index: 5, kind: input, shape index: {}]
  %s6 = inlined_call_operand.hbm [shape: f32[32,96], index: 6, kind: input, shape index: {}]
  %s7 = inlined_call_operand.hbm [shape: f32[32,96], index: 7, kind: input, shape index: {}]
  %s8 = inlined_call_operand.hbm [shape: f32[1,96], index: 8, kind: input, shape index: {}]
  %s9 = inlined_call_operand.hbm [shape: f32[1,96], index: 9, kind: input, shape index: {}]
  %s10 = inlined_call_operand.hbm [shape: f32[32,96], index: 10, kind: input, shape index: {}]
  %s11 = inlined_call_operand.hbm [shape: f32[32,96], index: 11, kind: input, shape index: {}]
  %s12 = inlined_call_operand.hbm [shape: f32[1,96], index: 12, kind: input, shape index: {}]
  %s13 = inlined_call_operand.hbm [shape: f32[1,96], index: 13, kind: input, shape index: {}]
  %s14 = inlined_call_operand.vmem [shape: f32[32,96], index: 14, kind: input, shape index: {}]
  %s15 = inlined_call_operand.vmem [shape: f32[32,96], index: 15, kind: input, shape index: {}]
  %s16 = inlined_call_operand.vmem [shape: f32[1,96], index: 16, kind: input, shape index: {}]
  %s17 = inlined_call_operand.vmem [shape: f32[1,96], index: 17, kind: input, shape index: {}]
  %s18 = inlined_call_operand.vmem [shape: f32[32,16], index: 18, kind: input, shape index: {}]
  %s19 = inlined_call_operand.vmem [shape: f32[1,16], index: 19, kind: input, shape index: {}]
  %s20 = inlined_call_operand.vmem [shape: f32[16,2], index: 20, kind: input, shape index: {}]
  %s21 = inlined_call_operand.vmem [shape: f32[1,2], index: 21, kind: input, shape index: {}]
  %s22 = inlined_call_operand.vmem [shape: f32[2,16], index: 22, kind: output, shape index: {}]
  %s23 = sld [smem:[#allocation0]]
  $region146: #{_lambda_.1} parent=0
    _
  %s25 = ssub.s32 1, %s23
  %s26 = scalar_select 0, %s25, %s23
  $region1: #{_lambda_.1} parent=0
    #allocation2 [shape = 'u8[1024]{0}', space=vmem, size = 0x400, scoped, tag = 'input window, operand 2, single buffered']
    #allocation3 [shape = 's32[1]{0}', space=sflag, size = 0x4, scoped, tag = 'scoped memory for _lambda_.1']
    #allocation4 [shape = 'u8[16384]{0}', space=vmem, size = 0x4000, scoped, tag = 'input window, operand 3, single buffered']
    #allocation5 [shape = 's32[1]{0}', space=sflag, size = 0x4, scoped, tag = 'scoped memory for _lambda_.1']
    #allocation6 [shape = 'u8[512]{0}', space=vmem, size = 0x400, scoped, tag = 'input window, operand 4, single buffered']
    #allocation7 [shape = 'u8[512]{0}', space=vmem, size = 0x400, scoped, tag = 'input window, operand 5, single buffered']
    #allocation8 [shape = 's32[1]{0}', space=sflag, size = 0x4, scoped, tag = 'scoped memory for _lambda_.1']
    #allocation9 [shape = 'u8[16384]{0}', space=vmem, size = 0x4000, scoped, tag = 'input window, operand 6, single buffered']
    #allocation10 [shape = 'u8[16384]{0}', space=vmem, size = 0x4000, scoped, tag = 'input window, operand 7, single buffered']
    #allocation11 [shape = 's32[1]{0}', space=sflag, size = 0x4, scoped, tag = 'scoped memory for _lambda_.1']
    #allocation12 [shape = 'u8[512]{0}', space=vmem, size = 0x400, scoped, tag = 'input window, operand 8, single buffered']
    #allocation13 [shape = 'u8[512]{0}', space=vmem, size = 0x400, scoped, tag = 'input window, operand 9, single buffered']
    #allocation14 [shape = 's32[1]{0}', space=sflag, size = 0x4, scoped, tag = 'scoped memory for _lambda_.1']
    #allocation15 [shape = 'u8[16384]{0}', space=vmem, size = 0x4000, scoped, tag = 'input window, operand 10, single buffered']
    #allocation16 [shape = 'u8[16384]{0}', space=vmem, size = 0x4000, scoped, tag = 'input window, operand 11, single buffered']
    #allocation17 [shape = 's32[1]{0}', space=sflag, size = 0x4, scoped, tag = 'scoped memory for _lambda_.1']
    #allocation18 [shape = 'u8[512]{0}', space=vmem, size = 0x400, scoped, tag = 'input window, operand 12, single buffered']
    #allocation19 [shape = 'u8[512]{0}', space=vmem, size = 0x400, scoped, tag = 'input window, operand 13, single buffered']
    #allocation20 [shape = 's32[1]{0}', space=sflag, size = 0x4, scoped, tag = 'scoped memory for _lambda_.1']
    %27 = vsyncpa [#allocation3], 0
    %28 = vsyncpa [#allocation5], 0
    %29 = vsyncpa [#allocation8], 0
    %30 = vsyncpa [#allocation11], 0
    %31 = vsyncpa [#allocation14], 0
    %32 = vsyncpa [#allocation17], 0
    %33 = vsyncpa [#allocation20], 0
    // Predicated region
    $region2: #{_lambda_.1} parent=1 // pred_check
      _
    $region3: #{_lambda_.1} parent=1 // pred_check_branch
      %35 = sbr.rel (0) target = $region5
    $region4: #{_lambda_.1} parent=1 // pred_region
      _
    $region5: #{_lambda_.1} parent=1 // pred_fallthru
      _
    // Predicated region
    $region6: #{_lambda_.1} parent=1 // pred_check
      _
    $region7: #{_lambda_.1} parent=1 // pred_check_branch
      %37 = sbr.rel (0) target = $region9
    $region8: #{_lambda_.1} parent=1 // pred_region
      _
    $region9: #{_lambda_.1} parent=1 // pred_fallthru
      _
    // Predicated region
    $region10: #{_lambda_.1} parent=1 // pred_check
      _
    $region11: #{_lambda_.1} parent=1 // pred_check_branch
      %39 = sbr.rel (0) target = $region13
    $region12: #{_lambda_.1} parent=1 // pred_region
      %s41 = ssub.s32 32, 32
      %42 = vsyncadd [#allocation3], %s41
      %s44 = sshll.u32 [#allocation2], 4
      %s45 = int_to_ptr.vmem [resolvable:$true] %s44
      %47 = dma.hbm_to_vmem [thread:$0]  %s2, 32, %s45, [#allocation3]
    $region13: #{_lambda_.1} parent=1 // pred_fallthru
      _
    // Predicated region
    $region14: #{_lambda_.1} parent=1 // pred_check
      _
    $region15: #{_lambda_.1} parent=1 // pred_check_branch
      %49 = sbr.rel (0) target = $region17
    $region16: #{_lambda_.1} parent=1 // pred_region
      %s51 = ssub.s32 512, 512
      %52 = vsyncadd [#allocation5], %s51
      %s53 = sshll.u32 [#allocation4], 4
      %s54 = int_to_ptr.vmem [resolvable:$true] %s53
      %59 = dma.hbm_to_vmem [thread:$0]  %s3, 512, %s54, [#allocation5], 128, 128, 8
    $region17: #{_lambda_.1} parent=1 // pred_fallthru
      _
    // Predicated region
    $region18: #{_lambda_.1} parent=1 // pred_check
      _
    $region19: #{_lambda_.1} parent=1 // pred_check_branch
      %61 = sbr.rel (0) target = $region21
    $region20: #{_lambda_.1} parent=1 // pred_region
      %s63 = ssub.s32 16, 16
      %64 = vsyncadd [#allocation5], %s63
      %s66 = sshll.u32 [#allocation6], 4
      %s67 = int_to_ptr.vmem [resolvable:$true] %s66
      %69 = dma.hbm_to_vmem [thread:$0]  %s4, 16, %s67, [#allocation5]
    $region21: #{_lambda_.1} parent=1 // pred_fallthru
      _
    // Predicated region
    $region22: #{_lambda_.1} parent=1 // pred_check
      _
    $region23: #{_lambda_.1} parent=1 // pred_check_branch
      %71 = sbr.rel (0) target = $region25
    $region24: #{_lambda_.1} parent=1 // pred_region
      %s73 = ssub.s32 16, 16
      %74 = vsyncadd [#allocation8], %s73
      %s76 = sshll.u32 [#allocation7], 4
      %s77 = int_to_ptr.vmem [resolvable:$true] %s76
      %79 = dma.hbm_to_vmem [thread:$0]  %s5, 16, %s77, [#allocation8]
    $region25: #{_lambda_.1} parent=1 // pred_fallthru
      _
    // Predicated region
    $region26: #{_lambda_.1} parent=1 // pred_check
      _
    $region27: #{_lambda_.1} parent=1 // pred_check_branch
      %81 = sbr.rel (0) target = $region29
    $region28: #{_lambda_.1} parent=1 // pred_region
      %s83 = ssub.s32 512, 512
      %84 = vsyncadd [#allocation8], %s83
      %s85 = sshll.u32 [#allocation9], 4
      %s86 = int_to_ptr.vmem [resolvable:$true] %s85
      %91 = dma.hbm_to_vmem [thread:$0]  %s6, 512, %s86, [#allocation8], 128, 128, 8
    $region29: #{_lambda_.1} parent=1 // pred_fallthru
      _
    // Predicated region
    $region30: #{_lambda_.1} parent=1 // pred_check
      _
    $region31: #{_lambda_.1} parent=1 // pred_check_branch
      %93 = sbr.rel (0) target = $region33
    $region32: #{_lambda_.1} parent=1 // pred_region
      %s95 = ssub.s32 512, 512
      %96 = vsyncadd [#allocation11], %s95
      %s97 = sshll.u32 [#allocation10], 4
      %s98 = int_to_ptr.vmem [resolvable:$true] %s97
      %103 = dma.hbm_to_vmem [thread:$0]  %s7, 512, %s98, [#allocation11], 128, 128, 8
    $region33: #{_lambda_.1} parent=1 // pred_fallthru
      _
    // Predicated region
    $region34: #{_lambda_.1} parent=1 // pred_check
      _
    $region35: #{_lambda_.1} parent=1 // pred_check_branch
      %105 = sbr.rel (0) target = $region37
    $region36: #{_lambda_.1} parent=1 // pred_region
      %s107 = ssub.s32 16, 16
      %108 = vsyncadd [#allocation11], %s107
      %s110 = sshll.u32 [#allocation12], 4
      %s111 = int_to_ptr.vmem [resolvable:$true] %s110
      %113 = dma.hbm_to_vmem [thread:$0]  %s8, 16, %s111, [#allocation11]
    $region37: #{_lambda_.1} parent=1 // pred_fallthru
      _
    // Predicated region
    $region38: #{_lambda_.1} parent=1 // pred_check
      _
    $region39: #{_lambda_.1} parent=1 // pred_check_branch
      %115 = sbr.rel (0) target = $region41
    $region40: #{_lambda_.1} parent=1 // pred_region
      %s117 = ssub.s32 16, 16
      %118 = vsyncadd [#allocation14], %s117
      %s120 = sshll.u32 [#allocation13], 4
      %s121 = int_to_ptr.vmem [resolvable:$true] %s120
      %123 = dma.hbm_to_vmem [thread:$0]  %s9, 16, %s121, [#allocation14]
    $region41: #{_lambda_.1} parent=1 // pred_fallthru
      _
    // Predicated region
    $region42: #{_lambda_.1} parent=1 // pred_check
      _
    $region43: #{_lambda_.1} parent=1 // pred_check_branch
      %125 = sbr.rel (0) target = $region45
    $region44: #{_lambda_.1} parent=1 // pred_region
      %s127 = ssub.s32 512, 512
      %128 = vsyncadd [#allocation14], %s127
      %s129 = sshll.u32 [#allocation15], 4
      %s130 = int_to_ptr.vmem [resolvable:$true] %s129
      %135 = dma.hbm_to_vmem [thread:$0]  %s10, 512, %s130, [#allocation14], 128, 128, 8
    $region45: #{_lambda_.1} parent=1 // pred_fallthru
      _
    // Predicated region
    $region46: #{_lambda_.1} parent=1 // pred_check
      _
    $region47: #{_lambda_.1} parent=1 // pred_check_branch
      %137 = sbr.rel (0) target = $region49
    $region48: #{_lambda_.1} parent=1 // pred_region
      %s139 = ssub.s32 512, 512
      %140 = vsyncadd [#allocation17], %s139
      %s141 = sshll.u32 [#allocation16], 4
      %s142 = int_to_ptr.vmem [resolvable:$true] %s141
      %147 = dma.hbm_to_vmem [thread:$0]  %s11, 512, %s142, [#allocation17], 128, 128, 8
    $region49: #{_lambda_.1} parent=1 // pred_fallthru
      _
    // Predicated region
    $region50: #{_lambda_.1} parent=1 // pred_check
      _
    $region51: #{_lambda_.1} parent=1 // pred_check_branch
      %149 = sbr.rel (0) target = $region53
    $region52: #{_lambda_.1} parent=1 // pred_region
      %s151 = ssub.s32 16, 16
      %152 = vsyncadd [#allocation17], %s151
      %s154 = sshll.u32 [#allocation18], 4
      %s155 = int_to_ptr.vmem [resolvable:$true] %s154
      %157 = dma.hbm_to_vmem [thread:$0]  %s12, 16, %s155, [#allocation17]
    $region53: #{_lambda_.1} parent=1 // pred_fallthru
      _
    // Predicated region
    $region54: #{_lambda_.1} parent=1 // pred_check
      _
    $region55: #{_lambda_.1} parent=1 // pred_check_branch
      %159 = sbr.rel (0) target = $region57
    $region56: #{_lambda_.1} parent=1 // pred_region
      %s161 = ssub.s32 16, 16
      %162 = vsyncadd [#allocation20], %s161
      %s164 = sshll.u32 [#allocation19], 4
      %s165 = int_to_ptr.vmem [resolvable:$true] %s164
      %167 = dma.hbm_to_vmem [thread:$0]  %s13, 16, %s165, [#allocation20]
    $region57: #{_lambda_.1} parent=1 // pred_fallthru
      _
    // Predicated region
    $region58: #{_lambda_.1} parent=1 // pred_check
      _
    $region59: #{_lambda_.1} parent=1 // pred_check_branch
      %169 = sbr.rel (0) target = $region61
    $region60: #{_lambda_.1} parent=1 // pred_region
      _
    $region61: #{_lambda_.1} parent=1 // pred_fallthru
      _
    // Predicated region
    $region62: #{_lambda_.1} parent=1 // pred_check
      _
    $region63: #{_lambda_.1} parent=1 // pred_check_branch
      %171 = sbr.rel (0) target = $region65
    $region64: #{_lambda_.1} parent=1 // pred_region
      _
    $region65: #{_lambda_.1} parent=1 // pred_fallthru
      _
    // Predicated region
    $region66: #{_lambda_.1} parent=1 // pred_check
      _
    $region67: #{_lambda_.1} parent=1 // pred_check_branch
      %173 = sbr.rel (0) target = $region69
    $region68: #{_lambda_.1} parent=1 // pred_region
      _
    $region69: #{_lambda_.1} parent=1 // pred_fallthru
      _
    // Predicated region
    $region70: #{_lambda_.1} parent=1 // pred_check
      _
    $region71: #{_lambda_.1} parent=1 // pred_check_branch
      %175 = sbr.rel (0) target = $region73
    $region72: #{_lambda_.1} parent=1 // pred_region
      _
    $region73: #{_lambda_.1} parent=1 // pred_fallthru
      _
    // Predicated region
    $region74: #{_lambda_.1} parent=1 // pred_check
      _
    $region75: #{_lambda_.1} parent=1 // pred_check_branch
      %177 = sbr.rel (0) target = $region77
    $region76: #{_lambda_.1} parent=1 // pred_region
      _
    $region77: #{_lambda_.1} parent=1 // pred_fallthru
      _
    // Predicated region
    $region78: #{_lambda_.1} parent=1 // pred_check
      _
    $region79: #{_lambda_.1} parent=1 // pred_check_branch
      %179 = sbr.rel (0) target = $region81
    $region80: #{_lambda_.1} parent=1 // pred_region
      _
    $region81: #{_lambda_.1} parent=1 // pred_fallthru
      _
    // Predicated region
    $region82: #{_lambda_.1} parent=1 // pred_check
      _
    $region83: #{_lambda_.1} parent=1 // pred_check_branch
      %181 = sbr.rel (0) target = $region85
    $region84: #{_lambda_.1} parent=1 // pred_region
      _
    $region85: #{_lambda_.1} parent=1 // pred_fallthru
      _
    // Predicated region
    $region86: #{_lambda_.1} parent=1 // pred_check
      _
    $region87: #{_lambda_.1} parent=1 // pred_check_branch
      %183 = sbr.rel (0) target = $region89
    $region88: #{_lambda_.1} parent=1 // pred_region
      _
    $region89: #{_lambda_.1} parent=1 // pred_fallthru
      _
    // Predicated region
    $region90: #{_lambda_.1} parent=1 // pred_check
      _
    $region91: #{_lambda_.1} parent=1 // pred_check_branch
      %185 = sbr.rel (0) target = $region93
    $region92: #{_lambda_.1} parent=1 // pred_region
      %186 = dma.done [#allocation3], 32
    $region93: #{_lambda_.1} parent=1 // pred_fallthru
      _
    // Predicated region
    $region94: #{_lambda_.1} parent=1 // pred_check
      _
    $region95: #{_lambda_.1} parent=1 // pred_check_branch
      %188 = sbr.rel (0) target = $region97
    $region96: #{_lambda_.1} parent=1 // pred_region
      %189 = dma.done [#allocation5], 512
    $region97: #{_lambda_.1} parent=1 // pred_fallthru
      _
    // Predicated region
    $region98: #{_lambda_.1} parent=1 // pred_check
      _
    $region99: #{_lambda_.1} parent=1 // pred_check_branch
      %191 = sbr.rel (0) target = $region101
    $region100: #{_lambda_.1} parent=1 // pred_region
      %192 = dma.done [#allocation5], 16
    $region101: #{_lambda_.1} parent=1 // pred_fallthru
      _
    // Predicated region
    $region102: #{_lambda_.1} parent=1 // pred_check
      _
    $region103: #{_lambda_.1} parent=1 // pred_check_branch
      %194 = sbr.rel (0) target = $region105
    $region104: #{_lambda_.1} parent=1 // pred_region
      %195 = dma.done [#allocation8], 16
    $region105: #{_lambda_.1} parent=1 // pred_fallthru
      _
    // Predicated region
    $region106: #{_lambda_.1} parent=1 // pred_check
      _
    $region107: #{_lambda_.1} parent=1 // pred_check_branch
      %197 = sbr.rel (0) target = $region109
    $region108: #{_lambda_.1} parent=1 // pred_region
      %198 = dma.done [#allocation8], 512
    $region109: #{_lambda_.1} parent=1 // pred_fallthru
      _
    // Predicated region
    $region110: #{_lambda_.1} parent=1 // pred_check
      _
    $region111: #{_lambda_.1} parent=1 // pred_check_branch
      %200 = sbr.rel (0) target = $region113
    $region112: #{_lambda_.1} parent=1 // pred_region
      %201 = dma.done [#allocation11], 512
    $region113: #{_lambda_.1} parent=1 // pred_fallthru
      _
    // Predicated region
    $region114: #{_lambda_.1} parent=1 // pred_check
      _
    $region115: #{_lambda_.1} parent=1 // pred_check_branch
      %203 = sbr.rel (0) target = $region117
    $region116: #{_lambda_.1} parent=1 // pred_region
      %204 = dma.done [#allocation11], 16
    $region117: #{_lambda_.1} parent=1 // pred_fallthru
      _
    // Predicated region
    $region118: #{_lambda_.1} parent=1 // pred_check
      _
    $region119: #{_lambda_.1} parent=1 // pred_check_branch
      %206 = sbr.rel (0) target = $region121
    $region120: #{_lambda_.1} parent=1 // pred_region
      %207 = dma.done [#allocation14], 16
    $region121: #{_lambda_.1} parent=1 // pred_fallthru
      _
    // Predicated region
    $region122: #{_lambda_.1} parent=1 // pred_check
      _
    $region123: #{_lambda_.1} parent=1 // pred_check_branch
      %209 = sbr.rel (0) target = $region125
    $region124: #{_lambda_.1} parent=1 // pred_region
      %210 = dma.done [#allocation14], 512
    $region125: #{_lambda_.1} parent=1 // pred_fallthru
      _
    // Predicated region
    $region126: #{_lambda_.1} parent=1 // pred_check
      _
    $region127: #{_lambda_.1} parent=1 // pred_check_branch
      %212 = sbr.rel (0) target = $region129
    $region128: #{_lambda_.1} parent=1 // pred_region
      %213 = dma.done [#allocation17], 512
    $region129: #{_lambda_.1} parent=1 // pred_fallthru
      _
    // Predicated region
    $region130: #{_lambda_.1} parent=1 // pred_check
      _
    $region131: #{_lambda_.1} parent=1 // pred_check_branch
      %215 = sbr.rel (0) target = $region133
    $region132: #{_lambda_.1} parent=1 // pred_region
      %216 = dma.done [#allocation17], 16
    $region133: #{_lambda_.1} parent=1 // pred_fallthru
      _
    // Predicated region
    $region134: #{_lambda_.1} parent=1 // pred_check
      _
    $region135: #{_lambda_.1} parent=1 // pred_check_branch
      %218 = sbr.rel (0) target = $region137
    $region136: #{_lambda_.1} parent=1 // pred_region
      %219 = dma.done [#allocation20], 16
    $region137: #{_lambda_.1} parent=1 // pred_fallthru
      _
    %v220 = vld [vmem:[%s0] sm:$0x3]
    %v221 = vld [vmem:[%s1] sm:$0x3]
    %v222 = vld [vmem:[#allocation2] sm:$0x3]
    %v223 = vld [vmem:[#allocation4] sm:$0xff]
    %v224 = vld [vmem:[#allocation4 + $0x8] sm:$0xff]
    %v225 = vld [vmem:[#allocation4 + $0x10] sm:$0xff]
    %v226 = vld [vmem:[#allocation4 + $0x18] sm:$0xff]
    %v227 = vld [vmem:[#allocation6] sm:$0x1]
    %v228 = vld [vmem:[#allocation7] sm:$0x1]
    %230 = vset.pattern.permute.xlu0 0
    %231 = vperm.xlu0 %230, %v220
    %v232 = vpop.permute.xlu0 %231
    %v234 = vlaneseq
    %v235 = vshrl.u32 %v234, 7
    %v236 = vsub.s32 0, %v235
    %v237 = vrot.slane %v222, %v236
    %v238 = vmul.f32 %v232, %v237
    %240 = vset.pattern.permute.xlu0 0
    %241 = vperm.xlu0 %240, %v221
    %v242 = vpop.permute.xlu0 %241
    %v244 = vlaneseq
    %v245 = vshrl.u32 %v244, 7
    %v246 = vsub.s32 1, %v245
    %v247 = vrot.slane %v222, %v246
    %v248 = vmul.f32 %v242, %v247
    %v249 = vadd.f32 %v238, %v248
    %v251 = vlaneseq
    %v252 = vshrl.u32 %v251, 7
    %v253 = vsub.s32 0, %v252
    %v254 = vrot.slane %v227, %v253
    %v256 = vadd.f32 %v249, %v254
    %v258 = vlaneseq
    %v259 = vshrl.u32 %v258, 7
    %v260 = vsub.s32 0, %v259
    %v261 = vrot.slane %v228, %v260
    %vm263 = vcmask 261120
    %v265 = vsel %vm263, 0.0, 0
    %267 = vmatprep.subr.mxu0 0.0
    %268 = vmatpush1.msra.mxu0 0.0
    %269 = vmatprep.subr.mxu0 0.0
    %270 = vmatpush1.msra.mxu0 0.0
    %271 = vmatprep.subr.mxu0 0.0
    %272 = vmatpush1.msra.mxu0 0.0
    %273 = vmatprep.subr.mxu0 0.0
    %274 = vmatpush1.msra.mxu0 0.0
    %275 = vmatprep.subr.mxu0 0.0
    %276 = vmatpush1.msra.mxu0 0.0
    %277 = vmatprep.subr.mxu0 0.0
    %278 = vmatpush1.msra.mxu0 0.0
    %279 = vmatprep.subr.mxu0 0.0
    %280 = vmatpush1.msra.mxu0 0.0
    %281 = vmatprep.subr.mxu0 0.0
    %282 = vmatpush1.msra.mxu0 0.0
    %283 = vmatprep.subr.mxu0 0.0
    %284 = vmatpush1.msra.mxu0 0.0
    %285 = vmatprep.subr.mxu0 0.0
    %286 = vmatpush1.msra.mxu0 0.0
    %287 = vmatprep.subr.mxu0 0.0
    %288 = vmatpush1.msra.mxu0 0.0
    %289 = vmatprep.subr.mxu0 0.0
    %290 = vmatpush1.msra.mxu0 0.0
    %291 = vmatprep.subr.mxu0 0.0
    %292 = vmatpush1.msra.mxu0 %v226
    %293 = vmatprep.subr.mxu0 0.0
    %294 = vmatpush1.msra.mxu0 %v225
    %295 = vmatprep.subr.mxu0 0.0
    %296 = vmatpush1.msra.mxu0 %v224
    %297 = vmatprep.subr.mxu0 0.0
    %298 = vmatpush1.msra.mxu0 %v223
    %299 = vmatprep.subr.mxu0 0.0
    %300 = vmatpush2.msra.mxu0 0.0
    %301 = vmatprep.subr.mxu0 0.0
    %302 = vmatpush2.msra.mxu0 0.0
    %303 = vmatprep.subr.mxu0 0.0
    %304 = vmatpush2.msra.mxu0 0.0
    %305 = vmatprep.subr.mxu0 0.0
    %306 = vmatpush2.msra.mxu0 0.0
    %307 = vmatprep.subr.mxu0 0.0
    %308 = vmatpush2.msra.mxu0 0.0
    %309 = vmatprep.subr.mxu0 0.0
    %310 = vmatpush2.msra.mxu0 0.0
    %311 = vmatprep.subr.mxu0 0.0
    %312 = vmatpush2.msra.mxu0 0.0
    %313 = vmatprep.subr.mxu0 0.0
    %314 = vmatpush2.msra.mxu0 0.0
    %315 = vmatprep.subr.mxu0 0.0
    %316 = vmatpush2.msra.mxu0 0.0
    %317 = vmatprep.subr.mxu0 0.0
    %318 = vmatpush2.msra.mxu0 0.0
    %319 = vmatprep.subr.mxu0 0.0
    %320 = vmatpush2.msra.mxu0 0.0
    %321 = vmatprep.subr.mxu0 0.0
    %322 = vmatpush2.msra.mxu0 0.0
    %323 = vmatprep.subr.mxu0 0.0
    %324 = vmatpush2.msra.mxu0 0.0
    %325 = vmatprep.subr.mxu0 0.0
    %326 = vmatpush2.msra.mxu0 0.0
    %327 = vmatprep.subr.mxu0 0.0
    %328 = vmatpush2.msra.mxu0 0.0
    %329 = vmatprep.subr.mxu0 0.0
    %330 = vmatpush2.msra.mxu0 0.0
    %331 = vmatprep.mubr.f32.mxu0 0.0
    %332 = vmatmul.mubr.f32.gmra.mxu0 %v265
    %v333 = vpop.f32.mrf.mxu0
    %v334 = vadd.f32 %v261, %v333
    %v335 = vpop.f32.mrf.mxu0
    %336 = vdwg.mxu0
    %v337 = vadd.f32 %v256, %v334
    %v338 = vxor.u32 %v337, 2147483648
    %v339 = vmul.f32 %v338, 1.442695
    %v340 = vpow.pop %v339
    %v341 = vadd.f32 %v340, 1.0
    %v342 = vrcp.pop %v341
    %v343 = vmul.f32 1.0, %v342
    %345 = vrot.lane.b32.xlu0 %v334, 64
    %v346 = vpop.permute.xlu0 %345
    %v348 = vmul.f32 %v343, %v346
    %350 = vrot.lane.b32.xlu0 %v348, 64
    %v351 = vpop.permute.xlu0 %350
    %v353 = vadd.f32 %v256, %v351
    %v354 = vtanh.pop %v353
    %v355 = vsub.f32 1.0, %v343
    %357 = vrot.lane.b32.xlu0 %v354, 96
    %v358 = vpop.permute.xlu0 %357
    %v360 = vmul.f32 %v355, %v358
    %v361 = vmul.f32 %v343, 0.0
    %v362 = vadd.f32 %v360, %v361
    %v363 = vld [vmem:[#allocation9] sm:$0xff]
    %v364 = vld [vmem:[#allocation9 + $0x8] sm:$0xff]
    %v365 = vld [vmem:[#allocation9 + $0x10] sm:$0xff]
    %v366 = vld [vmem:[#allocation9 + $0x18] sm:$0xff]
    %v367 = vld [vmem:[#allocation10] sm:$0xff]
    %v368 = vld [vmem:[#allocation10 + $0x8] sm:$0xff]
    %v369 = vld [vmem:[#allocation10 + $0x10] sm:$0xff]
    %v370 = vld [vmem:[#allocation10 + $0x18] sm:$0xff]
    %v371 = vld [vmem:[#allocation12] sm:$0x1]
    %v372 = vld [vmem:[#allocation13] sm:$0x1]
    %v374 = vlaneseq
    %v375 = vshrl.u32 %v374, 7
    %v376 = vsub.s32 0, %v375
    %v377 = vrot.slane %v371, %v376
    %380 = vrot.lane.b32.xlu0 %v362, 96
    %v381 = vpop.permute.xlu0 %380
    %v382 = vsel %vm263, %v381, 0
    %384 = vmatprep.subr.mxu0 0.0
    %385 = vmatpush1.msra.mxu0 0.0
    %386 = vmatprep.subr.mxu0 0.0
    %387 = vmatpush1.msra.mxu0 0.0
    %388 = vmatprep.subr.mxu0 0.0
    %389 = vmatpush1.msra.mxu0 0.0
    %390 = vmatprep.subr.mxu0 0.0
    %391 = vmatpush1.msra.mxu0 0.0
    %392 = vmatprep.subr.mxu0 0.0
    %393 = vmatpush1.msra.mxu0 0.0
    %394 = vmatprep.subr.mxu0 0.0
    %395 = vmatpush1.msra.mxu0 0.0
    %396 = vmatprep.subr.mxu0 0.0
    %397 = vmatpush1.msra.mxu0 0.0
    %398 = vmatprep.subr.mxu0 0.0
    %399 = vmatpush1.msra.mxu0 0.0
    %400 = vmatprep.subr.mxu0 0.0
    %401 = vmatpush1.msra.mxu0 0.0
    %402 = vmatprep.subr.mxu0 0.0
    %403 = vmatpush1.msra.mxu0 0.0
    %404 = vmatprep.subr.mxu0 0.0
    %405 = vmatpush1.msra.mxu0 0.0
    %406 = vmatprep.subr.mxu0 0.0
    %407 = vmatpush1.msra.mxu0 0.0
    %408 = vmatprep.subr.mxu0 0.0
    %409 = vmatpush1.msra.mxu0 %v366
    %410 = vmatprep.subr.mxu0 0.0
    %411 = vmatpush1.msra.mxu0 %v365
    %412 = vmatprep.subr.mxu0 0.0
    %413 = vmatpush1.msra.mxu0 %v364
    %414 = vmatprep.subr.mxu0 0.0
    %415 = vmatpush1.msra.mxu0 %v363
    %416 = vmatprep.subr.mxu0 0.0
    %417 = vmatpush2.msra.mxu0 0.0
    %418 = vmatprep.subr.mxu0 0.0
    %419 = vmatpush2.msra.mxu0 0.0
    %420 = vmatprep.subr.mxu0 0.0
    %421 = vmatpush2.msra.mxu0 0.0
    %422 = vmatprep.subr.mxu0 0.0
    %423 = vmatpush2.msra.mxu0 0.0
    %424 = vmatprep.subr.mxu0 0.0
    %425 = vmatpush2.msra.mxu0 0.0
    %426 = vmatprep.subr.mxu0 0.0
    %427 = vmatpush2.msra.mxu0 0.0
    %428 = vmatprep.subr.mxu0 0.0
    %429 = vmatpush2.msra.mxu0 0.0
    %430 = vmatprep.subr.mxu0 0.0
    %431 = vmatpush2.msra.mxu0 0.0
    %432 = vmatprep.subr.mxu0 0.0
    %433 = vmatpush2.msra.mxu0 0.0
    %434 = vmatprep.subr.mxu0 0.0
    %435 = vmatpush2.msra.mxu0 0.0
    %436 = vmatprep.subr.mxu0 0.0
    %437 = vmatpush2.msra.mxu0 0.0
    %438 = vmatprep.subr.mxu0 0.0
    %439 = vmatpush2.msra.mxu0 0.0
    %440 = vmatprep.subr.mxu0 0.0
    %441 = vmatpush2.msra.mxu0 0.0
    %442 = vmatprep.subr.mxu0 0.0
    %443 = vmatpush2.msra.mxu0 0.0
    %444 = vmatprep.subr.mxu0 0.0
    %445 = vmatpush2.msra.mxu0 0.0
    %446 = vmatprep.subr.mxu0 0.0
    %447 = vmatpush2.msra.mxu0 0.0
    %448 = vmatprep.mubr.f32.mxu0 0.0
    %449 = vmatmul.mubr.f32.gmra.mxu0 %v382
    %v450 = vpop.f32.mrf.mxu0
    %v451 = vadd.f32 %v377, %v450
    %v452 = vpop.f32.mrf.mxu0
    %453 = vdwg.mxu0
    %v455 = vlaneseq
    %v456 = vshrl.u32 %v455, 7
    %v457 = vsub.s32 0, %v456
    %v458 = vrot.slane %v372, %v457
    %460 = vmatprep.subr.mxu0 0.0
    %461 = vmatpush1.msra.mxu0 0.0
    %462 = vmatprep.subr.mxu0 0.0
    %463 = vmatpush1.msra.mxu0 0.0
    %464 = vmatprep.subr.mxu0 0.0
    %465 = vmatpush1.msra.mxu0 0.0
    %466 = vmatprep.subr.mxu0 0.0
    %467 = vmatpush1.msra.mxu0 0.0
    %468 = vmatprep.subr.mxu0 0.0
    %469 = vmatpush1.msra.mxu0 0.0
    %470 = vmatprep.subr.mxu0 0.0
    %471 = vmatpush1.msra.mxu0 0.0
    %472 = vmatprep.subr.mxu0 0.0
    %473 = vmatpush1.msra.mxu0 0.0
    %474 = vmatprep.subr.mxu0 0.0
    %475 = vmatpush1.msra.mxu0 0.0
    %476 = vmatprep.subr.mxu0 0.0
    %477 = vmatpush1.msra.mxu0 0.0
    %478 = vmatprep.subr.mxu0 0.0
    %479 = vmatpush1.msra.mxu0 0.0
    %480 = vmatprep.subr.mxu0 0.0
    %481 = vmatpush1.msra.mxu0 0.0
    %482 = vmatprep.subr.mxu0 0.0
    %483 = vmatpush1.msra.mxu0 0.0
    %484 = vmatprep.subr.mxu0 0.0
    %485 = vmatpush1.msra.mxu0 %v370
    %486 = vmatprep.subr.mxu0 0.0
    %487 = vmatpush1.msra.mxu0 %v369
    %488 = vmatprep.subr.mxu0 0.0
    %489 = vmatpush1.msra.mxu0 %v368
    %490 = vmatprep.subr.mxu0 0.0
    %491 = vmatpush1.msra.mxu0 %v367
    %492 = vmatprep.subr.mxu0 0.0
    %493 = vmatpush2.msra.mxu0 0.0
    %494 = vmatprep.subr.mxu0 0.0
    %495 = vmatpush2.msra.mxu0 0.0
    %496 = vmatprep.subr.mxu0 0.0
    %497 = vmatpush2.msra.mxu0 0.0
    %498 = vmatprep.subr.mxu0 0.0
    %499 = vmatpush2.msra.mxu0 0.0
    %500 = vmatprep.subr.mxu0 0.0
    %501 = vmatpush2.msra.mxu0 0.0
    %502 = vmatprep.subr.mxu0 0.0
    %503 = vmatpush2.msra.mxu0 0.0
    %504 = vmatprep.subr.mxu0 0.0
    %505 = vmatpush2.msra.mxu0 0.0
    %506 = vmatprep.subr.mxu0 0.0
    %507 = vmatpush2.msra.mxu0 0.0
    %508 = vmatprep.subr.mxu0 0.0
    %509 = vmatpush2.msra.mxu0 0.0
    %510 = vmatprep.subr.mxu0 0.0
    %511 = vmatpush2.msra.mxu0 0.0
    %512 = vmatprep.subr.mxu0 0.0
    %513 = vmatpush2.msra.mxu0 0.0
    %514 = vmatprep.subr.mxu0 0.0
    %515 = vmatpush2.msra.mxu0 0.0
    %516 = vmatprep.subr.mxu0 0.0
    %517 = vmatpush2.msra.mxu0 0.0
    %518 = vmatprep.subr.mxu0 0.0
    %519 = vmatpush2.msra.mxu0 0.0
    %520 = vmatprep.subr.mxu0 0.0
    %521 = vmatpush2.msra.mxu0 0.0
    %522 = vmatprep.subr.mxu0 0.0
    %523 = vmatpush2.msra.mxu0 0.0
    %524 = vmatprep.mubr.f32.mxu0 0.0
    %525 = vmatmul.mubr.f32.gmra.mxu0 %v265
    %v526 = vpop.f32.mrf.mxu0
    %v527 = vadd.f32 %v458, %v526
    %v528 = vpop.f32.mrf.mxu0
    %529 = vdwg.mxu0
    %v530 = vadd.f32 %v451, %v527
    %v531 = vxor.u32 %v530, 2147483648
    %v532 = vmul.f32 %v531, 1.442695
    %v533 = vpow.pop %v532
    %v534 = vadd.f32 %v533, 1.0
    %v535 = vrcp.pop %v534
    %v536 = vmul.f32 1.0, %v535
    %538 = vrot.lane.b32.xlu0 %v527, 64
    %v539 = vpop.permute.xlu0 %538
    %v541 = vmul.f32 %v536, %v539
    %543 = vrot.lane.b32.xlu0 %v541, 64
    %v544 = vpop.permute.xlu0 %543
    %v546 = vadd.f32 %v451, %v544
    %v547 = vtanh.pop %v546
    %v548 = vsub.f32 1.0, %v536
    %550 = vrot.lane.b32.xlu0 %v547, 96
    %v551 = vpop.permute.xlu0 %550
    %v553 = vmul.f32 %v548, %v551
    %v554 = vmul.f32 %v536, 0.0
    %v555 = vadd.f32 %v553, %v554
    %s556 = scalar_lea.vmem %s0, 2
    %v557 = vld [vmem:[%s556] sm:$0x3]
    %s558 = scalar_lea.vmem %s1, 2
    %v559 = vld [vmem:[%s558] sm:$0x3]
    %561 = vset.pattern.permute.xlu0 0
    %562 = vperm.xlu0 %561, %v557
    %v563 = vpop.permute.xlu0 %562
    %v565 = vmul.f32 %v563, %v237
    %567 = vset.pattern.permute.xlu0 0
    %568 = vperm.xlu0 %567, %v559
    %v569 = vpop.permute.xlu0 %568
    %v571 = vmul.f32 %v569, %v247
    %v572 = vadd.f32 %v565, %v571
    %v573 = vadd.f32 %v572, %v254
    %574 = vmatprep.subr.mxu0 0.0
    %575 = vmatpush1.msra.mxu0 0.0
    %576 = vmatprep.subr.mxu0 0.0
    %577 = vmatpush1.msra.mxu0 0.0
    %578 = vmatprep.subr.mxu0 0.0
    %579 = vmatpush1.msra.mxu0 0.0
    %580 = vmatprep.subr.mxu0 0.0
    %581 = vmatpush1.msra.mxu0 0.0
    %582 = vmatprep.subr.mxu0 0.0
    %583 = vmatpush1.msra.mxu0 0.0
    %584 = vmatprep.subr.mxu0 0.0
    %585 = vmatpush1.msra.mxu0 0.0
    %586 = vmatprep.subr.mxu0 0.0
    %587 = vmatpush1.msra.mxu0 0.0
    %588 = vmatprep.subr.mxu0 0.0
    %589 = vmatpush1.msra.mxu0 0.0
    %590 = vmatprep.subr.mxu0 0.0
    %591 = vmatpush1.msra.mxu0 0.0
    %592 = vmatprep.subr.mxu0 0.0
    %593 = vmatpush1.msra.mxu0 0.0
    %594 = vmatprep.subr.mxu0 0.0
    %595 = vmatpush1.msra.mxu0 0.0
    %596 = vmatprep.subr.mxu0 0.0
    %597 = vmatpush1.msra.mxu0 0.0
    %598 = vmatprep.subr.mxu0 0.0
    %599 = vmatpush1.msra.mxu0 %v226
    %600 = vmatprep.subr.mxu0 0.0
    %601 = vmatpush1.msra.mxu0 %v225
    %602 = vmatprep.subr.mxu0 0.0
    %603 = vmatpush1.msra.mxu0 %v224
    %604 = vmatprep.subr.mxu0 0.0
    %605 = vmatpush1.msra.mxu0 %v223
    %606 = vmatprep.subr.mxu0 0.0
    %607 = vmatpush2.msra.mxu0 0.0
    %608 = vmatprep.subr.mxu0 0.0
    %609 = vmatpush2.msra.mxu0 0.0
    %610 = vmatprep.subr.mxu0 0.0
    %611 = vmatpush2.msra.mxu0 0.0
    %612 = vmatprep.subr.mxu0 0.0
    %613 = vmatpush2.msra.mxu0 0.0
    %614 = vmatprep.subr.mxu0 0.0
    %615 = vmatpush2.msra.mxu0 0.0
    %616 = vmatprep.subr.mxu0 0.0
    %617 = vmatpush2.msra.mxu0 0.0
    %618 = vmatprep.subr.mxu0 0.0
    %619 = vmatpush2.msra.mxu0 0.0
    %620 = vmatprep.subr.mxu0 0.0
    %621 = vmatpush2.msra.mxu0 0.0
    %622 = vmatprep.subr.mxu0 0.0
    %623 = vmatpush2.msra.mxu0 0.0
    %624 = vmatprep.subr.mxu0 0.0
    %625 = vmatpush2.msra.mxu0 0.0
    %626 = vmatprep.subr.mxu0 0.0
    %627 = vmatpush2.msra.mxu0 0.0
    %628 = vmatprep.subr.mxu0 0.0
    %629 = vmatpush2.msra.mxu0 0.0
    %630 = vmatprep.subr.mxu0 0.0
    %631 = vmatpush2.msra.mxu0 0.0
    %632 = vmatprep.subr.mxu0 0.0
    %633 = vmatpush2.msra.mxu0 0.0
    %634 = vmatprep.subr.mxu0 0.0
    %635 = vmatpush2.msra.mxu0 0.0
    %636 = vmatprep.subr.mxu0 0.0
    %637 = vmatpush2.msra.mxu0 0.0
    %638 = vmatprep.mubr.f32.mxu0 0.0
    %639 = vmatmul.mubr.f32.gmra.mxu0 %v382
    %v640 = vpop.f32.mrf.mxu0
    %v641 = vadd.f32 %v261, %v640
    %v642 = vpop.f32.mrf.mxu0
    %643 = vdwg.mxu0
    %v644 = vadd.f32 %v573, %v641
    %v645 = vxor.u32 %v644, 2147483648
    %v646 = vmul.f32 %v645, 1.442695
    %v647 = vpow.pop %v646
    %v648 = vadd.f32 %v647, 1.0
    %v649 = vrcp.pop %v648
    %v650 = vmul.f32 1.0, %v649
    %652 = vrot.lane.b32.xlu0 %v641, 64
    %v653 = vpop.permute.xlu0 %652
    %v655 = vmul.f32 %v650, %v653
    %657 = vrot.lane.b32.xlu0 %v655, 64
    %v658 = vpop.permute.xlu0 %657
    %v660 = vadd.f32 %v573, %v658
    %v661 = vtanh.pop %v660
    %v662 = vsub.f32 1.0, %v650
    %664 = vrot.lane.b32.xlu0 %v661, 96
    %v665 = vpop.permute.xlu0 %664
    %v667 = vmul.f32 %v662, %v665
    %v668 = vmul.f32 %v650, %v362
    %v669 = vadd.f32 %v667, %v668
    %671 = vrot.lane.b32.xlu0 %v669, 96
    %v672 = vpop.permute.xlu0 %671
    %v673 = vsel %vm263, %v672, 0
    %675 = vmatprep.subr.mxu0 0.0
    %676 = vmatpush1.msra.mxu0 0.0
    %677 = vmatprep.subr.mxu0 0.0
    %678 = vmatpush1.msra.mxu0 0.0
    %679 = vmatprep.subr.mxu0 0.0
    %680 = vmatpush1.msra.mxu0 0.0
    %681 = vmatprep.subr.mxu0 0.0
    %682 = vmatpush1.msra.mxu0 0.0
    %683 = vmatprep.subr.mxu0 0.0
    %684 = vmatpush1.msra.mxu0 0.0
    %685 = vmatprep.subr.mxu0 0.0
    %686 = vmatpush1.msra.mxu0 0.0
    %687 = vmatprep.subr.mxu0 0.0
    %688 = vmatpush1.msra.mxu0 0.0
    %689 = vmatprep.subr.mxu0 0.0
    %690 = vmatpush1.msra.mxu0 0.0
    %691 = vmatprep.subr.mxu0 0.0
    %692 = vmatpush1.msra.mxu0 0.0
    %693 = vmatprep.subr.mxu0 0.0
    %694 = vmatpush1.msra.mxu0 0.0
    %695 = vmatprep.subr.mxu0 0.0
    %696 = vmatpush1.msra.mxu0 0.0
    %697 = vmatprep.subr.mxu0 0.0
    %698 = vmatpush1.msra.mxu0 0.0
    %699 = vmatprep.subr.mxu0 0.0
    %700 = vmatpush1.msra.mxu0 %v366
    %701 = vmatprep.subr.mxu0 0.0
    %702 = vmatpush1.msra.mxu0 %v365
    %703 = vmatprep.subr.mxu0 0.0
    %704 = vmatpush1.msra.mxu0 %v364
    %705 = vmatprep.subr.mxu0 0.0
    %706 = vmatpush1.msra.mxu0 %v363
    %707 = vmatprep.subr.mxu0 0.0
    %708 = vmatpush2.msra.mxu0 0.0
    %709 = vmatprep.subr.mxu0 0.0
    %710 = vmatpush2.msra.mxu0 0.0
    %711 = vmatprep.subr.mxu0 0.0
    %712 = vmatpush2.msra.mxu0 0.0
    %713 = vmatprep.subr.mxu0 0.0
    %714 = vmatpush2.msra.mxu0 0.0
    %715 = vmatprep.subr.mxu0 0.0
    %716 = vmatpush2.msra.mxu0 0.0
    %717 = vmatprep.subr.mxu0 0.0
    %718 = vmatpush2.msra.mxu0 0.0
    %719 = vmatprep.subr.mxu0 0.0
    %720 = vmatpush2.msra.mxu0 0.0
    %721 = vmatprep.subr.mxu0 0.0
    %722 = vmatpush2.msra.mxu0 0.0
    %723 = vmatprep.subr.mxu0 0.0
    %724 = vmatpush2.msra.mxu0 0.0
    %725 = vmatprep.subr.mxu0 0.0
    %726 = vmatpush2.msra.mxu0 0.0
    %727 = vmatprep.subr.mxu0 0.0
    %728 = vmatpush2.msra.mxu0 0.0
    %729 = vmatprep.subr.mxu0 0.0
    %730 = vmatpush2.msra.mxu0 0.0
    %731 = vmatprep.subr.mxu0 0.0
    %732 = vmatpush2.msra.mxu0 0.0
    %733 = vmatprep.subr.mxu0 0.0
    %734 = vmatpush2.msra.mxu0 0.0
    %735 = vmatprep.subr.mxu0 0.0
    %736 = vmatpush2.msra.mxu0 0.0
    %737 = vmatprep.subr.mxu0 0.0
    %738 = vmatpush2.msra.mxu0 0.0
    %739 = vmatprep.mubr.f32.mxu0 0.0
    %740 = vmatmul.mubr.f32.gmra.mxu0 %v673
    %v741 = vpop.f32.mrf.mxu0
    %v742 = vadd.f32 %v377, %v741
    %v743 = vpop.f32.mrf.mxu0
    %744 = vdwg.mxu0
    %746 = vrot.lane.b32.xlu0 %v555, 96
    %v747 = vpop.permute.xlu0 %746
    %v748 = vsel %vm263, %v747, 0
    %750 = vmatprep.subr.mxu0 0.0
    %751 = vmatpush1.msra.mxu0 0.0
    %752 = vmatprep.subr.mxu0 0.0
    %753 = vmatpush1.msra.mxu0 0.0
    %754 = vmatprep.subr.mxu0 0.0
    %755 = vmatpush1.msra.mxu0 0.0
    %756 = vmatprep.subr.mxu0 0.0
    %757 = vmatpush1.msra.mxu0 0.0
    %758 = vmatprep.subr.mxu0 0.0
    %759 = vmatpush1.msra.mxu0 0.0
    %760 = vmatprep.subr.mxu0 0.0
    %761 = vmatpush1.msra.mxu0 0.0
    %762 = vmatprep.subr.mxu0 0.0
    %763 = vmatpush1.msra.mxu0 0.0
    %764 = vmatprep.subr.mxu0 0.0
    %765 = vmatpush1.msra.mxu0 0.0
    %766 = vmatprep.subr.mxu0 0.0
    %767 = vmatpush1.msra.mxu0 0.0
    %768 = vmatprep.subr.mxu0 0.0
    %769 = vmatpush1.msra.mxu0 0.0
    %770 = vmatprep.subr.mxu0 0.0
    %771 = vmatpush1.msra.mxu0 0.0
    %772 = vmatprep.subr.mxu0 0.0
    %773 = vmatpush1.msra.mxu0 0.0
    %774 = vmatprep.subr.mxu0 0.0
    %775 = vmatpush1.msra.mxu0 %v370
    %776 = vmatprep.subr.mxu0 0.0
    %777 = vmatpush1.msra.mxu0 %v369
    %778 = vmatprep.subr.mxu0 0.0
    %779 = vmatpush1.msra.mxu0 %v368
    %780 = vmatprep.subr.mxu0 0.0
    %781 = vmatpush1.msra.mxu0 %v367
    %782 = vmatprep.subr.mxu0 0.0
    %783 = vmatpush2.msra.mxu0 0.0
    %784 = vmatprep.subr.mxu0 0.0
    %785 = vmatpush2.msra.mxu0 0.0
    %786 = vmatprep.subr.mxu0 0.0
    %787 = vmatpush2.msra.mxu0 0.0
    %788 = vmatprep.subr.mxu0 0.0
    %789 = vmatpush2.msra.mxu0 0.0
    %790 = vmatprep.subr.mxu0 0.0
    %791 = vmatpush2.msra.mxu0 0.0
    %792 = vmatprep.subr.mxu0 0.0
    %793 = vmatpush2.msra.mxu0 0.0
    %794 = vmatprep.subr.mxu0 0.0
    %795 = vmatpush2.msra.mxu0 0.0
    %796 = vmatprep.subr.mxu0 0.0
    %797 = vmatpush2.msra.mxu0 0.0
    %798 = vmatprep.subr.mxu0 0.0
    %799 = vmatpush2.msra.mxu0 0.0
    %800 = vmatprep.subr.mxu0 0.0
    %801 = vmatpush2.msra.mxu0 0.0
    %802 = vmatprep.subr.mxu0 0.0
    %803 = vmatpush2.msra.mxu0 0.0
    %804 = vmatprep.subr.mxu0 0.0
    %805 = vmatpush2.msra.mxu0 0.0
    %806 = vmatprep.subr.mxu0 0.0
    %807 = vmatpush2.msra.mxu0 0.0
    %808 = vmatprep.subr.mxu0 0.0
    %809 = vmatpush2.msra.mxu0 0.0
    %810 = vmatprep.subr.mxu0 0.0
    %811 = vmatpush2.msra.mxu0 0.0
    %812 = vmatprep.subr.mxu0 0.0
    %813 = vmatpush2.msra.mxu0 0.0
    %814 = vmatprep.mubr.f32.mxu0 0.0
    %815 = vmatmul.mubr.f32.gmra.mxu0 %v748
    %v816 = vpop.f32.mrf.mxu0
    %v817 = vadd.f32 %v458, %v816
    %v818 = vpop.f32.mrf.mxu0
    %819 = vdwg.mxu0
    %v820 = vadd.f32 %v742, %v817
    %v821 = vxor.u32 %v820, 2147483648
    %v822 = vmul.f32 %v821, 1.442695
    %v823 = vpow.pop %v822
    %v824 = vadd.f32 %v823, 1.0
    %v825 = vrcp.pop %v824
    %v826 = vmul.f32 1.0, %v825
    %828 = vrot.lane.b32.xlu0 %v817, 64
    %v829 = vpop.permute.xlu0 %828
    %v831 = vmul.f32 %v826, %v829
    %833 = vrot.lane.b32.xlu0 %v831, 64
    %v834 = vpop.permute.xlu0 %833
    %v836 = vadd.f32 %v742, %v834
    %v837 = vtanh.pop %v836
    %v838 = vsub.f32 1.0, %v826
    %840 = vrot.lane.b32.xlu0 %v837, 96
    %v841 = vpop.permute.xlu0 %840
    %v843 = vmul.f32 %v838, %v841
    %v844 = vmul.f32 %v826, %v555
    %v845 = vadd.f32 %v843, %v844
    %s846 = scalar_lea.vmem %s0, 4
    %v847 = vld [vmem:[%s846] sm:$0x3]
    %s848 = scalar_lea.vmem %s1, 4
    %v849 = vld [vmem:[%s848] sm:$0x3]
    %851 = vset.pattern.permute.xlu0 0
    %852 = vperm.xlu0 %851, %v847
    %v853 = vpop.permute.xlu0 %852
    %v855 = vmul.f32 %v853, %v237
    %857 = vset.pattern.permute.xlu0 0
    %858 = vperm.xlu0 %857, %v849
    %v859 = vpop.permute.xlu0 %858
    %v861 = vmul.f32 %v859, %v247
    %v862 = vadd.f32 %v855, %v861
    %v863 = vadd.f32 %v862, %v254
    %864 = vmatprep.subr.mxu0 0.0
    %865 = vmatpush1.msra.mxu0 0.0
    %866 = vmatprep.subr.mxu0 0.0
    %867 = vmatpush1.msra.mxu0 0.0
    %868 = vmatprep.subr.mxu0 0.0
    %869 = vmatpush1.msra.mxu0 0.0
    %870 = vmatprep.subr.mxu0 0.0
    %871 = vmatpush1.msra.mxu0 0.0
    %872 = vmatprep.subr.mxu0 0.0
    %873 = vmatpush1.msra.mxu0 0.0
    %874 = vmatprep.subr.mxu0 0.0
    %875 = vmatpush1.msra.mxu0 0.0
    %876 = vmatprep.subr.mxu0 0.0
    %877 = vmatpush1.msra.mxu0 0.0
    %878 = vmatprep.subr.mxu0 0.0
    %879 = vmatpush1.msra.mxu0 0.0
    %880 = vmatprep.subr.mxu0 0.0
    %881 = vmatpush1.msra.mxu0 0.0
    %882 = vmatprep.subr.mxu0 0.0
    %883 = vmatpush1.msra.mxu0 0.0
    %884 = vmatprep.subr.mxu0 0.0
    %885 = vmatpush1.msra.mxu0 0.0
    %886 = vmatprep.subr.mxu0 0.0
    %887 = vmatpush1.msra.mxu0 0.0
    %888 = vmatprep.subr.mxu0 0.0
    %889 = vmatpush1.msra.mxu0 %v226
    %890 = vmatprep.subr.mxu0 0.0
    %891 = vmatpush1.msra.mxu0 %v225
    %892 = vmatprep.subr.mxu0 0.0
    %893 = vmatpush1.msra.mxu0 %v224
    %894 = vmatprep.subr.mxu0 0.0
    %895 = vmatpush1.msra.mxu0 %v223
    %896 = vmatprep.subr.mxu0 0.0
    %897 = vmatpush2.msra.mxu0 0.0
    %898 = vmatprep.subr.mxu0 0.0
    %899 = vmatpush2.msra.mxu0 0.0
    %900 = vmatprep.subr.mxu0 0.0
    %901 = vmatpush2.msra.mxu0 0.0
    %902 = vmatprep.subr.mxu0 0.0
    %903 = vmatpush2.msra.mxu0 0.0
    %904 = vmatprep.subr.mxu0 0.0
    %905 = vmatpush2.msra.mxu0 0.0
    %906 = vmatprep.subr.mxu0 0.0
    %907 = vmatpush2.msra.mxu0 0.0
    %908 = vmatprep.subr.mxu0 0.0
    %909 = vmatpush2.msra.mxu0 0.0
    %910 = vmatprep.subr.mxu0 0.0
    %911 = vmatpush2.msra.mxu0 0.0
    %912 = vmatprep.subr.mxu0 0.0
    %913 = vmatpush2.msra.mxu0 0.0
    %914 = vmatprep.subr.mxu0 0.0
    %915 = vmatpush2.msra.mxu0 0.0
    %916 = vmatprep.subr.mxu0 0.0
    %917 = vmatpush2.msra.mxu0 0.0
    %918 = vmatprep.subr.mxu0 0.0
    %919 = vmatpush2.msra.mxu0 0.0
    %920 = vmatprep.subr.mxu0 0.0
    %921 = vmatpush2.msra.mxu0 0.0
    %922 = vmatprep.subr.mxu0 0.0
    %923 = vmatpush2.msra.mxu0 0.0
    %924 = vmatprep.subr.mxu0 0.0
    %925 = vmatpush2.msra.mxu0 0.0
    %926 = vmatprep.subr.mxu0 0.0
    %927 = vmatpush2.msra.mxu0 0.0
    %928 = vmatprep.mubr.f32.mxu0 0.0
    %929 = vmatmul.mubr.f32.gmra.mxu0 %v673
    %v930 = vpop.f32.mrf.mxu0
    %v931 = vadd.f32 %v261, %v930
    %v932 = vpop.f32.mrf.mxu0
    %933 = vdwg.mxu0
    %v934 = vadd.f32 %v863, %v931
    %v935 = vxor.u32 %v934, 2147483648
    %v936 = vmul.f32 %v935, 1.442695
    %v937 = vpow.pop %v936
    %v938 = vadd.f32 %v937, 1.0
    %v939 = vrcp.pop %v938
    %v940 = vmul.f32 1.0, %v939
    %942 = vrot.lane.b32.xlu0 %v931, 64
    %v943 = vpop.permute.xlu0 %942
    %v945 = vmul.f32 %v940, %v943
    %947 = vrot.lane.b32.xlu0 %v945, 64
    %v948 = vpop.permute.xlu0 %947
    %v950 = vadd.f32 %v863, %v948
    %v951 = vtanh.pop %v950
    %v952 = vsub.f32 1.0, %v940
    %954 = vrot.lane.b32.xlu0 %v951, 96
    %v955 = vpop.permute.xlu0 %954
    %v957 = vmul.f32 %v952, %v955
    %v958 = vmul.f32 %v940, %v669
    %v959 = vadd.f32 %v957, %v958
    %961 = vrot.lane.b32.xlu0 %v959, 96
    %v962 = vpop.permute.xlu0 %961
    %v963 = vsel %vm263, %v962, 0
    %965 = vmatprep.subr.mxu0 0.0
    %966 = vmatpush1.msra.mxu0 0.0
    %967 = vmatprep.subr.mxu0 0.0
    %968 = vmatpush1.msra.mxu0 0.0
    %969 = vmatprep.subr.mxu0 0.0
    %970 = vmatpush1.msra.mxu0 0.0
    %971 = vmatprep.subr.mxu0 0.0
    %972 = vmatpush1.msra.mxu0 0.0
    %973 = vmatprep.subr.mxu0 0.0
    %974 = vmatpush1.msra.mxu0 0.0
    %975 = vmatprep.subr.mxu0 0.0
    %976 = vmatpush1.msra.mxu0 0.0
    %977 = vmatprep.subr.mxu0 0.0
    %978 = vmatpush1.msra.mxu0 0.0
    %979 = vmatprep.subr.mxu0 0.0
    %980 = vmatpush1.msra.mxu0 0.0
    %981 = vmatprep.subr.mxu0 0.0
    %982 = vmatpush1.msra.mxu0 0.0
    %983 = vmatprep.subr.mxu0 0.0
    %984 = vmatpush1.msra.mxu0 0.0
    %985 = vmatprep.subr.mxu0 0.0
    %986 = vmatpush1.msra.mxu0 0.0
    %987 = vmatprep.subr.mxu0 0.0
    %988 = vmatpush1.msra.mxu0 0.0
    %989 = vmatprep.subr.mxu0 0.0
    %990 = vmatpush1.msra.mxu0 %v366
    %991 = vmatprep.subr.mxu0 0.0
    %992 = vmatpush1.msra.mxu0 %v365
    %993 = vmatprep.subr.mxu0 0.0
    %994 = vmatpush1.msra.mxu0 %v364
    %995 = vmatprep.subr.mxu0 0.0
    %996 = vmatpush1.msra.mxu0 %v363
    %997 = vmatprep.subr.mxu0 0.0
    %998 = vmatpush2.msra.mxu0 0.0
    %999 = vmatprep.subr.mxu0 0.0
    %1000 = vmatpush2.msra.mxu0 0.0
    %1001 = vmatprep.subr.mxu0 0.0
    %1002 = vmatpush2.msra.mxu0 0.0
    %1003 = vmatprep.subr.mxu0 0.0
    %1004 = vmatpush2.msra.mxu0 0.0
    %1005 = vmatprep.subr.mxu0 0.0
    %1006 = vmatpush2.msra.mxu0 0.0
    %1007 = vmatprep.subr.mxu0 0.0
    %1008 = vmatpush2.msra.mxu0 0.0
    %1009 = vmatprep.subr.mxu0 0.0
    %1010 = vmatpush2.msra.mxu0 0.0
    %1011 = vmatprep.subr.mxu0 0.0
    %1012 = vmatpush2.msra.mxu0 0.0
    %1013 = vmatprep.subr.mxu0 0.0
    %1014 = vmatpush2.msra.mxu0 0.0
    %1015 = vmatprep.subr.mxu0 0.0
    %1016 = vmatpush2.msra.mxu0 0.0
    %1017 = vmatprep.subr.mxu0 0.0
    %1018 = vmatpush2.msra.mxu0 0.0
    %1019 = vmatprep.subr.mxu0 0.0
    %1020 = vmatpush2.msra.mxu0 0.0
    %1021 = vmatprep.subr.mxu0 0.0
    %1022 = vmatpush2.msra.mxu0 0.0
    %1023 = vmatprep.subr.mxu0 0.0
    %1024 = vmatpush2.msra.mxu0 0.0
    %1025 = vmatprep.subr.mxu0 0.0
    %1026 = vmatpush2.msra.mxu0 0.0
    %1027 = vmatprep.subr.mxu0 0.0
    %1028 = vmatpush2.msra.mxu0 0.0
    %1029 = vmatprep.mubr.f32.mxu0 0.0
    %1030 = vmatmul.mubr.f32.gmra.mxu0 %v963
    %v1031 = vpop.f32.mrf.mxu0
    %v1032 = vadd.f32 %v377, %v1031
    %v1033 = vpop.f32.mrf.mxu0
    %1034 = vdwg.mxu0
    %1036 = vrot.lane.b32.xlu0 %v845, 96
    %v1037 = vpop.permute.xlu0 %1036
    %v1038 = vsel %vm263, %v1037, 0
    %1040 = vmatprep.subr.mxu0 0.0
    %1041 = vmatpush1.msra.mxu0 0.0
    %1042 = vmatprep.subr.mxu0 0.0
    %1043 = vmatpush1.msra.mxu0 0.0
    %1044 = vmatprep.subr.mxu0 0.0
    %1045 = vmatpush1.msra.mxu0 0.0
    %1046 = vmatprep.subr.mxu0 0.0
    %1047 = vmatpush1.msra.mxu0 0.0
    %1048 = vmatprep.subr.mxu0 0.0
    %1049 = vmatpush1.msra.mxu0 0.0
    %1050 = vmatprep.subr.mxu0 0.0
    %1051 = vmatpush1.msra.mxu0 0.0
    %1052 = vmatprep.subr.mxu0 0.0
    %1053 = vmatpush1.msra.mxu0 0.0
    %1054 = vmatprep.subr.mxu0 0.0
    %1055 = vmatpush1.msra.mxu0 0.0
    %1056 = vmatprep.subr.mxu0 0.0
    %1057 = vmatpush1.msra.mxu0 0.0
    %1058 = vmatprep.subr.mxu0 0.0
    %1059 = vmatpush1.msra.mxu0 0.0
    %1060 = vmatprep.subr.mxu0 0.0
    %1061 = vmatpush1.msra.mxu0 0.0
    %1062 = vmatprep.subr.mxu0 0.0
    %1063 = vmatpush1.msra.mxu0 0.0
    %1064 = vmatprep.subr.mxu0 0.0
    %1065 = vmatpush1.msra.mxu0 %v370
    %1066 = vmatprep.subr.mxu0 0.0
    %1067 = vmatpush1.msra.mxu0 %v369
    %1068 = vmatprep.subr.mxu0 0.0
    %1069 = vmatpush1.msra.mxu0 %v368
    %1070 = vmatprep.subr.mxu0 0.0
    %1071 = vmatpush1.msra.mxu0 %v367
    %1072 = vmatprep.subr.mxu0 0.0
    %1073 = vmatpush2.msra.mxu0 0.0
    %1074 = vmatprep.subr.mxu0 0.0
    %1075 = vmatpush2.msra.mxu0 0.0
    %1076 = vmatprep.subr.mxu0 0.0
    %1077 = vmatpush2.msra.mxu0 0.0
    %1078 = vmatprep.subr.mxu0 0.0
    %1079 = vmatpush2.msra.mxu0 0.0
    %1080 = vmatprep.subr.mxu0 0.0
    %1081 = vmatpush2.msra.mxu0 0.0
    %1082 = vmatprep.subr.mxu0 0.0
    %1083 = vmatpush2.msra.mxu0 0.0
    %1084 = vmatprep.subr.mxu0 0.0
    %1085 = vmatpush2.msra.mxu0 0.0
    %1086 = vmatprep.subr.mxu0 0.0
    %1087 = vmatpush2.msra.mxu0 0.0
    %1088 = vmatprep.subr.mxu0 0.0
    %1089 = vmatpush2.msra.mxu0 0.0
    %1090 = vmatprep.subr.mxu0 0.0
    %1091 = vmatpush2.msra.mxu0 0.0
    %1092 = vmatprep.subr.mxu0 0.0
    %1093 = vmatpush2.msra.mxu0 0.0
    %1094 = vmatprep.subr.mxu0 0.0
    %1095 = vmatpush2.msra.mxu0 0.0
    %1096 = vmatprep.subr.mxu0 0.0
    %1097 = vmatpush2.msra.mxu0 0.0
    %1098 = vmatprep.subr.mxu0 0.0
    %1099 = vmatpush2.msra.mxu0 0.0
    %1100 = vmatprep.subr.mxu0 0.0
    %1101 = vmatpush2.msra.mxu0 0.0
    %1102 = vmatprep.subr.mxu0 0.0
    %1103 = vmatpush2.msra.mxu0 0.0
    %1104 = vmatprep.mubr.f32.mxu0 0.0
    %1105 = vmatmul.mubr.f32.gmra.mxu0 %v1038
    %v1106 = vpop.f32.mrf.mxu0
    %v1107 = vadd.f32 %v458, %v1106
    %v1108 = vpop.f32.mrf.mxu0
    %1109 = vdwg.mxu0
    %v1110 = vadd.f32 %v1032, %v1107
    %v1111 = vxor.u32 %v1110, 2147483648
    %v1112 = vmul.f32 %v1111, 1.442695
    %v1113 = vpow.pop %v1112
    %v1114 = vadd.f32 %v1113, 1.0
    %v1115 = vrcp.pop %v1114
    %v1116 = vmul.f32 1.0, %v1115
    %1118 = vrot.lane.b32.xlu0 %v1107, 64
    %v1119 = vpop.permute.xlu0 %1118
    %v1121 = vmul.f32 %v1116, %v1119
    %1123 = vrot.lane.b32.xlu0 %v1121, 64
    %v1124 = vpop.permute.xlu0 %1123
    %v1126 = vadd.f32 %v1032, %v1124
    %v1127 = vtanh.pop %v1126
    %v1128 = vsub.f32 1.0, %v1116
    %1130 = vrot.lane.b32.xlu0 %v1127, 96
    %v1131 = vpop.permute.xlu0 %1130
    %v1133 = vmul.f32 %v1128, %v1131
    %v1134 = vmul.f32 %v1116, %v845
    %v1135 = vadd.f32 %v1133, %v1134
    %s1136 = scalar_lea.vmem %s0, 6
    %v1137 = vld [vmem:[%s1136] sm:$0x3]
    %s1138 = scalar_lea.vmem %s1, 6
    %v1139 = vld [vmem:[%s1138] sm:$0x3]
    %1141 = vset.pattern.permute.xlu0 0
    %1142 = vperm.xlu0 %1141, %v1137
    %v1143 = vpop.permute.xlu0 %1142
    %v1145 = vmul.f32 %v1143, %v237
    %1147 = vset.pattern.permute.xlu0 0
    %1148 = vperm.xlu0 %1147, %v1139
    %v1149 = vpop.permute.xlu0 %1148
    %v1151 = vmul.f32 %v1149, %v247
    %v1152 = vadd.f32 %v1145, %v1151
    %v1153 = vadd.f32 %v1152, %v254
    %1154 = vmatprep.subr.mxu0 0.0
    %1155 = vmatpush1.msra.mxu0 0.0
    %1156 = vmatprep.subr.mxu0 0.0
    %1157 = vmatpush1.msra.mxu0 0.0
    %1158 = vmatprep.subr.mxu0 0.0
    %1159 = vmatpush1.msra.mxu0 0.0
    %1160 = vmatprep.subr.mxu0 0.0
    %1161 = vmatpush1.msra.mxu0 0.0
    %1162 = vmatprep.subr.mxu0 0.0
    %1163 = vmatpush1.msra.mxu0 0.0
    %1164 = vmatprep.subr.mxu0 0.0
    %1165 = vmatpush1.msra.mxu0 0.0
    %1166 = vmatprep.subr.mxu0 0.0
    %1167 = vmatpush1.msra.mxu0 0.0
    %1168 = vmatprep.subr.mxu0 0.0
    %1169 = vmatpush1.msra.mxu0 0.0
    %1170 = vmatprep.subr.mxu0 0.0
    %1171 = vmatpush1.msra.mxu0 0.0
    %1172 = vmatprep.subr.mxu0 0.0
    %1173 = vmatpush1.msra.mxu0 0.0
    %1174 = vmatprep.subr.mxu0 0.0
    %1175 = vmatpush1.msra.mxu0 0.0
    %1176 = vmatprep.subr.mxu0 0.0
    %1177 = vmatpush1.msra.mxu0 0.0
    %1178 = vmatprep.subr.mxu0 0.0
    %1179 = vmatpush1.msra.mxu0 %v226
    %1180 = vmatprep.subr.mxu0 0.0
    %1181 = vmatpush1.msra.mxu0 %v225
    %1182 = vmatprep.subr.mxu0 0.0
    %1183 = vmatpush1.msra.mxu0 %v224
    %1184 = vmatprep.subr.mxu0 0.0
    %1185 = vmatpush1.msra.mxu0 %v223
    %1186 = vmatprep.subr.mxu0 0.0
    %1187 = vmatpush2.msra.mxu0 0.0
    %1188 = vmatprep.subr.mxu0 0.0
    %1189 = vmatpush2.msra.mxu0 0.0
    %1190 = vmatprep.subr.mxu0 0.0
    %1191 = vmatpush2.msra.mxu0 0.0
    %1192 = vmatprep.subr.mxu0 0.0
    %1193 = vmatpush2.msra.mxu0 0.0
    %1194 = vmatprep.subr.mxu0 0.0
    %1195 = vmatpush2.msra.mxu0 0.0
    %1196 = vmatprep.subr.mxu0 0.0
    %1197 = vmatpush2.msra.mxu0 0.0
    %1198 = vmatprep.subr.mxu0 0.0
    %1199 = vmatpush2.msra.mxu0 0.0
    %1200 = vmatprep.subr.mxu0 0.0
    %1201 = vmatpush2.msra.mxu0 0.0
    %1202 = vmatprep.subr.mxu0 0.0
    %1203 = vmatpush2.msra.mxu0 0.0
    %1204 = vmatprep.subr.mxu0 0.0
    %1205 = vmatpush2.msra.mxu0 0.0
    %1206 = vmatprep.subr.mxu0 0.0
    %1207 = vmatpush2.msra.mxu0 0.0
    %1208 = vmatprep.subr.mxu0 0.0
    %1209 = vmatpush2.msra.mxu0 0.0
    %1210 = vmatprep.subr.mxu0 0.0
    %1211 = vmatpush2.msra.mxu0 0.0
    %1212 = vmatprep.subr.mxu0 0.0
    %1213 = vmatpush2.msra.mxu0 0.0
    %1214 = vmatprep.subr.mxu0 0.0
    %1215 = vmatpush2.msra.mxu0 0.0
    %1216 = vmatprep.subr.mxu0 0.0
    %1217 = vmatpush2.msra.mxu0 0.0
    %1218 = vmatprep.mubr.f32.mxu0 0.0
    %1219 = vmatmul.mubr.f32.gmra.mxu0 %v963
    %v1220 = vpop.f32.mrf.mxu0
    %v1221 = vadd.f32 %v261, %v1220
    %v1222 = vpop.f32.mrf.mxu0
    %1223 = vdwg.mxu0
    %v1224 = vadd.f32 %v1153, %v1221
    %v1225 = vxor.u32 %v1224, 2147483648
    %v1226 = vmul.f32 %v1225, 1.442695
    %v1227 = vpow.pop %v1226
    %v1228 = vadd.f32 %v1227, 1.0
    %v1229 = vrcp.pop %v1228
    %v1230 = vmul.f32 1.0, %v1229
    %1232 = vrot.lane.b32.xlu0 %v1221, 64
    %v1233 = vpop.permute.xlu0 %1232
    %v1235 = vmul.f32 %v1230, %v1233
    %1237 = vrot.lane.b32.xlu0 %v1235, 64
    %v1238 = vpop.permute.xlu0 %1237
    %v1240 = vadd.f32 %v1153, %v1238
    %v1241 = vtanh.pop %v1240
    %v1242 = vsub.f32 1.0, %v1230
    %1244 = vrot.lane.b32.xlu0 %v1241, 96
    %v1245 = vpop.permute.xlu0 %1244
    %v1247 = vmul.f32 %v1242, %v1245
    %v1248 = vmul.f32 %v1230, %v959
    %v1249 = vadd.f32 %v1247, %v1248
    %1251 = vrot.lane.b32.xlu0 %v1249, 96
    %v1252 = vpop.permute.xlu0 %1251
    %v1253 = vsel %vm263, %v1252, 0
    %1255 = vmatprep.subr.mxu0 0.0
    %1256 = vmatpush1.msra.mxu0 0.0
    %1257 = vmatprep.subr.mxu0 0.0
    %1258 = vmatpush1.msra.mxu0 0.0
    %1259 = vmatprep.subr.mxu0 0.0
    %1260 = vmatpush1.msra.mxu0 0.0
    %1261 = vmatprep.subr.mxu0 0.0
    %1262 = vmatpush1.msra.mxu0 0.0
    %1263 = vmatprep.subr.mxu0 0.0
    %1264 = vmatpush1.msra.mxu0 0.0
    %1265 = vmatprep.subr.mxu0 0.0
    %1266 = vmatpush1.msra.mxu0 0.0
    %1267 = vmatprep.subr.mxu0 0.0
    %1268 = vmatpush1.msra.mxu0 0.0
    %1269 = vmatprep.subr.mxu0 0.0
    %1270 = vmatpush1.msra.mxu0 0.0
    %1271 = vmatprep.subr.mxu0 0.0
    %1272 = vmatpush1.msra.mxu0 0.0
    %1273 = vmatprep.subr.mxu0 0.0
    %1274 = vmatpush1.msra.mxu0 0.0
    %1275 = vmatprep.subr.mxu0 0.0
    %1276 = vmatpush1.msra.mxu0 0.0
    %1277 = vmatprep.subr.mxu0 0.0
    %1278 = vmatpush1.msra.mxu0 0.0
    %1279 = vmatprep.subr.mxu0 0.0
    %1280 = vmatpush1.msra.mxu0 %v366
    %1281 = vmatprep.subr.mxu0 0.0
    %1282 = vmatpush1.msra.mxu0 %v365
    %1283 = vmatprep.subr.mxu0 0.0
    %1284 = vmatpush1.msra.mxu0 %v364
    %1285 = vmatprep.subr.mxu0 0.0
    %1286 = vmatpush1.msra.mxu0 %v363
    %1287 = vmatprep.subr.mxu0 0.0
    %1288 = vmatpush2.msra.mxu0 0.0
    %1289 = vmatprep.subr.mxu0 0.0
    %1290 = vmatpush2.msra.mxu0 0.0
    %1291 = vmatprep.subr.mxu0 0.0
    %1292 = vmatpush2.msra.mxu0 0.0
    %1293 = vmatprep.subr.mxu0 0.0
    %1294 = vmatpush2.msra.mxu0 0.0
    %1295 = vmatprep.subr.mxu0 0.0
    %1296 = vmatpush2.msra.mxu0 0.0
    %1297 = vmatprep.subr.mxu0 0.0
    %1298 = vmatpush2.msra.mxu0 0.0
    %1299 = vmatprep.subr.mxu0 0.0
    %1300 = vmatpush2.msra.mxu0 0.0
    %1301 = vmatprep.subr.mxu0 0.0
    %1302 = vmatpush2.msra.mxu0 0.0
    %1303 = vmatprep.subr.mxu0 0.0
    %1304 = vmatpush2.msra.mxu0 0.0
    %1305 = vmatprep.subr.mxu0 0.0
    %1306 = vmatpush2.msra.mxu0 0.0
    %1307 = vmatprep.subr.mxu0 0.0
    %1308 = vmatpush2.msra.mxu0 0.0
    %1309 = vmatprep.subr.mxu0 0.0
    %1310 = vmatpush2.msra.mxu0 0.0
    %1311 = vmatprep.subr.mxu0 0.0
    %1312 = vmatpush2.msra.mxu0 0.0
    %1313 = vmatprep.subr.mxu0 0.0
    %1314 = vmatpush2.msra.mxu0 0.0
    %1315 = vmatprep.subr.mxu0 0.0
    %1316 = vmatpush2.msra.mxu0 0.0
    %1317 = vmatprep.subr.mxu0 0.0
    %1318 = vmatpush2.msra.mxu0 0.0
    %1319 = vmatprep.mubr.f32.mxu0 0.0
    %1320 = vmatmul.mubr.f32.gmra.mxu0 %v1253
    %v1321 = vpop.f32.mrf.mxu0
    %v1322 = vadd.f32 %v377, %v1321
    %v1323 = vpop.f32.mrf.mxu0
    %1324 = vdwg.mxu0
    %1326 = vrot.lane.b32.xlu0 %v1135, 96
    %v1327 = vpop.permute.xlu0 %1326
    %v1328 = vsel %vm263, %v1327, 0
    %1330 = vmatprep.subr.mxu0 0.0
    %1331 = vmatpush1.msra.mxu0 0.0
    %1332 = vmatprep.subr.mxu0 0.0
    %1333 = vmatpush1.msra.mxu0 0.0
    %1334 = vmatprep.subr.mxu0 0.0
    %1335 = vmatpush1.msra.mxu0 0.0
    %1336 = vmatprep.subr.mxu0 0.0
    %1337 = vmatpush1.msra.mxu0 0.0
    %1338 = vmatprep.subr.mxu0 0.0
    %1339 = vmatpush1.msra.mxu0 0.0
    %1340 = vmatprep.subr.mxu0 0.0
    %1341 = vmatpush1.msra.mxu0 0.0
    %1342 = vmatprep.subr.mxu0 0.0
    %1343 = vmatpush1.msra.mxu0 0.0
    %1344 = vmatprep.subr.mxu0 0.0
    %1345 = vmatpush1.msra.mxu0 0.0
    %1346 = vmatprep.subr.mxu0 0.0
    %1347 = vmatpush1.msra.mxu0 0.0
    %1348 = vmatprep.subr.mxu0 0.0
    %1349 = vmatpush1.msra.mxu0 0.0
    %1350 = vmatprep.subr.mxu0 0.0
    %1351 = vmatpush1.msra.mxu0 0.0
    %1352 = vmatprep.subr.mxu0 0.0
    %1353 = vmatpush1.msra.mxu0 0.0
    %1354 = vmatprep.subr.mxu0 0.0
    %1355 = vmatpush1.msra.mxu0 %v370
    %1356 = vmatprep.subr.mxu0 0.0
    %1357 = vmatpush1.msra.mxu0 %v369
    %1358 = vmatprep.subr.mxu0 0.0
    %1359 = vmatpush1.msra.mxu0 %v368
    %1360 = vmatprep.subr.mxu0 0.0
    %1361 = vmatpush1.msra.mxu0 %v367
    %1362 = vmatprep.subr.mxu0 0.0
    %1363 = vmatpush2.msra.mxu0 0.0
    %1364 = vmatprep.subr.mxu0 0.0
    %1365 = vmatpush2.msra.mxu0 0.0
    %1366 = vmatprep.subr.mxu0 0.0
    %1367 = vmatpush2.msra.mxu0 0.0
    %1368 = vmatprep.subr.mxu0 0.0
    %1369 = vmatpush2.msra.mxu0 0.0
    %1370 = vmatprep.subr.mxu0 0.0
    %1371 = vmatpush2.msra.mxu0 0.0
    %1372 = vmatprep.subr.mxu0 0.0
    %1373 = vmatpush2.msra.mxu0 0.0
    %1374 = vmatprep.subr.mxu0 0.0
    %1375 = vmatpush2.msra.mxu0 0.0
    %1376 = vmatprep.subr.mxu0 0.0
    %1377 = vmatpush2.msra.mxu0 0.0
    %1378 = vmatprep.subr.mxu0 0.0
    %1379 = vmatpush2.msra.mxu0 0.0
    %1380 = vmatprep.subr.mxu0 0.0
    %1381 = vmatpush2.msra.mxu0 0.0
    %1382 = vmatprep.subr.mxu0 0.0
    %1383 = vmatpush2.msra.mxu0 0.0
    %1384 = vmatprep.subr.mxu0 0.0
    %1385 = vmatpush2.msra.mxu0 0.0
    %1386 = vmatprep.subr.mxu0 0.0
    %1387 = vmatpush2.msra.mxu0 0.0
    %1388 = vmatprep.subr.mxu0 0.0
    %1389 = vmatpush2.msra.mxu0 0.0
    %1390 = vmatprep.subr.mxu0 0.0
    %1391 = vmatpush2.msra.mxu0 0.0
    %1392 = vmatprep.subr.mxu0 0.0
    %1393 = vmatpush2.msra.mxu0 0.0
    %1394 = vmatprep.mubr.f32.mxu0 0.0
    %1395 = vmatmul.mubr.f32.gmra.mxu0 %v1328
    %v1396 = vpop.f32.mrf.mxu0
    %v1397 = vadd.f32 %v458, %v1396
    %v1398 = vpop.f32.mrf.mxu0
    %1399 = vdwg.mxu0
    %v1400 = vadd.f32 %v1322, %v1397
    %v1401 = vxor.u32 %v1400, 2147483648
    %v1402 = vmul.f32 %v1401, 1.442695
    %v1403 = vpow.pop %v1402
    %v1404 = vadd.f32 %v1403, 1.0
    %v1405 = vrcp.pop %v1404
    %v1406 = vmul.f32 1.0, %v1405
    %1408 = vrot.lane.b32.xlu0 %v1397, 64
    %v1409 = vpop.permute.xlu0 %1408
    %v1411 = vmul.f32 %v1406, %v1409
    %1413 = vrot.lane.b32.xlu0 %v1411, 64
    %v1414 = vpop.permute.xlu0 %1413
    %v1416 = vadd.f32 %v1322, %v1414
    %v1417 = vtanh.pop %v1416
    %v1418 = vsub.f32 1.0, %v1406
    %1420 = vrot.lane.b32.xlu0 %v1417, 96
    %v1421 = vpop.permute.xlu0 %1420
    %v1423 = vmul.f32 %v1418, %v1421
    %v1424 = vmul.f32 %v1406, %v1135
    %v1425 = vadd.f32 %v1423, %v1424
    %s1426 = scalar_lea.vmem %s0, 8
    %v1427 = vld [vmem:[%s1426] sm:$0x3]
    %s1428 = scalar_lea.vmem %s1, 8
    %v1429 = vld [vmem:[%s1428] sm:$0x3]
    %1431 = vset.pattern.permute.xlu0 0
    %1432 = vperm.xlu0 %1431, %v1427
    %v1433 = vpop.permute.xlu0 %1432
    %v1435 = vmul.f32 %v1433, %v237
    %1437 = vset.pattern.permute.xlu0 0
    %1438 = vperm.xlu0 %1437, %v1429
    %v1439 = vpop.permute.xlu0 %1438
    %v1441 = vmul.f32 %v1439, %v247
    %v1442 = vadd.f32 %v1435, %v1441
    %v1443 = vadd.f32 %v1442, %v254
    %1444 = vmatprep.subr.mxu0 0.0
    %1445 = vmatpush1.msra.mxu0 0.0
    %1446 = vmatprep.subr.mxu0 0.0
    %1447 = vmatpush1.msra.mxu0 0.0
    %1448 = vmatprep.subr.mxu0 0.0
    %1449 = vmatpush1.msra.mxu0 0.0
    %1450 = vmatprep.subr.mxu0 0.0
    %1451 = vmatpush1.msra.mxu0 0.0
    %1452 = vmatprep.subr.mxu0 0.0
    %1453 = vmatpush1.msra.mxu0 0.0
    %1454 = vmatprep.subr.mxu0 0.0
    %1455 = vmatpush1.msra.mxu0 0.0
    %1456 = vmatprep.subr.mxu0 0.0
    %1457 = vmatpush1.msra.mxu0 0.0
    %1458 = vmatprep.subr.mxu0 0.0
    %1459 = vmatpush1.msra.mxu0 0.0
    %1460 = vmatprep.subr.mxu0 0.0
    %1461 = vmatpush1.msra.mxu0 0.0
    %1462 = vmatprep.subr.mxu0 0.0
    %1463 = vmatpush1.msra.mxu0 0.0
    %1464 = vmatprep.subr.mxu0 0.0
    %1465 = vmatpush1.msra.mxu0 0.0
    %1466 = vmatprep.subr.mxu0 0.0
    %1467 = vmatpush1.msra.mxu0 0.0
    %1468 = vmatprep.subr.mxu0 0.0
    %1469 = vmatpush1.msra.mxu0 %v226
    %1470 = vmatprep.subr.mxu0 0.0
    %1471 = vmatpush1.msra.mxu0 %v225
    %1472 = vmatprep.subr.mxu0 0.0
    %1473 = vmatpush1.msra.mxu0 %v224
    %1474 = vmatprep.subr.mxu0 0.0
    %1475 = vmatpush1.msra.mxu0 %v223
    %1476 = vmatprep.subr.mxu0 0.0
    %1477 = vmatpush2.msra.mxu0 0.0
    %1478 = vmatprep.subr.mxu0 0.0
    %1479 = vmatpush2.msra.mxu0 0.0
    %1480 = vmatprep.subr.mxu0 0.0
    %1481 = vmatpush2.msra.mxu0 0.0
    %1482 = vmatprep.subr.mxu0 0.0
    %1483 = vmatpush2.msra.mxu0 0.0
    %1484 = vmatprep.subr.mxu0 0.0
    %1485 = vmatpush2.msra.mxu0 0.0
    %1486 = vmatprep.subr.mxu0 0.0
    %1487 = vmatpush2.msra.mxu0 0.0
    %1488 = vmatprep.subr.mxu0 0.0
    %1489 = vmatpush2.msra.mxu0 0.0
    %1490 = vmatprep.subr.mxu0 0.0
    %1491 = vmatpush2.msra.mxu0 0.0
    %1492 = vmatprep.subr.mxu0 0.0
    %1493 = vmatpush2.msra.mxu0 0.0
    %1494 = vmatprep.subr.mxu0 0.0
    %1495 = vmatpush2.msra.mxu0 0.0
    %1496 = vmatprep.subr.mxu0 0.0
    %1497 = vmatpush2.msra.mxu0 0.0
    %1498 = vmatprep.subr.mxu0 0.0
    %1499 = vmatpush2.msra.mxu0 0.0
    %1500 = vmatprep.subr.mxu0 0.0
    %1501 = vmatpush2.msra.mxu0 0.0
    %1502 = vmatprep.subr.mxu0 0.0
    %1503 = vmatpush2.msra.mxu0 0.0
    %1504 = vmatprep.subr.mxu0 0.0
    %1505 = vmatpush2.msra.mxu0 0.0
    %1506 = vmatprep.subr.mxu0 0.0
    %1507 = vmatpush2.msra.mxu0 0.0
    %1508 = vmatprep.mubr.f32.mxu0 0.0
    %1509 = vmatmul.mubr.f32.gmra.mxu0 %v1253
    %v1510 = vpop.f32.mrf.mxu0
    %v1511 = vadd.f32 %v261, %v1510
    %v1512 = vpop.f32.mrf.mxu0
    %1513 = vdwg.mxu0
    %v1514 = vadd.f32 %v1443, %v1511
    %v1515 = vxor.u32 %v1514, 2147483648
    %v1516 = vmul.f32 %v1515, 1.442695
    %v1517 = vpow.pop %v1516
    %v1518 = vadd.f32 %v1517, 1.0
    %v1519 = vrcp.pop %v1518
    %v1520 = vmul.f32 1.0, %v1519
    %1522 = vrot.lane.b32.xlu0 %v1511, 64
    %v1523 = vpop.permute.xlu0 %1522
    %v1525 = vmul.f32 %v1520, %v1523
    %1527 = vrot.lane.b32.xlu0 %v1525, 64
    %v1528 = vpop.permute.xlu0 %1527
    %v1530 = vadd.f32 %v1443, %v1528
    %v1531 = vtanh.pop %v1530
    %v1532 = vsub.f32 1.0, %v1520
    %1534 = vrot.lane.b32.xlu0 %v1531, 96
    %v1535 = vpop.permute.xlu0 %1534
    %v1537 = vmul.f32 %v1532, %v1535
    %v1538 = vmul.f32 %v1520, %v1249
    %v1539 = vadd.f32 %v1537, %v1538
    %1541 = vrot.lane.b32.xlu0 %v1539, 96
    %v1542 = vpop.permute.xlu0 %1541
    %v1543 = vsel %vm263, %v1542, 0
    %1545 = vmatprep.subr.mxu0 0.0
    %1546 = vmatpush1.msra.mxu0 0.0
    %1547 = vmatprep.subr.mxu0 0.0
    %1548 = vmatpush1.msra.mxu0 0.0
    %1549 = vmatprep.subr.mxu0 0.0
    %1550 = vmatpush1.msra.mxu0 0.0
    %1551 = vmatprep.subr.mxu0 0.0
    %1552 = vmatpush1.msra.mxu0 0.0
    %1553 = vmatprep.subr.mxu0 0.0
    %1554 = vmatpush1.msra.mxu0 0.0
    %1555 = vmatprep.subr.mxu0 0.0
    %1556 = vmatpush1.msra.mxu0 0.0
    %1557 = vmatprep.subr.mxu0 0.0
    %1558 = vmatpush1.msra.mxu0 0.0
    %1559 = vmatprep.subr.mxu0 0.0
    %1560 = vmatpush1.msra.mxu0 0.0
    %1561 = vmatprep.subr.mxu0 0.0
    %1562 = vmatpush1.msra.mxu0 0.0
    %1563 = vmatprep.subr.mxu0 0.0
    %1564 = vmatpush1.msra.mxu0 0.0
    %1565 = vmatprep.subr.mxu0 0.0
    %1566 = vmatpush1.msra.mxu0 0.0
    %1567 = vmatprep.subr.mxu0 0.0
    %1568 = vmatpush1.msra.mxu0 0.0
    %1569 = vmatprep.subr.mxu0 0.0
    %1570 = vmatpush1.msra.mxu0 %v366
    %1571 = vmatprep.subr.mxu0 0.0
    %1572 = vmatpush1.msra.mxu0 %v365
    %1573 = vmatprep.subr.mxu0 0.0
    %1574 = vmatpush1.msra.mxu0 %v364
    %1575 = vmatprep.subr.mxu0 0.0
    %1576 = vmatpush1.msra.mxu0 %v363
    %1577 = vmatprep.subr.mxu0 0.0
    %1578 = vmatpush2.msra.mxu0 0.0
    %1579 = vmatprep.subr.mxu0 0.0
    %1580 = vmatpush2.msra.mxu0 0.0
    %1581 = vmatprep.subr.mxu0 0.0
    %1582 = vmatpush2.msra.mxu0 0.0
    %1583 = vmatprep.subr.mxu0 0.0
    %1584 = vmatpush2.msra.mxu0 0.0
    %1585 = vmatprep.subr.mxu0 0.0
    %1586 = vmatpush2.msra.mxu0 0.0
    %1587 = vmatprep.subr.mxu0 0.0
    %1588 = vmatpush2.msra.mxu0 0.0
    %1589 = vmatprep.subr.mxu0 0.0
    %1590 = vmatpush2.msra.mxu0 0.0
    %1591 = vmatprep.subr.mxu0 0.0
    %1592 = vmatpush2.msra.mxu0 0.0
    %1593 = vmatprep.subr.mxu0 0.0
    %1594 = vmatpush2.msra.mxu0 0.0
    %1595 = vmatprep.subr.mxu0 0.0
    %1596 = vmatpush2.msra.mxu0 0.0
    %1597 = vmatprep.subr.mxu0 0.0
    %1598 = vmatpush2.msra.mxu0 0.0
    %1599 = vmatprep.subr.mxu0 0.0
    %1600 = vmatpush2.msra.mxu0 0.0
    %1601 = vmatprep.subr.mxu0 0.0
    %1602 = vmatpush2.msra.mxu0 0.0
    %1603 = vmatprep.subr.mxu0 0.0
    %1604 = vmatpush2.msra.mxu0 0.0
    %1605 = vmatprep.subr.mxu0 0.0
    %1606 = vmatpush2.msra.mxu0 0.0
    %1607 = vmatprep.subr.mxu0 0.0
    %1608 = vmatpush2.msra.mxu0 0.0
    %1609 = vmatprep.mubr.f32.mxu0 0.0
    %1610 = vmatmul.mubr.f32.gmra.mxu0 %v1543
    %v1611 = vpop.f32.mrf.mxu0
    %v1612 = vadd.f32 %v377, %v1611
    %v1613 = vpop.f32.mrf.mxu0
    %1614 = vdwg.mxu0
    %1616 = vrot.lane.b32.xlu0 %v1425, 96
    %v1617 = vpop.permute.xlu0 %1616
    %v1618 = vsel %vm263, %v1617, 0
    %1620 = vmatprep.subr.mxu0 0.0
    %1621 = vmatpush1.msra.mxu0 0.0
    %1622 = vmatprep.subr.mxu0 0.0
    %1623 = vmatpush1.msra.mxu0 0.0
    %1624 = vmatprep.subr.mxu0 0.0
    %1625 = vmatpush1.msra.mxu0 0.0
    %1626 = vmatprep.subr.mxu0 0.0
    %1627 = vmatpush1.msra.mxu0 0.0
    %1628 = vmatprep.subr.mxu0 0.0
    %1629 = vmatpush1.msra.mxu0 0.0
    %1630 = vmatprep.subr.mxu0 0.0
    %1631 = vmatpush1.msra.mxu0 0.0
    %1632 = vmatprep.subr.mxu0 0.0
    %1633 = vmatpush1.msra.mxu0 0.0
    %1634 = vmatprep.subr.mxu0 0.0
    %1635 = vmatpush1.msra.mxu0 0.0
    %1636 = vmatprep.subr.mxu0 0.0
    %1637 = vmatpush1.msra.mxu0 0.0
    %1638 = vmatprep.subr.mxu0 0.0
    %1639 = vmatpush1.msra.mxu0 0.0
    %1640 = vmatprep.subr.mxu0 0.0
    %1641 = vmatpush1.msra.mxu0 0.0
    %1642 = vmatprep.subr.mxu0 0.0
    %1643 = vmatpush1.msra.mxu0 0.0
    %1644 = vmatprep.subr.mxu0 0.0
    %1645 = vmatpush1.msra.mxu0 %v370
    %1646 = vmatprep.subr.mxu0 0.0
    %1647 = vmatpush1.msra.mxu0 %v369
    %1648 = vmatprep.subr.mxu0 0.0
    %1649 = vmatpush1.msra.mxu0 %v368
    %1650 = vmatprep.subr.mxu0 0.0
    %1651 = vmatpush1.msra.mxu0 %v367
    %1652 = vmatprep.subr.mxu0 0.0
    %1653 = vmatpush2.msra.mxu0 0.0
    %1654 = vmatprep.subr.mxu0 0.0
    %1655 = vmatpush2.msra.mxu0 0.0
    %1656 = vmatprep.subr.mxu0 0.0
    %1657 = vmatpush2.msra.mxu0 0.0
    %1658 = vmatprep.subr.mxu0 0.0
    %1659 = vmatpush2.msra.mxu0 0.0
    %1660 = vmatprep.subr.mxu0 0.0
    %1661 = vmatpush2.msra.mxu0 0.0
    %1662 = vmatprep.subr.mxu0 0.0
    %1663 = vmatpush2.msra.mxu0 0.0
    %1664 = vmatprep.subr.mxu0 0.0
    %1665 = vmatpush2.msra.mxu0 0.0
    %1666 = vmatprep.subr.mxu0 0.0
    %1667 = vmatpush2.msra.mxu0 0.0
    %1668 = vmatprep.subr.mxu0 0.0
    %1669 = vmatpush2.msra.mxu0 0.0
    %1670 = vmatprep.subr.mxu0 0.0
    %1671 = vmatpush2.msra.mxu0 0.0
    %1672 = vmatprep.subr.mxu0 0.0
    %1673 = vmatpush2.msra.mxu0 0.0
    %1674 = vmatprep.subr.mxu0 0.0
    %1675 = vmatpush2.msra.mxu0 0.0
    %1676 = vmatprep.subr.mxu0 0.0
    %1677 = vmatpush2.msra.mxu0 0.0
    %1678 = vmatprep.subr.mxu0 0.0
    %1679 = vmatpush2.msra.mxu0 0.0
    %1680 = vmatprep.subr.mxu0 0.0
    %1681 = vmatpush2.msra.mxu0 0.0
    %1682 = vmatprep.subr.mxu0 0.0
    %1683 = vmatpush2.msra.mxu0 0.0
    %1684 = vmatprep.mubr.f32.mxu0 0.0
    %1685 = vmatmul.mubr.f32.gmra.mxu0 %v1618
    %v1686 = vpop.f32.mrf.mxu0
    %v1687 = vadd.f32 %v458, %v1686
    %v1688 = vpop.f32.mrf.mxu0
    %1689 = vdwg.mxu0
    %v1690 = vadd.f32 %v1612, %v1687
    %v1691 = vxor.u32 %v1690, 2147483648
    %v1692 = vmul.f32 %v1691, 1.442695
    %v1693 = vpow.pop %v1692
    %v1694 = vadd.f32 %v1693, 1.0
    %v1695 = vrcp.pop %v1694
    %v1696 = vmul.f32 1.0, %v1695
    %1698 = vrot.lane.b32.xlu0 %v1687, 64
    %v1699 = vpop.permute.xlu0 %1698
    %v1701 = vmul.f32 %v1696, %v1699
    %1703 = vrot.lane.b32.xlu0 %v1701, 64
    %v1704 = vpop.permute.xlu0 %1703
    %v1706 = vadd.f32 %v1612, %v1704
    %v1707 = vtanh.pop %v1706
    %v1708 = vsub.f32 1.0, %v1696
    %1710 = vrot.lane.b32.xlu0 %v1707, 96
    %v1711 = vpop.permute.xlu0 %1710
    %v1713 = vmul.f32 %v1708, %v1711
    %v1714 = vmul.f32 %v1696, %v1425
    %v1715 = vadd.f32 %v1713, %v1714
    %s1716 = scalar_lea.vmem %s0, 10
    %v1717 = vld [vmem:[%s1716] sm:$0x3]
    %s1718 = scalar_lea.vmem %s1, 10
    %v1719 = vld [vmem:[%s1718] sm:$0x3]
    %1721 = vset.pattern.permute.xlu0 0
    %1722 = vperm.xlu0 %1721, %v1717
    %v1723 = vpop.permute.xlu0 %1722
    %v1725 = vmul.f32 %v1723, %v237
    %1727 = vset.pattern.permute.xlu0 0
    %1728 = vperm.xlu0 %1727, %v1719
    %v1729 = vpop.permute.xlu0 %1728
    %v1731 = vmul.f32 %v1729, %v247
    %v1732 = vadd.f32 %v1725, %v1731
    %v1733 = vadd.f32 %v1732, %v254
    %1734 = vmatprep.subr.mxu0 0.0
    %1735 = vmatpush1.msra.mxu0 0.0
    %1736 = vmatprep.subr.mxu0 0.0
    %1737 = vmatpush1.msra.mxu0 0.0
    %1738 = vmatprep.subr.mxu0 0.0
    %1739 = vmatpush1.msra.mxu0 0.0
    %1740 = vmatprep.subr.mxu0 0.0
    %1741 = vmatpush1.msra.mxu0 0.0
    %1742 = vmatprep.subr.mxu0 0.0
    %1743 = vmatpush1.msra.mxu0 0.0
    %1744 = vmatprep.subr.mxu0 0.0
    %1745 = vmatpush1.msra.mxu0 0.0
    %1746 = vmatprep.subr.mxu0 0.0
    %1747 = vmatpush1.msra.mxu0 0.0
    %1748 = vmatprep.subr.mxu0 0.0
    %1749 = vmatpush1.msra.mxu0 0.0
    %1750 = vmatprep.subr.mxu0 0.0
    %1751 = vmatpush1.msra.mxu0 0.0
    %1752 = vmatprep.subr.mxu0 0.0
    %1753 = vmatpush1.msra.mxu0 0.0
    %1754 = vmatprep.subr.mxu0 0.0
    %1755 = vmatpush1.msra.mxu0 0.0
    %1756 = vmatprep.subr.mxu0 0.0
    %1757 = vmatpush1.msra.mxu0 0.0
    %1758 = vmatprep.subr.mxu0 0.0
    %1759 = vmatpush1.msra.mxu0 %v226
    %1760 = vmatprep.subr.mxu0 0.0
    %1761 = vmatpush1.msra.mxu0 %v225
    %1762 = vmatprep.subr.mxu0 0.0
    %1763 = vmatpush1.msra.mxu0 %v224
    %1764 = vmatprep.subr.mxu0 0.0
    %1765 = vmatpush1.msra.mxu0 %v223
    %1766 = vmatprep.subr.mxu0 0.0
    %1767 = vmatpush2.msra.mxu0 0.0
    %1768 = vmatprep.subr.mxu0 0.0
    %1769 = vmatpush2.msra.mxu0 0.0
    %1770 = vmatprep.subr.mxu0 0.0
    %1771 = vmatpush2.msra.mxu0 0.0
    %1772 = vmatprep.subr.mxu0 0.0
    %1773 = vmatpush2.msra.mxu0 0.0
    %1774 = vmatprep.subr.mxu0 0.0
    %1775 = vmatpush2.msra.mxu0 0.0
    %1776 = vmatprep.subr.mxu0 0.0
    %1777 = vmatpush2.msra.mxu0 0.0
    %1778 = vmatprep.subr.mxu0 0.0
    %1779 = vmatpush2.msra.mxu0 0.0
    %1780 = vmatprep.subr.mxu0 0.0
    %1781 = vmatpush2.msra.mxu0 0.0
    %1782 = vmatprep.subr.mxu0 0.0
    %1783 = vmatpush2.msra.mxu0 0.0
    %1784 = vmatprep.subr.mxu0 0.0
    %1785 = vmatpush2.msra.mxu0 0.0
    %1786 = vmatprep.subr.mxu0 0.0
    %1787 = vmatpush2.msra.mxu0 0.0
    %1788 = vmatprep.subr.mxu0 0.0
    %1789 = vmatpush2.msra.mxu0 0.0
    %1790 = vmatprep.subr.mxu0 0.0
    %1791 = vmatpush2.msra.mxu0 0.0
    %1792 = vmatprep.subr.mxu0 0.0
    %1793 = vmatpush2.msra.mxu0 0.0
    %1794 = vmatprep.subr.mxu0 0.0
    %1795 = vmatpush2.msra.mxu0 0.0
    %1796 = vmatprep.subr.mxu0 0.0
    %1797 = vmatpush2.msra.mxu0 0.0
    %1798 = vmatprep.mubr.f32.mxu0 0.0
    %1799 = vmatmul.mubr.f32.gmra.mxu0 %v1543
    %v1800 = vpop.f32.mrf.mxu0
    %v1801 = vadd.f32 %v261, %v1800
    %v1802 = vpop.f32.mrf.mxu0
    %1803 = vdwg.mxu0
    %v1804 = vadd.f32 %v1733, %v1801
    %v1805 = vxor.u32 %v1804, 2147483648
    %v1806 = vmul.f32 %v1805, 1.442695
    %v1807 = vpow.pop %v1806
    %v1808 = vadd.f32 %v1807, 1.0
    %v1809 = vrcp.pop %v1808
    %v1810 = vmul.f32 1.0, %v1809
    %1812 = vrot.lane.b32.xlu0 %v1801, 64
    %v1813 = vpop.permute.xlu0 %1812
    %v1815 = vmul.f32 %v1810, %v1813
    %1817 = vrot.lane.b32.xlu0 %v1815, 64
    %v1818 = vpop.permute.xlu0 %1817
    %v1820 = vadd.f32 %v1733, %v1818
    %v1821 = vtanh.pop %v1820
    %v1822 = vsub.f32 1.0, %v1810
    %1824 = vrot.lane.b32.xlu0 %v1821, 96
    %v1825 = vpop.permute.xlu0 %1824
    %v1827 = vmul.f32 %v1822, %v1825
    %v1828 = vmul.f32 %v1810, %v1539
    %v1829 = vadd.f32 %v1827, %v1828
    %1831 = vrot.lane.b32.xlu0 %v1829, 96
    %v1832 = vpop.permute.xlu0 %1831
    %v1833 = vsel %vm263, %v1832, 0
    %1835 = vmatprep.subr.mxu0 0.0
    %1836 = vmatpush1.msra.mxu0 0.0
    %1837 = vmatprep.subr.mxu0 0.0
    %1838 = vmatpush1.msra.mxu0 0.0
    %1839 = vmatprep.subr.mxu0 0.0
    %1840 = vmatpush1.msra.mxu0 0.0
    %1841 = vmatprep.subr.mxu0 0.0
    %1842 = vmatpush1.msra.mxu0 0.0
    %1843 = vmatprep.subr.mxu0 0.0
    %1844 = vmatpush1.msra.mxu0 0.0
    %1845 = vmatprep.subr.mxu0 0.0
    %1846 = vmatpush1.msra.mxu0 0.0
    %1847 = vmatprep.subr.mxu0 0.0
    %1848 = vmatpush1.msra.mxu0 0.0
    %1849 = vmatprep.subr.mxu0 0.0
    %1850 = vmatpush1.msra.mxu0 0.0
    %1851 = vmatprep.subr.mxu0 0.0
    %1852 = vmatpush1.msra.mxu0 0.0
    %1853 = vmatprep.subr.mxu0 0.0
    %1854 = vmatpush1.msra.mxu0 0.0
    %1855 = vmatprep.subr.mxu0 0.0
    %1856 = vmatpush1.msra.mxu0 0.0
    %1857 = vmatprep.subr.mxu0 0.0
    %1858 = vmatpush1.msra.mxu0 0.0
    %1859 = vmatprep.subr.mxu0 0.0
    %1860 = vmatpush1.msra.mxu0 %v366
    %1861 = vmatprep.subr.mxu0 0.0
    %1862 = vmatpush1.msra.mxu0 %v365
    %1863 = vmatprep.subr.mxu0 0.0
    %1864 = vmatpush1.msra.mxu0 %v364
    %1865 = vmatprep.subr.mxu0 0.0
    %1866 = vmatpush1.msra.mxu0 %v363
    %1867 = vmatprep.subr.mxu0 0.0
    %1868 = vmatpush2.msra.mxu0 0.0
    %1869 = vmatprep.subr.mxu0 0.0
    %1870 = vmatpush2.msra.mxu0 0.0
    %1871 = vmatprep.subr.mxu0 0.0
    %1872 = vmatpush2.msra.mxu0 0.0
    %1873 = vmatprep.subr.mxu0 0.0
    %1874 = vmatpush2.msra.mxu0 0.0
    %1875 = vmatprep.subr.mxu0 0.0
    %1876 = vmatpush2.msra.mxu0 0.0
    %1877 = vmatprep.subr.mxu0 0.0
    %1878 = vmatpush2.msra.mxu0 0.0
    %1879 = vmatprep.subr.mxu0 0.0
    %1880 = vmatpush2.msra.mxu0 0.0
    %1881 = vmatprep.subr.mxu0 0.0
    %1882 = vmatpush2.msra.mxu0 0.0
    %1883 = vmatprep.subr.mxu0 0.0
    %1884 = vmatpush2.msra.mxu0 0.0
    %1885 = vmatprep.subr.mxu0 0.0
    %1886 = vmatpush2.msra.mxu0 0.0
    %1887 = vmatprep.subr.mxu0 0.0
    %1888 = vmatpush2.msra.mxu0 0.0
    %1889 = vmatprep.subr.mxu0 0.0
    %1890 = vmatpush2.msra.mxu0 0.0
    %1891 = vmatprep.subr.mxu0 0.0
    %1892 = vmatpush2.msra.mxu0 0.0
    %1893 = vmatprep.subr.mxu0 0.0
    %1894 = vmatpush2.msra.mxu0 0.0
    %1895 = vmatprep.subr.mxu0 0.0
    %1896 = vmatpush2.msra.mxu0 0.0
    %1897 = vmatprep.subr.mxu0 0.0
    %1898 = vmatpush2.msra.mxu0 0.0
    %1899 = vmatprep.mubr.f32.mxu0 0.0
    %1900 = vmatmul.mubr.f32.gmra.mxu0 %v1833
    %v1901 = vpop.f32.mrf.mxu0
    %v1902 = vadd.f32 %v377, %v1901
    %v1903 = vpop.f32.mrf.mxu0
    %1904 = vdwg.mxu0
    %1906 = vrot.lane.b32.xlu0 %v1715, 96
    %v1907 = vpop.permute.xlu0 %1906
    %v1908 = vsel %vm263, %v1907, 0
    %1910 = vmatprep.subr.mxu0 0.0
    %1911 = vmatpush1.msra.mxu0 0.0
    %1912 = vmatprep.subr.mxu0 0.0
    %1913 = vmatpush1.msra.mxu0 0.0
    %1914 = vmatprep.subr.mxu0 0.0
    %1915 = vmatpush1.msra.mxu0 0.0
    %1916 = vmatprep.subr.mxu0 0.0
    %1917 = vmatpush1.msra.mxu0 0.0
    %1918 = vmatprep.subr.mxu0 0.0
    %1919 = vmatpush1.msra.mxu0 0.0
    %1920 = vmatprep.subr.mxu0 0.0
    %1921 = vmatpush1.msra.mxu0 0.0
    %1922 = vmatprep.subr.mxu0 0.0
    %1923 = vmatpush1.msra.mxu0 0.0
    %1924 = vmatprep.subr.mxu0 0.0
    %1925 = vmatpush1.msra.mxu0 0.0
    %1926 = vmatprep.subr.mxu0 0.0
    %1927 = vmatpush1.msra.mxu0 0.0
    %1928 = vmatprep.subr.mxu0 0.0
    %1929 = vmatpush1.msra.mxu0 0.0
    %1930 = vmatprep.subr.mxu0 0.0
    %1931 = vmatpush1.msra.mxu0 0.0
    %1932 = vmatprep.subr.mxu0 0.0
    %1933 = vmatpush1.msra.mxu0 0.0
    %1934 = vmatprep.subr.mxu0 0.0
    %1935 = vmatpush1.msra.mxu0 %v370
    %1936 = vmatprep.subr.mxu0 0.0
    %1937 = vmatpush1.msra.mxu0 %v369
    %1938 = vmatprep.subr.mxu0 0.0
    %1939 = vmatpush1.msra.mxu0 %v368
    %1940 = vmatprep.subr.mxu0 0.0
    %1941 = vmatpush1.msra.mxu0 %v367
    %1942 = vmatprep.subr.mxu0 0.0
    %1943 = vmatpush2.msra.mxu0 0.0
    %1944 = vmatprep.subr.mxu0 0.0
    %1945 = vmatpush2.msra.mxu0 0.0
    %1946 = vmatprep.subr.mxu0 0.0
    %1947 = vmatpush2.msra.mxu0 0.0
    %1948 = vmatprep.subr.mxu0 0.0
    %1949 = vmatpush2.msra.mxu0 0.0
    %1950 = vmatprep.subr.mxu0 0.0
    %1951 = vmatpush2.msra.mxu0 0.0
    %1952 = vmatprep.subr.mxu0 0.0
    %1953 = vmatpush2.msra.mxu0 0.0
    %1954 = vmatprep.subr.mxu0 0.0
    %1955 = vmatpush2.msra.mxu0 0.0
    %1956 = vmatprep.subr.mxu0 0.0
    %1957 = vmatpush2.msra.mxu0 0.0
    %1958 = vmatprep.subr.mxu0 0.0
    %1959 = vmatpush2.msra.mxu0 0.0
    %1960 = vmatprep.subr.mxu0 0.0
    %1961 = vmatpush2.msra.mxu0 0.0
    %1962 = vmatprep.subr.mxu0 0.0
    %1963 = vmatpush2.msra.mxu0 0.0
    %1964 = vmatprep.subr.mxu0 0.0
    %1965 = vmatpush2.msra.mxu0 0.0
    %1966 = vmatprep.subr.mxu0 0.0
    %1967 = vmatpush2.msra.mxu0 0.0
    %1968 = vmatprep.subr.mxu0 0.0
    %1969 = vmatpush2.msra.mxu0 0.0
    %1970 = vmatprep.subr.mxu0 0.0
    %1971 = vmatpush2.msra.mxu0 0.0
    %1972 = vmatprep.subr.mxu0 0.0
    %1973 = vmatpush2.msra.mxu0 0.0
    %1974 = vmatprep.mubr.f32.mxu0 0.0
    %1975 = vmatmul.mubr.f32.gmra.mxu0 %v1908
    %v1976 = vpop.f32.mrf.mxu0
    %v1977 = vadd.f32 %v458, %v1976
    %v1978 = vpop.f32.mrf.mxu0
    %1979 = vdwg.mxu0
    %v1980 = vadd.f32 %v1902, %v1977
    %v1981 = vxor.u32 %v1980, 2147483648
    %v1982 = vmul.f32 %v1981, 1.442695
    %v1983 = vpow.pop %v1982
    %v1984 = vadd.f32 %v1983, 1.0
    %v1985 = vrcp.pop %v1984
    %v1986 = vmul.f32 1.0, %v1985
    %1988 = vrot.lane.b32.xlu0 %v1977, 64
    %v1989 = vpop.permute.xlu0 %1988
    %v1991 = vmul.f32 %v1986, %v1989
    %1993 = vrot.lane.b32.xlu0 %v1991, 64
    %v1994 = vpop.permute.xlu0 %1993
    %v1996 = vadd.f32 %v1902, %v1994
    %v1997 = vtanh.pop %v1996
    %v1998 = vsub.f32 1.0, %v1986
    %2000 = vrot.lane.b32.xlu0 %v1997, 96
    %v2001 = vpop.permute.xlu0 %2000
    %v2003 = vmul.f32 %v1998, %v2001
    %v2004 = vmul.f32 %v1986, %v1715
    %v2005 = vadd.f32 %v2003, %v2004
    %s2006 = scalar_lea.vmem %s0, 12
    %v2007 = vld [vmem:[%s2006] sm:$0x3]
    %s2008 = scalar_lea.vmem %s1, 12
    %v2009 = vld [vmem:[%s2008] sm:$0x3]
    %2011 = vset.pattern.permute.xlu0 0
    %2012 = vperm.xlu0 %2011, %v2007
    %v2013 = vpop.permute.xlu0 %2012
    %v2015 = vmul.f32 %v2013, %v237
    %2017 = vset.pattern.permute.xlu0 0
    %2018 = vperm.xlu0 %2017, %v2009
    %v2019 = vpop.permute.xlu0 %2018
    %v2021 = vmul.f32 %v2019, %v247
    %v2022 = vadd.f32 %v2015, %v2021
    %v2023 = vadd.f32 %v2022, %v254
    %2024 = vmatprep.subr.mxu0 0.0
    %2025 = vmatpush1.msra.mxu0 0.0
    %2026 = vmatprep.subr.mxu0 0.0
    %2027 = vmatpush1.msra.mxu0 0.0
    %2028 = vmatprep.subr.mxu0 0.0
    %2029 = vmatpush1.msra.mxu0 0.0
    %2030 = vmatprep.subr.mxu0 0.0
    %2031 = vmatpush1.msra.mxu0 0.0
    %2032 = vmatprep.subr.mxu0 0.0
    %2033 = vmatpush1.msra.mxu0 0.0
    %2034 = vmatprep.subr.mxu0 0.0
    %2035 = vmatpush1.msra.mxu0 0.0
    %2036 = vmatprep.subr.mxu0 0.0
    %2037 = vmatpush1.msra.mxu0 0.0
    %2038 = vmatprep.subr.mxu0 0.0
    %2039 = vmatpush1.msra.mxu0 0.0
    %2040 = vmatprep.subr.mxu0 0.0
    %2041 = vmatpush1.msra.mxu0 0.0
    %2042 = vmatprep.subr.mxu0 0.0
    %2043 = vmatpush1.msra.mxu0 0.0
    %2044 = vmatprep.subr.mxu0 0.0
    %2045 = vmatpush1.msra.mxu0 0.0
    %2046 = vmatprep.subr.mxu0 0.0
    %2047 = vmatpush1.msra.mxu0 0.0
    %2048 = vmatprep.subr.mxu0 0.0
    %2049 = vmatpush1.msra.mxu0 %v226
    %2050 = vmatprep.subr.mxu0 0.0
    %2051 = vmatpush1.msra.mxu0 %v225
    %2052 = vmatprep.subr.mxu0 0.0
    %2053 = vmatpush1.msra.mxu0 %v224
    %2054 = vmatprep.subr.mxu0 0.0
    %2055 = vmatpush1.msra.mxu0 %v223
    %2056 = vmatprep.subr.mxu0 0.0
    %2057 = vmatpush2.msra.mxu0 0.0
    %2058 = vmatprep.subr.mxu0 0.0
    %2059 = vmatpush2.msra.mxu0 0.0
    %2060 = vmatprep.subr.mxu0 0.0
    %2061 = vmatpush2.msra.mxu0 0.0
    %2062 = vmatprep.subr.mxu0 0.0
    %2063 = vmatpush2.msra.mxu0 0.0
    %2064 = vmatprep.subr.mxu0 0.0
    %2065 = vmatpush2.msra.mxu0 0.0
    %2066 = vmatprep.subr.mxu0 0.0
    %2067 = vmatpush2.msra.mxu0 0.0
    %2068 = vmatprep.subr.mxu0 0.0
    %2069 = vmatpush2.msra.mxu0 0.0
    %2070 = vmatprep.subr.mxu0 0.0
    %2071 = vmatpush2.msra.mxu0 0.0
    %2072 = vmatprep.subr.mxu0 0.0
    %2073 = vmatpush2.msra.mxu0 0.0
    %2074 = vmatprep.subr.mxu0 0.0
    %2075 = vmatpush2.msra.mxu0 0.0
    %2076 = vmatprep.subr.mxu0 0.0
    %2077 = vmatpush2.msra.mxu0 0.0
    %2078 = vmatprep.subr.mxu0 0.0
    %2079 = vmatpush2.msra.mxu0 0.0
    %2080 = vmatprep.subr.mxu0 0.0
    %2081 = vmatpush2.msra.mxu0 0.0
    %2082 = vmatprep.subr.mxu0 0.0
    %2083 = vmatpush2.msra.mxu0 0.0
    %2084 = vmatprep.subr.mxu0 0.0
    %2085 = vmatpush2.msra.mxu0 0.0
    %2086 = vmatprep.subr.mxu0 0.0
    %2087 = vmatpush2.msra.mxu0 0.0
    %2088 = vmatprep.mubr.f32.mxu0 0.0
    %2089 = vmatmul.mubr.f32.gmra.mxu0 %v1833
    %v2090 = vpop.f32.mrf.mxu0
    %v2091 = vadd.f32 %v261, %v2090
    %v2092 = vpop.f32.mrf.mxu0
    %2093 = vdwg.mxu0
    %v2094 = vadd.f32 %v2023, %v2091
    %v2095 = vxor.u32 %v2094, 2147483648
    %v2096 = vmul.f32 %v2095, 1.442695
    %v2097 = vpow.pop %v2096
    %v2098 = vadd.f32 %v2097, 1.0
    %v2099 = vrcp.pop %v2098
    %v2100 = vmul.f32 1.0, %v2099
    %2102 = vrot.lane.b32.xlu0 %v2091, 64
    %v2103 = vpop.permute.xlu0 %2102
    %v2105 = vmul.f32 %v2100, %v2103
    %2107 = vrot.lane.b32.xlu0 %v2105, 64
    %v2108 = vpop.permute.xlu0 %2107
    %v2110 = vadd.f32 %v2023, %v2108
    %v2111 = vtanh.pop %v2110
    %v2112 = vsub.f32 1.0, %v2100
    %2114 = vrot.lane.b32.xlu0 %v2111, 96
    %v2115 = vpop.permute.xlu0 %2114
    %v2117 = vmul.f32 %v2112, %v2115
    %v2118 = vmul.f32 %v2100, %v1829
    %v2119 = vadd.f32 %v2117, %v2118
    %2121 = vrot.lane.b32.xlu0 %v2119, 96
    %v2122 = vpop.permute.xlu0 %2121
    %v2123 = vsel %vm263, %v2122, 0
    %2125 = vmatprep.subr.mxu0 0.0
    %2126 = vmatpush1.msra.mxu0 0.0
    %2127 = vmatprep.subr.mxu0 0.0
    %2128 = vmatpush1.msra.mxu0 0.0
    %2129 = vmatprep.subr.mxu0 0.0
    %2130 = vmatpush1.msra.mxu0 0.0
    %2131 = vmatprep.subr.mxu0 0.0
    %2132 = vmatpush1.msra.mxu0 0.0
    %2133 = vmatprep.subr.mxu0 0.0
    %2134 = vmatpush1.msra.mxu0 0.0
    %2135 = vmatprep.subr.mxu0 0.0
    %2136 = vmatpush1.msra.mxu0 0.0
    %2137 = vmatprep.subr.mxu0 0.0
    %2138 = vmatpush1.msra.mxu0 0.0
    %2139 = vmatprep.subr.mxu0 0.0
    %2140 = vmatpush1.msra.mxu0 0.0
    %2141 = vmatprep.subr.mxu0 0.0
    %2142 = vmatpush1.msra.mxu0 0.0
    %2143 = vmatprep.subr.mxu0 0.0
    %2144 = vmatpush1.msra.mxu0 0.0
    %2145 = vmatprep.subr.mxu0 0.0
    %2146 = vmatpush1.msra.mxu0 0.0
    %2147 = vmatprep.subr.mxu0 0.0
    %2148 = vmatpush1.msra.mxu0 0.0
    %2149 = vmatprep.subr.mxu0 0.0
    %2150 = vmatpush1.msra.mxu0 %v366
    %2151 = vmatprep.subr.mxu0 0.0
    %2152 = vmatpush1.msra.mxu0 %v365
    %2153 = vmatprep.subr.mxu0 0.0
    %2154 = vmatpush1.msra.mxu0 %v364
    %2155 = vmatprep.subr.mxu0 0.0
    %2156 = vmatpush1.msra.mxu0 %v363
    %2157 = vmatprep.subr.mxu0 0.0
    %2158 = vmatpush2.msra.mxu0 0.0
    %2159 = vmatprep.subr.mxu0 0.0
    %2160 = vmatpush2.msra.mxu0 0.0
    %2161 = vmatprep.subr.mxu0 0.0
    %2162 = vmatpush2.msra.mxu0 0.0
    %2163 = vmatprep.subr.mxu0 0.0
    %2164 = vmatpush2.msra.mxu0 0.0
    %2165 = vmatprep.subr.mxu0 0.0
    %2166 = vmatpush2.msra.mxu0 0.0
    %2167 = vmatprep.subr.mxu0 0.0
    %2168 = vmatpush2.msra.mxu0 0.0
    %2169 = vmatprep.subr.mxu0 0.0
    %2170 = vmatpush2.msra.mxu0 0.0
    %2171 = vmatprep.subr.mxu0 0.0
    %2172 = vmatpush2.msra.mxu0 0.0
    %2173 = vmatprep.subr.mxu0 0.0
    %2174 = vmatpush2.msra.mxu0 0.0
    %2175 = vmatprep.subr.mxu0 0.0
    %2176 = vmatpush2.msra.mxu0 0.0
    %2177 = vmatprep.subr.mxu0 0.0
    %2178 = vmatpush2.msra.mxu0 0.0
    %2179 = vmatprep.subr.mxu0 0.0
    %2180 = vmatpush2.msra.mxu0 0.0
    %2181 = vmatprep.subr.mxu0 0.0
    %2182 = vmatpush2.msra.mxu0 0.0
    %2183 = vmatprep.subr.mxu0 0.0
    %2184 = vmatpush2.msra.mxu0 0.0
    %2185 = vmatprep.subr.mxu0 0.0
    %2186 = vmatpush2.msra.mxu0 0.0
    %2187 = vmatprep.subr.mxu0 0.0
    %2188 = vmatpush2.msra.mxu0 0.0
    %2189 = vmatprep.mubr.f32.mxu0 0.0
    %2190 = vmatmul.mubr.f32.gmra.mxu0 %v2123
    %v2191 = vpop.f32.mrf.mxu0
    %v2192 = vadd.f32 %v377, %v2191
    %v2193 = vpop.f32.mrf.mxu0
    %2194 = vdwg.mxu0
    %2196 = vrot.lane.b32.xlu0 %v2005, 96
    %v2197 = vpop.permute.xlu0 %2196
    %v2198 = vsel %vm263, %v2197, 0
    %2200 = vmatprep.subr.mxu0 0.0
    %2201 = vmatpush1.msra.mxu0 0.0
    %2202 = vmatprep.subr.mxu0 0.0
    %2203 = vmatpush1.msra.mxu0 0.0
    %2204 = vmatprep.subr.mxu0 0.0
    %2205 = vmatpush1.msra.mxu0 0.0
    %2206 = vmatprep.subr.mxu0 0.0
    %2207 = vmatpush1.msra.mxu0 0.0
    %2208 = vmatprep.subr.mxu0 0.0
    %2209 = vmatpush1.msra.mxu0 0.0
    %2210 = vmatprep.subr.mxu0 0.0
    %2211 = vmatpush1.msra.mxu0 0.0
    %2212 = vmatprep.subr.mxu0 0.0
    %2213 = vmatpush1.msra.mxu0 0.0
    %2214 = vmatprep.subr.mxu0 0.0
    %2215 = vmatpush1.msra.mxu0 0.0
    %2216 = vmatprep.subr.mxu0 0.0
    %2217 = vmatpush1.msra.mxu0 0.0
    %2218 = vmatprep.subr.mxu0 0.0
    %2219 = vmatpush1.msra.mxu0 0.0
    %2220 = vmatprep.subr.mxu0 0.0
    %2221 = vmatpush1.msra.mxu0 0.0
    %2222 = vmatprep.subr.mxu0 0.0
    %2223 = vmatpush1.msra.mxu0 0.0
    %2224 = vmatprep.subr.mxu0 0.0
    %2225 = vmatpush1.msra.mxu0 %v370
    %2226 = vmatprep.subr.mxu0 0.0
    %2227 = vmatpush1.msra.mxu0 %v369
    %2228 = vmatprep.subr.mxu0 0.0
    %2229 = vmatpush1.msra.mxu0 %v368
    %2230 = vmatprep.subr.mxu0 0.0
    %2231 = vmatpush1.msra.mxu0 %v367
    %2232 = vmatprep.subr.mxu0 0.0
    %2233 = vmatpush2.msra.mxu0 0.0
    %2234 = vmatprep.subr.mxu0 0.0
    %2235 = vmatpush2.msra.mxu0 0.0
    %2236 = vmatprep.subr.mxu0 0.0
    %2237 = vmatpush2.msra.mxu0 0.0
    %2238 = vmatprep.subr.mxu0 0.0
    %2239 = vmatpush2.msra.mxu0 0.0
    %2240 = vmatprep.subr.mxu0 0.0
    %2241 = vmatpush2.msra.mxu0 0.0
    %2242 = vmatprep.subr.mxu0 0.0
    %2243 = vmatpush2.msra.mxu0 0.0
    %2244 = vmatprep.subr.mxu0 0.0
    %2245 = vmatpush2.msra.mxu0 0.0
    %2246 = vmatprep.subr.mxu0 0.0
    %2247 = vmatpush2.msra.mxu0 0.0
    %2248 = vmatprep.subr.mxu0 0.0
    %2249 = vmatpush2.msra.mxu0 0.0
    %2250 = vmatprep.subr.mxu0 0.0
    %2251 = vmatpush2.msra.mxu0 0.0
    %2252 = vmatprep.subr.mxu0 0.0
    %2253 = vmatpush2.msra.mxu0 0.0
    %2254 = vmatprep.subr.mxu0 0.0
    %2255 = vmatpush2.msra.mxu0 0.0
    %2256 = vmatprep.subr.mxu0 0.0
    %2257 = vmatpush2.msra.mxu0 0.0
    %2258 = vmatprep.subr.mxu0 0.0
    %2259 = vmatpush2.msra.mxu0 0.0
    %2260 = vmatprep.subr.mxu0 0.0
    %2261 = vmatpush2.msra.mxu0 0.0
    %2262 = vmatprep.subr.mxu0 0.0
    %2263 = vmatpush2.msra.mxu0 0.0
    %2264 = vmatprep.mubr.f32.mxu0 0.0
    %2265 = vmatmul.mubr.f32.gmra.mxu0 %v2198
    %v2266 = vpop.f32.mrf.mxu0
    %v2267 = vadd.f32 %v458, %v2266
    %v2268 = vpop.f32.mrf.mxu0
    %2269 = vdwg.mxu0
    %v2270 = vadd.f32 %v2192, %v2267
    %v2271 = vxor.u32 %v2270, 2147483648
    %v2272 = vmul.f32 %v2271, 1.442695
    %v2273 = vpow.pop %v2272
    %v2274 = vadd.f32 %v2273, 1.0
    %v2275 = vrcp.pop %v2274
    %v2276 = vmul.f32 1.0, %v2275
    %2278 = vrot.lane.b32.xlu0 %v2267, 64
    %v2279 = vpop.permute.xlu0 %2278
    %v2281 = vmul.f32 %v2276, %v2279
    %2283 = vrot.lane.b32.xlu0 %v2281, 64
    %v2284 = vpop.permute.xlu0 %2283
    %v2286 = vadd.f32 %v2192, %v2284
    %v2287 = vtanh.pop %v2286
    %v2288 = vsub.f32 1.0, %v2276
    %2290 = vrot.lane.b32.xlu0 %v2287, 96
    %v2291 = vpop.permute.xlu0 %2290
    %v2293 = vmul.f32 %v2288, %v2291
    %v2294 = vmul.f32 %v2276, %v2005
    %v2295 = vadd.f32 %v2293, %v2294
    %s2296 = scalar_lea.vmem %s0, 14
    %v2297 = vld [vmem:[%s2296] sm:$0x3]
    %s2298 = scalar_lea.vmem %s1, 14
    %v2299 = vld [vmem:[%s2298] sm:$0x3]
    %2301 = vset.pattern.permute.xlu0 0
    %2302 = vperm.xlu0 %2301, %v2297
    %v2303 = vpop.permute.xlu0 %2302
    %v2305 = vmul.f32 %v2303, %v237
    %2307 = vset.pattern.permute.xlu0 0
    %2308 = vperm.xlu0 %2307, %v2299
    %v2309 = vpop.permute.xlu0 %2308
    %v2311 = vmul.f32 %v2309, %v247
    %v2312 = vadd.f32 %v2305, %v2311
    %v2313 = vadd.f32 %v2312, %v254
    %2314 = vmatprep.subr.mxu0 0.0
    %2315 = vmatpush1.msra.mxu0 0.0
    %2316 = vmatprep.subr.mxu0 0.0
    %2317 = vmatpush1.msra.mxu0 0.0
    %2318 = vmatprep.subr.mxu0 0.0
    %2319 = vmatpush1.msra.mxu0 0.0
    %2320 = vmatprep.subr.mxu0 0.0
    %2321 = vmatpush1.msra.mxu0 0.0
    %2322 = vmatprep.subr.mxu0 0.0
    %2323 = vmatpush1.msra.mxu0 0.0
    %2324 = vmatprep.subr.mxu0 0.0
    %2325 = vmatpush1.msra.mxu0 0.0
    %2326 = vmatprep.subr.mxu0 0.0
    %2327 = vmatpush1.msra.mxu0 0.0
    %2328 = vmatprep.subr.mxu0 0.0
    %2329 = vmatpush1.msra.mxu0 0.0
    %2330 = vmatprep.subr.mxu0 0.0
    %2331 = vmatpush1.msra.mxu0 0.0
    %2332 = vmatprep.subr.mxu0 0.0
    %2333 = vmatpush1.msra.mxu0 0.0
    %2334 = vmatprep.subr.mxu0 0.0
    %2335 = vmatpush1.msra.mxu0 0.0
    %2336 = vmatprep.subr.mxu0 0.0
    %2337 = vmatpush1.msra.mxu0 0.0
    %2338 = vmatprep.subr.mxu0 0.0
    %2339 = vmatpush1.msra.mxu0 %v226
    %2340 = vmatprep.subr.mxu0 0.0
    %2341 = vmatpush1.msra.mxu0 %v225
    %2342 = vmatprep.subr.mxu0 0.0
    %2343 = vmatpush1.msra.mxu0 %v224
    %2344 = vmatprep.subr.mxu0 0.0
    %2345 = vmatpush1.msra.mxu0 %v223
    %2346 = vmatprep.subr.mxu0 0.0
    %2347 = vmatpush2.msra.mxu0 0.0
    %2348 = vmatprep.subr.mxu0 0.0
    %2349 = vmatpush2.msra.mxu0 0.0
    %2350 = vmatprep.subr.mxu0 0.0
    %2351 = vmatpush2.msra.mxu0 0.0
    %2352 = vmatprep.subr.mxu0 0.0
    %2353 = vmatpush2.msra.mxu0 0.0
    %2354 = vmatprep.subr.mxu0 0.0
    %2355 = vmatpush2.msra.mxu0 0.0
    %2356 = vmatprep.subr.mxu0 0.0
    %2357 = vmatpush2.msra.mxu0 0.0
    %2358 = vmatprep.subr.mxu0 0.0
    %2359 = vmatpush2.msra.mxu0 0.0
    %2360 = vmatprep.subr.mxu0 0.0
    %2361 = vmatpush2.msra.mxu0 0.0
    %2362 = vmatprep.subr.mxu0 0.0
    %2363 = vmatpush2.msra.mxu0 0.0
    %2364 = vmatprep.subr.mxu0 0.0
    %2365 = vmatpush2.msra.mxu0 0.0
    %2366 = vmatprep.subr.mxu0 0.0
    %2367 = vmatpush2.msra.mxu0 0.0
    %2368 = vmatprep.subr.mxu0 0.0
    %2369 = vmatpush2.msra.mxu0 0.0
    %2370 = vmatprep.subr.mxu0 0.0
    %2371 = vmatpush2.msra.mxu0 0.0
    %2372 = vmatprep.subr.mxu0 0.0
    %2373 = vmatpush2.msra.mxu0 0.0
    %2374 = vmatprep.subr.mxu0 0.0
    %2375 = vmatpush2.msra.mxu0 0.0
    %2376 = vmatprep.subr.mxu0 0.0
    %2377 = vmatpush2.msra.mxu0 0.0
    %2378 = vmatprep.mubr.f32.mxu0 0.0
    %2379 = vmatmul.mubr.f32.gmra.mxu0 %v2123
    %v2380 = vpop.f32.mrf.mxu0
    %v2381 = vadd.f32 %v261, %v2380
    %v2382 = vpop.f32.mrf.mxu0
    %2383 = vdwg.mxu0
    %v2384 = vadd.f32 %v2313, %v2381
    %v2385 = vxor.u32 %v2384, 2147483648
    %v2386 = vmul.f32 %v2385, 1.442695
    %v2387 = vpow.pop %v2386
    %v2388 = vadd.f32 %v2387, 1.0
    %v2389 = vrcp.pop %v2388
    %v2390 = vmul.f32 1.0, %v2389
    %2392 = vrot.lane.b32.xlu0 %v2381, 64
    %v2393 = vpop.permute.xlu0 %2392
    %v2395 = vmul.f32 %v2390, %v2393
    %2397 = vrot.lane.b32.xlu0 %v2395, 64
    %v2398 = vpop.permute.xlu0 %2397
    %v2400 = vadd.f32 %v2313, %v2398
    %v2401 = vtanh.pop %v2400
    %v2402 = vsub.f32 1.0, %v2390
    %2404 = vrot.lane.b32.xlu0 %v2401, 96
    %v2405 = vpop.permute.xlu0 %2404
    %v2407 = vmul.f32 %v2402, %v2405
    %v2408 = vmul.f32 %v2390, %v2119
    %v2409 = vadd.f32 %v2407, %v2408
    %2411 = vrot.lane.b32.xlu0 %v2409, 96
    %v2412 = vpop.permute.xlu0 %2411
    %v2413 = vsel %vm263, %v2412, 0
    %2415 = vmatprep.subr.mxu0 0.0
    %2416 = vmatpush1.msra.mxu0 0.0
    %2417 = vmatprep.subr.mxu0 0.0
    %2418 = vmatpush1.msra.mxu0 0.0
    %2419 = vmatprep.subr.mxu0 0.0
    %2420 = vmatpush1.msra.mxu0 0.0
    %2421 = vmatprep.subr.mxu0 0.0
    %2422 = vmatpush1.msra.mxu0 0.0
    %2423 = vmatprep.subr.mxu0 0.0
    %2424 = vmatpush1.msra.mxu0 0.0
    %2425 = vmatprep.subr.mxu0 0.0
    %2426 = vmatpush1.msra.mxu0 0.0
    %2427 = vmatprep.subr.mxu0 0.0
    %2428 = vmatpush1.msra.mxu0 0.0
    %2429 = vmatprep.subr.mxu0 0.0
    %2430 = vmatpush1.msra.mxu0 0.0
    %2431 = vmatprep.subr.mxu0 0.0
    %2432 = vmatpush1.msra.mxu0 0.0
    %2433 = vmatprep.subr.mxu0 0.0
    %2434 = vmatpush1.msra.mxu0 0.0
    %2435 = vmatprep.subr.mxu0 0.0
    %2436 = vmatpush1.msra.mxu0 0.0
    %2437 = vmatprep.subr.mxu0 0.0
    %2438 = vmatpush1.msra.mxu0 0.0
    %2439 = vmatprep.subr.mxu0 0.0
    %2440 = vmatpush1.msra.mxu0 %v366
    %2441 = vmatprep.subr.mxu0 0.0
    %2442 = vmatpush1.msra.mxu0 %v365
    %2443 = vmatprep.subr.mxu0 0.0
    %2444 = vmatpush1.msra.mxu0 %v364
    %2445 = vmatprep.subr.mxu0 0.0
    %2446 = vmatpush1.msra.mxu0 %v363
    %2447 = vmatprep.subr.mxu0 0.0
    %2448 = vmatpush2.msra.mxu0 0.0
    %2449 = vmatprep.subr.mxu0 0.0
    %2450 = vmatpush2.msra.mxu0 0.0
    %2451 = vmatprep.subr.mxu0 0.0
    %2452 = vmatpush2.msra.mxu0 0.0
    %2453 = vmatprep.subr.mxu0 0.0
    %2454 = vmatpush2.msra.mxu0 0.0
    %2455 = vmatprep.subr.mxu0 0.0
    %2456 = vmatpush2.msra.mxu0 0.0
    %2457 = vmatprep.subr.mxu0 0.0
    %2458 = vmatpush2.msra.mxu0 0.0
    %2459 = vmatprep.subr.mxu0 0.0
    %2460 = vmatpush2.msra.mxu0 0.0
    %2461 = vmatprep.subr.mxu0 0.0
    %2462 = vmatpush2.msra.mxu0 0.0
    %2463 = vmatprep.subr.mxu0 0.0
    %2464 = vmatpush2.msra.mxu0 0.0
    %2465 = vmatprep.subr.mxu0 0.0
    %2466 = vmatpush2.msra.mxu0 0.0
    %2467 = vmatprep.subr.mxu0 0.0
    %2468 = vmatpush2.msra.mxu0 0.0
    %2469 = vmatprep.subr.mxu0 0.0
    %2470 = vmatpush2.msra.mxu0 0.0
    %2471 = vmatprep.subr.mxu0 0.0
    %2472 = vmatpush2.msra.mxu0 0.0
    %2473 = vmatprep.subr.mxu0 0.0
    %2474 = vmatpush2.msra.mxu0 0.0
    %2475 = vmatprep.subr.mxu0 0.0
    %2476 = vmatpush2.msra.mxu0 0.0
    %2477 = vmatprep.subr.mxu0 0.0
    %2478 = vmatpush2.msra.mxu0 0.0
    %2479 = vmatprep.mubr.f32.mxu0 0.0
    %2480 = vmatmul.mubr.f32.gmra.mxu0 %v2413
    %v2481 = vpop.f32.mrf.mxu0
    %v2482 = vadd.f32 %v377, %v2481
    %v2483 = vpop.f32.mrf.mxu0
    %2484 = vdwg.mxu0
    %2486 = vrot.lane.b32.xlu0 %v2295, 96
    %v2487 = vpop.permute.xlu0 %2486
    %v2488 = vsel %vm263, %v2487, 0
    %2490 = vmatprep.subr.mxu0 0.0
    %2491 = vmatpush1.msra.mxu0 0.0
    %2492 = vmatprep.subr.mxu0 0.0
    %2493 = vmatpush1.msra.mxu0 0.0
    %2494 = vmatprep.subr.mxu0 0.0
    %2495 = vmatpush1.msra.mxu0 0.0
    %2496 = vmatprep.subr.mxu0 0.0
    %2497 = vmatpush1.msra.mxu0 0.0
    %2498 = vmatprep.subr.mxu0 0.0
    %2499 = vmatpush1.msra.mxu0 0.0
    %2500 = vmatprep.subr.mxu0 0.0
    %2501 = vmatpush1.msra.mxu0 0.0
    %2502 = vmatprep.subr.mxu0 0.0
    %2503 = vmatpush1.msra.mxu0 0.0
    %2504 = vmatprep.subr.mxu0 0.0
    %2505 = vmatpush1.msra.mxu0 0.0
    %2506 = vmatprep.subr.mxu0 0.0
    %2507 = vmatpush1.msra.mxu0 0.0
    %2508 = vmatprep.subr.mxu0 0.0
    %2509 = vmatpush1.msra.mxu0 0.0
    %2510 = vmatprep.subr.mxu0 0.0
    %2511 = vmatpush1.msra.mxu0 0.0
    %2512 = vmatprep.subr.mxu0 0.0
    %2513 = vmatpush1.msra.mxu0 0.0
    %2514 = vmatprep.subr.mxu0 0.0
    %2515 = vmatpush1.msra.mxu0 %v370
    %2516 = vmatprep.subr.mxu0 0.0
    %2517 = vmatpush1.msra.mxu0 %v369
    %2518 = vmatprep.subr.mxu0 0.0
    %2519 = vmatpush1.msra.mxu0 %v368
    %2520 = vmatprep.subr.mxu0 0.0
    %2521 = vmatpush1.msra.mxu0 %v367
    %2522 = vmatprep.subr.mxu0 0.0
    %2523 = vmatpush2.msra.mxu0 0.0
    %2524 = vmatprep.subr.mxu0 0.0
    %2525 = vmatpush2.msra.mxu0 0.0
    %2526 = vmatprep.subr.mxu0 0.0
    %2527 = vmatpush2.msra.mxu0 0.0
    %2528 = vmatprep.subr.mxu0 0.0
    %2529 = vmatpush2.msra.mxu0 0.0
    %2530 = vmatprep.subr.mxu0 0.0
    %2531 = vmatpush2.msra.mxu0 0.0
    %2532 = vmatprep.subr.mxu0 0.0
    %2533 = vmatpush2.msra.mxu0 0.0
    %2534 = vmatprep.subr.mxu0 0.0
    %2535 = vmatpush2.msra.mxu0 0.0
    %2536 = vmatprep.subr.mxu0 0.0
    %2537 = vmatpush2.msra.mxu0 0.0
    %2538 = vmatprep.subr.mxu0 0.0
    %2539 = vmatpush2.msra.mxu0 0.0
    %2540 = vmatprep.subr.mxu0 0.0
    %2541 = vmatpush2.msra.mxu0 0.0
    %2542 = vmatprep.subr.mxu0 0.0
    %2543 = vmatpush2.msra.mxu0 0.0
    %2544 = vmatprep.subr.mxu0 0.0
    %2545 = vmatpush2.msra.mxu0 0.0
    %2546 = vmatprep.subr.mxu0 0.0
    %2547 = vmatpush2.msra.mxu0 0.0
    %2548 = vmatprep.subr.mxu0 0.0
    %2549 = vmatpush2.msra.mxu0 0.0
    %2550 = vmatprep.subr.mxu0 0.0
    %2551 = vmatpush2.msra.mxu0 0.0
    %2552 = vmatprep.subr.mxu0 0.0
    %2553 = vmatpush2.msra.mxu0 0.0
    %2554 = vmatprep.mubr.f32.mxu0 0.0
    %2555 = vmatmul.mubr.f32.gmra.mxu0 %v2488
    %v2556 = vpop.f32.mrf.mxu0
    %v2557 = vadd.f32 %v458, %v2556
    %v2558 = vpop.f32.mrf.mxu0
    %2559 = vdwg.mxu0
    %v2560 = vadd.f32 %v2482, %v2557
    %v2561 = vxor.u32 %v2560, 2147483648
    %v2562 = vmul.f32 %v2561, 1.442695
    %v2563 = vpow.pop %v2562
    %v2564 = vadd.f32 %v2563, 1.0
    %v2565 = vrcp.pop %v2564
    %v2566 = vmul.f32 1.0, %v2565
    %2568 = vrot.lane.b32.xlu0 %v2557, 64
    %v2569 = vpop.permute.xlu0 %2568
    %v2571 = vmul.f32 %v2566, %v2569
    %2573 = vrot.lane.b32.xlu0 %v2571, 64
    %v2574 = vpop.permute.xlu0 %2573
    %v2576 = vadd.f32 %v2482, %v2574
    %v2577 = vtanh.pop %v2576
    %v2578 = vsub.f32 1.0, %v2566
    %2580 = vrot.lane.b32.xlu0 %v2577, 96
    %v2581 = vpop.permute.xlu0 %2580
    %v2583 = vmul.f32 %v2578, %v2581
    %v2584 = vmul.f32 %v2566, %v2295
    %v2585 = vadd.f32 %v2583, %v2584
    %v2586 = vlaneseq
    %v2587 = vand.u32 %v2586, 127
    %vm2588 = vcmp.eq.s32.totalorder %v2587, 0
    %v2589 = vsel %vm2588, 1.0, 0.0
    %v2590 = vld [vmem:[#allocation15] sm:$0xff]
    %v2591 = vld [vmem:[#allocation15 + $0x8] sm:$0xff]
    %v2592 = vld [vmem:[#allocation15 + $0x10] sm:$0xff]
    %v2593 = vld [vmem:[#allocation15 + $0x18] sm:$0xff]
    %v2594 = vld [vmem:[#allocation16] sm:$0xff]
    %v2595 = vld [vmem:[#allocation16 + $0x8] sm:$0xff]
    %v2596 = vld [vmem:[#allocation16 + $0x10] sm:$0xff]
    %v2597 = vld [vmem:[#allocation16 + $0x18] sm:$0xff]
    %v2598 = vld [vmem:[#allocation18] sm:$0x1]
    %v2599 = vld [vmem:[#allocation19] sm:$0x1]
    %v2601 = vlaneseq
    %v2602 = vshrl.u32 %v2601, 7
    %v2603 = vsub.s32 0, %v2602
    %v2604 = vrot.slane %v2598, %v2603
    %2607 = vrot.lane.b32.xlu0 %v2585, 96
    %v2608 = vpop.permute.xlu0 %2607
    %v2609 = vsel %vm263, %v2608, 0
    %2611 = vmatprep.subr.mxu0 0.0
    %2612 = vmatpush1.msra.mxu0 0.0
    %2613 = vmatprep.subr.mxu0 0.0
    %2614 = vmatpush1.msra.mxu0 0.0
    %2615 = vmatprep.subr.mxu0 0.0
    %2616 = vmatpush1.msra.mxu0 0.0
    %2617 = vmatprep.subr.mxu0 0.0
    %2618 = vmatpush1.msra.mxu0 0.0
    %2619 = vmatprep.subr.mxu0 0.0
    %2620 = vmatpush1.msra.mxu0 0.0
    %2621 = vmatprep.subr.mxu0 0.0
    %2622 = vmatpush1.msra.mxu0 0.0
    %2623 = vmatprep.subr.mxu0 0.0
    %2624 = vmatpush1.msra.mxu0 0.0
    %2625 = vmatprep.subr.mxu0 0.0
    %2626 = vmatpush1.msra.mxu0 0.0
    %2627 = vmatprep.subr.mxu0 0.0
    %2628 = vmatpush1.msra.mxu0 0.0
    %2629 = vmatprep.subr.mxu0 0.0
    %2630 = vmatpush1.msra.mxu0 0.0
    %2631 = vmatprep.subr.mxu0 0.0
    %2632 = vmatpush1.msra.mxu0 0.0
    %2633 = vmatprep.subr.mxu0 0.0
    %2634 = vmatpush1.msra.mxu0 0.0
    %2635 = vmatprep.subr.mxu0 0.0
    %2636 = vmatpush1.msra.mxu0 %v2593
    %2637 = vmatprep.subr.mxu0 0.0
    %2638 = vmatpush1.msra.mxu0 %v2592
    %2639 = vmatprep.subr.mxu0 0.0
    %2640 = vmatpush1.msra.mxu0 %v2591
    %2641 = vmatprep.subr.mxu0 0.0
    %2642 = vmatpush1.msra.mxu0 %v2590
    %2643 = vmatprep.subr.mxu0 0.0
    %2644 = vmatpush2.msra.mxu0 0.0
    %2645 = vmatprep.subr.mxu0 0.0
    %2646 = vmatpush2.msra.mxu0 0.0
    %2647 = vmatprep.subr.mxu0 0.0
    %2648 = vmatpush2.msra.mxu0 0.0
    %2649 = vmatprep.subr.mxu0 0.0
    %2650 = vmatpush2.msra.mxu0 0.0
    %2651 = vmatprep.subr.mxu0 0.0
    %2652 = vmatpush2.msra.mxu0 0.0
    %2653 = vmatprep.subr.mxu0 0.0
    %2654 = vmatpush2.msra.mxu0 0.0
    %2655 = vmatprep.subr.mxu0 0.0
    %2656 = vmatpush2.msra.mxu0 0.0
    %2657 = vmatprep.subr.mxu0 0.0
    %2658 = vmatpush2.msra.mxu0 0.0
    %2659 = vmatprep.subr.mxu0 0.0
    %2660 = vmatpush2.msra.mxu0 0.0
    %2661 = vmatprep.subr.mxu0 0.0
    %2662 = vmatpush2.msra.mxu0 0.0
    %2663 = vmatprep.subr.mxu0 0.0
    %2664 = vmatpush2.msra.mxu0 0.0
    %2665 = vmatprep.subr.mxu0 0.0
    %2666 = vmatpush2.msra.mxu0 0.0
    %2667 = vmatprep.subr.mxu0 0.0
    %2668 = vmatpush2.msra.mxu0 0.0
    %2669 = vmatprep.subr.mxu0 0.0
    %2670 = vmatpush2.msra.mxu0 0.0
    %2671 = vmatprep.subr.mxu0 0.0
    %2672 = vmatpush2.msra.mxu0 0.0
    %2673 = vmatprep.subr.mxu0 0.0
    %2674 = vmatpush2.msra.mxu0 0.0
    %2675 = vmatprep.mubr.f32.mxu0 0.0
    %2676 = vmatmul.mubr.f32.gmra.mxu0 %v2609
    %v2677 = vpop.f32.mrf.mxu0
    %v2678 = vadd.f32 %v2604, %v2677
    %v2679 = vpop.f32.mrf.mxu0
    %2680 = vdwg.mxu0
    %v2682 = vlaneseq
    %v2683 = vshrl.u32 %v2682, 7
    %v2684 = vsub.s32 0, %v2683
    %v2685 = vrot.slane %v2599, %v2684
    %2687 = vmatprep.subr.mxu0 0.0
    %2688 = vmatpush1.msra.mxu0 0.0
    %2689 = vmatprep.subr.mxu0 0.0
    %2690 = vmatpush1.msra.mxu0 0.0
    %2691 = vmatprep.subr.mxu0 0.0
    %2692 = vmatpush1.msra.mxu0 0.0
    %2693 = vmatprep.subr.mxu0 0.0
    %2694 = vmatpush1.msra.mxu0 0.0
    %2695 = vmatprep.subr.mxu0 0.0
    %2696 = vmatpush1.msra.mxu0 0.0
    %2697 = vmatprep.subr.mxu0 0.0
    %2698 = vmatpush1.msra.mxu0 0.0
    %2699 = vmatprep.subr.mxu0 0.0
    %2700 = vmatpush1.msra.mxu0 0.0
    %2701 = vmatprep.subr.mxu0 0.0
    %2702 = vmatpush1.msra.mxu0 0.0
    %2703 = vmatprep.subr.mxu0 0.0
    %2704 = vmatpush1.msra.mxu0 0.0
    %2705 = vmatprep.subr.mxu0 0.0
    %2706 = vmatpush1.msra.mxu0 0.0
    %2707 = vmatprep.subr.mxu0 0.0
    %2708 = vmatpush1.msra.mxu0 0.0
    %2709 = vmatprep.subr.mxu0 0.0
    %2710 = vmatpush1.msra.mxu0 0.0
    %2711 = vmatprep.subr.mxu0 0.0
    %2712 = vmatpush1.msra.mxu0 %v2597
    %2713 = vmatprep.subr.mxu0 0.0
    %2714 = vmatpush1.msra.mxu0 %v2596
    %2715 = vmatprep.subr.mxu0 0.0
    %2716 = vmatpush1.msra.mxu0 %v2595
    %2717 = vmatprep.subr.mxu0 0.0
    %2718 = vmatpush1.msra.mxu0 %v2594
    %2719 = vmatprep.subr.mxu0 0.0
    %2720 = vmatpush2.msra.mxu0 0.0
    %2721 = vmatprep.subr.mxu0 0.0
    %2722 = vmatpush2.msra.mxu0 0.0
    %2723 = vmatprep.subr.mxu0 0.0
    %2724 = vmatpush2.msra.mxu0 0.0
    %2725 = vmatprep.subr.mxu0 0.0
    %2726 = vmatpush2.msra.mxu0 0.0
    %2727 = vmatprep.subr.mxu0 0.0
    %2728 = vmatpush2.msra.mxu0 0.0
    %2729 = vmatprep.subr.mxu0 0.0
    %2730 = vmatpush2.msra.mxu0 0.0
    %2731 = vmatprep.subr.mxu0 0.0
    %2732 = vmatpush2.msra.mxu0 0.0
    %2733 = vmatprep.subr.mxu0 0.0
    %2734 = vmatpush2.msra.mxu0 0.0
    %2735 = vmatprep.subr.mxu0 0.0
    %2736 = vmatpush2.msra.mxu0 0.0
    %2737 = vmatprep.subr.mxu0 0.0
    %2738 = vmatpush2.msra.mxu0 0.0
    %2739 = vmatprep.subr.mxu0 0.0
    %2740 = vmatpush2.msra.mxu0 0.0
    %2741 = vmatprep.subr.mxu0 0.0
    %2742 = vmatpush2.msra.mxu0 0.0
    %2743 = vmatprep.subr.mxu0 0.0
    %2744 = vmatpush2.msra.mxu0 0.0
    %2745 = vmatprep.subr.mxu0 0.0
    %2746 = vmatpush2.msra.mxu0 0.0
    %2747 = vmatprep.subr.mxu0 0.0
    %2748 = vmatpush2.msra.mxu0 0.0
    %2749 = vmatprep.subr.mxu0 0.0
    %2750 = vmatpush2.msra.mxu0 0.0
    %2751 = vmatprep.mubr.f32.mxu0 0.0
    %2752 = vmatmul.mubr.f32.gmra.mxu0 %v2609
    %v2753 = vpop.f32.mrf.mxu0
    %v2754 = vadd.f32 %v2685, %v2753
    %v2755 = vpop.f32.mrf.mxu0
    %2756 = vdwg.mxu0
    %v2757 = vadd.f32 %v2678, %v2754
    %v2758 = vxor.u32 %v2757, 2147483648
    %v2759 = vmul.f32 %v2758, 1.442695
    %v2760 = vpow.pop %v2759
    %v2761 = vadd.f32 %v2760, 1.0
    %v2762 = vrcp.pop %v2761
    %v2763 = vmul.f32 1.0, %v2762
    %2765 = vrot.lane.b32.xlu0 %v2754, 64
    %v2766 = vpop.permute.xlu0 %2765
    %v2768 = vmul.f32 %v2763, %v2766
    %2770 = vrot.lane.b32.xlu0 %v2768, 64
    %v2771 = vpop.permute.xlu0 %2770
    %v2773 = vadd.f32 %v2678, %v2771
    %v2774 = vtanh.pop %v2773
    %v2775 = vsub.f32 1.0, %v2763
    %2777 = vrot.lane.b32.xlu0 %v2774, 96
    %v2778 = vpop.permute.xlu0 %2777
    %v2780 = vmul.f32 %v2775, %v2778
    %v2781 = vmul.f32 %v2763, %v2585
    %v2782 = vadd.f32 %v2780, %v2781
    %v2783 = vld [vmem:[%s14] sm:$0xff]
    %v2784 = vld [vmem:[%s14 + $0x8] sm:$0xff]
    %v2785 = vld [vmem:[%s14 + $0x10] sm:$0xff]
    %v2786 = vld [vmem:[%s14 + $0x18] sm:$0xff]
    %v2787 = vld [vmem:[%s15] sm:$0xff]
    %v2788 = vld [vmem:[%s15 + $0x8] sm:$0xff]
    %v2789 = vld [vmem:[%s15 + $0x10] sm:$0xff]
    %v2790 = vld [vmem:[%s15 + $0x18] sm:$0xff]
    %v2791 = vld [vmem:[%s16] sm:$0x1]
    %v2792 = vld [vmem:[%s17] sm:$0x1]
    %v2794 = vlaneseq
    %v2795 = vshrl.u32 %v2794, 7
    %v2796 = vsub.s32 0, %v2795
    %v2797 = vrot.slane %v2791, %v2796
    %2800 = vrot.lane.b32.xlu0 %v2782, 96
    %v2801 = vpop.permute.xlu0 %2800
    %v2802 = vsel %vm263, %v2801, 0
    %2804 = vmatprep.subr.mxu0 0.0
    %2805 = vmatpush1.msra.mxu0 0.0
    %2806 = vmatprep.subr.mxu0 0.0
    %2807 = vmatpush1.msra.mxu0 0.0
    %2808 = vmatprep.subr.mxu0 0.0
    %2809 = vmatpush1.msra.mxu0 0.0
    %2810 = vmatprep.subr.mxu0 0.0
    %2811 = vmatpush1.msra.mxu0 0.0
    %2812 = vmatprep.subr.mxu0 0.0
    %2813 = vmatpush1.msra.mxu0 0.0
    %2814 = vmatprep.subr.mxu0 0.0
    %2815 = vmatpush1.msra.mxu0 0.0
    %2816 = vmatprep.subr.mxu0 0.0
    %2817 = vmatpush1.msra.mxu0 0.0
    %2818 = vmatprep.subr.mxu0 0.0
    %2819 = vmatpush1.msra.mxu0 0.0
    %2820 = vmatprep.subr.mxu0 0.0
    %2821 = vmatpush1.msra.mxu0 0.0
    %2822 = vmatprep.subr.mxu0 0.0
    %2823 = vmatpush1.msra.mxu0 0.0
    %2824 = vmatprep.subr.mxu0 0.0
    %2825 = vmatpush1.msra.mxu0 0.0
    %2826 = vmatprep.subr.mxu0 0.0
    %2827 = vmatpush1.msra.mxu0 0.0
    %2828 = vmatprep.subr.mxu0 0.0
    %2829 = vmatpush1.msra.mxu0 %v2786
    %2830 = vmatprep.subr.mxu0 0.0
    %2831 = vmatpush1.msra.mxu0 %v2785
    %2832 = vmatprep.subr.mxu0 0.0
    %2833 = vmatpush1.msra.mxu0 %v2784
    %2834 = vmatprep.subr.mxu0 0.0
    %2835 = vmatpush1.msra.mxu0 %v2783
    %2836 = vmatprep.subr.mxu0 0.0
    %2837 = vmatpush2.msra.mxu0 0.0
    %2838 = vmatprep.subr.mxu0 0.0
    %2839 = vmatpush2.msra.mxu0 0.0
    %2840 = vmatprep.subr.mxu0 0.0
    %2841 = vmatpush2.msra.mxu0 0.0
    %2842 = vmatprep.subr.mxu0 0.0
    %2843 = vmatpush2.msra.mxu0 0.0
    %2844 = vmatprep.subr.mxu0 0.0
    %2845 = vmatpush2.msra.mxu0 0.0
    %2846 = vmatprep.subr.mxu0 0.0
    %2847 = vmatpush2.msra.mxu0 0.0
    %2848 = vmatprep.subr.mxu0 0.0
    %2849 = vmatpush2.msra.mxu0 0.0
    %2850 = vmatprep.subr.mxu0 0.0
    %2851 = vmatpush2.msra.mxu0 0.0
    %2852 = vmatprep.subr.mxu0 0.0
    %2853 = vmatpush2.msra.mxu0 0.0
    %2854 = vmatprep.subr.mxu0 0.0
    %2855 = vmatpush2.msra.mxu0 0.0
    %2856 = vmatprep.subr.mxu0 0.0
    %2857 = vmatpush2.msra.mxu0 0.0
    %2858 = vmatprep.subr.mxu0 0.0
    %2859 = vmatpush2.msra.mxu0 0.0
    %2860 = vmatprep.subr.mxu0 0.0
    %2861 = vmatpush2.msra.mxu0 0.0
    %2862 = vmatprep.subr.mxu0 0.0
    %2863 = vmatpush2.msra.mxu0 0.0
    %2864 = vmatprep.subr.mxu0 0.0
    %2865 = vmatpush2.msra.mxu0 0.0
    %2866 = vmatprep.subr.mxu0 0.0
    %2867 = vmatpush2.msra.mxu0 0.0
    %2868 = vmatprep.mubr.f32.mxu0 0.0
    %2869 = vmatmul.mubr.f32.gmra.mxu0 %v2802
    %v2870 = vpop.f32.mrf.mxu0
    %v2871 = vadd.f32 %v2797, %v2870
    %v2872 = vpop.f32.mrf.mxu0
    %2873 = vdwg.mxu0
    %v2875 = vlaneseq
    %v2876 = vshrl.u32 %v2875, 7
    %v2877 = vsub.s32 0, %v2876
    %v2878 = vrot.slane %v2792, %v2877
    %2880 = vmatprep.subr.mxu0 0.0
    %2881 = vmatpush1.msra.mxu0 0.0
    %2882 = vmatprep.subr.mxu0 0.0
    %2883 = vmatpush1.msra.mxu0 0.0
    %2884 = vmatprep.subr.mxu0 0.0
    %2885 = vmatpush1.msra.mxu0 0.0
    %2886 = vmatprep.subr.mxu0 0.0
    %2887 = vmatpush1.msra.mxu0 0.0
    %2888 = vmatprep.subr.mxu0 0.0
    %2889 = vmatpush1.msra.mxu0 0.0
    %2890 = vmatprep.subr.mxu0 0.0
    %2891 = vmatpush1.msra.mxu0 0.0
    %2892 = vmatprep.subr.mxu0 0.0
    %2893 = vmatpush1.msra.mxu0 0.0
    %2894 = vmatprep.subr.mxu0 0.0
    %2895 = vmatpush1.msra.mxu0 0.0
    %2896 = vmatprep.subr.mxu0 0.0
    %2897 = vmatpush1.msra.mxu0 0.0
    %2898 = vmatprep.subr.mxu0 0.0
    %2899 = vmatpush1.msra.mxu0 0.0
    %2900 = vmatprep.subr.mxu0 0.0
    %2901 = vmatpush1.msra.mxu0 0.0
    %2902 = vmatprep.subr.mxu0 0.0
    %2903 = vmatpush1.msra.mxu0 0.0
    %2904 = vmatprep.subr.mxu0 0.0
    %2905 = vmatpush1.msra.mxu0 %v2790
    %2906 = vmatprep.subr.mxu0 0.0
    %2907 = vmatpush1.msra.mxu0 %v2789
    %2908 = vmatprep.subr.mxu0 0.0
    %2909 = vmatpush1.msra.mxu0 %v2788
    %2910 = vmatprep.subr.mxu0 0.0
    %2911 = vmatpush1.msra.mxu0 %v2787
    %2912 = vmatprep.subr.mxu0 0.0
    %2913 = vmatpush2.msra.mxu0 0.0
    %2914 = vmatprep.subr.mxu0 0.0
    %2915 = vmatpush2.msra.mxu0 0.0
    %2916 = vmatprep.subr.mxu0 0.0
    %2917 = vmatpush2.msra.mxu0 0.0
    %2918 = vmatprep.subr.mxu0 0.0
    %2919 = vmatpush2.msra.mxu0 0.0
    %2920 = vmatprep.subr.mxu0 0.0
    %2921 = vmatpush2.msra.mxu0 0.0
    %2922 = vmatprep.subr.mxu0 0.0
    %2923 = vmatpush2.msra.mxu0 0.0
    %2924 = vmatprep.subr.mxu0 0.0
    %2925 = vmatpush2.msra.mxu0 0.0
    %2926 = vmatprep.subr.mxu0 0.0
    %2927 = vmatpush2.msra.mxu0 0.0
    %2928 = vmatprep.subr.mxu0 0.0
    %2929 = vmatpush2.msra.mxu0 0.0
    %2930 = vmatprep.subr.mxu0 0.0
    %2931 = vmatpush2.msra.mxu0 0.0
    %2932 = vmatprep.subr.mxu0 0.0
    %2933 = vmatpush2.msra.mxu0 0.0
    %2934 = vmatprep.subr.mxu0 0.0
    %2935 = vmatpush2.msra.mxu0 0.0
    %2936 = vmatprep.subr.mxu0 0.0
    %2937 = vmatpush2.msra.mxu0 0.0
    %2938 = vmatprep.subr.mxu0 0.0
    %2939 = vmatpush2.msra.mxu0 0.0
    %2940 = vmatprep.subr.mxu0 0.0
    %2941 = vmatpush2.msra.mxu0 0.0
    %2942 = vmatprep.subr.mxu0 0.0
    %2943 = vmatpush2.msra.mxu0 0.0
    %2944 = vmatprep.mubr.f32.mxu0 0.0
    %2945 = vmatmul.mubr.f32.gmra.mxu0 %v2609
    %v2946 = vpop.f32.mrf.mxu0
    %v2947 = vadd.f32 %v2878, %v2946
    %v2948 = vpop.f32.mrf.mxu0
    %2949 = vdwg.mxu0
    %v2950 = vadd.f32 %v2871, %v2947
    %v2951 = vxor.u32 %v2950, 2147483648
    %v2952 = vmul.f32 %v2951, 1.442695
    %v2953 = vpow.pop %v2952
    %v2954 = vadd.f32 %v2953, 1.0
    %v2955 = vrcp.pop %v2954
    %v2956 = vmul.f32 1.0, %v2955
    %2958 = vrot.lane.b32.xlu0 %v2947, 64
    %v2959 = vpop.permute.xlu0 %2958
    %v2961 = vmul.f32 %v2956, %v2959
    %2963 = vrot.lane.b32.xlu0 %v2961, 64
    %v2964 = vpop.permute.xlu0 %2963
    %v2966 = vadd.f32 %v2871, %v2964
    %v2967 = vtanh.pop %v2966
    %v2968 = vsub.f32 1.0, %v2956
    %2970 = vrot.lane.b32.xlu0 %v2967, 96
    %v2971 = vpop.permute.xlu0 %2970
    %v2973 = vmul.f32 %v2968, %v2971
    %v2974 = vmul.f32 %v2956, %v2585
    %v2975 = vadd.f32 %v2973, %v2974
    %v2976 = vld [vmem:[%s18] sm:$0xff]
    %v2977 = vld [vmem:[%s18 + $0x8] sm:$0xff]
    %v2978 = vld [vmem:[%s18 + $0x10] sm:$0xff]
    %v2979 = vld [vmem:[%s18 + $0x18] sm:$0xff]
    %v2980 = vld [vmem:[%s19] sm:$0x1]
    %v2981 = vld [vmem:[%s20] sm:$0xff]
    %v2982 = vld [vmem:[%s20 + $0x8] sm:$0xff]
    %v2983 = vld [vmem:[%s21] sm:$0x1]
    %v2985 = vlaneseq
    %v2986 = vshrl.u32 %v2985, 7
    %v2987 = vsub.s32 0, %v2986
    %v2988 = vrot.slane %v2980, %v2987
    %2991 = vrot.lane.b32.xlu0 %v2975, 96
    %v2992 = vpop.permute.xlu0 %2991
    %v2993 = vsel %vm263, %v2992, 0
    %2995 = vmatprep.subr.mxu0 0.0
    %2996 = vmatpush1.msra.mxu0 0.0
    %2997 = vmatprep.subr.mxu0 0.0
    %2998 = vmatpush1.msra.mxu0 0.0
    %2999 = vmatprep.subr.mxu0 0.0
    %3000 = vmatpush1.msra.mxu0 0.0
    %3001 = vmatprep.subr.mxu0 0.0
    %3002 = vmatpush1.msra.mxu0 0.0
    %3003 = vmatprep.subr.mxu0 0.0
    %3004 = vmatpush1.msra.mxu0 0.0
    %3005 = vmatprep.subr.mxu0 0.0
    %3006 = vmatpush1.msra.mxu0 0.0
    %3007 = vmatprep.subr.mxu0 0.0
    %3008 = vmatpush1.msra.mxu0 0.0
    %3009 = vmatprep.subr.mxu0 0.0
    %3010 = vmatpush1.msra.mxu0 0.0
    %3011 = vmatprep.subr.mxu0 0.0
    %3012 = vmatpush1.msra.mxu0 0.0
    %3013 = vmatprep.subr.mxu0 0.0
    %3014 = vmatpush1.msra.mxu0 0.0
    %3015 = vmatprep.subr.mxu0 0.0
    %3016 = vmatpush1.msra.mxu0 0.0
    %3017 = vmatprep.subr.mxu0 0.0
    %3018 = vmatpush1.msra.mxu0 0.0
    %3019 = vmatprep.subr.mxu0 0.0
    %3020 = vmatpush1.msra.mxu0 %v2979
    %3021 = vmatprep.subr.mxu0 0.0
    %3022 = vmatpush1.msra.mxu0 %v2978
    %3023 = vmatprep.subr.mxu0 0.0
    %3024 = vmatpush1.msra.mxu0 %v2977
    %3025 = vmatprep.subr.mxu0 0.0
    %3026 = vmatpush1.msra.mxu0 %v2976
    %3027 = vmatprep.subr.mxu0 0.0
    %3028 = vmatpush2.msra.mxu0 0.0
    %3029 = vmatprep.subr.mxu0 0.0
    %3030 = vmatpush2.msra.mxu0 0.0
    %3031 = vmatprep.subr.mxu0 0.0
    %3032 = vmatpush2.msra.mxu0 0.0
    %3033 = vmatprep.subr.mxu0 0.0
    %3034 = vmatpush2.msra.mxu0 0.0
    %3035 = vmatprep.subr.mxu0 0.0
    %3036 = vmatpush2.msra.mxu0 0.0
    %3037 = vmatprep.subr.mxu0 0.0
    %3038 = vmatpush2.msra.mxu0 0.0
    %3039 = vmatprep.subr.mxu0 0.0
    %3040 = vmatpush2.msra.mxu0 0.0
    %3041 = vmatprep.subr.mxu0 0.0
    %3042 = vmatpush2.msra.mxu0 0.0
    %3043 = vmatprep.subr.mxu0 0.0
    %3044 = vmatpush2.msra.mxu0 0.0
    %3045 = vmatprep.subr.mxu0 0.0
    %3046 = vmatpush2.msra.mxu0 0.0
    %3047 = vmatprep.subr.mxu0 0.0
    %3048 = vmatpush2.msra.mxu0 0.0
    %3049 = vmatprep.subr.mxu0 0.0
    %3050 = vmatpush2.msra.mxu0 0.0
    %3051 = vmatprep.subr.mxu0 0.0
    %3052 = vmatpush2.msra.mxu0 0.0
    %3053 = vmatprep.subr.mxu0 0.0
    %3054 = vmatpush2.msra.mxu0 0.0
    %3055 = vmatprep.subr.mxu0 0.0
    %3056 = vmatpush2.msra.mxu0 0.0
    %3057 = vmatprep.subr.mxu0 0.0
    %3058 = vmatpush2.msra.mxu0 0.0
    %3059 = vmatprep.mubr.f32.mxu0 0.0
    %3060 = vmatmul.mubr.f32.gmra.mxu0 %v2993
    %v3061 = vpop.f32.mrf.mxu0
    %v3062 = vadd.f32 %v2988, %v3061
    %v3063 = vpop.f32.mrf.mxu0
    %3064 = vdwg.mxu0
    %v3065 = vmax.f32 %v3062, 0.0
    %v3067 = vlaneseq
    %v3068 = vshrl.u32 %v3067, 7
    %v3069 = vsub.s32 0, %v3068
    %v3070 = vrot.slane %v2983, %v3069
    %vm3072 = vcmask 130048
    %v3074 = vsel %vm3072, %v3065, 0
    %3076 = vmatprep.subr.mxu0 0.0
    %3077 = vmatpush1.msra.mxu0 0.0
    %3078 = vmatprep.subr.mxu0 0.0
    %3079 = vmatpush1.msra.mxu0 0.0
    %3080 = vmatprep.subr.mxu0 0.0
    %3081 = vmatpush1.msra.mxu0 0.0
    %3082 = vmatprep.subr.mxu0 0.0
    %3083 = vmatpush1.msra.mxu0 0.0
    %3084 = vmatprep.subr.mxu0 0.0
    %3085 = vmatpush1.msra.mxu0 0.0
    %3086 = vmatprep.subr.mxu0 0.0
    %3087 = vmatpush1.msra.mxu0 0.0
    %3088 = vmatprep.subr.mxu0 0.0
    %3089 = vmatpush1.msra.mxu0 0.0
    %3090 = vmatprep.subr.mxu0 0.0
    %3091 = vmatpush1.msra.mxu0 0.0
    %3092 = vmatprep.subr.mxu0 0.0
    %3093 = vmatpush1.msra.mxu0 0.0
    %3094 = vmatprep.subr.mxu0 0.0
    %3095 = vmatpush1.msra.mxu0 0.0
    %3096 = vmatprep.subr.mxu0 0.0
    %3097 = vmatpush1.msra.mxu0 0.0
    %3098 = vmatprep.subr.mxu0 0.0
    %3099 = vmatpush1.msra.mxu0 0.0
    %3100 = vmatprep.subr.mxu0 0.0
    %3101 = vmatpush1.msra.mxu0 0.0
    %3102 = vmatprep.subr.mxu0 0.0
    %3103 = vmatpush1.msra.mxu0 0.0
    %3104 = vmatprep.subr.mxu0 0.0
    %3105 = vmatpush1.msra.mxu0 %v2982
    %3106 = vmatprep.subr.mxu0 0.0
    %3107 = vmatpush1.msra.mxu0 %v2981
    %3108 = vmatprep.subr.mxu0 0.0
    %3109 = vmatpush2.msra.mxu0 0.0
    %3110 = vmatprep.subr.mxu0 0.0
    %3111 = vmatpush2.msra.mxu0 0.0
    %3112 = vmatprep.subr.mxu0 0.0
    %3113 = vmatpush2.msra.mxu0 0.0
    %3114 = vmatprep.subr.mxu0 0.0
    %3115 = vmatpush2.msra.mxu0 0.0
    %3116 = vmatprep.subr.mxu0 0.0
    %3117 = vmatpush2.msra.mxu0 0.0
    %3118 = vmatprep.subr.mxu0 0.0
    %3119 = vmatpush2.msra.mxu0 0.0
    %3120 = vmatprep.subr.mxu0 0.0
    %3121 = vmatpush2.msra.mxu0 0.0
    %3122 = vmatprep.subr.mxu0 0.0
    %3123 = vmatpush2.msra.mxu0 0.0
    %3124 = vmatprep.subr.mxu0 0.0
    %3125 = vmatpush2.msra.mxu0 0.0
    %3126 = vmatprep.subr.mxu0 0.0
    %3127 = vmatpush2.msra.mxu0 0.0
    %3128 = vmatprep.subr.mxu0 0.0
    %3129 = vmatpush2.msra.mxu0 0.0
    %3130 = vmatprep.subr.mxu0 0.0
    %3131 = vmatpush2.msra.mxu0 0.0
    %3132 = vmatprep.subr.mxu0 0.0
    %3133 = vmatpush2.msra.mxu0 0.0
    %3134 = vmatprep.subr.mxu0 0.0
    %3135 = vmatpush2.msra.mxu0 0.0
    %3136 = vmatprep.subr.mxu0 0.0
    %3137 = vmatpush2.msra.mxu0 0.0
    %3138 = vmatprep.subr.mxu0 0.0
    %3139 = vmatpush2.msra.mxu0 0.0
    %3140 = vmatprep.mubr.f32.mxu0 0.0
    %3141 = vmatmul.mubr.f32.gmra.mxu0 %v3074
    %v3142 = vpop.f32.mrf.mxu0
    %v3143 = vadd.f32 %v3070, %v3142
    %v3144 = vpop.f32.mrf.mxu0
    %3145 = vdwg.mxu0
    %v3146 = vadd.f32 %v2589, %v3143
    %3147 = vmatprep.subr.mxu0 0.0
    %3148 = vmatpush1.msra.mxu0 0.0
    %3149 = vmatprep.subr.mxu0 0.0
    %3150 = vmatpush1.msra.mxu0 0.0
    %3151 = vmatprep.subr.mxu0 0.0
    %3152 = vmatpush1.msra.mxu0 0.0
    %3153 = vmatprep.subr.mxu0 0.0
    %3154 = vmatpush1.msra.mxu0 0.0
    %3155 = vmatprep.subr.mxu0 0.0
    %3156 = vmatpush1.msra.mxu0 0.0
    %3157 = vmatprep.subr.mxu0 0.0
    %3158 = vmatpush1.msra.mxu0 0.0
    %3159 = vmatprep.subr.mxu0 0.0
    %3160 = vmatpush1.msra.mxu0 0.0
    %3161 = vmatprep.subr.mxu0 0.0
    %3162 = vmatpush1.msra.mxu0 0.0
    %3163 = vmatprep.subr.mxu0 0.0
    %3164 = vmatpush1.msra.mxu0 0.0
    %3165 = vmatprep.subr.mxu0 0.0
    %3166 = vmatpush1.msra.mxu0 0.0
    %3167 = vmatprep.subr.mxu0 0.0
    %3168 = vmatpush1.msra.mxu0 0.0
    %3169 = vmatprep.subr.mxu0 0.0
    %3170 = vmatpush1.msra.mxu0 0.0
    %3171 = vmatprep.subr.mxu0 0.0
    %3172 = vmatpush1.msra.mxu0 %v2593
    %3173 = vmatprep.subr.mxu0 0.0
    %3174 = vmatpush1.msra.mxu0 %v2592
    %3175 = vmatprep.subr.mxu0 0.0
    %3176 = vmatpush1.msra.mxu0 %v2591
    %3177 = vmatprep.subr.mxu0 0.0
    %3178 = vmatpush1.msra.mxu0 %v2590
    %3179 = vmatprep.subr.mxu0 0.0
    %3180 = vmatpush2.msra.mxu0 0.0
    %3181 = vmatprep.subr.mxu0 0.0
    %3182 = vmatpush2.msra.mxu0 0.0
    %3183 = vmatprep.subr.mxu0 0.0
    %3184 = vmatpush2.msra.mxu0 0.0
    %3185 = vmatprep.subr.mxu0 0.0
    %3186 = vmatpush2.msra.mxu0 0.0
    %3187 = vmatprep.subr.mxu0 0.0
    %3188 = vmatpush2.msra.mxu0 0.0
    %3189 = vmatprep.subr.mxu0 0.0
    %3190 = vmatpush2.msra.mxu0 0.0
    %3191 = vmatprep.subr.mxu0 0.0
    %3192 = vmatpush2.msra.mxu0 0.0
    %3193 = vmatprep.subr.mxu0 0.0
    %3194 = vmatpush2.msra.mxu0 0.0
    %3195 = vmatprep.subr.mxu0 0.0
    %3196 = vmatpush2.msra.mxu0 0.0
    %3197 = vmatprep.subr.mxu0 0.0
    %3198 = vmatpush2.msra.mxu0 0.0
    %3199 = vmatprep.subr.mxu0 0.0
    %3200 = vmatpush2.msra.mxu0 0.0
    %3201 = vmatprep.subr.mxu0 0.0
    %3202 = vmatpush2.msra.mxu0 0.0
    %3203 = vmatprep.subr.mxu0 0.0
    %3204 = vmatpush2.msra.mxu0 0.0
    %3205 = vmatprep.subr.mxu0 0.0
    %3206 = vmatpush2.msra.mxu0 0.0
    %3207 = vmatprep.subr.mxu0 0.0
    %3208 = vmatpush2.msra.mxu0 0.0
    %3209 = vmatprep.subr.mxu0 0.0
    %3210 = vmatpush2.msra.mxu0 0.0
    %3211 = vmatprep.mubr.f32.mxu0 0.0
    %3212 = vmatmul.mubr.f32.gmra.mxu0 %v2993
    %v3213 = vpop.f32.mrf.mxu0
    %v3214 = vadd.f32 %v2604, %v3213
    %v3215 = vpop.f32.mrf.mxu0
    %3216 = vdwg.mxu0
    %3217 = vmatprep.subr.mxu0 0.0
    %3218 = vmatpush1.msra.mxu0 0.0
    %3219 = vmatprep.subr.mxu0 0.0
    %3220 = vmatpush1.msra.mxu0 0.0
    %3221 = vmatprep.subr.mxu0 0.0
    %3222 = vmatpush1.msra.mxu0 0.0
    %3223 = vmatprep.subr.mxu0 0.0
    %3224 = vmatpush1.msra.mxu0 0.0
    %3225 = vmatprep.subr.mxu0 0.0
    %3226 = vmatpush1.msra.mxu0 0.0
    %3227 = vmatprep.subr.mxu0 0.0
    %3228 = vmatpush1.msra.mxu0 0.0
    %3229 = vmatprep.subr.mxu0 0.0
    %3230 = vmatpush1.msra.mxu0 0.0
    %3231 = vmatprep.subr.mxu0 0.0
    %3232 = vmatpush1.msra.mxu0 0.0
    %3233 = vmatprep.subr.mxu0 0.0
    %3234 = vmatpush1.msra.mxu0 0.0
    %3235 = vmatprep.subr.mxu0 0.0
    %3236 = vmatpush1.msra.mxu0 0.0
    %3237 = vmatprep.subr.mxu0 0.0
    %3238 = vmatpush1.msra.mxu0 0.0
    %3239 = vmatprep.subr.mxu0 0.0
    %3240 = vmatpush1.msra.mxu0 0.0
    %3241 = vmatprep.subr.mxu0 0.0
    %3242 = vmatpush1.msra.mxu0 %v2597
    %3243 = vmatprep.subr.mxu0 0.0
    %3244 = vmatpush1.msra.mxu0 %v2596
    %3245 = vmatprep.subr.mxu0 0.0
    %3246 = vmatpush1.msra.mxu0 %v2595
    %3247 = vmatprep.subr.mxu0 0.0
    %3248 = vmatpush1.msra.mxu0 %v2594
    %3249 = vmatprep.subr.mxu0 0.0
    %3250 = vmatpush2.msra.mxu0 0.0
    %3251 = vmatprep.subr.mxu0 0.0
    %3252 = vmatpush2.msra.mxu0 0.0
    %3253 = vmatprep.subr.mxu0 0.0
    %3254 = vmatpush2.msra.mxu0 0.0
    %3255 = vmatprep.subr.mxu0 0.0
    %3256 = vmatpush2.msra.mxu0 0.0
    %3257 = vmatprep.subr.mxu0 0.0
    %3258 = vmatpush2.msra.mxu0 0.0
    %3259 = vmatprep.subr.mxu0 0.0
    %3260 = vmatpush2.msra.mxu0 0.0
    %3261 = vmatprep.subr.mxu0 0.0
    %3262 = vmatpush2.msra.mxu0 0.0
    %3263 = vmatprep.subr.mxu0 0.0
    %3264 = vmatpush2.msra.mxu0 0.0
    %3265 = vmatprep.subr.mxu0 0.0
    %3266 = vmatpush2.msra.mxu0 0.0
    %3267 = vmatprep.subr.mxu0 0.0
    %3268 = vmatpush2.msra.mxu0 0.0
    %3269 = vmatprep.subr.mxu0 0.0
    %3270 = vmatpush2.msra.mxu0 0.0
    %3271 = vmatprep.subr.mxu0 0.0
    %3272 = vmatpush2.msra.mxu0 0.0
    %3273 = vmatprep.subr.mxu0 0.0
    %3274 = vmatpush2.msra.mxu0 0.0
    %3275 = vmatprep.subr.mxu0 0.0
    %3276 = vmatpush2.msra.mxu0 0.0
    %3277 = vmatprep.subr.mxu0 0.0
    %3278 = vmatpush2.msra.mxu0 0.0
    %3279 = vmatprep.subr.mxu0 0.0
    %3280 = vmatpush2.msra.mxu0 0.0
    %3281 = vmatprep.mubr.f32.mxu0 0.0
    %3282 = vmatmul.mubr.f32.gmra.mxu0 %v2802
    %v3283 = vpop.f32.mrf.mxu0
    %v3284 = vadd.f32 %v2685, %v3283
    %v3285 = vpop.f32.mrf.mxu0
    %3286 = vdwg.mxu0
    %v3287 = vadd.f32 %v3214, %v3284
    %v3288 = vxor.u32 %v3287, 2147483648
    %v3289 = vmul.f32 %v3288, 1.442695
    %v3290 = vpow.pop %v3289
    %v3291 = vadd.f32 %v3290, 1.0
    %v3292 = vrcp.pop %v3291
    %v3293 = vmul.f32 1.0, %v3292
    %3295 = vrot.lane.b32.xlu0 %v3284, 64
    %v3296 = vpop.permute.xlu0 %3295
    %v3298 = vmul.f32 %v3293, %v3296
    %3300 = vrot.lane.b32.xlu0 %v3298, 64
    %v3301 = vpop.permute.xlu0 %3300
    %v3303 = vadd.f32 %v3214, %v3301
    %v3304 = vtanh.pop %v3303
    %v3305 = vsub.f32 1.0, %v3293
    %3307 = vrot.lane.b32.xlu0 %v3304, 96
    %v3308 = vpop.permute.xlu0 %3307
    %v3310 = vmul.f32 %v3305, %v3308
    %v3311 = vmul.f32 %v3293, %v2782
    %v3312 = vadd.f32 %v3310, %v3311
    %3314 = vrot.lane.b32.xlu0 %v3312, 96
    %v3315 = vpop.permute.xlu0 %3314
    %v3316 = vsel %vm263, %v3315, 0
    %3318 = vmatprep.subr.mxu0 0.0
    %3319 = vmatpush1.msra.mxu0 0.0
    %3320 = vmatprep.subr.mxu0 0.0
    %3321 = vmatpush1.msra.mxu0 0.0
    %3322 = vmatprep.subr.mxu0 0.0
    %3323 = vmatpush1.msra.mxu0 0.0
    %3324 = vmatprep.subr.mxu0 0.0
    %3325 = vmatpush1.msra.mxu0 0.0
    %3326 = vmatprep.subr.mxu0 0.0
    %3327 = vmatpush1.msra.mxu0 0.0
    %3328 = vmatprep.subr.mxu0 0.0
    %3329 = vmatpush1.msra.mxu0 0.0
    %3330 = vmatprep.subr.mxu0 0.0
    %3331 = vmatpush1.msra.mxu0 0.0
    %3332 = vmatprep.subr.mxu0 0.0
    %3333 = vmatpush1.msra.mxu0 0.0
    %3334 = vmatprep.subr.mxu0 0.0
    %3335 = vmatpush1.msra.mxu0 0.0
    %3336 = vmatprep.subr.mxu0 0.0
    %3337 = vmatpush1.msra.mxu0 0.0
    %3338 = vmatprep.subr.mxu0 0.0
    %3339 = vmatpush1.msra.mxu0 0.0
    %3340 = vmatprep.subr.mxu0 0.0
    %3341 = vmatpush1.msra.mxu0 0.0
    %3342 = vmatprep.subr.mxu0 0.0
    %3343 = vmatpush1.msra.mxu0 %v2786
    %3344 = vmatprep.subr.mxu0 0.0
    %3345 = vmatpush1.msra.mxu0 %v2785
    %3346 = vmatprep.subr.mxu0 0.0
    %3347 = vmatpush1.msra.mxu0 %v2784
    %3348 = vmatprep.subr.mxu0 0.0
    %3349 = vmatpush1.msra.mxu0 %v2783
    %3350 = vmatprep.subr.mxu0 0.0
    %3351 = vmatpush2.msra.mxu0 0.0
    %3352 = vmatprep.subr.mxu0 0.0
    %3353 = vmatpush2.msra.mxu0 0.0
    %3354 = vmatprep.subr.mxu0 0.0
    %3355 = vmatpush2.msra.mxu0 0.0
    %3356 = vmatprep.subr.mxu0 0.0
    %3357 = vmatpush2.msra.mxu0 0.0
    %3358 = vmatprep.subr.mxu0 0.0
    %3359 = vmatpush2.msra.mxu0 0.0
    %3360 = vmatprep.subr.mxu0 0.0
    %3361 = vmatpush2.msra.mxu0 0.0
    %3362 = vmatprep.subr.mxu0 0.0
    %3363 = vmatpush2.msra.mxu0 0.0
    %3364 = vmatprep.subr.mxu0 0.0
    %3365 = vmatpush2.msra.mxu0 0.0
    %3366 = vmatprep.subr.mxu0 0.0
    %3367 = vmatpush2.msra.mxu0 0.0
    %3368 = vmatprep.subr.mxu0 0.0
    %3369 = vmatpush2.msra.mxu0 0.0
    %3370 = vmatprep.subr.mxu0 0.0
    %3371 = vmatpush2.msra.mxu0 0.0
    %3372 = vmatprep.subr.mxu0 0.0
    %3373 = vmatpush2.msra.mxu0 0.0
    %3374 = vmatprep.subr.mxu0 0.0
    %3375 = vmatpush2.msra.mxu0 0.0
    %3376 = vmatprep.subr.mxu0 0.0
    %3377 = vmatpush2.msra.mxu0 0.0
    %3378 = vmatprep.subr.mxu0 0.0
    %3379 = vmatpush2.msra.mxu0 0.0
    %3380 = vmatprep.subr.mxu0 0.0
    %3381 = vmatpush2.msra.mxu0 0.0
    %3382 = vmatprep.mubr.f32.mxu0 0.0
    %3383 = vmatmul.mubr.f32.gmra.mxu0 %v3316
    %v3384 = vpop.f32.mrf.mxu0
    %v3385 = vadd.f32 %v2797, %v3384
    %v3386 = vpop.f32.mrf.mxu0
    %3387 = vdwg.mxu0
    %3388 = vmatprep.subr.mxu0 0.0
    %3389 = vmatpush1.msra.mxu0 0.0
    %3390 = vmatprep.subr.mxu0 0.0
    %3391 = vmatpush1.msra.mxu0 0.0
    %3392 = vmatprep.subr.mxu0 0.0
    %3393 = vmatpush1.msra.mxu0 0.0
    %3394 = vmatprep.subr.mxu0 0.0
    %3395 = vmatpush1.msra.mxu0 0.0
    %3396 = vmatprep.subr.mxu0 0.0
    %3397 = vmatpush1.msra.mxu0 0.0
    %3398 = vmatprep.subr.mxu0 0.0
    %3399 = vmatpush1.msra.mxu0 0.0
    %3400 = vmatprep.subr.mxu0 0.0
    %3401 = vmatpush1.msra.mxu0 0.0
    %3402 = vmatprep.subr.mxu0 0.0
    %3403 = vmatpush1.msra.mxu0 0.0
    %3404 = vmatprep.subr.mxu0 0.0
    %3405 = vmatpush1.msra.mxu0 0.0
    %3406 = vmatprep.subr.mxu0 0.0
    %3407 = vmatpush1.msra.mxu0 0.0
    %3408 = vmatprep.subr.mxu0 0.0
    %3409 = vmatpush1.msra.mxu0 0.0
    %3410 = vmatprep.subr.mxu0 0.0
    %3411 = vmatpush1.msra.mxu0 0.0
    %3412 = vmatprep.subr.mxu0 0.0
    %3413 = vmatpush1.msra.mxu0 %v2790
    %3414 = vmatprep.subr.mxu0 0.0
    %3415 = vmatpush1.msra.mxu0 %v2789
    %3416 = vmatprep.subr.mxu0 0.0
    %3417 = vmatpush1.msra.mxu0 %v2788
    %3418 = vmatprep.subr.mxu0 0.0
    %3419 = vmatpush1.msra.mxu0 %v2787
    %3420 = vmatprep.subr.mxu0 0.0
    %3421 = vmatpush2.msra.mxu0 0.0
    %3422 = vmatprep.subr.mxu0 0.0
    %3423 = vmatpush2.msra.mxu0 0.0
    %3424 = vmatprep.subr.mxu0 0.0
    %3425 = vmatpush2.msra.mxu0 0.0
    %3426 = vmatprep.subr.mxu0 0.0
    %3427 = vmatpush2.msra.mxu0 0.0
    %3428 = vmatprep.subr.mxu0 0.0
    %3429 = vmatpush2.msra.mxu0 0.0
    %3430 = vmatprep.subr.mxu0 0.0
    %3431 = vmatpush2.msra.mxu0 0.0
    %3432 = vmatprep.subr.mxu0 0.0
    %3433 = vmatpush2.msra.mxu0 0.0
    %3434 = vmatprep.subr.mxu0 0.0
    %3435 = vmatpush2.msra.mxu0 0.0
    %3436 = vmatprep.subr.mxu0 0.0
    %3437 = vmatpush2.msra.mxu0 0.0
    %3438 = vmatprep.subr.mxu0 0.0
    %3439 = vmatpush2.msra.mxu0 0.0
    %3440 = vmatprep.subr.mxu0 0.0
    %3441 = vmatpush2.msra.mxu0 0.0
    %3442 = vmatprep.subr.mxu0 0.0
    %3443 = vmatpush2.msra.mxu0 0.0
    %3444 = vmatprep.subr.mxu0 0.0
    %3445 = vmatpush2.msra.mxu0 0.0
    %3446 = vmatprep.subr.mxu0 0.0
    %3447 = vmatpush2.msra.mxu0 0.0
    %3448 = vmatprep.subr.mxu0 0.0
    %3449 = vmatpush2.msra.mxu0 0.0
    %3450 = vmatprep.subr.mxu0 0.0
    %3451 = vmatpush2.msra.mxu0 0.0
    %3452 = vmatprep.mubr.f32.mxu0 0.0
    %3453 = vmatmul.mubr.f32.gmra.mxu0 %v2993
    %v3454 = vpop.f32.mrf.mxu0
    %v3455 = vadd.f32 %v2878, %v3454
    %v3456 = vpop.f32.mrf.mxu0
    %3457 = vdwg.mxu0
    %v3458 = vadd.f32 %v3385, %v3455
    %v3459 = vxor.u32 %v3458, 2147483648
    %v3460 = vmul.f32 %v3459, 1.442695
    %v3461 = vpow.pop %v3460
    %v3462 = vadd.f32 %v3461, 1.0
    %v3463 = vrcp.pop %v3462
    %v3464 = vmul.f32 1.0, %v3463
    %3466 = vrot.lane.b32.xlu0 %v3455, 64
    %v3467 = vpop.permute.xlu0 %3466
    %v3469 = vmul.f32 %v3464, %v3467
    %3471 = vrot.lane.b32.xlu0 %v3469, 64
    %v3472 = vpop.permute.xlu0 %3471
    %v3474 = vadd.f32 %v3385, %v3472
    %v3475 = vtanh.pop %v3474
    %v3476 = vsub.f32 1.0, %v3464
    %3478 = vrot.lane.b32.xlu0 %v3475, 96
    %v3479 = vpop.permute.xlu0 %3478
    %v3481 = vmul.f32 %v3476, %v3479
    %v3482 = vmul.f32 %v3464, %v2975
    %v3483 = vadd.f32 %v3481, %v3482
    %3485 = vrot.lane.b32.xlu0 %v3483, 96
    %v3486 = vpop.permute.xlu0 %3485
    %v3487 = vsel %vm263, %v3486, 0
    %3489 = vmatprep.subr.mxu0 0.0
    %3490 = vmatpush1.msra.mxu0 0.0
    %3491 = vmatprep.subr.mxu0 0.0
    %3492 = vmatpush1.msra.mxu0 0.0
    %3493 = vmatprep.subr.mxu0 0.0
    %3494 = vmatpush1.msra.mxu0 0.0
    %3495 = vmatprep.subr.mxu0 0.0
    %3496 = vmatpush1.msra.mxu0 0.0
    %3497 = vmatprep.subr.mxu0 0.0
    %3498 = vmatpush1.msra.mxu0 0.0
    %3499 = vmatprep.subr.mxu0 0.0
    %3500 = vmatpush1.msra.mxu0 0.0
    %3501 = vmatprep.subr.mxu0 0.0
    %3502 = vmatpush1.msra.mxu0 0.0
    %3503 = vmatprep.subr.mxu0 0.0
    %3504 = vmatpush1.msra.mxu0 0.0
    %3505 = vmatprep.subr.mxu0 0.0
    %3506 = vmatpush1.msra.mxu0 0.0
    %3507 = vmatprep.subr.mxu0 0.0
    %3508 = vmatpush1.msra.mxu0 0.0
    %3509 = vmatprep.subr.mxu0 0.0
    %3510 = vmatpush1.msra.mxu0 0.0
    %3511 = vmatprep.subr.mxu0 0.0
    %3512 = vmatpush1.msra.mxu0 0.0
    %3513 = vmatprep.subr.mxu0 0.0
    %3514 = vmatpush1.msra.mxu0 %v2979
    %3515 = vmatprep.subr.mxu0 0.0
    %3516 = vmatpush1.msra.mxu0 %v2978
    %3517 = vmatprep.subr.mxu0 0.0
    %3518 = vmatpush1.msra.mxu0 %v2977
    %3519 = vmatprep.subr.mxu0 0.0
    %3520 = vmatpush1.msra.mxu0 %v2976
    %3521 = vmatprep.subr.mxu0 0.0
    %3522 = vmatpush2.msra.mxu0 0.0
    %3523 = vmatprep.subr.mxu0 0.0
    %3524 = vmatpush2.msra.mxu0 0.0
    %3525 = vmatprep.subr.mxu0 0.0
    %3526 = vmatpush2.msra.mxu0 0.0
    %3527 = vmatprep.subr.mxu0 0.0
    %3528 = vmatpush2.msra.mxu0 0.0
    %3529 = vmatprep.subr.mxu0 0.0
    %3530 = vmatpush2.msra.mxu0 0.0
    %3531 = vmatprep.subr.mxu0 0.0
    %3532 = vmatpush2.msra.mxu0 0.0
    %3533 = vmatprep.subr.mxu0 0.0
    %3534 = vmatpush2.msra.mxu0 0.0
    %3535 = vmatprep.subr.mxu0 0.0
    %3536 = vmatpush2.msra.mxu0 0.0
    %3537 = vmatprep.subr.mxu0 0.0
    %3538 = vmatpush2.msra.mxu0 0.0
    %3539 = vmatprep.subr.mxu0 0.0
    %3540 = vmatpush2.msra.mxu0 0.0
    %3541 = vmatprep.subr.mxu0 0.0
    %3542 = vmatpush2.msra.mxu0 0.0
    %3543 = vmatprep.subr.mxu0 0.0
    %3544 = vmatpush2.msra.mxu0 0.0
    %3545 = vmatprep.subr.mxu0 0.0
    %3546 = vmatpush2.msra.mxu0 0.0
    %3547 = vmatprep.subr.mxu0 0.0
    %3548 = vmatpush2.msra.mxu0 0.0
    %3549 = vmatprep.subr.mxu0 0.0
    %3550 = vmatpush2.msra.mxu0 0.0
    %3551 = vmatprep.subr.mxu0 0.0
    %3552 = vmatpush2.msra.mxu0 0.0
    %3553 = vmatprep.mubr.f32.mxu0 0.0
    %3554 = vmatmul.mubr.f32.gmra.mxu0 %v3487
    %v3555 = vpop.f32.mrf.mxu0
    %v3556 = vadd.f32 %v2988, %v3555
    %v3557 = vpop.f32.mrf.mxu0
    %3558 = vdwg.mxu0
    %v3559 = vmax.f32 %v3556, 0.0
    %v3561 = vsel %vm3072, %v3559, 0
    %3563 = vmatprep.subr.mxu0 0.0
    %3564 = vmatpush1.msra.mxu0 0.0
    %3565 = vmatprep.subr.mxu0 0.0
    %3566 = vmatpush1.msra.mxu0 0.0
    %3567 = vmatprep.subr.mxu0 0.0
    %3568 = vmatpush1.msra.mxu0 0.0
    %3569 = vmatprep.subr.mxu0 0.0
    %3570 = vmatpush1.msra.mxu0 0.0
    %3571 = vmatprep.subr.mxu0 0.0
    %3572 = vmatpush1.msra.mxu0 0.0
    %3573 = vmatprep.subr.mxu0 0.0
    %3574 = vmatpush1.msra.mxu0 0.0
    %3575 = vmatprep.subr.mxu0 0.0
    %3576 = vmatpush1.msra.mxu0 0.0
    %3577 = vmatprep.subr.mxu0 0.0
    %3578 = vmatpush1.msra.mxu0 0.0
    %3579 = vmatprep.subr.mxu0 0.0
    %3580 = vmatpush1.msra.mxu0 0.0
    %3581 = vmatprep.subr.mxu0 0.0
    %3582 = vmatpush1.msra.mxu0 0.0
    %3583 = vmatprep.subr.mxu0 0.0
    %3584 = vmatpush1.msra.mxu0 0.0
    %3585 = vmatprep.subr.mxu0 0.0
    %3586 = vmatpush1.msra.mxu0 0.0
    %3587 = vmatprep.subr.mxu0 0.0
    %3588 = vmatpush1.msra.mxu0 0.0
    %3589 = vmatprep.subr.mxu0 0.0
    %3590 = vmatpush1.msra.mxu0 0.0
    %3591 = vmatprep.subr.mxu0 0.0
    %3592 = vmatpush1.msra.mxu0 %v2982
    %3593 = vmatprep.subr.mxu0 0.0
    %3594 = vmatpush1.msra.mxu0 %v2981
    %3595 = vmatprep.subr.mxu0 0.0
    %3596 = vmatpush2.msra.mxu0 0.0
    %3597 = vmatprep.subr.mxu0 0.0
    %3598 = vmatpush2.msra.mxu0 0.0
    %3599 = vmatprep.subr.mxu0 0.0
    %3600 = vmatpush2.msra.mxu0 0.0
    %3601 = vmatprep.subr.mxu0 0.0
    %3602 = vmatpush2.msra.mxu0 0.0
    %3603 = vmatprep.subr.mxu0 0.0
    %3604 = vmatpush2.msra.mxu0 0.0
    %3605 = vmatprep.subr.mxu0 0.0
    %3606 = vmatpush2.msra.mxu0 0.0
    %3607 = vmatprep.subr.mxu0 0.0
    %3608 = vmatpush2.msra.mxu0 0.0
    %3609 = vmatprep.subr.mxu0 0.0
    %3610 = vmatpush2.msra.mxu0 0.0
    %3611 = vmatprep.subr.mxu0 0.0
    %3612 = vmatpush2.msra.mxu0 0.0
    %3613 = vmatprep.subr.mxu0 0.0
    %3614 = vmatpush2.msra.mxu0 0.0
    %3615 = vmatprep.subr.mxu0 0.0
    %3616 = vmatpush2.msra.mxu0 0.0
    %3617 = vmatprep.subr.mxu0 0.0
    %3618 = vmatpush2.msra.mxu0 0.0
    %3619 = vmatprep.subr.mxu0 0.0
    %3620 = vmatpush2.msra.mxu0 0.0
    %3621 = vmatprep.subr.mxu0 0.0
    %3622 = vmatpush2.msra.mxu0 0.0
    %3623 = vmatprep.subr.mxu0 0.0
    %3624 = vmatpush2.msra.mxu0 0.0
    %3625 = vmatprep.subr.mxu0 0.0
    %3626 = vmatpush2.msra.mxu0 0.0
    %3627 = vmatprep.mubr.f32.mxu0 0.0
    %3628 = vmatmul.mubr.f32.gmra.mxu0 %v3561
    %v3629 = vpop.f32.mrf.mxu0
    %v3630 = vadd.f32 %v3070, %v3629
    %v3631 = vpop.f32.mrf.mxu0
    %3632 = vdwg.mxu0
    %v3633 = vadd.f32 %v3146, %v3630
    %3634 = vmatprep.subr.mxu0 0.0
    %3635 = vmatpush1.msra.mxu0 0.0
    %3636 = vmatprep.subr.mxu0 0.0
    %3637 = vmatpush1.msra.mxu0 0.0
    %3638 = vmatprep.subr.mxu0 0.0
    %3639 = vmatpush1.msra.mxu0 0.0
    %3640 = vmatprep.subr.mxu0 0.0
    %3641 = vmatpush1.msra.mxu0 0.0
    %3642 = vmatprep.subr.mxu0 0.0
    %3643 = vmatpush1.msra.mxu0 0.0
    %3644 = vmatprep.subr.mxu0 0.0
    %3645 = vmatpush1.msra.mxu0 0.0
    %3646 = vmatprep.subr.mxu0 0.0
    %3647 = vmatpush1.msra.mxu0 0.0
    %3648 = vmatprep.subr.mxu0 0.0
    %3649 = vmatpush1.msra.mxu0 0.0
    %3650 = vmatprep.subr.mxu0 0.0
    %3651 = vmatpush1.msra.mxu0 0.0
    %3652 = vmatprep.subr.mxu0 0.0
    %3653 = vmatpush1.msra.mxu0 0.0
    %3654 = vmatprep.subr.mxu0 0.0
    %3655 = vmatpush1.msra.mxu0 0.0
    %3656 = vmatprep.subr.mxu0 0.0
    %3657 = vmatpush1.msra.mxu0 0.0
    %3658 = vmatprep.subr.mxu0 0.0
    %3659 = vmatpush1.msra.mxu0 %v2593
    %3660 = vmatprep.subr.mxu0 0.0
    %3661 = vmatpush1.msra.mxu0 %v2592
    %3662 = vmatprep.subr.mxu0 0.0
    %3663 = vmatpush1.msra.mxu0 %v2591
    %3664 = vmatprep.subr.mxu0 0.0
    %3665 = vmatpush1.msra.mxu0 %v2590
    %3666 = vmatprep.subr.mxu0 0.0
    %3667 = vmatpush2.msra.mxu0 0.0
    %3668 = vmatprep.subr.mxu0 0.0
    %3669 = vmatpush2.msra.mxu0 0.0
    %3670 = vmatprep.subr.mxu0 0.0
    %3671 = vmatpush2.msra.mxu0 0.0
    %3672 = vmatprep.subr.mxu0 0.0
    %3673 = vmatpush2.msra.mxu0 0.0
    %3674 = vmatprep.subr.mxu0 0.0
    %3675 = vmatpush2.msra.mxu0 0.0
    %3676 = vmatprep.subr.mxu0 0.0
    %3677 = vmatpush2.msra.mxu0 0.0
    %3678 = vmatprep.subr.mxu0 0.0
    %3679 = vmatpush2.msra.mxu0 0.0
    %3680 = vmatprep.subr.mxu0 0.0
    %3681 = vmatpush2.msra.mxu0 0.0
    %3682 = vmatprep.subr.mxu0 0.0
    %3683 = vmatpush2.msra.mxu0 0.0
    %3684 = vmatprep.subr.mxu0 0.0
    %3685 = vmatpush2.msra.mxu0 0.0
    %3686 = vmatprep.subr.mxu0 0.0
    %3687 = vmatpush2.msra.mxu0 0.0
    %3688 = vmatprep.subr.mxu0 0.0
    %3689 = vmatpush2.msra.mxu0 0.0
    %3690 = vmatprep.subr.mxu0 0.0
    %3691 = vmatpush2.msra.mxu0 0.0
    %3692 = vmatprep.subr.mxu0 0.0
    %3693 = vmatpush2.msra.mxu0 0.0
    %3694 = vmatprep.subr.mxu0 0.0
    %3695 = vmatpush2.msra.mxu0 0.0
    %3696 = vmatprep.subr.mxu0 0.0
    %3697 = vmatpush2.msra.mxu0 0.0
    %3698 = vmatprep.mubr.f32.mxu0 0.0
    %3699 = vmatmul.mubr.f32.gmra.mxu0 %v3487
    %v3700 = vpop.f32.mrf.mxu0
    %v3701 = vadd.f32 %v2604, %v3700
    %v3702 = vpop.f32.mrf.mxu0
    %3703 = vdwg.mxu0
    %3704 = vmatprep.subr.mxu0 0.0
    %3705 = vmatpush1.msra.mxu0 0.0
    %3706 = vmatprep.subr.mxu0 0.0
    %3707 = vmatpush1.msra.mxu0 0.0
    %3708 = vmatprep.subr.mxu0 0.0
    %3709 = vmatpush1.msra.mxu0 0.0
    %3710 = vmatprep.subr.mxu0 0.0
    %3711 = vmatpush1.msra.mxu0 0.0
    %3712 = vmatprep.subr.mxu0 0.0
    %3713 = vmatpush1.msra.mxu0 0.0
    %3714 = vmatprep.subr.mxu0 0.0
    %3715 = vmatpush1.msra.mxu0 0.0
    %3716 = vmatprep.subr.mxu0 0.0
    %3717 = vmatpush1.msra.mxu0 0.0
    %3718 = vmatprep.subr.mxu0 0.0
    %3719 = vmatpush1.msra.mxu0 0.0
    %3720 = vmatprep.subr.mxu0 0.0
    %3721 = vmatpush1.msra.mxu0 0.0
    %3722 = vmatprep.subr.mxu0 0.0
    %3723 = vmatpush1.msra.mxu0 0.0
    %3724 = vmatprep.subr.mxu0 0.0
    %3725 = vmatpush1.msra.mxu0 0.0
    %3726 = vmatprep.subr.mxu0 0.0
    %3727 = vmatpush1.msra.mxu0 0.0
    %3728 = vmatprep.subr.mxu0 0.0
    %3729 = vmatpush1.msra.mxu0 %v2597
    %3730 = vmatprep.subr.mxu0 0.0
    %3731 = vmatpush1.msra.mxu0 %v2596
    %3732 = vmatprep.subr.mxu0 0.0
    %3733 = vmatpush1.msra.mxu0 %v2595
    %3734 = vmatprep.subr.mxu0 0.0
    %3735 = vmatpush1.msra.mxu0 %v2594
    %3736 = vmatprep.subr.mxu0 0.0
    %3737 = vmatpush2.msra.mxu0 0.0
    %3738 = vmatprep.subr.mxu0 0.0
    %3739 = vmatpush2.msra.mxu0 0.0
    %3740 = vmatprep.subr.mxu0 0.0
    %3741 = vmatpush2.msra.mxu0 0.0
    %3742 = vmatprep.subr.mxu0 0.0
    %3743 = vmatpush2.msra.mxu0 0.0
    %3744 = vmatprep.subr.mxu0 0.0
    %3745 = vmatpush2.msra.mxu0 0.0
    %3746 = vmatprep.subr.mxu0 0.0
    %3747 = vmatpush2.msra.mxu0 0.0
    %3748 = vmatprep.subr.mxu0 0.0
    %3749 = vmatpush2.msra.mxu0 0.0
    %3750 = vmatprep.subr.mxu0 0.0
    %3751 = vmatpush2.msra.mxu0 0.0
    %3752 = vmatprep.subr.mxu0 0.0
    %3753 = vmatpush2.msra.mxu0 0.0
    %3754 = vmatprep.subr.mxu0 0.0
    %3755 = vmatpush2.msra.mxu0 0.0
    %3756 = vmatprep.subr.mxu0 0.0
    %3757 = vmatpush2.msra.mxu0 0.0
    %3758 = vmatprep.subr.mxu0 0.0
    %3759 = vmatpush2.msra.mxu0 0.0
    %3760 = vmatprep.subr.mxu0 0.0
    %3761 = vmatpush2.msra.mxu0 0.0
    %3762 = vmatprep.subr.mxu0 0.0
    %3763 = vmatpush2.msra.mxu0 0.0
    %3764 = vmatprep.subr.mxu0 0.0
    %3765 = vmatpush2.msra.mxu0 0.0
    %3766 = vmatprep.subr.mxu0 0.0
    %3767 = vmatpush2.msra.mxu0 0.0
    %3768 = vmatprep.mubr.f32.mxu0 0.0
    %3769 = vmatmul.mubr.f32.gmra.mxu0 %v3316
    %v3770 = vpop.f32.mrf.mxu0
    %v3771 = vadd.f32 %v2685, %v3770
    %v3772 = vpop.f32.mrf.mxu0
    %3773 = vdwg.mxu0
    %v3774 = vadd.f32 %v3701, %v3771
    %v3775 = vxor.u32 %v3774, 2147483648
    %v3776 = vmul.f32 %v3775, 1.442695
    %v3777 = vpow.pop %v3776
    %v3778 = vadd.f32 %v3777, 1.0
    %v3779 = vrcp.pop %v3778
    %v3780 = vmul.f32 1.0, %v3779
    %3782 = vrot.lane.b32.xlu0 %v3771, 64
    %v3783 = vpop.permute.xlu0 %3782
    %v3785 = vmul.f32 %v3780, %v3783
    %3787 = vrot.lane.b32.xlu0 %v3785, 64
    %v3788 = vpop.permute.xlu0 %3787
    %v3790 = vadd.f32 %v3701, %v3788
    %v3791 = vtanh.pop %v3790
    %v3792 = vsub.f32 1.0, %v3780
    %3794 = vrot.lane.b32.xlu0 %v3791, 96
    %v3795 = vpop.permute.xlu0 %3794
    %v3797 = vmul.f32 %v3792, %v3795
    %v3798 = vmul.f32 %v3780, %v3312
    %v3799 = vadd.f32 %v3797, %v3798
    %3801 = vrot.lane.b32.xlu0 %v3799, 96
    %v3802 = vpop.permute.xlu0 %3801
    %v3803 = vsel %vm263, %v3802, 0
    %3805 = vmatprep.subr.mxu0 0.0
    %3806 = vmatpush1.msra.mxu0 0.0
    %3807 = vmatprep.subr.mxu0 0.0
    %3808 = vmatpush1.msra.mxu0 0.0
    %3809 = vmatprep.subr.mxu0 0.0
    %3810 = vmatpush1.msra.mxu0 0.0
    %3811 = vmatprep.subr.mxu0 0.0
    %3812 = vmatpush1.msra.mxu0 0.0
    %3813 = vmatprep.subr.mxu0 0.0
    %3814 = vmatpush1.msra.mxu0 0.0
    %3815 = vmatprep.subr.mxu0 0.0
    %3816 = vmatpush1.msra.mxu0 0.0
    %3817 = vmatprep.subr.mxu0 0.0
    %3818 = vmatpush1.msra.mxu0 0.0
    %3819 = vmatprep.subr.mxu0 0.0
    %3820 = vmatpush1.msra.mxu0 0.0
    %3821 = vmatprep.subr.mxu0 0.0
    %3822 = vmatpush1.msra.mxu0 0.0
    %3823 = vmatprep.subr.mxu0 0.0
    %3824 = vmatpush1.msra.mxu0 0.0
    %3825 = vmatprep.subr.mxu0 0.0
    %3826 = vmatpush1.msra.mxu0 0.0
    %3827 = vmatprep.subr.mxu0 0.0
    %3828 = vmatpush1.msra.mxu0 0.0
    %3829 = vmatprep.subr.mxu0 0.0
    %3830 = vmatpush1.msra.mxu0 %v2786
    %3831 = vmatprep.subr.mxu0 0.0
    %3832 = vmatpush1.msra.mxu0 %v2785
    %3833 = vmatprep.subr.mxu0 0.0
    %3834 = vmatpush1.msra.mxu0 %v2784
    %3835 = vmatprep.subr.mxu0 0.0
    %3836 = vmatpush1.msra.mxu0 %v2783
    %3837 = vmatprep.subr.mxu0 0.0
    %3838 = vmatpush2.msra.mxu0 0.0
    %3839 = vmatprep.subr.mxu0 0.0
    %3840 = vmatpush2.msra.mxu0 0.0
    %3841 = vmatprep.subr.mxu0 0.0
    %3842 = vmatpush2.msra.mxu0 0.0
    %3843 = vmatprep.subr.mxu0 0.0
    %3844 = vmatpush2.msra.mxu0 0.0
    %3845 = vmatprep.subr.mxu0 0.0
    %3846 = vmatpush2.msra.mxu0 0.0
    %3847 = vmatprep.subr.mxu0 0.0
    %3848 = vmatpush2.msra.mxu0 0.0
    %3849 = vmatprep.subr.mxu0 0.0
    %3850 = vmatpush2.msra.mxu0 0.0
    %3851 = vmatprep.subr.mxu0 0.0
    %3852 = vmatpush2.msra.mxu0 0.0
    %3853 = vmatprep.subr.mxu0 0.0
    %3854 = vmatpush2.msra.mxu0 0.0
    %3855 = vmatprep.subr.mxu0 0.0
    %3856 = vmatpush2.msra.mxu0 0.0
    %3857 = vmatprep.subr.mxu0 0.0
    %3858 = vmatpush2.msra.mxu0 0.0
    %3859 = vmatprep.subr.mxu0 0.0
    %3860 = vmatpush2.msra.mxu0 0.0
    %3861 = vmatprep.subr.mxu0 0.0
    %3862 = vmatpush2.msra.mxu0 0.0
    %3863 = vmatprep.subr.mxu0 0.0
    %3864 = vmatpush2.msra.mxu0 0.0
    %3865 = vmatprep.subr.mxu0 0.0
    %3866 = vmatpush2.msra.mxu0 0.0
    %3867 = vmatprep.subr.mxu0 0.0
    %3868 = vmatpush2.msra.mxu0 0.0
    %3869 = vmatprep.mubr.f32.mxu0 0.0
    %3870 = vmatmul.mubr.f32.gmra.mxu0 %v3803
    %v3871 = vpop.f32.mrf.mxu0
    %v3872 = vadd.f32 %v2797, %v3871
    %v3873 = vpop.f32.mrf.mxu0
    %3874 = vdwg.mxu0
    %3875 = vmatprep.subr.mxu0 0.0
    %3876 = vmatpush1.msra.mxu0 0.0
    %3877 = vmatprep.subr.mxu0 0.0
    %3878 = vmatpush1.msra.mxu0 0.0
    %3879 = vmatprep.subr.mxu0 0.0
    %3880 = vmatpush1.msra.mxu0 0.0
    %3881 = vmatprep.subr.mxu0 0.0
    %3882 = vmatpush1.msra.mxu0 0.0
    %3883 = vmatprep.subr.mxu0 0.0
    %3884 = vmatpush1.msra.mxu0 0.0
    %3885 = vmatprep.subr.mxu0 0.0
    %3886 = vmatpush1.msra.mxu0 0.0
    %3887 = vmatprep.subr.mxu0 0.0
    %3888 = vmatpush1.msra.mxu0 0.0
    %3889 = vmatprep.subr.mxu0 0.0
    %3890 = vmatpush1.msra.mxu0 0.0
    %3891 = vmatprep.subr.mxu0 0.0
    %3892 = vmatpush1.msra.mxu0 0.0
    %3893 = vmatprep.subr.mxu0 0.0
    %3894 = vmatpush1.msra.mxu0 0.0
    %3895 = vmatprep.subr.mxu0 0.0
    %3896 = vmatpush1.msra.mxu0 0.0
    %3897 = vmatprep.subr.mxu0 0.0
    %3898 = vmatpush1.msra.mxu0 0.0
    %3899 = vmatprep.subr.mxu0 0.0
    %3900 = vmatpush1.msra.mxu0 %v2790
    %3901 = vmatprep.subr.mxu0 0.0
    %3902 = vmatpush1.msra.mxu0 %v2789
    %3903 = vmatprep.subr.mxu0 0.0
    %3904 = vmatpush1.msra.mxu0 %v2788
    %3905 = vmatprep.subr.mxu0 0.0
    %3906 = vmatpush1.msra.mxu0 %v2787
    %3907 = vmatprep.subr.mxu0 0.0
    %3908 = vmatpush2.msra.mxu0 0.0
    %3909 = vmatprep.subr.mxu0 0.0
    %3910 = vmatpush2.msra.mxu0 0.0
    %3911 = vmatprep.subr.mxu0 0.0
    %3912 = vmatpush2.msra.mxu0 0.0
    %3913 = vmatprep.subr.mxu0 0.0
    %3914 = vmatpush2.msra.mxu0 0.0
    %3915 = vmatprep.subr.mxu0 0.0
    %3916 = vmatpush2.msra.mxu0 0.0
    %3917 = vmatprep.subr.mxu0 0.0
    %3918 = vmatpush2.msra.mxu0 0.0
    %3919 = vmatprep.subr.mxu0 0.0
    %3920 = vmatpush2.msra.mxu0 0.0
    %3921 = vmatprep.subr.mxu0 0.0
    %3922 = vmatpush2.msra.mxu0 0.0
    %3923 = vmatprep.subr.mxu0 0.0
    %3924 = vmatpush2.msra.mxu0 0.0
    %3925 = vmatprep.subr.mxu0 0.0
    %3926 = vmatpush2.msra.mxu0 0.0
    %3927 = vmatprep.subr.mxu0 0.0
    %3928 = vmatpush2.msra.mxu0 0.0
    %3929 = vmatprep.subr.mxu0 0.0
    %3930 = vmatpush2.msra.mxu0 0.0
    %3931 = vmatprep.subr.mxu0 0.0
    %3932 = vmatpush2.msra.mxu0 0.0
    %3933 = vmatprep.subr.mxu0 0.0
    %3934 = vmatpush2.msra.mxu0 0.0
    %3935 = vmatprep.subr.mxu0 0.0
    %3936 = vmatpush2.msra.mxu0 0.0
    %3937 = vmatprep.subr.mxu0 0.0
    %3938 = vmatpush2.msra.mxu0 0.0
    %3939 = vmatprep.mubr.f32.mxu0 0.0
    %3940 = vmatmul.mubr.f32.gmra.mxu0 %v3487
    %v3941 = vpop.f32.mrf.mxu0
    %v3942 = vadd.f32 %v2878, %v3941
    %v3943 = vpop.f32.mrf.mxu0
    %3944 = vdwg.mxu0
    %v3945 = vadd.f32 %v3872, %v3942
    %v3946 = vxor.u32 %v3945, 2147483648
    %v3947 = vmul.f32 %v3946, 1.442695
    %v3948 = vpow.pop %v3947
    %v3949 = vadd.f32 %v3948, 1.0
    %v3950 = vrcp.pop %v3949
    %v3951 = vmul.f32 1.0, %v3950
    %3953 = vrot.lane.b32.xlu0 %v3942, 64
    %v3954 = vpop.permute.xlu0 %3953
    %v3956 = vmul.f32 %v3951, %v3954
    %3958 = vrot.lane.b32.xlu0 %v3956, 64
    %v3959 = vpop.permute.xlu0 %3958
    %v3961 = vadd.f32 %v3872, %v3959
    %v3962 = vtanh.pop %v3961
    %v3963 = vsub.f32 1.0, %v3951
    %3965 = vrot.lane.b32.xlu0 %v3962, 96
    %v3966 = vpop.permute.xlu0 %3965
    %v3968 = vmul.f32 %v3963, %v3966
    %v3969 = vmul.f32 %v3951, %v3483
    %v3970 = vadd.f32 %v3968, %v3969
    %3972 = vrot.lane.b32.xlu0 %v3970, 96
    %v3973 = vpop.permute.xlu0 %3972
    %v3974 = vsel %vm263, %v3973, 0
    %3976 = vmatprep.subr.mxu0 0.0
    %3977 = vmatpush1.msra.mxu0 0.0
    %3978 = vmatprep.subr.mxu0 0.0
    %3979 = vmatpush1.msra.mxu0 0.0
    %3980 = vmatprep.subr.mxu0 0.0
    %3981 = vmatpush1.msra.mxu0 0.0
    %3982 = vmatprep.subr.mxu0 0.0
    %3983 = vmatpush1.msra.mxu0 0.0
    %3984 = vmatprep.subr.mxu0 0.0
    %3985 = vmatpush1.msra.mxu0 0.0
    %3986 = vmatprep.subr.mxu0 0.0
    %3987 = vmatpush1.msra.mxu0 0.0
    %3988 = vmatprep.subr.mxu0 0.0
    %3989 = vmatpush1.msra.mxu0 0.0
    %3990 = vmatprep.subr.mxu0 0.0
    %3991 = vmatpush1.msra.mxu0 0.0
    %3992 = vmatprep.subr.mxu0 0.0
    %3993 = vmatpush1.msra.mxu0 0.0
    %3994 = vmatprep.subr.mxu0 0.0
    %3995 = vmatpush1.msra.mxu0 0.0
    %3996 = vmatprep.subr.mxu0 0.0
    %3997 = vmatpush1.msra.mxu0 0.0
    %3998 = vmatprep.subr.mxu0 0.0
    %3999 = vmatpush1.msra.mxu0 0.0
    %4000 = vmatprep.subr.mxu0 0.0
    %4001 = vmatpush1.msra.mxu0 %v2979
    %4002 = vmatprep.subr.mxu0 0.0
    %4003 = vmatpush1.msra.mxu0 %v2978
    %4004 = vmatprep.subr.mxu0 0.0
    %4005 = vmatpush1.msra.mxu0 %v2977
    %4006 = vmatprep.subr.mxu0 0.0
    %4007 = vmatpush1.msra.mxu0 %v2976
    %4008 = vmatprep.subr.mxu0 0.0
    %4009 = vmatpush2.msra.mxu0 0.0
    %4010 = vmatprep.subr.mxu0 0.0
    %4011 = vmatpush2.msra.mxu0 0.0
    %4012 = vmatprep.subr.mxu0 0.0
    %4013 = vmatpush2.msra.mxu0 0.0
    %4014 = vmatprep.subr.mxu0 0.0
    %4015 = vmatpush2.msra.mxu0 0.0
    %4016 = vmatprep.subr.mxu0 0.0
    %4017 = vmatpush2.msra.mxu0 0.0
    %4018 = vmatprep.subr.mxu0 0.0
    %4019 = vmatpush2.msra.mxu0 0.0
    %4020 = vmatprep.subr.mxu0 0.0
    %4021 = vmatpush2.msra.mxu0 0.0
    %4022 = vmatprep.subr.mxu0 0.0
    %4023 = vmatpush2.msra.mxu0 0.0
    %4024 = vmatprep.subr.mxu0 0.0
    %4025 = vmatpush2.msra.mxu0 0.0
    %4026 = vmatprep.subr.mxu0 0.0
    %4027 = vmatpush2.msra.mxu0 0.0
    %4028 = vmatprep.subr.mxu0 0.0
    %4029 = vmatpush2.msra.mxu0 0.0
    %4030 = vmatprep.subr.mxu0 0.0
    %4031 = vmatpush2.msra.mxu0 0.0
    %4032 = vmatprep.subr.mxu0 0.0
    %4033 = vmatpush2.msra.mxu0 0.0
    %4034 = vmatprep.subr.mxu0 0.0
    %4035 = vmatpush2.msra.mxu0 0.0
    %4036 = vmatprep.subr.mxu0 0.0
    %4037 = vmatpush2.msra.mxu0 0.0
    %4038 = vmatprep.subr.mxu0 0.0
    %4039 = vmatpush2.msra.mxu0 0.0
    %4040 = vmatprep.mubr.f32.mxu0 0.0
    %4041 = vmatmul.mubr.f32.gmra.mxu0 %v3974
    %v4042 = vpop.f32.mrf.mxu0
    %v4043 = vadd.f32 %v2988, %v4042
    %v4044 = vpop.f32.mrf.mxu0
    %4045 = vdwg.mxu0
    %v4046 = vmax.f32 %v4043, 0.0
    %v4048 = vsel %vm3072, %v4046, 0
    %4050 = vmatprep.subr.mxu0 0.0
    %4051 = vmatpush1.msra.mxu0 0.0
    %4052 = vmatprep.subr.mxu0 0.0
    %4053 = vmatpush1.msra.mxu0 0.0
    %4054 = vmatprep.subr.mxu0 0.0
    %4055 = vmatpush1.msra.mxu0 0.0
    %4056 = vmatprep.subr.mxu0 0.0
    %4057 = vmatpush1.msra.mxu0 0.0
    %4058 = vmatprep.subr.mxu0 0.0
    %4059 = vmatpush1.msra.mxu0 0.0
    %4060 = vmatprep.subr.mxu0 0.0
    %4061 = vmatpush1.msra.mxu0 0.0
    %4062 = vmatprep.subr.mxu0 0.0
    %4063 = vmatpush1.msra.mxu0 0.0
    %4064 = vmatprep.subr.mxu0 0.0
    %4065 = vmatpush1.msra.mxu0 0.0
    %4066 = vmatprep.subr.mxu0 0.0
    %4067 = vmatpush1.msra.mxu0 0.0
    %4068 = vmatprep.subr.mxu0 0.0
    %4069 = vmatpush1.msra.mxu0 0.0
    %4070 = vmatprep.subr.mxu0 0.0
    %4071 = vmatpush1.msra.mxu0 0.0
    %4072 = vmatprep.subr.mxu0 0.0
    %4073 = vmatpush1.msra.mxu0 0.0
    %4074 = vmatprep.subr.mxu0 0.0
    %4075 = vmatpush1.msra.mxu0 0.0
    %4076 = vmatprep.subr.mxu0 0.0
    %4077 = vmatpush1.msra.mxu0 0.0
    %4078 = vmatprep.subr.mxu0 0.0
    %4079 = vmatpush1.msra.mxu0 %v2982
    %4080 = vmatprep.subr.mxu0 0.0
    %4081 = vmatpush1.msra.mxu0 %v2981
    %4082 = vmatprep.subr.mxu0 0.0
    %4083 = vmatpush2.msra.mxu0 0.0
    %4084 = vmatprep.subr.mxu0 0.0
    %4085 = vmatpush2.msra.mxu0 0.0
    %4086 = vmatprep.subr.mxu0 0.0
    %4087 = vmatpush2.msra.mxu0 0.0
    %4088 = vmatprep.subr.mxu0 0.0
    %4089 = vmatpush2.msra.mxu0 0.0
    %4090 = vmatprep.subr.mxu0 0.0
    %4091 = vmatpush2.msra.mxu0 0.0
    %4092 = vmatprep.subr.mxu0 0.0
    %4093 = vmatpush2.msra.mxu0 0.0
    %4094 = vmatprep.subr.mxu0 0.0
    %4095 = vmatpush2.msra.mxu0 0.0
    %4096 = vmatprep.subr.mxu0 0.0
    %4097 = vmatpush2.msra.mxu0 0.0
    %4098 = vmatprep.subr.mxu0 0.0
    %4099 = vmatpush2.msra.mxu0 0.0
    %4100 = vmatprep.subr.mxu0 0.0
    %4101 = vmatpush2.msra.mxu0 0.0
    %4102 = vmatprep.subr.mxu0 0.0
    %4103 = vmatpush2.msra.mxu0 0.0
    %4104 = vmatprep.subr.mxu0 0.0
    %4105 = vmatpush2.msra.mxu0 0.0
    %4106 = vmatprep.subr.mxu0 0.0
    %4107 = vmatpush2.msra.mxu0 0.0
    %4108 = vmatprep.subr.mxu0 0.0
    %4109 = vmatpush2.msra.mxu0 0.0
    %4110 = vmatprep.subr.mxu0 0.0
    %4111 = vmatpush2.msra.mxu0 0.0
    %4112 = vmatprep.subr.mxu0 0.0
    %4113 = vmatpush2.msra.mxu0 0.0
    %4114 = vmatprep.mubr.f32.mxu0 0.0
    %4115 = vmatmul.mubr.f32.gmra.mxu0 %v4048
    %v4116 = vpop.f32.mrf.mxu0
    %v4117 = vadd.f32 %v3070, %v4116
    %v4118 = vpop.f32.mrf.mxu0
    %4119 = vdwg.mxu0
    %v4120 = vadd.f32 %v3633, %v4117
    %4121 = vmatprep.subr.mxu0 0.0
    %4122 = vmatpush1.msra.mxu0 0.0
    %4123 = vmatprep.subr.mxu0 0.0
    %4124 = vmatpush1.msra.mxu0 0.0
    %4125 = vmatprep.subr.mxu0 0.0
    %4126 = vmatpush1.msra.mxu0 0.0
    %4127 = vmatprep.subr.mxu0 0.0
    %4128 = vmatpush1.msra.mxu0 0.0
    %4129 = vmatprep.subr.mxu0 0.0
    %4130 = vmatpush1.msra.mxu0 0.0
    %4131 = vmatprep.subr.mxu0 0.0
    %4132 = vmatpush1.msra.mxu0 0.0
    %4133 = vmatprep.subr.mxu0 0.0
    %4134 = vmatpush1.msra.mxu0 0.0
    %4135 = vmatprep.subr.mxu0 0.0
    %4136 = vmatpush1.msra.mxu0 0.0
    %4137 = vmatprep.subr.mxu0 0.0
    %4138 = vmatpush1.msra.mxu0 0.0
    %4139 = vmatprep.subr.mxu0 0.0
    %4140 = vmatpush1.msra.mxu0 0.0
    %4141 = vmatprep.subr.mxu0 0.0
    %4142 = vmatpush1.msra.mxu0 0.0
    %4143 = vmatprep.subr.mxu0 0.0
    %4144 = vmatpush1.msra.mxu0 0.0
    %4145 = vmatprep.subr.mxu0 0.0
    %4146 = vmatpush1.msra.mxu0 %v2593
    %4147 = vmatprep.subr.mxu0 0.0
    %4148 = vmatpush1.msra.mxu0 %v2592
    %4149 = vmatprep.subr.mxu0 0.0
    %4150 = vmatpush1.msra.mxu0 %v2591
    %4151 = vmatprep.subr.mxu0 0.0
    %4152 = vmatpush1.msra.mxu0 %v2590
    %4153 = vmatprep.subr.mxu0 0.0
    %4154 = vmatpush2.msra.mxu0 0.0
    %4155 = vmatprep.subr.mxu0 0.0
    %4156 = vmatpush2.msra.mxu0 0.0
    %4157 = vmatprep.subr.mxu0 0.0
    %4158 = vmatpush2.msra.mxu0 0.0
    %4159 = vmatprep.subr.mxu0 0.0
    %4160 = vmatpush2.msra.mxu0 0.0
    %4161 = vmatprep.subr.mxu0 0.0
    %4162 = vmatpush2.msra.mxu0 0.0
    %4163 = vmatprep.subr.mxu0 0.0
    %4164 = vmatpush2.msra.mxu0 0.0
    %4165 = vmatprep.subr.mxu0 0.0
    %4166 = vmatpush2.msra.mxu0 0.0
    %4167 = vmatprep.subr.mxu0 0.0
    %4168 = vmatpush2.msra.mxu0 0.0
    %4169 = vmatprep.subr.mxu0 0.0
    %4170 = vmatpush2.msra.mxu0 0.0
    %4171 = vmatprep.subr.mxu0 0.0
    %4172 = vmatpush2.msra.mxu0 0.0
    %4173 = vmatprep.subr.mxu0 0.0
    %4174 = vmatpush2.msra.mxu0 0.0
    %4175 = vmatprep.subr.mxu0 0.0
    %4176 = vmatpush2.msra.mxu0 0.0
    %4177 = vmatprep.subr.mxu0 0.0
    %4178 = vmatpush2.msra.mxu0 0.0
    %4179 = vmatprep.subr.mxu0 0.0
    %4180 = vmatpush2.msra.mxu0 0.0
    %4181 = vmatprep.subr.mxu0 0.0
    %4182 = vmatpush2.msra.mxu0 0.0
    %4183 = vmatprep.subr.mxu0 0.0
    %4184 = vmatpush2.msra.mxu0 0.0
    %4185 = vmatprep.mubr.f32.mxu0 0.0
    %4186 = vmatmul.mubr.f32.gmra.mxu0 %v3974
    %v4187 = vpop.f32.mrf.mxu0
    %v4188 = vadd.f32 %v2604, %v4187
    %v4189 = vpop.f32.mrf.mxu0
    %4190 = vdwg.mxu0
    %4191 = vmatprep.subr.mxu0 0.0
    %4192 = vmatpush1.msra.mxu0 0.0
    %4193 = vmatprep.subr.mxu0 0.0
    %4194 = vmatpush1.msra.mxu0 0.0
    %4195 = vmatprep.subr.mxu0 0.0
    %4196 = vmatpush1.msra.mxu0 0.0
    %4197 = vmatprep.subr.mxu0 0.0
    %4198 = vmatpush1.msra.mxu0 0.0
    %4199 = vmatprep.subr.mxu0 0.0
    %4200 = vmatpush1.msra.mxu0 0.0
    %4201 = vmatprep.subr.mxu0 0.0
    %4202 = vmatpush1.msra.mxu0 0.0
    %4203 = vmatprep.subr.mxu0 0.0
    %4204 = vmatpush1.msra.mxu0 0.0
    %4205 = vmatprep.subr.mxu0 0.0
    %4206 = vmatpush1.msra.mxu0 0.0
    %4207 = vmatprep.subr.mxu0 0.0
    %4208 = vmatpush1.msra.mxu0 0.0
    %4209 = vmatprep.subr.mxu0 0.0
    %4210 = vmatpush1.msra.mxu0 0.0
    %4211 = vmatprep.subr.mxu0 0.0
    %4212 = vmatpush1.msra.mxu0 0.0
    %4213 = vmatprep.subr.mxu0 0.0
    %4214 = vmatpush1.msra.mxu0 0.0
    %4215 = vmatprep.subr.mxu0 0.0
    %4216 = vmatpush1.msra.mxu0 %v2597
    %4217 = vmatprep.subr.mxu0 0.0
    %4218 = vmatpush1.msra.mxu0 %v2596
    %4219 = vmatprep.subr.mxu0 0.0
    %4220 = vmatpush1.msra.mxu0 %v2595
    %4221 = vmatprep.subr.mxu0 0.0
    %4222 = vmatpush1.msra.mxu0 %v2594
    %4223 = vmatprep.subr.mxu0 0.0
    %4224 = vmatpush2.msra.mxu0 0.0
    %4225 = vmatprep.subr.mxu0 0.0
    %4226 = vmatpush2.msra.mxu0 0.0
    %4227 = vmatprep.subr.mxu0 0.0
    %4228 = vmatpush2.msra.mxu0 0.0
    %4229 = vmatprep.subr.mxu0 0.0
    %4230 = vmatpush2.msra.mxu0 0.0
    %4231 = vmatprep.subr.mxu0 0.0
    %4232 = vmatpush2.msra.mxu0 0.0
    %4233 = vmatprep.subr.mxu0 0.0
    %4234 = vmatpush2.msra.mxu0 0.0
    %4235 = vmatprep.subr.mxu0 0.0
    %4236 = vmatpush2.msra.mxu0 0.0
    %4237 = vmatprep.subr.mxu0 0.0
    %4238 = vmatpush2.msra.mxu0 0.0
    %4239 = vmatprep.subr.mxu0 0.0
    %4240 = vmatpush2.msra.mxu0 0.0
    %4241 = vmatprep.subr.mxu0 0.0
    %4242 = vmatpush2.msra.mxu0 0.0
    %4243 = vmatprep.subr.mxu0 0.0
    %4244 = vmatpush2.msra.mxu0 0.0
    %4245 = vmatprep.subr.mxu0 0.0
    %4246 = vmatpush2.msra.mxu0 0.0
    %4247 = vmatprep.subr.mxu0 0.0
    %4248 = vmatpush2.msra.mxu0 0.0
    %4249 = vmatprep.subr.mxu0 0.0
    %4250 = vmatpush2.msra.mxu0 0.0
    %4251 = vmatprep.subr.mxu0 0.0
    %4252 = vmatpush2.msra.mxu0 0.0
    %4253 = vmatprep.subr.mxu0 0.0
    %4254 = vmatpush2.msra.mxu0 0.0
    %4255 = vmatprep.mubr.f32.mxu0 0.0
    %4256 = vmatmul.mubr.f32.gmra.mxu0 %v3803
    %v4257 = vpop.f32.mrf.mxu0
    %v4258 = vadd.f32 %v2685, %v4257
    %v4259 = vpop.f32.mrf.mxu0
    %4260 = vdwg.mxu0
    %v4261 = vadd.f32 %v4188, %v4258
    %v4262 = vxor.u32 %v4261, 2147483648
    %v4263 = vmul.f32 %v4262, 1.442695
    %v4264 = vpow.pop %v4263
    %v4265 = vadd.f32 %v4264, 1.0
    %v4266 = vrcp.pop %v4265
    %v4267 = vmul.f32 1.0, %v4266
    %4269 = vrot.lane.b32.xlu0 %v4258, 64
    %v4270 = vpop.permute.xlu0 %4269
    %v4272 = vmul.f32 %v4267, %v4270
    %4274 = vrot.lane.b32.xlu0 %v4272, 64
    %v4275 = vpop.permute.xlu0 %4274
    %v4277 = vadd.f32 %v4188, %v4275
    %v4278 = vtanh.pop %v4277
    %v4279 = vsub.f32 1.0, %v4267
    %4281 = vrot.lane.b32.xlu0 %v4278, 96
    %v4282 = vpop.permute.xlu0 %4281
    %v4284 = vmul.f32 %v4279, %v4282
    %v4285 = vmul.f32 %v4267, %v3799
    %v4286 = vadd.f32 %v4284, %v4285
    %4288 = vrot.lane.b32.xlu0 %v4286, 96
    %v4289 = vpop.permute.xlu0 %4288
    %v4290 = vsel %vm263, %v4289, 0
    %4292 = vmatprep.subr.mxu0 0.0
    %4293 = vmatpush1.msra.mxu0 0.0
    %4294 = vmatprep.subr.mxu0 0.0
    %4295 = vmatpush1.msra.mxu0 0.0
    %4296 = vmatprep.subr.mxu0 0.0
    %4297 = vmatpush1.msra.mxu0 0.0
    %4298 = vmatprep.subr.mxu0 0.0
    %4299 = vmatpush1.msra.mxu0 0.0
    %4300 = vmatprep.subr.mxu0 0.0
    %4301 = vmatpush1.msra.mxu0 0.0
    %4302 = vmatprep.subr.mxu0 0.0
    %4303 = vmatpush1.msra.mxu0 0.0
    %4304 = vmatprep.subr.mxu0 0.0
    %4305 = vmatpush1.msra.mxu0 0.0
    %4306 = vmatprep.subr.mxu0 0.0
    %4307 = vmatpush1.msra.mxu0 0.0
    %4308 = vmatprep.subr.mxu0 0.0
    %4309 = vmatpush1.msra.mxu0 0.0
    %4310 = vmatprep.subr.mxu0 0.0
    %4311 = vmatpush1.msra.mxu0 0.0
    %4312 = vmatprep.subr.mxu0 0.0
    %4313 = vmatpush1.msra.mxu0 0.0
    %4314 = vmatprep.subr.mxu0 0.0
    %4315 = vmatpush1.msra.mxu0 0.0
    %4316 = vmatprep.subr.mxu0 0.0
    %4317 = vmatpush1.msra.mxu0 %v2786
    %4318 = vmatprep.subr.mxu0 0.0
    %4319 = vmatpush1.msra.mxu0 %v2785
    %4320 = vmatprep.subr.mxu0 0.0
    %4321 = vmatpush1.msra.mxu0 %v2784
    %4322 = vmatprep.subr.mxu0 0.0
    %4323 = vmatpush1.msra.mxu0 %v2783
    %4324 = vmatprep.subr.mxu0 0.0
    %4325 = vmatpush2.msra.mxu0 0.0
    %4326 = vmatprep.subr.mxu0 0.0
    %4327 = vmatpush2.msra.mxu0 0.0
    %4328 = vmatprep.subr.mxu0 0.0
    %4329 = vmatpush2.msra.mxu0 0.0
    %4330 = vmatprep.subr.mxu0 0.0
    %4331 = vmatpush2.msra.mxu0 0.0
    %4332 = vmatprep.subr.mxu0 0.0
    %4333 = vmatpush2.msra.mxu0 0.0
    %4334 = vmatprep.subr.mxu0 0.0
    %4335 = vmatpush2.msra.mxu0 0.0
    %4336 = vmatprep.subr.mxu0 0.0
    %4337 = vmatpush2.msra.mxu0 0.0
    %4338 = vmatprep.subr.mxu0 0.0
    %4339 = vmatpush2.msra.mxu0 0.0
    %4340 = vmatprep.subr.mxu0 0.0
    %4341 = vmatpush2.msra.mxu0 0.0
    %4342 = vmatprep.subr.mxu0 0.0
    %4343 = vmatpush2.msra.mxu0 0.0
    %4344 = vmatprep.subr.mxu0 0.0
    %4345 = vmatpush2.msra.mxu0 0.0
    %4346 = vmatprep.subr.mxu0 0.0
    %4347 = vmatpush2.msra.mxu0 0.0
    %4348 = vmatprep.subr.mxu0 0.0
    %4349 = vmatpush2.msra.mxu0 0.0
    %4350 = vmatprep.subr.mxu0 0.0
    %4351 = vmatpush2.msra.mxu0 0.0
    %4352 = vmatprep.subr.mxu0 0.0
    %4353 = vmatpush2.msra.mxu0 0.0
    %4354 = vmatprep.subr.mxu0 0.0
    %4355 = vmatpush2.msra.mxu0 0.0
    %4356 = vmatprep.mubr.f32.mxu0 0.0
    %4357 = vmatmul.mubr.f32.gmra.mxu0 %v4290
    %v4358 = vpop.f32.mrf.mxu0
    %v4359 = vadd.f32 %v2797, %v4358
    %v4360 = vpop.f32.mrf.mxu0
    %4361 = vdwg.mxu0
    %4362 = vmatprep.subr.mxu0 0.0
    %4363 = vmatpush1.msra.mxu0 0.0
    %4364 = vmatprep.subr.mxu0 0.0
    %4365 = vmatpush1.msra.mxu0 0.0
    %4366 = vmatprep.subr.mxu0 0.0
    %4367 = vmatpush1.msra.mxu0 0.0
    %4368 = vmatprep.subr.mxu0 0.0
    %4369 = vmatpush1.msra.mxu0 0.0
    %4370 = vmatprep.subr.mxu0 0.0
    %4371 = vmatpush1.msra.mxu0 0.0
    %4372 = vmatprep.subr.mxu0 0.0
    %4373 = vmatpush1.msra.mxu0 0.0
    %4374 = vmatprep.subr.mxu0 0.0
    %4375 = vmatpush1.msra.mxu0 0.0
    %4376 = vmatprep.subr.mxu0 0.0
    %4377 = vmatpush1.msra.mxu0 0.0
    %4378 = vmatprep.subr.mxu0 0.0
    %4379 = vmatpush1.msra.mxu0 0.0
    %4380 = vmatprep.subr.mxu0 0.0
    %4381 = vmatpush1.msra.mxu0 0.0
    %4382 = vmatprep.subr.mxu0 0.0
    %4383 = vmatpush1.msra.mxu0 0.0
    %4384 = vmatprep.subr.mxu0 0.0
    %4385 = vmatpush1.msra.mxu0 0.0
    %4386 = vmatprep.subr.mxu0 0.0
    %4387 = vmatpush1.msra.mxu0 %v2790
    %4388 = vmatprep.subr.mxu0 0.0
    %4389 = vmatpush1.msra.mxu0 %v2789
    %4390 = vmatprep.subr.mxu0 0.0
    %4391 = vmatpush1.msra.mxu0 %v2788
    %4392 = vmatprep.subr.mxu0 0.0
    %4393 = vmatpush1.msra.mxu0 %v2787
    %4394 = vmatprep.subr.mxu0 0.0
    %4395 = vmatpush2.msra.mxu0 0.0
    %4396 = vmatprep.subr.mxu0 0.0
    %4397 = vmatpush2.msra.mxu0 0.0
    %4398 = vmatprep.subr.mxu0 0.0
    %4399 = vmatpush2.msra.mxu0 0.0
    %4400 = vmatprep.subr.mxu0 0.0
    %4401 = vmatpush2.msra.mxu0 0.0
    %4402 = vmatprep.subr.mxu0 0.0
    %4403 = vmatpush2.msra.mxu0 0.0
    %4404 = vmatprep.subr.mxu0 0.0
    %4405 = vmatpush2.msra.mxu0 0.0
    %4406 = vmatprep.subr.mxu0 0.0
    %4407 = vmatpush2.msra.mxu0 0.0
    %4408 = vmatprep.subr.mxu0 0.0
    %4409 = vmatpush2.msra.mxu0 0.0
    %4410 = vmatprep.subr.mxu0 0.0
    %4411 = vmatpush2.msra.mxu0 0.0
    %4412 = vmatprep.subr.mxu0 0.0
    %4413 = vmatpush2.msra.mxu0 0.0
    %4414 = vmatprep.subr.mxu0 0.0
    %4415 = vmatpush2.msra.mxu0 0.0
    %4416 = vmatprep.subr.mxu0 0.0
    %4417 = vmatpush2.msra.mxu0 0.0
    %4418 = vmatprep.subr.mxu0 0.0
    %4419 = vmatpush2.msra.mxu0 0.0
    %4420 = vmatprep.subr.mxu0 0.0
    %4421 = vmatpush2.msra.mxu0 0.0
    %4422 = vmatprep.subr.mxu0 0.0
    %4423 = vmatpush2.msra.mxu0 0.0
    %4424 = vmatprep.subr.mxu0 0.0
    %4425 = vmatpush2.msra.mxu0 0.0
    %4426 = vmatprep.mubr.f32.mxu0 0.0
    %4427 = vmatmul.mubr.f32.gmra.mxu0 %v3974
    %v4428 = vpop.f32.mrf.mxu0
    %v4429 = vadd.f32 %v2878, %v4428
    %v4430 = vpop.f32.mrf.mxu0
    %4431 = vdwg.mxu0
    %v4432 = vadd.f32 %v4359, %v4429
    %v4433 = vxor.u32 %v4432, 2147483648
    %v4434 = vmul.f32 %v4433, 1.442695
    %v4435 = vpow.pop %v4434
    %v4436 = vadd.f32 %v4435, 1.0
    %v4437 = vrcp.pop %v4436
    %v4438 = vmul.f32 1.0, %v4437
    %4440 = vrot.lane.b32.xlu0 %v4429, 64
    %v4441 = vpop.permute.xlu0 %4440
    %v4443 = vmul.f32 %v4438, %v4441
    %4445 = vrot.lane.b32.xlu0 %v4443, 64
    %v4446 = vpop.permute.xlu0 %4445
    %v4448 = vadd.f32 %v4359, %v4446
    %v4449 = vtanh.pop %v4448
    %v4450 = vsub.f32 1.0, %v4438
    %4452 = vrot.lane.b32.xlu0 %v4449, 96
    %v4453 = vpop.permute.xlu0 %4452
    %v4455 = vmul.f32 %v4450, %v4453
    %v4456 = vmul.f32 %v4438, %v3970
    %v4457 = vadd.f32 %v4455, %v4456
    %4459 = vrot.lane.b32.xlu0 %v4457, 96
    %v4460 = vpop.permute.xlu0 %4459
    %v4461 = vsel %vm263, %v4460, 0
    %4463 = vmatprep.subr.mxu0 0.0
    %4464 = vmatpush1.msra.mxu0 0.0
    %4465 = vmatprep.subr.mxu0 0.0
    %4466 = vmatpush1.msra.mxu0 0.0
    %4467 = vmatprep.subr.mxu0 0.0
    %4468 = vmatpush1.msra.mxu0 0.0
    %4469 = vmatprep.subr.mxu0 0.0
    %4470 = vmatpush1.msra.mxu0 0.0
    %4471 = vmatprep.subr.mxu0 0.0
    %4472 = vmatpush1.msra.mxu0 0.0
    %4473 = vmatprep.subr.mxu0 0.0
    %4474 = vmatpush1.msra.mxu0 0.0
    %4475 = vmatprep.subr.mxu0 0.0
    %4476 = vmatpush1.msra.mxu0 0.0
    %4477 = vmatprep.subr.mxu0 0.0
    %4478 = vmatpush1.msra.mxu0 0.0
    %4479 = vmatprep.subr.mxu0 0.0
    %4480 = vmatpush1.msra.mxu0 0.0
    %4481 = vmatprep.subr.mxu0 0.0
    %4482 = vmatpush1.msra.mxu0 0.0
    %4483 = vmatprep.subr.mxu0 0.0
    %4484 = vmatpush1.msra.mxu0 0.0
    %4485 = vmatprep.subr.mxu0 0.0
    %4486 = vmatpush1.msra.mxu0 0.0
    %4487 = vmatprep.subr.mxu0 0.0
    %4488 = vmatpush1.msra.mxu0 %v2979
    %4489 = vmatprep.subr.mxu0 0.0
    %4490 = vmatpush1.msra.mxu0 %v2978
    %4491 = vmatprep.subr.mxu0 0.0
    %4492 = vmatpush1.msra.mxu0 %v2977
    %4493 = vmatprep.subr.mxu0 0.0
    %4494 = vmatpush1.msra.mxu0 %v2976
    %4495 = vmatprep.subr.mxu0 0.0
    %4496 = vmatpush2.msra.mxu0 0.0
    %4497 = vmatprep.subr.mxu0 0.0
    %4498 = vmatpush2.msra.mxu0 0.0
    %4499 = vmatprep.subr.mxu0 0.0
    %4500 = vmatpush2.msra.mxu0 0.0
    %4501 = vmatprep.subr.mxu0 0.0
    %4502 = vmatpush2.msra.mxu0 0.0
    %4503 = vmatprep.subr.mxu0 0.0
    %4504 = vmatpush2.msra.mxu0 0.0
    %4505 = vmatprep.subr.mxu0 0.0
    %4506 = vmatpush2.msra.mxu0 0.0
    %4507 = vmatprep.subr.mxu0 0.0
    %4508 = vmatpush2.msra.mxu0 0.0
    %4509 = vmatprep.subr.mxu0 0.0
    %4510 = vmatpush2.msra.mxu0 0.0
    %4511 = vmatprep.subr.mxu0 0.0
    %4512 = vmatpush2.msra.mxu0 0.0
    %4513 = vmatprep.subr.mxu0 0.0
    %4514 = vmatpush2.msra.mxu0 0.0
    %4515 = vmatprep.subr.mxu0 0.0
    %4516 = vmatpush2.msra.mxu0 0.0
    %4517 = vmatprep.subr.mxu0 0.0
    %4518 = vmatpush2.msra.mxu0 0.0
    %4519 = vmatprep.subr.mxu0 0.0
    %4520 = vmatpush2.msra.mxu0 0.0
    %4521 = vmatprep.subr.mxu0 0.0
    %4522 = vmatpush2.msra.mxu0 0.0
    %4523 = vmatprep.subr.mxu0 0.0
    %4524 = vmatpush2.msra.mxu0 0.0
    %4525 = vmatprep.subr.mxu0 0.0
    %4526 = vmatpush2.msra.mxu0 0.0
    %4527 = vmatprep.mubr.f32.mxu0 0.0
    %4528 = vmatmul.mubr.f32.gmra.mxu0 %v4461
    %v4529 = vpop.f32.mrf.mxu0
    %v4530 = vadd.f32 %v2988, %v4529
    %v4531 = vpop.f32.mrf.mxu0
    %4532 = vdwg.mxu0
    %v4533 = vmax.f32 %v4530, 0.0
    %v4535 = vsel %vm3072, %v4533, 0
    %4537 = vmatprep.subr.mxu0 0.0
    %4538 = vmatpush1.msra.mxu0 0.0
    %4539 = vmatprep.subr.mxu0 0.0
    %4540 = vmatpush1.msra.mxu0 0.0
    %4541 = vmatprep.subr.mxu0 0.0
    %4542 = vmatpush1.msra.mxu0 0.0
    %4543 = vmatprep.subr.mxu0 0.0
    %4544 = vmatpush1.msra.mxu0 0.0
    %4545 = vmatprep.subr.mxu0 0.0
    %4546 = vmatpush1.msra.mxu0 0.0
    %4547 = vmatprep.subr.mxu0 0.0
    %4548 = vmatpush1.msra.mxu0 0.0
    %4549 = vmatprep.subr.mxu0 0.0
    %4550 = vmatpush1.msra.mxu0 0.0
    %4551 = vmatprep.subr.mxu0 0.0
    %4552 = vmatpush1.msra.mxu0 0.0
    %4553 = vmatprep.subr.mxu0 0.0
    %4554 = vmatpush1.msra.mxu0 0.0
    %4555 = vmatprep.subr.mxu0 0.0
    %4556 = vmatpush1.msra.mxu0 0.0
    %4557 = vmatprep.subr.mxu0 0.0
    %4558 = vmatpush1.msra.mxu0 0.0
    %4559 = vmatprep.subr.mxu0 0.0
    %4560 = vmatpush1.msra.mxu0 0.0
    %4561 = vmatprep.subr.mxu0 0.0
    %4562 = vmatpush1.msra.mxu0 0.0
    %4563 = vmatprep.subr.mxu0 0.0
    %4564 = vmatpush1.msra.mxu0 0.0
    %4565 = vmatprep.subr.mxu0 0.0
    %4566 = vmatpush1.msra.mxu0 %v2982
    %4567 = vmatprep.subr.mxu0 0.0
    %4568 = vmatpush1.msra.mxu0 %v2981
    %4569 = vmatprep.subr.mxu0 0.0
    %4570 = vmatpush2.msra.mxu0 0.0
    %4571 = vmatprep.subr.mxu0 0.0
    %4572 = vmatpush2.msra.mxu0 0.0
    %4573 = vmatprep.subr.mxu0 0.0
    %4574 = vmatpush2.msra.mxu0 0.0
    %4575 = vmatprep.subr.mxu0 0.0
    %4576 = vmatpush2.msra.mxu0 0.0
    %4577 = vmatprep.subr.mxu0 0.0
    %4578 = vmatpush2.msra.mxu0 0.0
    %4579 = vmatprep.subr.mxu0 0.0
    %4580 = vmatpush2.msra.mxu0 0.0
    %4581 = vmatprep.subr.mxu0 0.0
    %4582 = vmatpush2.msra.mxu0 0.0
    %4583 = vmatprep.subr.mxu0 0.0
    %4584 = vmatpush2.msra.mxu0 0.0
    %4585 = vmatprep.subr.mxu0 0.0
    %4586 = vmatpush2.msra.mxu0 0.0
    %4587 = vmatprep.subr.mxu0 0.0
    %4588 = vmatpush2.msra.mxu0 0.0
    %4589 = vmatprep.subr.mxu0 0.0
    %4590 = vmatpush2.msra.mxu0 0.0
    %4591 = vmatprep.subr.mxu0 0.0
    %4592 = vmatpush2.msra.mxu0 0.0
    %4593 = vmatprep.subr.mxu0 0.0
    %4594 = vmatpush2.msra.mxu0 0.0
    %4595 = vmatprep.subr.mxu0 0.0
    %4596 = vmatpush2.msra.mxu0 0.0
    %4597 = vmatprep.subr.mxu0 0.0
    %4598 = vmatpush2.msra.mxu0 0.0
    %4599 = vmatprep.subr.mxu0 0.0
    %4600 = vmatpush2.msra.mxu0 0.0
    %4601 = vmatprep.mubr.f32.mxu0 0.0
    %4602 = vmatmul.mubr.f32.gmra.mxu0 %v4535
    %v4603 = vpop.f32.mrf.mxu0
    %v4604 = vadd.f32 %v3070, %v4603
    %v4605 = vpop.f32.mrf.mxu0
    %4606 = vdwg.mxu0
    %v4607 = vadd.f32 %v4120, %v4604
    %4608 = vmatprep.subr.mxu0 0.0
    %4609 = vmatpush1.msra.mxu0 0.0
    %4610 = vmatprep.subr.mxu0 0.0
    %4611 = vmatpush1.msra.mxu0 0.0
    %4612 = vmatprep.subr.mxu0 0.0
    %4613 = vmatpush1.msra.mxu0 0.0
    %4614 = vmatprep.subr.mxu0 0.0
    %4615 = vmatpush1.msra.mxu0 0.0
    %4616 = vmatprep.subr.mxu0 0.0
    %4617 = vmatpush1.msra.mxu0 0.0
    %4618 = vmatprep.subr.mxu0 0.0
    %4619 = vmatpush1.msra.mxu0 0.0
    %4620 = vmatprep.subr.mxu0 0.0
    %4621 = vmatpush1.msra.mxu0 0.0
    %4622 = vmatprep.subr.mxu0 0.0
    %4623 = vmatpush1.msra.mxu0 0.0
    %4624 = vmatprep.subr.mxu0 0.0
    %4625 = vmatpush1.msra.mxu0 0.0
    %4626 = vmatprep.subr.mxu0 0.0
    %4627 = vmatpush1.msra.mxu0 0.0
    %4628 = vmatprep.subr.mxu0 0.0
    %4629 = vmatpush1.msra.mxu0 0.0
    %4630 = vmatprep.subr.mxu0 0.0
    %4631 = vmatpush1.msra.mxu0 0.0
    %4632 = vmatprep.subr.mxu0 0.0
    %4633 = vmatpush1.msra.mxu0 %v2593
    %4634 = vmatprep.subr.mxu0 0.0
    %4635 = vmatpush1.msra.mxu0 %v2592
    %4636 = vmatprep.subr.mxu0 0.0
    %4637 = vmatpush1.msra.mxu0 %v2591
    %4638 = vmatprep.subr.mxu0 0.0
    %4639 = vmatpush1.msra.mxu0 %v2590
    %4640 = vmatprep.subr.mxu0 0.0
    %4641 = vmatpush2.msra.mxu0 0.0
    %4642 = vmatprep.subr.mxu0 0.0
    %4643 = vmatpush2.msra.mxu0 0.0
    %4644 = vmatprep.subr.mxu0 0.0
    %4645 = vmatpush2.msra.mxu0 0.0
    %4646 = vmatprep.subr.mxu0 0.0
    %4647 = vmatpush2.msra.mxu0 0.0
    %4648 = vmatprep.subr.mxu0 0.0
    %4649 = vmatpush2.msra.mxu0 0.0
    %4650 = vmatprep.subr.mxu0 0.0
    %4651 = vmatpush2.msra.mxu0 0.0
    %4652 = vmatprep.subr.mxu0 0.0
    %4653 = vmatpush2.msra.mxu0 0.0
    %4654 = vmatprep.subr.mxu0 0.0
    %4655 = vmatpush2.msra.mxu0 0.0
    %4656 = vmatprep.subr.mxu0 0.0
    %4657 = vmatpush2.msra.mxu0 0.0
    %4658 = vmatprep.subr.mxu0 0.0
    %4659 = vmatpush2.msra.mxu0 0.0
    %4660 = vmatprep.subr.mxu0 0.0
    %4661 = vmatpush2.msra.mxu0 0.0
    %4662 = vmatprep.subr.mxu0 0.0
    %4663 = vmatpush2.msra.mxu0 0.0
    %4664 = vmatprep.subr.mxu0 0.0
    %4665 = vmatpush2.msra.mxu0 0.0
    %4666 = vmatprep.subr.mxu0 0.0
    %4667 = vmatpush2.msra.mxu0 0.0
    %4668 = vmatprep.subr.mxu0 0.0
    %4669 = vmatpush2.msra.mxu0 0.0
    %4670 = vmatprep.subr.mxu0 0.0
    %4671 = vmatpush2.msra.mxu0 0.0
    %4672 = vmatprep.mubr.f32.mxu0 0.0
    %4673 = vmatmul.mubr.f32.gmra.mxu0 %v4461
    %v4674 = vpop.f32.mrf.mxu0
    %v4675 = vadd.f32 %v2604, %v4674
    %v4676 = vpop.f32.mrf.mxu0
    %4677 = vdwg.mxu0
    %4678 = vmatprep.subr.mxu0 0.0
    %4679 = vmatpush1.msra.mxu0 0.0
    %4680 = vmatprep.subr.mxu0 0.0
    %4681 = vmatpush1.msra.mxu0 0.0
    %4682 = vmatprep.subr.mxu0 0.0
    %4683 = vmatpush1.msra.mxu0 0.0
    %4684 = vmatprep.subr.mxu0 0.0
    %4685 = vmatpush1.msra.mxu0 0.0
    %4686 = vmatprep.subr.mxu0 0.0
    %4687 = vmatpush1.msra.mxu0 0.0
    %4688 = vmatprep.subr.mxu0 0.0
    %4689 = vmatpush1.msra.mxu0 0.0
    %4690 = vmatprep.subr.mxu0 0.0
    %4691 = vmatpush1.msra.mxu0 0.0
    %4692 = vmatprep.subr.mxu0 0.0
    %4693 = vmatpush1.msra.mxu0 0.0
    %4694 = vmatprep.subr.mxu0 0.0
    %4695 = vmatpush1.msra.mxu0 0.0
    %4696 = vmatprep.subr.mxu0 0.0
    %4697 = vmatpush1.msra.mxu0 0.0
    %4698 = vmatprep.subr.mxu0 0.0
    %4699 = vmatpush1.msra.mxu0 0.0
    %4700 = vmatprep.subr.mxu0 0.0
    %4701 = vmatpush1.msra.mxu0 0.0
    %4702 = vmatprep.subr.mxu0 0.0
    %4703 = vmatpush1.msra.mxu0 %v2597
    %4704 = vmatprep.subr.mxu0 0.0
    %4705 = vmatpush1.msra.mxu0 %v2596
    %4706 = vmatprep.subr.mxu0 0.0
    %4707 = vmatpush1.msra.mxu0 %v2595
    %4708 = vmatprep.subr.mxu0 0.0
    %4709 = vmatpush1.msra.mxu0 %v2594
    %4710 = vmatprep.subr.mxu0 0.0
    %4711 = vmatpush2.msra.mxu0 0.0
    %4712 = vmatprep.subr.mxu0 0.0
    %4713 = vmatpush2.msra.mxu0 0.0
    %4714 = vmatprep.subr.mxu0 0.0
    %4715 = vmatpush2.msra.mxu0 0.0
    %4716 = vmatprep.subr.mxu0 0.0
    %4717 = vmatpush2.msra.mxu0 0.0
    %4718 = vmatprep.subr.mxu0 0.0
    %4719 = vmatpush2.msra.mxu0 0.0
    %4720 = vmatprep.subr.mxu0 0.0
    %4721 = vmatpush2.msra.mxu0 0.0
    %4722 = vmatprep.subr.mxu0 0.0
    %4723 = vmatpush2.msra.mxu0 0.0
    %4724 = vmatprep.subr.mxu0 0.0
    %4725 = vmatpush2.msra.mxu0 0.0
    %4726 = vmatprep.subr.mxu0 0.0
    %4727 = vmatpush2.msra.mxu0 0.0
    %4728 = vmatprep.subr.mxu0 0.0
    %4729 = vmatpush2.msra.mxu0 0.0
    %4730 = vmatprep.subr.mxu0 0.0
    %4731 = vmatpush2.msra.mxu0 0.0
    %4732 = vmatprep.subr.mxu0 0.0
    %4733 = vmatpush2.msra.mxu0 0.0
    %4734 = vmatprep.subr.mxu0 0.0
    %4735 = vmatpush2.msra.mxu0 0.0
    %4736 = vmatprep.subr.mxu0 0.0
    %4737 = vmatpush2.msra.mxu0 0.0
    %4738 = vmatprep.subr.mxu0 0.0
    %4739 = vmatpush2.msra.mxu0 0.0
    %4740 = vmatprep.subr.mxu0 0.0
    %4741 = vmatpush2.msra.mxu0 0.0
    %4742 = vmatprep.mubr.f32.mxu0 0.0
    %4743 = vmatmul.mubr.f32.gmra.mxu0 %v4290
    %v4744 = vpop.f32.mrf.mxu0
    %v4745 = vadd.f32 %v2685, %v4744
    %v4746 = vpop.f32.mrf.mxu0
    %4747 = vdwg.mxu0
    %v4748 = vadd.f32 %v4675, %v4745
    %v4749 = vxor.u32 %v4748, 2147483648
    %v4750 = vmul.f32 %v4749, 1.442695
    %v4751 = vpow.pop %v4750
    %v4752 = vadd.f32 %v4751, 1.0
    %v4753 = vrcp.pop %v4752
    %v4754 = vmul.f32 1.0, %v4753
    %4756 = vrot.lane.b32.xlu0 %v4745, 64
    %v4757 = vpop.permute.xlu0 %4756
    %v4759 = vmul.f32 %v4754, %v4757
    %4761 = vrot.lane.b32.xlu0 %v4759, 64
    %v4762 = vpop.permute.xlu0 %4761
    %v4764 = vadd.f32 %v4675, %v4762
    %v4765 = vtanh.pop %v4764
    %v4766 = vsub.f32 1.0, %v4754
    %4768 = vrot.lane.b32.xlu0 %v4765, 96
    %v4769 = vpop.permute.xlu0 %4768
    %v4771 = vmul.f32 %v4766, %v4769
    %v4772 = vmul.f32 %v4754, %v4286
    %v4773 = vadd.f32 %v4771, %v4772
    %4775 = vrot.lane.b32.xlu0 %v4773, 96
    %v4776 = vpop.permute.xlu0 %4775
    %v4777 = vsel %vm263, %v4776, 0
    %4779 = vmatprep.subr.mxu0 0.0
    %4780 = vmatpush1.msra.mxu0 0.0
    %4781 = vmatprep.subr.mxu0 0.0
    %4782 = vmatpush1.msra.mxu0 0.0
    %4783 = vmatprep.subr.mxu0 0.0
    %4784 = vmatpush1.msra.mxu0 0.0
    %4785 = vmatprep.subr.mxu0 0.0
    %4786 = vmatpush1.msra.mxu0 0.0
    %4787 = vmatprep.subr.mxu0 0.0
    %4788 = vmatpush1.msra.mxu0 0.0
    %4789 = vmatprep.subr.mxu0 0.0
    %4790 = vmatpush1.msra.mxu0 0.0
    %4791 = vmatprep.subr.mxu0 0.0
    %4792 = vmatpush1.msra.mxu0 0.0
    %4793 = vmatprep.subr.mxu0 0.0
    %4794 = vmatpush1.msra.mxu0 0.0
    %4795 = vmatprep.subr.mxu0 0.0
    %4796 = vmatpush1.msra.mxu0 0.0
    %4797 = vmatprep.subr.mxu0 0.0
    %4798 = vmatpush1.msra.mxu0 0.0
    %4799 = vmatprep.subr.mxu0 0.0
    %4800 = vmatpush1.msra.mxu0 0.0
    %4801 = vmatprep.subr.mxu0 0.0
    %4802 = vmatpush1.msra.mxu0 0.0
    %4803 = vmatprep.subr.mxu0 0.0
    %4804 = vmatpush1.msra.mxu0 %v2786
    %4805 = vmatprep.subr.mxu0 0.0
    %4806 = vmatpush1.msra.mxu0 %v2785
    %4807 = vmatprep.subr.mxu0 0.0
    %4808 = vmatpush1.msra.mxu0 %v2784
    %4809 = vmatprep.subr.mxu0 0.0
    %4810 = vmatpush1.msra.mxu0 %v2783
    %4811 = vmatprep.subr.mxu0 0.0
    %4812 = vmatpush2.msra.mxu0 0.0
    %4813 = vmatprep.subr.mxu0 0.0
    %4814 = vmatpush2.msra.mxu0 0.0
    %4815 = vmatprep.subr.mxu0 0.0
    %4816 = vmatpush2.msra.mxu0 0.0
    %4817 = vmatprep.subr.mxu0 0.0
    %4818 = vmatpush2.msra.mxu0 0.0
    %4819 = vmatprep.subr.mxu0 0.0
    %4820 = vmatpush2.msra.mxu0 0.0
    %4821 = vmatprep.subr.mxu0 0.0
    %4822 = vmatpush2.msra.mxu0 0.0
    %4823 = vmatprep.subr.mxu0 0.0
    %4824 = vmatpush2.msra.mxu0 0.0
    %4825 = vmatprep.subr.mxu0 0.0
    %4826 = vmatpush2.msra.mxu0 0.0
    %4827 = vmatprep.subr.mxu0 0.0
    %4828 = vmatpush2.msra.mxu0 0.0
    %4829 = vmatprep.subr.mxu0 0.0
    %4830 = vmatpush2.msra.mxu0 0.0
    %4831 = vmatprep.subr.mxu0 0.0
    %4832 = vmatpush2.msra.mxu0 0.0
    %4833 = vmatprep.subr.mxu0 0.0
    %4834 = vmatpush2.msra.mxu0 0.0
    %4835 = vmatprep.subr.mxu0 0.0
    %4836 = vmatpush2.msra.mxu0 0.0
    %4837 = vmatprep.subr.mxu0 0.0
    %4838 = vmatpush2.msra.mxu0 0.0
    %4839 = vmatprep.subr.mxu0 0.0
    %4840 = vmatpush2.msra.mxu0 0.0
    %4841 = vmatprep.subr.mxu0 0.0
    %4842 = vmatpush2.msra.mxu0 0.0
    %4843 = vmatprep.mubr.f32.mxu0 0.0
    %4844 = vmatmul.mubr.f32.gmra.mxu0 %v4777
    %v4845 = vpop.f32.mrf.mxu0
    %v4846 = vadd.f32 %v2797, %v4845
    %v4847 = vpop.f32.mrf.mxu0
    %4848 = vdwg.mxu0
    %4849 = vmatprep.subr.mxu0 0.0
    %4850 = vmatpush1.msra.mxu0 0.0
    %4851 = vmatprep.subr.mxu0 0.0
    %4852 = vmatpush1.msra.mxu0 0.0
    %4853 = vmatprep.subr.mxu0 0.0
    %4854 = vmatpush1.msra.mxu0 0.0
    %4855 = vmatprep.subr.mxu0 0.0
    %4856 = vmatpush1.msra.mxu0 0.0
    %4857 = vmatprep.subr.mxu0 0.0
    %4858 = vmatpush1.msra.mxu0 0.0
    %4859 = vmatprep.subr.mxu0 0.0
    %4860 = vmatpush1.msra.mxu0 0.0
    %4861 = vmatprep.subr.mxu0 0.0
    %4862 = vmatpush1.msra.mxu0 0.0
    %4863 = vmatprep.subr.mxu0 0.0
    %4864 = vmatpush1.msra.mxu0 0.0
    %4865 = vmatprep.subr.mxu0 0.0
    %4866 = vmatpush1.msra.mxu0 0.0
    %4867 = vmatprep.subr.mxu0 0.0
    %4868 = vmatpush1.msra.mxu0 0.0
    %4869 = vmatprep.subr.mxu0 0.0
    %4870 = vmatpush1.msra.mxu0 0.0
    %4871 = vmatprep.subr.mxu0 0.0
    %4872 = vmatpush1.msra.mxu0 0.0
    %4873 = vmatprep.subr.mxu0 0.0
    %4874 = vmatpush1.msra.mxu0 %v2790
    %4875 = vmatprep.subr.mxu0 0.0
    %4876 = vmatpush1.msra.mxu0 %v2789
    %4877 = vmatprep.subr.mxu0 0.0
    %4878 = vmatpush1.msra.mxu0 %v2788
    %4879 = vmatprep.subr.mxu0 0.0
    %4880 = vmatpush1.msra.mxu0 %v2787
    %4881 = vmatprep.subr.mxu0 0.0
    %4882 = vmatpush2.msra.mxu0 0.0
    %4883 = vmatprep.subr.mxu0 0.0
    %4884 = vmatpush2.msra.mxu0 0.0
    %4885 = vmatprep.subr.mxu0 0.0
    %4886 = vmatpush2.msra.mxu0 0.0
    %4887 = vmatprep.subr.mxu0 0.0
    %4888 = vmatpush2.msra.mxu0 0.0
    %4889 = vmatprep.subr.mxu0 0.0
    %4890 = vmatpush2.msra.mxu0 0.0
    %4891 = vmatprep.subr.mxu0 0.0
    %4892 = vmatpush2.msra.mxu0 0.0
    %4893 = vmatprep.subr.mxu0 0.0
    %4894 = vmatpush2.msra.mxu0 0.0
    %4895 = vmatprep.subr.mxu0 0.0
    %4896 = vmatpush2.msra.mxu0 0.0
    %4897 = vmatprep.subr.mxu0 0.0
    %4898 = vmatpush2.msra.mxu0 0.0
    %4899 = vmatprep.subr.mxu0 0.0
    %4900 = vmatpush2.msra.mxu0 0.0
    %4901 = vmatprep.subr.mxu0 0.0
    %4902 = vmatpush2.msra.mxu0 0.0
    %4903 = vmatprep.subr.mxu0 0.0
    %4904 = vmatpush2.msra.mxu0 0.0
    %4905 = vmatprep.subr.mxu0 0.0
    %4906 = vmatpush2.msra.mxu0 0.0
    %4907 = vmatprep.subr.mxu0 0.0
    %4908 = vmatpush2.msra.mxu0 0.0
    %4909 = vmatprep.subr.mxu0 0.0
    %4910 = vmatpush2.msra.mxu0 0.0
    %4911 = vmatprep.subr.mxu0 0.0
    %4912 = vmatpush2.msra.mxu0 0.0
    %4913 = vmatprep.mubr.f32.mxu0 0.0
    %4914 = vmatmul.mubr.f32.gmra.mxu0 %v4461
    %v4915 = vpop.f32.mrf.mxu0
    %v4916 = vadd.f32 %v2878, %v4915
    %v4917 = vpop.f32.mrf.mxu0
    %4918 = vdwg.mxu0
    %v4919 = vadd.f32 %v4846, %v4916
    %v4920 = vxor.u32 %v4919, 2147483648
    %v4921 = vmul.f32 %v4920, 1.442695
    %v4922 = vpow.pop %v4921
    %v4923 = vadd.f32 %v4922, 1.0
    %v4924 = vrcp.pop %v4923
    %v4925 = vmul.f32 1.0, %v4924
    %4927 = vrot.lane.b32.xlu0 %v4916, 64
    %v4928 = vpop.permute.xlu0 %4927
    %v4930 = vmul.f32 %v4925, %v4928
    %4932 = vrot.lane.b32.xlu0 %v4930, 64
    %v4933 = vpop.permute.xlu0 %4932
    %v4935 = vadd.f32 %v4846, %v4933
    %v4936 = vtanh.pop %v4935
    %v4937 = vsub.f32 1.0, %v4925
    %4939 = vrot.lane.b32.xlu0 %v4936, 96
    %v4940 = vpop.permute.xlu0 %4939
    %v4942 = vmul.f32 %v4937, %v4940
    %v4943 = vmul.f32 %v4925, %v4457
    %v4944 = vadd.f32 %v4942, %v4943
    %4946 = vrot.lane.b32.xlu0 %v4944, 96
    %v4947 = vpop.permute.xlu0 %4946
    %v4948 = vsel %vm263, %v4947, 0
    %4950 = vmatprep.subr.mxu0 0.0
    %4951 = vmatpush1.msra.mxu0 0.0
    %4952 = vmatprep.subr.mxu0 0.0
    %4953 = vmatpush1.msra.mxu0 0.0
    %4954 = vmatprep.subr.mxu0 0.0
    %4955 = vmatpush1.msra.mxu0 0.0
    %4956 = vmatprep.subr.mxu0 0.0
    %4957 = vmatpush1.msra.mxu0 0.0
    %4958 = vmatprep.subr.mxu0 0.0
    %4959 = vmatpush1.msra.mxu0 0.0
    %4960 = vmatprep.subr.mxu0 0.0
    %4961 = vmatpush1.msra.mxu0 0.0
    %4962 = vmatprep.subr.mxu0 0.0
    %4963 = vmatpush1.msra.mxu0 0.0
    %4964 = vmatprep.subr.mxu0 0.0
    %4965 = vmatpush1.msra.mxu0 0.0
    %4966 = vmatprep.subr.mxu0 0.0
    %4967 = vmatpush1.msra.mxu0 0.0
    %4968 = vmatprep.subr.mxu0 0.0
    %4969 = vmatpush1.msra.mxu0 0.0
    %4970 = vmatprep.subr.mxu0 0.0
    %4971 = vmatpush1.msra.mxu0 0.0
    %4972 = vmatprep.subr.mxu0 0.0
    %4973 = vmatpush1.msra.mxu0 0.0
    %4974 = vmatprep.subr.mxu0 0.0
    %4975 = vmatpush1.msra.mxu0 %v2979
    %4976 = vmatprep.subr.mxu0 0.0
    %4977 = vmatpush1.msra.mxu0 %v2978
    %4978 = vmatprep.subr.mxu0 0.0
    %4979 = vmatpush1.msra.mxu0 %v2977
    %4980 = vmatprep.subr.mxu0 0.0
    %4981 = vmatpush1.msra.mxu0 %v2976
    %4982 = vmatprep.subr.mxu0 0.0
    %4983 = vmatpush2.msra.mxu0 0.0
    %4984 = vmatprep.subr.mxu0 0.0
    %4985 = vmatpush2.msra.mxu0 0.0
    %4986 = vmatprep.subr.mxu0 0.0
    %4987 = vmatpush2.msra.mxu0 0.0
    %4988 = vmatprep.subr.mxu0 0.0
    %4989 = vmatpush2.msra.mxu0 0.0
    %4990 = vmatprep.subr.mxu0 0.0
    %4991 = vmatpush2.msra.mxu0 0.0
    %4992 = vmatprep.subr.mxu0 0.0
    %4993 = vmatpush2.msra.mxu0 0.0
    %4994 = vmatprep.subr.mxu0 0.0
    %4995 = vmatpush2.msra.mxu0 0.0
    %4996 = vmatprep.subr.mxu0 0.0
    %4997 = vmatpush2.msra.mxu0 0.0
    %4998 = vmatprep.subr.mxu0 0.0
    %4999 = vmatpush2.msra.mxu0 0.0
    %5000 = vmatprep.subr.mxu0 0.0
    %5001 = vmatpush2.msra.mxu0 0.0
    %5002 = vmatprep.subr.mxu0 0.0
    %5003 = vmatpush2.msra.mxu0 0.0
    %5004 = vmatprep.subr.mxu0 0.0
    %5005 = vmatpush2.msra.mxu0 0.0
    %5006 = vmatprep.subr.mxu0 0.0
    %5007 = vmatpush2.msra.mxu0 0.0
    %5008 = vmatprep.subr.mxu0 0.0
    %5009 = vmatpush2.msra.mxu0 0.0
    %5010 = vmatprep.subr.mxu0 0.0
    %5011 = vmatpush2.msra.mxu0 0.0
    %5012 = vmatprep.subr.mxu0 0.0
    %5013 = vmatpush2.msra.mxu0 0.0
    %5014 = vmatprep.mubr.f32.mxu0 0.0
    %5015 = vmatmul.mubr.f32.gmra.mxu0 %v4948
    %v5016 = vpop.f32.mrf.mxu0
    %v5017 = vadd.f32 %v2988, %v5016
    %v5018 = vpop.f32.mrf.mxu0
    %5019 = vdwg.mxu0
    %v5020 = vmax.f32 %v5017, 0.0
    %v5022 = vsel %vm3072, %v5020, 0
    %5024 = vmatprep.subr.mxu0 0.0
    %5025 = vmatpush1.msra.mxu0 0.0
    %5026 = vmatprep.subr.mxu0 0.0
    %5027 = vmatpush1.msra.mxu0 0.0
    %5028 = vmatprep.subr.mxu0 0.0
    %5029 = vmatpush1.msra.mxu0 0.0
    %5030 = vmatprep.subr.mxu0 0.0
    %5031 = vmatpush1.msra.mxu0 0.0
    %5032 = vmatprep.subr.mxu0 0.0
    %5033 = vmatpush1.msra.mxu0 0.0
    %5034 = vmatprep.subr.mxu0 0.0
    %5035 = vmatpush1.msra.mxu0 0.0
    %5036 = vmatprep.subr.mxu0 0.0
    %5037 = vmatpush1.msra.mxu0 0.0
    %5038 = vmatprep.subr.mxu0 0.0
    %5039 = vmatpush1.msra.mxu0 0.0
    %5040 = vmatprep.subr.mxu0 0.0
    %5041 = vmatpush1.msra.mxu0 0.0
    %5042 = vmatprep.subr.mxu0 0.0
    %5043 = vmatpush1.msra.mxu0 0.0
    %5044 = vmatprep.subr.mxu0 0.0
    %5045 = vmatpush1.msra.mxu0 0.0
    %5046 = vmatprep.subr.mxu0 0.0
    %5047 = vmatpush1.msra.mxu0 0.0
    %5048 = vmatprep.subr.mxu0 0.0
    %5049 = vmatpush1.msra.mxu0 0.0
    %5050 = vmatprep.subr.mxu0 0.0
    %5051 = vmatpush1.msra.mxu0 0.0
    %5052 = vmatprep.subr.mxu0 0.0
    %5053 = vmatpush1.msra.mxu0 %v2982
    %5054 = vmatprep.subr.mxu0 0.0
    %5055 = vmatpush1.msra.mxu0 %v2981
    %5056 = vmatprep.subr.mxu0 0.0
    %5057 = vmatpush2.msra.mxu0 0.0
    %5058 = vmatprep.subr.mxu0 0.0
    %5059 = vmatpush2.msra.mxu0 0.0
    %5060 = vmatprep.subr.mxu0 0.0
    %5061 = vmatpush2.msra.mxu0 0.0
    %5062 = vmatprep.subr.mxu0 0.0
    %5063 = vmatpush2.msra.mxu0 0.0
    %5064 = vmatprep.subr.mxu0 0.0
    %5065 = vmatpush2.msra.mxu0 0.0
    %5066 = vmatprep.subr.mxu0 0.0
    %5067 = vmatpush2.msra.mxu0 0.0
    %5068 = vmatprep.subr.mxu0 0.0
    %5069 = vmatpush2.msra.mxu0 0.0
    %5070 = vmatprep.subr.mxu0 0.0
    %5071 = vmatpush2.msra.mxu0 0.0
    %5072 = vmatprep.subr.mxu0 0.0
    %5073 = vmatpush2.msra.mxu0 0.0
    %5074 = vmatprep.subr.mxu0 0.0
    %5075 = vmatpush2.msra.mxu0 0.0
    %5076 = vmatprep.subr.mxu0 0.0
    %5077 = vmatpush2.msra.mxu0 0.0
    %5078 = vmatprep.subr.mxu0 0.0
    %5079 = vmatpush2.msra.mxu0 0.0
    %5080 = vmatprep.subr.mxu0 0.0
    %5081 = vmatpush2.msra.mxu0 0.0
    %5082 = vmatprep.subr.mxu0 0.0
    %5083 = vmatpush2.msra.mxu0 0.0
    %5084 = vmatprep.subr.mxu0 0.0
    %5085 = vmatpush2.msra.mxu0 0.0
    %5086 = vmatprep.subr.mxu0 0.0
    %5087 = vmatpush2.msra.mxu0 0.0
    %5088 = vmatprep.mubr.f32.mxu0 0.0
    %5089 = vmatmul.mubr.f32.gmra.mxu0 %v5022
    %v5090 = vpop.f32.mrf.mxu0
    %v5091 = vadd.f32 %v3070, %v5090
    %v5092 = vpop.f32.mrf.mxu0
    %5093 = vdwg.mxu0
    %v5094 = vadd.f32 %v4607, %v5091
    %5095 = vmatprep.subr.mxu0 0.0
    %5096 = vmatpush1.msra.mxu0 0.0
    %5097 = vmatprep.subr.mxu0 0.0
    %5098 = vmatpush1.msra.mxu0 0.0
    %5099 = vmatprep.subr.mxu0 0.0
    %5100 = vmatpush1.msra.mxu0 0.0
    %5101 = vmatprep.subr.mxu0 0.0
    %5102 = vmatpush1.msra.mxu0 0.0
    %5103 = vmatprep.subr.mxu0 0.0
    %5104 = vmatpush1.msra.mxu0 0.0
    %5105 = vmatprep.subr.mxu0 0.0
    %5106 = vmatpush1.msra.mxu0 0.0
    %5107 = vmatprep.subr.mxu0 0.0
    %5108 = vmatpush1.msra.mxu0 0.0
    %5109 = vmatprep.subr.mxu0 0.0
    %5110 = vmatpush1.msra.mxu0 0.0
    %5111 = vmatprep.subr.mxu0 0.0
    %5112 = vmatpush1.msra.mxu0 0.0
    %5113 = vmatprep.subr.mxu0 0.0
    %5114 = vmatpush1.msra.mxu0 0.0
    %5115 = vmatprep.subr.mxu0 0.0
    %5116 = vmatpush1.msra.mxu0 0.0
    %5117 = vmatprep.subr.mxu0 0.0
    %5118 = vmatpush1.msra.mxu0 0.0
    %5119 = vmatprep.subr.mxu0 0.0
    %5120 = vmatpush1.msra.mxu0 %v2593
    %5121 = vmatprep.subr.mxu0 0.0
    %5122 = vmatpush1.msra.mxu0 %v2592
    %5123 = vmatprep.subr.mxu0 0.0
    %5124 = vmatpush1.msra.mxu0 %v2591
    %5125 = vmatprep.subr.mxu0 0.0
    %5126 = vmatpush1.msra.mxu0 %v2590
    %5127 = vmatprep.subr.mxu0 0.0
    %5128 = vmatpush2.msra.mxu0 0.0
    %5129 = vmatprep.subr.mxu0 0.0
    %5130 = vmatpush2.msra.mxu0 0.0
    %5131 = vmatprep.subr.mxu0 0.0
    %5132 = vmatpush2.msra.mxu0 0.0
    %5133 = vmatprep.subr.mxu0 0.0
    %5134 = vmatpush2.msra.mxu0 0.0
    %5135 = vmatprep.subr.mxu0 0.0
    %5136 = vmatpush2.msra.mxu0 0.0
    %5137 = vmatprep.subr.mxu0 0.0
    %5138 = vmatpush2.msra.mxu0 0.0
    %5139 = vmatprep.subr.mxu0 0.0
    %5140 = vmatpush2.msra.mxu0 0.0
    %5141 = vmatprep.subr.mxu0 0.0
    %5142 = vmatpush2.msra.mxu0 0.0
    %5143 = vmatprep.subr.mxu0 0.0
    %5144 = vmatpush2.msra.mxu0 0.0
    %5145 = vmatprep.subr.mxu0 0.0
    %5146 = vmatpush2.msra.mxu0 0.0
    %5147 = vmatprep.subr.mxu0 0.0
    %5148 = vmatpush2.msra.mxu0 0.0
    %5149 = vmatprep.subr.mxu0 0.0
    %5150 = vmatpush2.msra.mxu0 0.0
    %5151 = vmatprep.subr.mxu0 0.0
    %5152 = vmatpush2.msra.mxu0 0.0
    %5153 = vmatprep.subr.mxu0 0.0
    %5154 = vmatpush2.msra.mxu0 0.0
    %5155 = vmatprep.subr.mxu0 0.0
    %5156 = vmatpush2.msra.mxu0 0.0
    %5157 = vmatprep.subr.mxu0 0.0
    %5158 = vmatpush2.msra.mxu0 0.0
    %5159 = vmatprep.mubr.f32.mxu0 0.0
    %5160 = vmatmul.mubr.f32.gmra.mxu0 %v4948
    %v5161 = vpop.f32.mrf.mxu0
    %v5162 = vadd.f32 %v2604, %v5161
    %v5163 = vpop.f32.mrf.mxu0
    %5164 = vdwg.mxu0
    %5165 = vmatprep.subr.mxu0 0.0
    %5166 = vmatpush1.msra.mxu0 0.0
    %5167 = vmatprep.subr.mxu0 0.0
    %5168 = vmatpush1.msra.mxu0 0.0
    %5169 = vmatprep.subr.mxu0 0.0
    %5170 = vmatpush1.msra.mxu0 0.0
    %5171 = vmatprep.subr.mxu0 0.0
    %5172 = vmatpush1.msra.mxu0 0.0
    %5173 = vmatprep.subr.mxu0 0.0
    %5174 = vmatpush1.msra.mxu0 0.0
    %5175 = vmatprep.subr.mxu0 0.0
    %5176 = vmatpush1.msra.mxu0 0.0
    %5177 = vmatprep.subr.mxu0 0.0
    %5178 = vmatpush1.msra.mxu0 0.0
    %5179 = vmatprep.subr.mxu0 0.0
    %5180 = vmatpush1.msra.mxu0 0.0
    %5181 = vmatprep.subr.mxu0 0.0
    %5182 = vmatpush1.msra.mxu0 0.0
    %5183 = vmatprep.subr.mxu0 0.0
    %5184 = vmatpush1.msra.mxu0 0.0
    %5185 = vmatprep.subr.mxu0 0.0
    %5186 = vmatpush1.msra.mxu0 0.0
    %5187 = vmatprep.subr.mxu0 0.0
    %5188 = vmatpush1.msra.mxu0 0.0
    %5189 = vmatprep.subr.mxu0 0.0
    %5190 = vmatpush1.msra.mxu0 %v2597
    %5191 = vmatprep.subr.mxu0 0.0
    %5192 = vmatpush1.msra.mxu0 %v2596
    %5193 = vmatprep.subr.mxu0 0.0
    %5194 = vmatpush1.msra.mxu0 %v2595
    %5195 = vmatprep.subr.mxu0 0.0
    %5196 = vmatpush1.msra.mxu0 %v2594
    %5197 = vmatprep.subr.mxu0 0.0
    %5198 = vmatpush2.msra.mxu0 0.0
    %5199 = vmatprep.subr.mxu0 0.0
    %5200 = vmatpush2.msra.mxu0 0.0
    %5201 = vmatprep.subr.mxu0 0.0
    %5202 = vmatpush2.msra.mxu0 0.0
    %5203 = vmatprep.subr.mxu0 0.0
    %5204 = vmatpush2.msra.mxu0 0.0
    %5205 = vmatprep.subr.mxu0 0.0
    %5206 = vmatpush2.msra.mxu0 0.0
    %5207 = vmatprep.subr.mxu0 0.0
    %5208 = vmatpush2.msra.mxu0 0.0
    %5209 = vmatprep.subr.mxu0 0.0
    %5210 = vmatpush2.msra.mxu0 0.0
    %5211 = vmatprep.subr.mxu0 0.0
    %5212 = vmatpush2.msra.mxu0 0.0
    %5213 = vmatprep.subr.mxu0 0.0
    %5214 = vmatpush2.msra.mxu0 0.0
    %5215 = vmatprep.subr.mxu0 0.0
    %5216 = vmatpush2.msra.mxu0 0.0
    %5217 = vmatprep.subr.mxu0 0.0
    %5218 = vmatpush2.msra.mxu0 0.0
    %5219 = vmatprep.subr.mxu0 0.0
    %5220 = vmatpush2.msra.mxu0 0.0
    %5221 = vmatprep.subr.mxu0 0.0
    %5222 = vmatpush2.msra.mxu0 0.0
    %5223 = vmatprep.subr.mxu0 0.0
    %5224 = vmatpush2.msra.mxu0 0.0
    %5225 = vmatprep.subr.mxu0 0.0
    %5226 = vmatpush2.msra.mxu0 0.0
    %5227 = vmatprep.subr.mxu0 0.0
    %5228 = vmatpush2.msra.mxu0 0.0
    %5229 = vmatprep.mubr.f32.mxu0 0.0
    %5230 = vmatmul.mubr.f32.gmra.mxu0 %v4777
    %v5231 = vpop.f32.mrf.mxu0
    %v5232 = vadd.f32 %v2685, %v5231
    %v5233 = vpop.f32.mrf.mxu0
    %5234 = vdwg.mxu0
    %v5235 = vadd.f32 %v5162, %v5232
    %v5236 = vxor.u32 %v5235, 2147483648
    %v5237 = vmul.f32 %v5236, 1.442695
    %v5238 = vpow.pop %v5237
    %v5239 = vadd.f32 %v5238, 1.0
    %v5240 = vrcp.pop %v5239
    %v5241 = vmul.f32 1.0, %v5240
    %5243 = vrot.lane.b32.xlu0 %v5232, 64
    %v5244 = vpop.permute.xlu0 %5243
    %v5246 = vmul.f32 %v5241, %v5244
    %5248 = vrot.lane.b32.xlu0 %v5246, 64
    %v5249 = vpop.permute.xlu0 %5248
    %v5251 = vadd.f32 %v5162, %v5249
    %v5252 = vtanh.pop %v5251
    %v5253 = vsub.f32 1.0, %v5241
    %5255 = vrot.lane.b32.xlu0 %v5252, 96
    %v5256 = vpop.permute.xlu0 %5255
    %v5258 = vmul.f32 %v5253, %v5256
    %v5259 = vmul.f32 %v5241, %v4773
    %v5260 = vadd.f32 %v5258, %v5259
    %5262 = vrot.lane.b32.xlu0 %v5260, 96
    %v5263 = vpop.permute.xlu0 %5262
    %v5264 = vsel %vm263, %v5263, 0
    %5266 = vmatprep.subr.mxu0 0.0
    %5267 = vmatpush1.msra.mxu0 0.0
    %5268 = vmatprep.subr.mxu0 0.0
    %5269 = vmatpush1.msra.mxu0 0.0
    %5270 = vmatprep.subr.mxu0 0.0
    %5271 = vmatpush1.msra.mxu0 0.0
    %5272 = vmatprep.subr.mxu0 0.0
    %5273 = vmatpush1.msra.mxu0 0.0
    %5274 = vmatprep.subr.mxu0 0.0
    %5275 = vmatpush1.msra.mxu0 0.0
    %5276 = vmatprep.subr.mxu0 0.0
    %5277 = vmatpush1.msra.mxu0 0.0
    %5278 = vmatprep.subr.mxu0 0.0
    %5279 = vmatpush1.msra.mxu0 0.0
    %5280 = vmatprep.subr.mxu0 0.0
    %5281 = vmatpush1.msra.mxu0 0.0
    %5282 = vmatprep.subr.mxu0 0.0
    %5283 = vmatpush1.msra.mxu0 0.0
    %5284 = vmatprep.subr.mxu0 0.0
    %5285 = vmatpush1.msra.mxu0 0.0
    %5286 = vmatprep.subr.mxu0 0.0
    %5287 = vmatpush1.msra.mxu0 0.0
    %5288 = vmatprep.subr.mxu0 0.0
    %5289 = vmatpush1.msra.mxu0 0.0
    %5290 = vmatprep.subr.mxu0 0.0
    %5291 = vmatpush1.msra.mxu0 %v2786
    %5292 = vmatprep.subr.mxu0 0.0
    %5293 = vmatpush1.msra.mxu0 %v2785
    %5294 = vmatprep.subr.mxu0 0.0
    %5295 = vmatpush1.msra.mxu0 %v2784
    %5296 = vmatprep.subr.mxu0 0.0
    %5297 = vmatpush1.msra.mxu0 %v2783
    %5298 = vmatprep.subr.mxu0 0.0
    %5299 = vmatpush2.msra.mxu0 0.0
    %5300 = vmatprep.subr.mxu0 0.0
    %5301 = vmatpush2.msra.mxu0 0.0
    %5302 = vmatprep.subr.mxu0 0.0
    %5303 = vmatpush2.msra.mxu0 0.0
    %5304 = vmatprep.subr.mxu0 0.0
    %5305 = vmatpush2.msra.mxu0 0.0
    %5306 = vmatprep.subr.mxu0 0.0
    %5307 = vmatpush2.msra.mxu0 0.0
    %5308 = vmatprep.subr.mxu0 0.0
    %5309 = vmatpush2.msra.mxu0 0.0
    %5310 = vmatprep.subr.mxu0 0.0
    %5311 = vmatpush2.msra.mxu0 0.0
    %5312 = vmatprep.subr.mxu0 0.0
    %5313 = vmatpush2.msra.mxu0 0.0
    %5314 = vmatprep.subr.mxu0 0.0
    %5315 = vmatpush2.msra.mxu0 0.0
    %5316 = vmatprep.subr.mxu0 0.0
    %5317 = vmatpush2.msra.mxu0 0.0
    %5318 = vmatprep.subr.mxu0 0.0
    %5319 = vmatpush2.msra.mxu0 0.0
    %5320 = vmatprep.subr.mxu0 0.0
    %5321 = vmatpush2.msra.mxu0 0.0
    %5322 = vmatprep.subr.mxu0 0.0
    %5323 = vmatpush2.msra.mxu0 0.0
    %5324 = vmatprep.subr.mxu0 0.0
    %5325 = vmatpush2.msra.mxu0 0.0
    %5326 = vmatprep.subr.mxu0 0.0
    %5327 = vmatpush2.msra.mxu0 0.0
    %5328 = vmatprep.subr.mxu0 0.0
    %5329 = vmatpush2.msra.mxu0 0.0
    %5330 = vmatprep.mubr.f32.mxu0 0.0
    %5331 = vmatmul.mubr.f32.gmra.mxu0 %v5264
    %v5332 = vpop.f32.mrf.mxu0
    %v5333 = vadd.f32 %v2797, %v5332
    %v5334 = vpop.f32.mrf.mxu0
    %5335 = vdwg.mxu0
    %5336 = vmatprep.subr.mxu0 0.0
    %5337 = vmatpush1.msra.mxu0 0.0
    %5338 = vmatprep.subr.mxu0 0.0
    %5339 = vmatpush1.msra.mxu0 0.0
    %5340 = vmatprep.subr.mxu0 0.0
    %5341 = vmatpush1.msra.mxu0 0.0
    %5342 = vmatprep.subr.mxu0 0.0
    %5343 = vmatpush1.msra.mxu0 0.0
    %5344 = vmatprep.subr.mxu0 0.0
    %5345 = vmatpush1.msra.mxu0 0.0
    %5346 = vmatprep.subr.mxu0 0.0
    %5347 = vmatpush1.msra.mxu0 0.0
    %5348 = vmatprep.subr.mxu0 0.0
    %5349 = vmatpush1.msra.mxu0 0.0
    %5350 = vmatprep.subr.mxu0 0.0
    %5351 = vmatpush1.msra.mxu0 0.0
    %5352 = vmatprep.subr.mxu0 0.0
    %5353 = vmatpush1.msra.mxu0 0.0
    %5354 = vmatprep.subr.mxu0 0.0
    %5355 = vmatpush1.msra.mxu0 0.0
    %5356 = vmatprep.subr.mxu0 0.0
    %5357 = vmatpush1.msra.mxu0 0.0
    %5358 = vmatprep.subr.mxu0 0.0
    %5359 = vmatpush1.msra.mxu0 0.0
    %5360 = vmatprep.subr.mxu0 0.0
    %5361 = vmatpush1.msra.mxu0 %v2790
    %5362 = vmatprep.subr.mxu0 0.0
    %5363 = vmatpush1.msra.mxu0 %v2789
    %5364 = vmatprep.subr.mxu0 0.0
    %5365 = vmatpush1.msra.mxu0 %v2788
    %5366 = vmatprep.subr.mxu0 0.0
    %5367 = vmatpush1.msra.mxu0 %v2787
    %5368 = vmatprep.subr.mxu0 0.0
    %5369 = vmatpush2.msra.mxu0 0.0
    %5370 = vmatprep.subr.mxu0 0.0
    %5371 = vmatpush2.msra.mxu0 0.0
    %5372 = vmatprep.subr.mxu0 0.0
    %5373 = vmatpush2.msra.mxu0 0.0
    %5374 = vmatprep.subr.mxu0 0.0
    %5375 = vmatpush2.msra.mxu0 0.0
    %5376 = vmatprep.subr.mxu0 0.0
    %5377 = vmatpush2.msra.mxu0 0.0
    %5378 = vmatprep.subr.mxu0 0.0
    %5379 = vmatpush2.msra.mxu0 0.0
    %5380 = vmatprep.subr.mxu0 0.0
    %5381 = vmatpush2.msra.mxu0 0.0
    %5382 = vmatprep.subr.mxu0 0.0
    %5383 = vmatpush2.msra.mxu0 0.0
    %5384 = vmatprep.subr.mxu0 0.0
    %5385 = vmatpush2.msra.mxu0 0.0
    %5386 = vmatprep.subr.mxu0 0.0
    %5387 = vmatpush2.msra.mxu0 0.0
    %5388 = vmatprep.subr.mxu0 0.0
    %5389 = vmatpush2.msra.mxu0 0.0
    %5390 = vmatprep.subr.mxu0 0.0
    %5391 = vmatpush2.msra.mxu0 0.0
    %5392 = vmatprep.subr.mxu0 0.0
    %5393 = vmatpush2.msra.mxu0 0.0
    %5394 = vmatprep.subr.mxu0 0.0
    %5395 = vmatpush2.msra.mxu0 0.0
    %5396 = vmatprep.subr.mxu0 0.0
    %5397 = vmatpush2.msra.mxu0 0.0
    %5398 = vmatprep.subr.mxu0 0.0
    %5399 = vmatpush2.msra.mxu0 0.0
    %5400 = vmatprep.mubr.f32.mxu0 0.0
    %5401 = vmatmul.mubr.f32.gmra.mxu0 %v4948
    %v5402 = vpop.f32.mrf.mxu0
    %v5403 = vadd.f32 %v2878, %v5402
    %v5404 = vpop.f32.mrf.mxu0
    %5405 = vdwg.mxu0
    %v5406 = vadd.f32 %v5333, %v5403
    %v5407 = vxor.u32 %v5406, 2147483648
    %v5408 = vmul.f32 %v5407, 1.442695
    %v5409 = vpow.pop %v5408
    %v5410 = vadd.f32 %v5409, 1.0
    %v5411 = vrcp.pop %v5410
    %v5412 = vmul.f32 1.0, %v5411
    %5414 = vrot.lane.b32.xlu0 %v5403, 64
    %v5415 = vpop.permute.xlu0 %5414
    %v5417 = vmul.f32 %v5412, %v5415
    %5419 = vrot.lane.b32.xlu0 %v5417, 64
    %v5420 = vpop.permute.xlu0 %5419
    %v5422 = vadd.f32 %v5333, %v5420
    %v5423 = vtanh.pop %v5422
    %v5424 = vsub.f32 1.0, %v5412
    %5426 = vrot.lane.b32.xlu0 %v5423, 96
    %v5427 = vpop.permute.xlu0 %5426
    %v5429 = vmul.f32 %v5424, %v5427
    %v5430 = vmul.f32 %v5412, %v4944
    %v5431 = vadd.f32 %v5429, %v5430
    %5433 = vrot.lane.b32.xlu0 %v5431, 96
    %v5434 = vpop.permute.xlu0 %5433
    %v5435 = vsel %vm263, %v5434, 0
    %5437 = vmatprep.subr.mxu0 0.0
    %5438 = vmatpush1.msra.mxu0 0.0
    %5439 = vmatprep.subr.mxu0 0.0
    %5440 = vmatpush1.msra.mxu0 0.0
    %5441 = vmatprep.subr.mxu0 0.0
    %5442 = vmatpush1.msra.mxu0 0.0
    %5443 = vmatprep.subr.mxu0 0.0
    %5444 = vmatpush1.msra.mxu0 0.0
    %5445 = vmatprep.subr.mxu0 0.0
    %5446 = vmatpush1.msra.mxu0 0.0
    %5447 = vmatprep.subr.mxu0 0.0
    %5448 = vmatpush1.msra.mxu0 0.0
    %5449 = vmatprep.subr.mxu0 0.0
    %5450 = vmatpush1.msra.mxu0 0.0
    %5451 = vmatprep.subr.mxu0 0.0
    %5452 = vmatpush1.msra.mxu0 0.0
    %5453 = vmatprep.subr.mxu0 0.0
    %5454 = vmatpush1.msra.mxu0 0.0
    %5455 = vmatprep.subr.mxu0 0.0
    %5456 = vmatpush1.msra.mxu0 0.0
    %5457 = vmatprep.subr.mxu0 0.0
    %5458 = vmatpush1.msra.mxu0 0.0
    %5459 = vmatprep.subr.mxu0 0.0
    %5460 = vmatpush1.msra.mxu0 0.0
    %5461 = vmatprep.subr.mxu0 0.0
    %5462 = vmatpush1.msra.mxu0 %v2979
    %5463 = vmatprep.subr.mxu0 0.0
    %5464 = vmatpush1.msra.mxu0 %v2978
    %5465 = vmatprep.subr.mxu0 0.0
    %5466 = vmatpush1.msra.mxu0 %v2977
    %5467 = vmatprep.subr.mxu0 0.0
    %5468 = vmatpush1.msra.mxu0 %v2976
    %5469 = vmatprep.subr.mxu0 0.0
    %5470 = vmatpush2.msra.mxu0 0.0
    %5471 = vmatprep.subr.mxu0 0.0
    %5472 = vmatpush2.msra.mxu0 0.0
    %5473 = vmatprep.subr.mxu0 0.0
    %5474 = vmatpush2.msra.mxu0 0.0
    %5475 = vmatprep.subr.mxu0 0.0
    %5476 = vmatpush2.msra.mxu0 0.0
    %5477 = vmatprep.subr.mxu0 0.0
    %5478 = vmatpush2.msra.mxu0 0.0
    %5479 = vmatprep.subr.mxu0 0.0
    %5480 = vmatpush2.msra.mxu0 0.0
    %5481 = vmatprep.subr.mxu0 0.0
    %5482 = vmatpush2.msra.mxu0 0.0
    %5483 = vmatprep.subr.mxu0 0.0
    %5484 = vmatpush2.msra.mxu0 0.0
    %5485 = vmatprep.subr.mxu0 0.0
    %5486 = vmatpush2.msra.mxu0 0.0
    %5487 = vmatprep.subr.mxu0 0.0
    %5488 = vmatpush2.msra.mxu0 0.0
    %5489 = vmatprep.subr.mxu0 0.0
    %5490 = vmatpush2.msra.mxu0 0.0
    %5491 = vmatprep.subr.mxu0 0.0
    %5492 = vmatpush2.msra.mxu0 0.0
    %5493 = vmatprep.subr.mxu0 0.0
    %5494 = vmatpush2.msra.mxu0 0.0
    %5495 = vmatprep.subr.mxu0 0.0
    %5496 = vmatpush2.msra.mxu0 0.0
    %5497 = vmatprep.subr.mxu0 0.0
    %5498 = vmatpush2.msra.mxu0 0.0
    %5499 = vmatprep.subr.mxu0 0.0
    %5500 = vmatpush2.msra.mxu0 0.0
    %5501 = vmatprep.mubr.f32.mxu0 0.0
    %5502 = vmatmul.mubr.f32.gmra.mxu0 %v5435
    %v5503 = vpop.f32.mrf.mxu0
    %v5504 = vadd.f32 %v2988, %v5503
    %v5505 = vpop.f32.mrf.mxu0
    %5506 = vdwg.mxu0
    %v5507 = vmax.f32 %v5504, 0.0
    %v5509 = vsel %vm3072, %v5507, 0
    %5511 = vmatprep.subr.mxu0 0.0
    %5512 = vmatpush1.msra.mxu0 0.0
    %5513 = vmatprep.subr.mxu0 0.0
    %5514 = vmatpush1.msra.mxu0 0.0
    %5515 = vmatprep.subr.mxu0 0.0
    %5516 = vmatpush1.msra.mxu0 0.0
    %5517 = vmatprep.subr.mxu0 0.0
    %5518 = vmatpush1.msra.mxu0 0.0
    %5519 = vmatprep.subr.mxu0 0.0
    %5520 = vmatpush1.msra.mxu0 0.0
    %5521 = vmatprep.subr.mxu0 0.0
    %5522 = vmatpush1.msra.mxu0 0.0
    %5523 = vmatprep.subr.mxu0 0.0
    %5524 = vmatpush1.msra.mxu0 0.0
    %5525 = vmatprep.subr.mxu0 0.0
    %5526 = vmatpush1.msra.mxu0 0.0
    %5527 = vmatprep.subr.mxu0 0.0
    %5528 = vmatpush1.msra.mxu0 0.0
    %5529 = vmatprep.subr.mxu0 0.0
    %5530 = vmatpush1.msra.mxu0 0.0
    %5531 = vmatprep.subr.mxu0 0.0
    %5532 = vmatpush1.msra.mxu0 0.0
    %5533 = vmatprep.subr.mxu0 0.0
    %5534 = vmatpush1.msra.mxu0 0.0
    %5535 = vmatprep.subr.mxu0 0.0
    %5536 = vmatpush1.msra.mxu0 0.0
    %5537 = vmatprep.subr.mxu0 0.0
    %5538 = vmatpush1.msra.mxu0 0.0
    %5539 = vmatprep.subr.mxu0 0.0
    %5540 = vmatpush1.msra.mxu0 %v2982
    %5541 = vmatprep.subr.mxu0 0.0
    %5542 = vmatpush1.msra.mxu0 %v2981
    %5543 = vmatprep.subr.mxu0 0.0
    %5544 = vmatpush2.msra.mxu0 0.0
    %5545 = vmatprep.subr.mxu0 0.0
    %5546 = vmatpush2.msra.mxu0 0.0
    %5547 = vmatprep.subr.mxu0 0.0
    %5548 = vmatpush2.msra.mxu0 0.0
    %5549 = vmatprep.subr.mxu0 0.0
    %5550 = vmatpush2.msra.mxu0 0.0
    %5551 = vmatprep.subr.mxu0 0.0
    %5552 = vmatpush2.msra.mxu0 0.0
    %5553 = vmatprep.subr.mxu0 0.0
    %5554 = vmatpush2.msra.mxu0 0.0
    %5555 = vmatprep.subr.mxu0 0.0
    %5556 = vmatpush2.msra.mxu0 0.0
    %5557 = vmatprep.subr.mxu0 0.0
    %5558 = vmatpush2.msra.mxu0 0.0
    %5559 = vmatprep.subr.mxu0 0.0
    %5560 = vmatpush2.msra.mxu0 0.0
    %5561 = vmatprep.subr.mxu0 0.0
    %5562 = vmatpush2.msra.mxu0 0.0
    %5563 = vmatprep.subr.mxu0 0.0
    %5564 = vmatpush2.msra.mxu0 0.0
    %5565 = vmatprep.subr.mxu0 0.0
    %5566 = vmatpush2.msra.mxu0 0.0
    %5567 = vmatprep.subr.mxu0 0.0
    %5568 = vmatpush2.msra.mxu0 0.0
    %5569 = vmatprep.subr.mxu0 0.0
    %5570 = vmatpush2.msra.mxu0 0.0
    %5571 = vmatprep.subr.mxu0 0.0
    %5572 = vmatpush2.msra.mxu0 0.0
    %5573 = vmatprep.subr.mxu0 0.0
    %5574 = vmatpush2.msra.mxu0 0.0
    %5575 = vmatprep.mubr.f32.mxu0 0.0
    %5576 = vmatmul.mubr.f32.gmra.mxu0 %v5509
    %v5577 = vpop.f32.mrf.mxu0
    %v5578 = vadd.f32 %v3070, %v5577
    %v5579 = vpop.f32.mrf.mxu0
    %5580 = vdwg.mxu0
    %v5581 = vadd.f32 %v5094, %v5578
    %5582 = vmatprep.subr.mxu0 0.0
    %5583 = vmatpush1.msra.mxu0 0.0
    %5584 = vmatprep.subr.mxu0 0.0
    %5585 = vmatpush1.msra.mxu0 0.0
    %5586 = vmatprep.subr.mxu0 0.0
    %5587 = vmatpush1.msra.mxu0 0.0
    %5588 = vmatprep.subr.mxu0 0.0
    %5589 = vmatpush1.msra.mxu0 0.0
    %5590 = vmatprep.subr.mxu0 0.0
    %5591 = vmatpush1.msra.mxu0 0.0
    %5592 = vmatprep.subr.mxu0 0.0
    %5593 = vmatpush1.msra.mxu0 0.0
    %5594 = vmatprep.subr.mxu0 0.0
    %5595 = vmatpush1.msra.mxu0 0.0
    %5596 = vmatprep.subr.mxu0 0.0
    %5597 = vmatpush1.msra.mxu0 0.0
    %5598 = vmatprep.subr.mxu0 0.0
    %5599 = vmatpush1.msra.mxu0 0.0
    %5600 = vmatprep.subr.mxu0 0.0
    %5601 = vmatpush1.msra.mxu0 0.0
    %5602 = vmatprep.subr.mxu0 0.0
    %5603 = vmatpush1.msra.mxu0 0.0
    %5604 = vmatprep.subr.mxu0 0.0
    %5605 = vmatpush1.msra.mxu0 0.0
    %5606 = vmatprep.subr.mxu0 0.0
    %5607 = vmatpush1.msra.mxu0 %v2593
    %5608 = vmatprep.subr.mxu0 0.0
    %5609 = vmatpush1.msra.mxu0 %v2592
    %5610 = vmatprep.subr.mxu0 0.0
    %5611 = vmatpush1.msra.mxu0 %v2591
    %5612 = vmatprep.subr.mxu0 0.0
    %5613 = vmatpush1.msra.mxu0 %v2590
    %5614 = vmatprep.subr.mxu0 0.0
    %5615 = vmatpush2.msra.mxu0 0.0
    %5616 = vmatprep.subr.mxu0 0.0
    %5617 = vmatpush2.msra.mxu0 0.0
    %5618 = vmatprep.subr.mxu0 0.0
    %5619 = vmatpush2.msra.mxu0 0.0
    %5620 = vmatprep.subr.mxu0 0.0
    %5621 = vmatpush2.msra.mxu0 0.0
    %5622 = vmatprep.subr.mxu0 0.0
    %5623 = vmatpush2.msra.mxu0 0.0
    %5624 = vmatprep.subr.mxu0 0.0
    %5625 = vmatpush2.msra.mxu0 0.0
    %5626 = vmatprep.subr.mxu0 0.0
    %5627 = vmatpush2.msra.mxu0 0.0
    %5628 = vmatprep.subr.mxu0 0.0
    %5629 = vmatpush2.msra.mxu0 0.0
    %5630 = vmatprep.subr.mxu0 0.0
    %5631 = vmatpush2.msra.mxu0 0.0
    %5632 = vmatprep.subr.mxu0 0.0
    %5633 = vmatpush2.msra.mxu0 0.0
    %5634 = vmatprep.subr.mxu0 0.0
    %5635 = vmatpush2.msra.mxu0 0.0
    %5636 = vmatprep.subr.mxu0 0.0
    %5637 = vmatpush2.msra.mxu0 0.0
    %5638 = vmatprep.subr.mxu0 0.0
    %5639 = vmatpush2.msra.mxu0 0.0
    %5640 = vmatprep.subr.mxu0 0.0
    %5641 = vmatpush2.msra.mxu0 0.0
    %5642 = vmatprep.subr.mxu0 0.0
    %5643 = vmatpush2.msra.mxu0 0.0
    %5644 = vmatprep.subr.mxu0 0.0
    %5645 = vmatpush2.msra.mxu0 0.0
    %5646 = vmatprep.mubr.f32.mxu0 0.0
    %5647 = vmatmul.mubr.f32.gmra.mxu0 %v5435
    %v5648 = vpop.f32.mrf.mxu0
    %v5649 = vadd.f32 %v2604, %v5648
    %v5650 = vpop.f32.mrf.mxu0
    %5651 = vdwg.mxu0
    %5652 = vmatprep.subr.mxu0 0.0
    %5653 = vmatpush1.msra.mxu0 0.0
    %5654 = vmatprep.subr.mxu0 0.0
    %5655 = vmatpush1.msra.mxu0 0.0
    %5656 = vmatprep.subr.mxu0 0.0
    %5657 = vmatpush1.msra.mxu0 0.0
    %5658 = vmatprep.subr.mxu0 0.0
    %5659 = vmatpush1.msra.mxu0 0.0
    %5660 = vmatprep.subr.mxu0 0.0
    %5661 = vmatpush1.msra.mxu0 0.0
    %5662 = vmatprep.subr.mxu0 0.0
    %5663 = vmatpush1.msra.mxu0 0.0
    %5664 = vmatprep.subr.mxu0 0.0
    %5665 = vmatpush1.msra.mxu0 0.0
    %5666 = vmatprep.subr.mxu0 0.0
    %5667 = vmatpush1.msra.mxu0 0.0
    %5668 = vmatprep.subr.mxu0 0.0
    %5669 = vmatpush1.msra.mxu0 0.0
    %5670 = vmatprep.subr.mxu0 0.0
    %5671 = vmatpush1.msra.mxu0 0.0
    %5672 = vmatprep.subr.mxu0 0.0
    %5673 = vmatpush1.msra.mxu0 0.0
    %5674 = vmatprep.subr.mxu0 0.0
    %5675 = vmatpush1.msra.mxu0 0.0
    %5676 = vmatprep.subr.mxu0 0.0
    %5677 = vmatpush1.msra.mxu0 %v2597
    %5678 = vmatprep.subr.mxu0 0.0
    %5679 = vmatpush1.msra.mxu0 %v2596
    %5680 = vmatprep.subr.mxu0 0.0
    %5681 = vmatpush1.msra.mxu0 %v2595
    %5682 = vmatprep.subr.mxu0 0.0
    %5683 = vmatpush1.msra.mxu0 %v2594
    %5684 = vmatprep.subr.mxu0 0.0
    %5685 = vmatpush2.msra.mxu0 0.0
    %5686 = vmatprep.subr.mxu0 0.0
    %5687 = vmatpush2.msra.mxu0 0.0
    %5688 = vmatprep.subr.mxu0 0.0
    %5689 = vmatpush2.msra.mxu0 0.0
    %5690 = vmatprep.subr.mxu0 0.0
    %5691 = vmatpush2.msra.mxu0 0.0
    %5692 = vmatprep.subr.mxu0 0.0
    %5693 = vmatpush2.msra.mxu0 0.0
    %5694 = vmatprep.subr.mxu0 0.0
    %5695 = vmatpush2.msra.mxu0 0.0
    %5696 = vmatprep.subr.mxu0 0.0
    %5697 = vmatpush2.msra.mxu0 0.0
    %5698 = vmatprep.subr.mxu0 0.0
    %5699 = vmatpush2.msra.mxu0 0.0
    %5700 = vmatprep.subr.mxu0 0.0
    %5701 = vmatpush2.msra.mxu0 0.0
    %5702 = vmatprep.subr.mxu0 0.0
    %5703 = vmatpush2.msra.mxu0 0.0
    %5704 = vmatprep.subr.mxu0 0.0
    %5705 = vmatpush2.msra.mxu0 0.0
    %5706 = vmatprep.subr.mxu0 0.0
    %5707 = vmatpush2.msra.mxu0 0.0
    %5708 = vmatprep.subr.mxu0 0.0
    %5709 = vmatpush2.msra.mxu0 0.0
    %5710 = vmatprep.subr.mxu0 0.0
    %5711 = vmatpush2.msra.mxu0 0.0
    %5712 = vmatprep.subr.mxu0 0.0
    %5713 = vmatpush2.msra.mxu0 0.0
    %5714 = vmatprep.subr.mxu0 0.0
    %5715 = vmatpush2.msra.mxu0 0.0
    %5716 = vmatprep.mubr.f32.mxu0 0.0
    %5717 = vmatmul.mubr.f32.gmra.mxu0 %v5264
    %v5718 = vpop.f32.mrf.mxu0
    %v5719 = vadd.f32 %v2685, %v5718
    %v5720 = vpop.f32.mrf.mxu0
    %5721 = vdwg.mxu0
    %v5722 = vadd.f32 %v5649, %v5719
    %v5723 = vxor.u32 %v5722, 2147483648
    %v5724 = vmul.f32 %v5723, 1.442695
    %v5725 = vpow.pop %v5724
    %v5726 = vadd.f32 %v5725, 1.0
    %v5727 = vrcp.pop %v5726
    %v5728 = vmul.f32 1.0, %v5727
    %5730 = vrot.lane.b32.xlu0 %v5719, 64
    %v5731 = vpop.permute.xlu0 %5730
    %v5733 = vmul.f32 %v5728, %v5731
    %5735 = vrot.lane.b32.xlu0 %v5733, 64
    %v5736 = vpop.permute.xlu0 %5735
    %v5738 = vadd.f32 %v5649, %v5736
    %v5739 = vtanh.pop %v5738
    %v5740 = vsub.f32 1.0, %v5728
    %5742 = vrot.lane.b32.xlu0 %v5739, 96
    %v5743 = vpop.permute.xlu0 %5742
    %v5745 = vmul.f32 %v5740, %v5743
    %v5746 = vmul.f32 %v5728, %v5260
    %v5747 = vadd.f32 %v5745, %v5746
    %5749 = vrot.lane.b32.xlu0 %v5747, 96
    %v5750 = vpop.permute.xlu0 %5749
    %v5751 = vsel %vm263, %v5750, 0
    %5753 = vmatprep.subr.mxu0 0.0
    %5754 = vmatpush1.msra.mxu0 0.0
    %5755 = vmatprep.subr.mxu0 0.0
    %5756 = vmatpush1.msra.mxu0 0.0
    %5757 = vmatprep.subr.mxu0 0.0
    %5758 = vmatpush1.msra.mxu0 0.0
    %5759 = vmatprep.subr.mxu0 0.0
    %5760 = vmatpush1.msra.mxu0 0.0
    %5761 = vmatprep.subr.mxu0 0.0
    %5762 = vmatpush1.msra.mxu0 0.0
    %5763 = vmatprep.subr.mxu0 0.0
    %5764 = vmatpush1.msra.mxu0 0.0
    %5765 = vmatprep.subr.mxu0 0.0
    %5766 = vmatpush1.msra.mxu0 0.0
    %5767 = vmatprep.subr.mxu0 0.0
    %5768 = vmatpush1.msra.mxu0 0.0
    %5769 = vmatprep.subr.mxu0 0.0
    %5770 = vmatpush1.msra.mxu0 0.0
    %5771 = vmatprep.subr.mxu0 0.0
    %5772 = vmatpush1.msra.mxu0 0.0
    %5773 = vmatprep.subr.mxu0 0.0
    %5774 = vmatpush1.msra.mxu0 0.0
    %5775 = vmatprep.subr.mxu0 0.0
    %5776 = vmatpush1.msra.mxu0 0.0
    %5777 = vmatprep.subr.mxu0 0.0
    %5778 = vmatpush1.msra.mxu0 %v2786
    %5779 = vmatprep.subr.mxu0 0.0
    %5780 = vmatpush1.msra.mxu0 %v2785
    %5781 = vmatprep.subr.mxu0 0.0
    %5782 = vmatpush1.msra.mxu0 %v2784
    %5783 = vmatprep.subr.mxu0 0.0
    %5784 = vmatpush1.msra.mxu0 %v2783
    %5785 = vmatprep.subr.mxu0 0.0
    %5786 = vmatpush2.msra.mxu0 0.0
    %5787 = vmatprep.subr.mxu0 0.0
    %5788 = vmatpush2.msra.mxu0 0.0
    %5789 = vmatprep.subr.mxu0 0.0
    %5790 = vmatpush2.msra.mxu0 0.0
    %5791 = vmatprep.subr.mxu0 0.0
    %5792 = vmatpush2.msra.mxu0 0.0
    %5793 = vmatprep.subr.mxu0 0.0
    %5794 = vmatpush2.msra.mxu0 0.0
    %5795 = vmatprep.subr.mxu0 0.0
    %5796 = vmatpush2.msra.mxu0 0.0
    %5797 = vmatprep.subr.mxu0 0.0
    %5798 = vmatpush2.msra.mxu0 0.0
    %5799 = vmatprep.subr.mxu0 0.0
    %5800 = vmatpush2.msra.mxu0 0.0
    %5801 = vmatprep.subr.mxu0 0.0
    %5802 = vmatpush2.msra.mxu0 0.0
    %5803 = vmatprep.subr.mxu0 0.0
    %5804 = vmatpush2.msra.mxu0 0.0
    %5805 = vmatprep.subr.mxu0 0.0
    %5806 = vmatpush2.msra.mxu0 0.0
    %5807 = vmatprep.subr.mxu0 0.0
    %5808 = vmatpush2.msra.mxu0 0.0
    %5809 = vmatprep.subr.mxu0 0.0
    %5810 = vmatpush2.msra.mxu0 0.0
    %5811 = vmatprep.subr.mxu0 0.0
    %5812 = vmatpush2.msra.mxu0 0.0
    %5813 = vmatprep.subr.mxu0 0.0
    %5814 = vmatpush2.msra.mxu0 0.0
    %5815 = vmatprep.subr.mxu0 0.0
    %5816 = vmatpush2.msra.mxu0 0.0
    %5817 = vmatprep.mubr.f32.mxu0 0.0
    %5818 = vmatmul.mubr.f32.gmra.mxu0 %v5751
    %v5819 = vpop.f32.mrf.mxu0
    %v5820 = vadd.f32 %v2797, %v5819
    %v5821 = vpop.f32.mrf.mxu0
    %5822 = vdwg.mxu0
    %5823 = vmatprep.subr.mxu0 0.0
    %5824 = vmatpush1.msra.mxu0 0.0
    %5825 = vmatprep.subr.mxu0 0.0
    %5826 = vmatpush1.msra.mxu0 0.0
    %5827 = vmatprep.subr.mxu0 0.0
    %5828 = vmatpush1.msra.mxu0 0.0
    %5829 = vmatprep.subr.mxu0 0.0
    %5830 = vmatpush1.msra.mxu0 0.0
    %5831 = vmatprep.subr.mxu0 0.0
    %5832 = vmatpush1.msra.mxu0 0.0
    %5833 = vmatprep.subr.mxu0 0.0
    %5834 = vmatpush1.msra.mxu0 0.0
    %5835 = vmatprep.subr.mxu0 0.0
    %5836 = vmatpush1.msra.mxu0 0.0
    %5837 = vmatprep.subr.mxu0 0.0
    %5838 = vmatpush1.msra.mxu0 0.0
    %5839 = vmatprep.subr.mxu0 0.0
    %5840 = vmatpush1.msra.mxu0 0.0
    %5841 = vmatprep.subr.mxu0 0.0
    %5842 = vmatpush1.msra.mxu0 0.0
    %5843 = vmatprep.subr.mxu0 0.0
    %5844 = vmatpush1.msra.mxu0 0.0
    %5845 = vmatprep.subr.mxu0 0.0
    %5846 = vmatpush1.msra.mxu0 0.0
    %5847 = vmatprep.subr.mxu0 0.0
    %5848 = vmatpush1.msra.mxu0 %v2790
    %5849 = vmatprep.subr.mxu0 0.0
    %5850 = vmatpush1.msra.mxu0 %v2789
    %5851 = vmatprep.subr.mxu0 0.0
    %5852 = vmatpush1.msra.mxu0 %v2788
    %5853 = vmatprep.subr.mxu0 0.0
    %5854 = vmatpush1.msra.mxu0 %v2787
    %5855 = vmatprep.subr.mxu0 0.0
    %5856 = vmatpush2.msra.mxu0 0.0
    %5857 = vmatprep.subr.mxu0 0.0
    %5858 = vmatpush2.msra.mxu0 0.0
    %5859 = vmatprep.subr.mxu0 0.0
    %5860 = vmatpush2.msra.mxu0 0.0
    %5861 = vmatprep.subr.mxu0 0.0
    %5862 = vmatpush2.msra.mxu0 0.0
    %5863 = vmatprep.subr.mxu0 0.0
    %5864 = vmatpush2.msra.mxu0 0.0
    %5865 = vmatprep.subr.mxu0 0.0
    %5866 = vmatpush2.msra.mxu0 0.0
    %5867 = vmatprep.subr.mxu0 0.0
    %5868 = vmatpush2.msra.mxu0 0.0
    %5869 = vmatprep.subr.mxu0 0.0
    %5870 = vmatpush2.msra.mxu0 0.0
    %5871 = vmatprep.subr.mxu0 0.0
    %5872 = vmatpush2.msra.mxu0 0.0
    %5873 = vmatprep.subr.mxu0 0.0
    %5874 = vmatpush2.msra.mxu0 0.0
    %5875 = vmatprep.subr.mxu0 0.0
    %5876 = vmatpush2.msra.mxu0 0.0
    %5877 = vmatprep.subr.mxu0 0.0
    %5878 = vmatpush2.msra.mxu0 0.0
    %5879 = vmatprep.subr.mxu0 0.0
    %5880 = vmatpush2.msra.mxu0 0.0
    %5881 = vmatprep.subr.mxu0 0.0
    %5882 = vmatpush2.msra.mxu0 0.0
    %5883 = vmatprep.subr.mxu0 0.0
    %5884 = vmatpush2.msra.mxu0 0.0
    %5885 = vmatprep.subr.mxu0 0.0
    %5886 = vmatpush2.msra.mxu0 0.0
    %5887 = vmatprep.mubr.f32.mxu0 0.0
    %5888 = vmatmul.mubr.f32.gmra.mxu0 %v5435
    %v5889 = vpop.f32.mrf.mxu0
    %v5890 = vadd.f32 %v2878, %v5889
    %v5891 = vpop.f32.mrf.mxu0
    %5892 = vdwg.mxu0
    %v5893 = vadd.f32 %v5820, %v5890
    %v5894 = vxor.u32 %v5893, 2147483648
    %v5895 = vmul.f32 %v5894, 1.442695
    %v5896 = vpow.pop %v5895
    %v5897 = vadd.f32 %v5896, 1.0
    %v5898 = vrcp.pop %v5897
    %v5899 = vmul.f32 1.0, %v5898
    %5901 = vrot.lane.b32.xlu0 %v5890, 64
    %v5902 = vpop.permute.xlu0 %5901
    %v5904 = vmul.f32 %v5899, %v5902
    %5906 = vrot.lane.b32.xlu0 %v5904, 64
    %v5907 = vpop.permute.xlu0 %5906
    %v5909 = vadd.f32 %v5820, %v5907
    %v5910 = vtanh.pop %v5909
    %v5911 = vsub.f32 1.0, %v5899
    %5913 = vrot.lane.b32.xlu0 %v5910, 96
    %v5914 = vpop.permute.xlu0 %5913
    %v5916 = vmul.f32 %v5911, %v5914
    %v5917 = vmul.f32 %v5899, %v5431
    %v5918 = vadd.f32 %v5916, %v5917
    %5920 = vrot.lane.b32.xlu0 %v5918, 96
    %v5921 = vpop.permute.xlu0 %5920
    %v5922 = vsel %vm263, %v5921, 0
    %5924 = vmatprep.subr.mxu0 0.0
    %5925 = vmatpush1.msra.mxu0 0.0
    %5926 = vmatprep.subr.mxu0 0.0
    %5927 = vmatpush1.msra.mxu0 0.0
    %5928 = vmatprep.subr.mxu0 0.0
    %5929 = vmatpush1.msra.mxu0 0.0
    %5930 = vmatprep.subr.mxu0 0.0
    %5931 = vmatpush1.msra.mxu0 0.0
    %5932 = vmatprep.subr.mxu0 0.0
    %5933 = vmatpush1.msra.mxu0 0.0
    %5934 = vmatprep.subr.mxu0 0.0
    %5935 = vmatpush1.msra.mxu0 0.0
    %5936 = vmatprep.subr.mxu0 0.0
    %5937 = vmatpush1.msra.mxu0 0.0
    %5938 = vmatprep.subr.mxu0 0.0
    %5939 = vmatpush1.msra.mxu0 0.0
    %5940 = vmatprep.subr.mxu0 0.0
    %5941 = vmatpush1.msra.mxu0 0.0
    %5942 = vmatprep.subr.mxu0 0.0
    %5943 = vmatpush1.msra.mxu0 0.0
    %5944 = vmatprep.subr.mxu0 0.0
    %5945 = vmatpush1.msra.mxu0 0.0
    %5946 = vmatprep.subr.mxu0 0.0
    %5947 = vmatpush1.msra.mxu0 0.0
    %5948 = vmatprep.subr.mxu0 0.0
    %5949 = vmatpush1.msra.mxu0 %v2979
    %5950 = vmatprep.subr.mxu0 0.0
    %5951 = vmatpush1.msra.mxu0 %v2978
    %5952 = vmatprep.subr.mxu0 0.0
    %5953 = vmatpush1.msra.mxu0 %v2977
    %5954 = vmatprep.subr.mxu0 0.0
    %5955 = vmatpush1.msra.mxu0 %v2976
    %5956 = vmatprep.subr.mxu0 0.0
    %5957 = vmatpush2.msra.mxu0 0.0
    %5958 = vmatprep.subr.mxu0 0.0
    %5959 = vmatpush2.msra.mxu0 0.0
    %5960 = vmatprep.subr.mxu0 0.0
    %5961 = vmatpush2.msra.mxu0 0.0
    %5962 = vmatprep.subr.mxu0 0.0
    %5963 = vmatpush2.msra.mxu0 0.0
    %5964 = vmatprep.subr.mxu0 0.0
    %5965 = vmatpush2.msra.mxu0 0.0
    %5966 = vmatprep.subr.mxu0 0.0
    %5967 = vmatpush2.msra.mxu0 0.0
    %5968 = vmatprep.subr.mxu0 0.0
    %5969 = vmatpush2.msra.mxu0 0.0
    %5970 = vmatprep.subr.mxu0 0.0
    %5971 = vmatpush2.msra.mxu0 0.0
    %5972 = vmatprep.subr.mxu0 0.0
    %5973 = vmatpush2.msra.mxu0 0.0
    %5974 = vmatprep.subr.mxu0 0.0
    %5975 = vmatpush2.msra.mxu0 0.0
    %5976 = vmatprep.subr.mxu0 0.0
    %5977 = vmatpush2.msra.mxu0 0.0
    %5978 = vmatprep.subr.mxu0 0.0
    %5979 = vmatpush2.msra.mxu0 0.0
    %5980 = vmatprep.subr.mxu0 0.0
    %5981 = vmatpush2.msra.mxu0 0.0
    %5982 = vmatprep.subr.mxu0 0.0
    %5983 = vmatpush2.msra.mxu0 0.0
    %5984 = vmatprep.subr.mxu0 0.0
    %5985 = vmatpush2.msra.mxu0 0.0
    %5986 = vmatprep.subr.mxu0 0.0
    %5987 = vmatpush2.msra.mxu0 0.0
    %5988 = vmatprep.mubr.f32.mxu0 0.0
    %5989 = vmatmul.mubr.f32.gmra.mxu0 %v5922
    %v5990 = vpop.f32.mrf.mxu0
    %v5991 = vadd.f32 %v2988, %v5990
    %v5992 = vpop.f32.mrf.mxu0
    %5993 = vdwg.mxu0
    %v5994 = vmax.f32 %v5991, 0.0
    %v5996 = vsel %vm3072, %v5994, 0
    %5998 = vmatprep.subr.mxu0 0.0
    %5999 = vmatpush1.msra.mxu0 0.0
    %6000 = vmatprep.subr.mxu0 0.0
    %6001 = vmatpush1.msra.mxu0 0.0
    %6002 = vmatprep.subr.mxu0 0.0
    %6003 = vmatpush1.msra.mxu0 0.0
    %6004 = vmatprep.subr.mxu0 0.0
    %6005 = vmatpush1.msra.mxu0 0.0
    %6006 = vmatprep.subr.mxu0 0.0
    %6007 = vmatpush1.msra.mxu0 0.0
    %6008 = vmatprep.subr.mxu0 0.0
    %6009 = vmatpush1.msra.mxu0 0.0
    %6010 = vmatprep.subr.mxu0 0.0
    %6011 = vmatpush1.msra.mxu0 0.0
    %6012 = vmatprep.subr.mxu0 0.0
    %6013 = vmatpush1.msra.mxu0 0.0
    %6014 = vmatprep.subr.mxu0 0.0
    %6015 = vmatpush1.msra.mxu0 0.0
    %6016 = vmatprep.subr.mxu0 0.0
    %6017 = vmatpush1.msra.mxu0 0.0
    %6018 = vmatprep.subr.mxu0 0.0
    %6019 = vmatpush1.msra.mxu0 0.0
    %6020 = vmatprep.subr.mxu0 0.0
    %6021 = vmatpush1.msra.mxu0 0.0
    %6022 = vmatprep.subr.mxu0 0.0
    %6023 = vmatpush1.msra.mxu0 0.0
    %6024 = vmatprep.subr.mxu0 0.0
    %6025 = vmatpush1.msra.mxu0 0.0
    %6026 = vmatprep.subr.mxu0 0.0
    %6027 = vmatpush1.msra.mxu0 %v2982
    %6028 = vmatprep.subr.mxu0 0.0
    %6029 = vmatpush1.msra.mxu0 %v2981
    %6030 = vmatprep.subr.mxu0 0.0
    %6031 = vmatpush2.msra.mxu0 0.0
    %6032 = vmatprep.subr.mxu0 0.0
    %6033 = vmatpush2.msra.mxu0 0.0
    %6034 = vmatprep.subr.mxu0 0.0
    %6035 = vmatpush2.msra.mxu0 0.0
    %6036 = vmatprep.subr.mxu0 0.0
    %6037 = vmatpush2.msra.mxu0 0.0
    %6038 = vmatprep.subr.mxu0 0.0
    %6039 = vmatpush2.msra.mxu0 0.0
    %6040 = vmatprep.subr.mxu0 0.0
    %6041 = vmatpush2.msra.mxu0 0.0
    %6042 = vmatprep.subr.mxu0 0.0
    %6043 = vmatpush2.msra.mxu0 0.0
    %6044 = vmatprep.subr.mxu0 0.0
    %6045 = vmatpush2.msra.mxu0 0.0
    %6046 = vmatprep.subr.mxu0 0.0
    %6047 = vmatpush2.msra.mxu0 0.0
    %6048 = vmatprep.subr.mxu0 0.0
    %6049 = vmatpush2.msra.mxu0 0.0
    %6050 = vmatprep.subr.mxu0 0.0
    %6051 = vmatpush2.msra.mxu0 0.0
    %6052 = vmatprep.subr.mxu0 0.0
    %6053 = vmatpush2.msra.mxu0 0.0
    %6054 = vmatprep.subr.mxu0 0.0
    %6055 = vmatpush2.msra.mxu0 0.0
    %6056 = vmatprep.subr.mxu0 0.0
    %6057 = vmatpush2.msra.mxu0 0.0
    %6058 = vmatprep.subr.mxu0 0.0
    %6059 = vmatpush2.msra.mxu0 0.0
    %6060 = vmatprep.subr.mxu0 0.0
    %6061 = vmatpush2.msra.mxu0 0.0
    %6062 = vmatprep.mubr.f32.mxu0 0.0
    %6063 = vmatmul.mubr.f32.gmra.mxu0 %v5996
    %v6064 = vpop.f32.mrf.mxu0
    %v6065 = vadd.f32 %v3070, %v6064
    %v6066 = vpop.f32.mrf.mxu0
    %6067 = vdwg.mxu0
    %v6068 = vadd.f32 %v5581, %v6065
    %6069 = vmatprep.subr.mxu0 0.0
    %6070 = vmatpush1.msra.mxu0 0.0
    %6071 = vmatprep.subr.mxu0 0.0
    %6072 = vmatpush1.msra.mxu0 0.0
    %6073 = vmatprep.subr.mxu0 0.0
    %6074 = vmatpush1.msra.mxu0 0.0
    %6075 = vmatprep.subr.mxu0 0.0
    %6076 = vmatpush1.msra.mxu0 0.0
    %6077 = vmatprep.subr.mxu0 0.0
    %6078 = vmatpush1.msra.mxu0 0.0
    %6079 = vmatprep.subr.mxu0 0.0
    %6080 = vmatpush1.msra.mxu0 0.0
    %6081 = vmatprep.subr.mxu0 0.0
    %6082 = vmatpush1.msra.mxu0 0.0
    %6083 = vmatprep.subr.mxu0 0.0
    %6084 = vmatpush1.msra.mxu0 0.0
    %6085 = vmatprep.subr.mxu0 0.0
    %6086 = vmatpush1.msra.mxu0 0.0
    %6087 = vmatprep.subr.mxu0 0.0
    %6088 = vmatpush1.msra.mxu0 0.0
    %6089 = vmatprep.subr.mxu0 0.0
    %6090 = vmatpush1.msra.mxu0 0.0
    %6091 = vmatprep.subr.mxu0 0.0
    %6092 = vmatpush1.msra.mxu0 0.0
    %6093 = vmatprep.subr.mxu0 0.0
    %6094 = vmatpush1.msra.mxu0 %v2593
    %6095 = vmatprep.subr.mxu0 0.0
    %6096 = vmatpush1.msra.mxu0 %v2592
    %6097 = vmatprep.subr.mxu0 0.0
    %6098 = vmatpush1.msra.mxu0 %v2591
    %6099 = vmatprep.subr.mxu0 0.0
    %6100 = vmatpush1.msra.mxu0 %v2590
    %6101 = vmatprep.subr.mxu0 0.0
    %6102 = vmatpush2.msra.mxu0 0.0
    %6103 = vmatprep.subr.mxu0 0.0
    %6104 = vmatpush2.msra.mxu0 0.0
    %6105 = vmatprep.subr.mxu0 0.0
    %6106 = vmatpush2.msra.mxu0 0.0
    %6107 = vmatprep.subr.mxu0 0.0
    %6108 = vmatpush2.msra.mxu0 0.0
    %6109 = vmatprep.subr.mxu0 0.0
    %6110 = vmatpush2.msra.mxu0 0.0
    %6111 = vmatprep.subr.mxu0 0.0
    %6112 = vmatpush2.msra.mxu0 0.0
    %6113 = vmatprep.subr.mxu0 0.0
    %6114 = vmatpush2.msra.mxu0 0.0
    %6115 = vmatprep.subr.mxu0 0.0
    %6116 = vmatpush2.msra.mxu0 0.0
    %6117 = vmatprep.subr.mxu0 0.0
    %6118 = vmatpush2.msra.mxu0 0.0
    %6119 = vmatprep.subr.mxu0 0.0
    %6120 = vmatpush2.msra.mxu0 0.0
    %6121 = vmatprep.subr.mxu0 0.0
    %6122 = vmatpush2.msra.mxu0 0.0
    %6123 = vmatprep.subr.mxu0 0.0
    %6124 = vmatpush2.msra.mxu0 0.0
    %6125 = vmatprep.subr.mxu0 0.0
    %6126 = vmatpush2.msra.mxu0 0.0
    %6127 = vmatprep.subr.mxu0 0.0
    %6128 = vmatpush2.msra.mxu0 0.0
    %6129 = vmatprep.subr.mxu0 0.0
    %6130 = vmatpush2.msra.mxu0 0.0
    %6131 = vmatprep.subr.mxu0 0.0
    %6132 = vmatpush2.msra.mxu0 0.0
    %6133 = vmatprep.mubr.f32.mxu0 0.0
    %6134 = vmatmul.mubr.f32.gmra.mxu0 %v5922
    %v6135 = vpop.f32.mrf.mxu0
    %v6136 = vadd.f32 %v2604, %v6135
    %v6137 = vpop.f32.mrf.mxu0
    %6138 = vdwg.mxu0
    %6139 = vmatprep.subr.mxu0 0.0
    %6140 = vmatpush1.msra.mxu0 0.0
    %6141 = vmatprep.subr.mxu0 0.0
    %6142 = vmatpush1.msra.mxu0 0.0
    %6143 = vmatprep.subr.mxu0 0.0
    %6144 = vmatpush1.msra.mxu0 0.0
    %6145 = vmatprep.subr.mxu0 0.0
    %6146 = vmatpush1.msra.mxu0 0.0
    %6147 = vmatprep.subr.mxu0 0.0
    %6148 = vmatpush1.msra.mxu0 0.0
    %6149 = vmatprep.subr.mxu0 0.0
    %6150 = vmatpush1.msra.mxu0 0.0
    %6151 = vmatprep.subr.mxu0 0.0
    %6152 = vmatpush1.msra.mxu0 0.0
    %6153 = vmatprep.subr.mxu0 0.0
    %6154 = vmatpush1.msra.mxu0 0.0
    %6155 = vmatprep.subr.mxu0 0.0
    %6156 = vmatpush1.msra.mxu0 0.0
    %6157 = vmatprep.subr.mxu0 0.0
    %6158 = vmatpush1.msra.mxu0 0.0
    %6159 = vmatprep.subr.mxu0 0.0
    %6160 = vmatpush1.msra.mxu0 0.0
    %6161 = vmatprep.subr.mxu0 0.0
    %6162 = vmatpush1.msra.mxu0 0.0
    %6163 = vmatprep.subr.mxu0 0.0
    %6164 = vmatpush1.msra.mxu0 %v2597
    %6165 = vmatprep.subr.mxu0 0.0
    %6166 = vmatpush1.msra.mxu0 %v2596
    %6167 = vmatprep.subr.mxu0 0.0
    %6168 = vmatpush1.msra.mxu0 %v2595
    %6169 = vmatprep.subr.mxu0 0.0
    %6170 = vmatpush1.msra.mxu0 %v2594
    %6171 = vmatprep.subr.mxu0 0.0
    %6172 = vmatpush2.msra.mxu0 0.0
    %6173 = vmatprep.subr.mxu0 0.0
    %6174 = vmatpush2.msra.mxu0 0.0
    %6175 = vmatprep.subr.mxu0 0.0
    %6176 = vmatpush2.msra.mxu0 0.0
    %6177 = vmatprep.subr.mxu0 0.0
    %6178 = vmatpush2.msra.mxu0 0.0
    %6179 = vmatprep.subr.mxu0 0.0
    %6180 = vmatpush2.msra.mxu0 0.0
    %6181 = vmatprep.subr.mxu0 0.0
    %6182 = vmatpush2.msra.mxu0 0.0
    %6183 = vmatprep.subr.mxu0 0.0
    %6184 = vmatpush2.msra.mxu0 0.0
    %6185 = vmatprep.subr.mxu0 0.0
    %6186 = vmatpush2.msra.mxu0 0.0
    %6187 = vmatprep.subr.mxu0 0.0
    %6188 = vmatpush2.msra.mxu0 0.0
    %6189 = vmatprep.subr.mxu0 0.0
    %6190 = vmatpush2.msra.mxu0 0.0
    %6191 = vmatprep.subr.mxu0 0.0
    %6192 = vmatpush2.msra.mxu0 0.0
    %6193 = vmatprep.subr.mxu0 0.0
    %6194 = vmatpush2.msra.mxu0 0.0
    %6195 = vmatprep.subr.mxu0 0.0
    %6196 = vmatpush2.msra.mxu0 0.0
    %6197 = vmatprep.subr.mxu0 0.0
    %6198 = vmatpush2.msra.mxu0 0.0
    %6199 = vmatprep.subr.mxu0 0.0
    %6200 = vmatpush2.msra.mxu0 0.0
    %6201 = vmatprep.subr.mxu0 0.0
    %6202 = vmatpush2.msra.mxu0 0.0
    %6203 = vmatprep.mubr.f32.mxu0 0.0
    %6204 = vmatmul.mubr.f32.gmra.mxu0 %v5751
    %v6205 = vpop.f32.mrf.mxu0
    %v6206 = vadd.f32 %v2685, %v6205
    %v6207 = vpop.f32.mrf.mxu0
    %6208 = vdwg.mxu0
    %v6209 = vadd.f32 %v6136, %v6206
    %v6210 = vxor.u32 %v6209, 2147483648
    %v6211 = vmul.f32 %v6210, 1.442695
    %v6212 = vpow.pop %v6211
    %v6213 = vadd.f32 %v6212, 1.0
    %v6214 = vrcp.pop %v6213
    %v6215 = vmul.f32 1.0, %v6214
    %6217 = vrot.lane.b32.xlu0 %v6206, 64
    %v6218 = vpop.permute.xlu0 %6217
    %v6220 = vmul.f32 %v6215, %v6218
    %6222 = vrot.lane.b32.xlu0 %v6220, 64
    %v6223 = vpop.permute.xlu0 %6222
    %v6225 = vadd.f32 %v6136, %v6223
    %v6226 = vtanh.pop %v6225
    %v6227 = vsub.f32 1.0, %v6215
    %6229 = vrot.lane.b32.xlu0 %v6226, 96
    %v6230 = vpop.permute.xlu0 %6229
    %v6232 = vmul.f32 %v6227, %v6230
    %v6233 = vmul.f32 %v6215, %v5747
    %v6234 = vadd.f32 %v6232, %v6233
    %6236 = vrot.lane.b32.xlu0 %v6234, 96
    %v6237 = vpop.permute.xlu0 %6236
    %v6238 = vsel %vm263, %v6237, 0
    %6240 = vmatprep.subr.mxu0 0.0
    %6241 = vmatpush1.msra.mxu0 0.0
    %6242 = vmatprep.subr.mxu0 0.0
    %6243 = vmatpush1.msra.mxu0 0.0
    %6244 = vmatprep.subr.mxu0 0.0
    %6245 = vmatpush1.msra.mxu0 0.0
    %6246 = vmatprep.subr.mxu0 0.0
    %6247 = vmatpush1.msra.mxu0 0.0
    %6248 = vmatprep.subr.mxu0 0.0
    %6249 = vmatpush1.msra.mxu0 0.0
    %6250 = vmatprep.subr.mxu0 0.0
    %6251 = vmatpush1.msra.mxu0 0.0
    %6252 = vmatprep.subr.mxu0 0.0
    %6253 = vmatpush1.msra.mxu0 0.0
    %6254 = vmatprep.subr.mxu0 0.0
    %6255 = vmatpush1.msra.mxu0 0.0
    %6256 = vmatprep.subr.mxu0 0.0
    %6257 = vmatpush1.msra.mxu0 0.0
    %6258 = vmatprep.subr.mxu0 0.0
    %6259 = vmatpush1.msra.mxu0 0.0
    %6260 = vmatprep.subr.mxu0 0.0
    %6261 = vmatpush1.msra.mxu0 0.0
    %6262 = vmatprep.subr.mxu0 0.0
    %6263 = vmatpush1.msra.mxu0 0.0
    %6264 = vmatprep.subr.mxu0 0.0
    %6265 = vmatpush1.msra.mxu0 %v2786
    %6266 = vmatprep.subr.mxu0 0.0
    %6267 = vmatpush1.msra.mxu0 %v2785
    %6268 = vmatprep.subr.mxu0 0.0
    %6269 = vmatpush1.msra.mxu0 %v2784
    %6270 = vmatprep.subr.mxu0 0.0
    %6271 = vmatpush1.msra.mxu0 %v2783
    %6272 = vmatprep.subr.mxu0 0.0
    %6273 = vmatpush2.msra.mxu0 0.0
    %6274 = vmatprep.subr.mxu0 0.0
    %6275 = vmatpush2.msra.mxu0 0.0
    %6276 = vmatprep.subr.mxu0 0.0
    %6277 = vmatpush2.msra.mxu0 0.0
    %6278 = vmatprep.subr.mxu0 0.0
    %6279 = vmatpush2.msra.mxu0 0.0
    %6280 = vmatprep.subr.mxu0 0.0
    %6281 = vmatpush2.msra.mxu0 0.0
    %6282 = vmatprep.subr.mxu0 0.0
    %6283 = vmatpush2.msra.mxu0 0.0
    %6284 = vmatprep.subr.mxu0 0.0
    %6285 = vmatpush2.msra.mxu0 0.0
    %6286 = vmatprep.subr.mxu0 0.0
    %6287 = vmatpush2.msra.mxu0 0.0
    %6288 = vmatprep.subr.mxu0 0.0
    %6289 = vmatpush2.msra.mxu0 0.0
    %6290 = vmatprep.subr.mxu0 0.0
    %6291 = vmatpush2.msra.mxu0 0.0
    %6292 = vmatprep.subr.mxu0 0.0
    %6293 = vmatpush2.msra.mxu0 0.0
    %6294 = vmatprep.subr.mxu0 0.0
    %6295 = vmatpush2.msra.mxu0 0.0
    %6296 = vmatprep.subr.mxu0 0.0
    %6297 = vmatpush2.msra.mxu0 0.0
    %6298 = vmatprep.subr.mxu0 0.0
    %6299 = vmatpush2.msra.mxu0 0.0
    %6300 = vmatprep.subr.mxu0 0.0
    %6301 = vmatpush2.msra.mxu0 0.0
    %6302 = vmatprep.subr.mxu0 0.0
    %6303 = vmatpush2.msra.mxu0 0.0
    %6304 = vmatprep.mubr.f32.mxu0 0.0
    %6305 = vmatmul.mubr.f32.gmra.mxu0 %v6238
    %v6306 = vpop.f32.mrf.mxu0
    %v6307 = vadd.f32 %v2797, %v6306
    %v6308 = vpop.f32.mrf.mxu0
    %6309 = vdwg.mxu0
    %6310 = vmatprep.subr.mxu0 0.0
    %6311 = vmatpush1.msra.mxu0 0.0
    %6312 = vmatprep.subr.mxu0 0.0
    %6313 = vmatpush1.msra.mxu0 0.0
    %6314 = vmatprep.subr.mxu0 0.0
    %6315 = vmatpush1.msra.mxu0 0.0
    %6316 = vmatprep.subr.mxu0 0.0
    %6317 = vmatpush1.msra.mxu0 0.0
    %6318 = vmatprep.subr.mxu0 0.0
    %6319 = vmatpush1.msra.mxu0 0.0
    %6320 = vmatprep.subr.mxu0 0.0
    %6321 = vmatpush1.msra.mxu0 0.0
    %6322 = vmatprep.subr.mxu0 0.0
    %6323 = vmatpush1.msra.mxu0 0.0
    %6324 = vmatprep.subr.mxu0 0.0
    %6325 = vmatpush1.msra.mxu0 0.0
    %6326 = vmatprep.subr.mxu0 0.0
    %6327 = vmatpush1.msra.mxu0 0.0
    %6328 = vmatprep.subr.mxu0 0.0
    %6329 = vmatpush1.msra.mxu0 0.0
    %6330 = vmatprep.subr.mxu0 0.0
    %6331 = vmatpush1.msra.mxu0 0.0
    %6332 = vmatprep.subr.mxu0 0.0
    %6333 = vmatpush1.msra.mxu0 0.0
    %6334 = vmatprep.subr.mxu0 0.0
    %6335 = vmatpush1.msra.mxu0 %v2790
    %6336 = vmatprep.subr.mxu0 0.0
    %6337 = vmatpush1.msra.mxu0 %v2789
    %6338 = vmatprep.subr.mxu0 0.0
    %6339 = vmatpush1.msra.mxu0 %v2788
    %6340 = vmatprep.subr.mxu0 0.0
    %6341 = vmatpush1.msra.mxu0 %v2787
    %6342 = vmatprep.subr.mxu0 0.0
    %6343 = vmatpush2.msra.mxu0 0.0
    %6344 = vmatprep.subr.mxu0 0.0
    %6345 = vmatpush2.msra.mxu0 0.0
    %6346 = vmatprep.subr.mxu0 0.0
    %6347 = vmatpush2.msra.mxu0 0.0
    %6348 = vmatprep.subr.mxu0 0.0
    %6349 = vmatpush2.msra.mxu0 0.0
    %6350 = vmatprep.subr.mxu0 0.0
    %6351 = vmatpush2.msra.mxu0 0.0
    %6352 = vmatprep.subr.mxu0 0.0
    %6353 = vmatpush2.msra.mxu0 0.0
    %6354 = vmatprep.subr.mxu0 0.0
    %6355 = vmatpush2.msra.mxu0 0.0
    %6356 = vmatprep.subr.mxu0 0.0
    %6357 = vmatpush2.msra.mxu0 0.0
    %6358 = vmatprep.subr.mxu0 0.0
    %6359 = vmatpush2.msra.mxu0 0.0
    %6360 = vmatprep.subr.mxu0 0.0
    %6361 = vmatpush2.msra.mxu0 0.0
    %6362 = vmatprep.subr.mxu0 0.0
    %6363 = vmatpush2.msra.mxu0 0.0
    %6364 = vmatprep.subr.mxu0 0.0
    %6365 = vmatpush2.msra.mxu0 0.0
    %6366 = vmatprep.subr.mxu0 0.0
    %6367 = vmatpush2.msra.mxu0 0.0
    %6368 = vmatprep.subr.mxu0 0.0
    %6369 = vmatpush2.msra.mxu0 0.0
    %6370 = vmatprep.subr.mxu0 0.0
    %6371 = vmatpush2.msra.mxu0 0.0
    %6372 = vmatprep.subr.mxu0 0.0
    %6373 = vmatpush2.msra.mxu0 0.0
    %6374 = vmatprep.mubr.f32.mxu0 0.0
    %6375 = vmatmul.mubr.f32.gmra.mxu0 %v5922
    %v6376 = vpop.f32.mrf.mxu0
    %v6377 = vadd.f32 %v2878, %v6376
    %v6378 = vpop.f32.mrf.mxu0
    %6379 = vdwg.mxu0
    %v6380 = vadd.f32 %v6307, %v6377
    %v6381 = vxor.u32 %v6380, 2147483648
    %v6382 = vmul.f32 %v6381, 1.442695
    %v6383 = vpow.pop %v6382
    %v6384 = vadd.f32 %v6383, 1.0
    %v6385 = vrcp.pop %v6384
    %v6386 = vmul.f32 1.0, %v6385
    %6388 = vrot.lane.b32.xlu0 %v6377, 64
    %v6389 = vpop.permute.xlu0 %6388
    %v6391 = vmul.f32 %v6386, %v6389
    %6393 = vrot.lane.b32.xlu0 %v6391, 64
    %v6394 = vpop.permute.xlu0 %6393
    %v6396 = vadd.f32 %v6307, %v6394
    %v6397 = vtanh.pop %v6396
    %v6398 = vsub.f32 1.0, %v6386
    %6400 = vrot.lane.b32.xlu0 %v6397, 96
    %v6401 = vpop.permute.xlu0 %6400
    %v6403 = vmul.f32 %v6398, %v6401
    %v6404 = vmul.f32 %v6386, %v5918
    %v6405 = vadd.f32 %v6403, %v6404
    %6407 = vrot.lane.b32.xlu0 %v6405, 96
    %v6408 = vpop.permute.xlu0 %6407
    %v6409 = vsel %vm263, %v6408, 0
    %6411 = vmatprep.subr.mxu0 0.0
    %6412 = vmatpush1.msra.mxu0 0.0
    %6413 = vmatprep.subr.mxu0 0.0
    %6414 = vmatpush1.msra.mxu0 0.0
    %6415 = vmatprep.subr.mxu0 0.0
    %6416 = vmatpush1.msra.mxu0 0.0
    %6417 = vmatprep.subr.mxu0 0.0
    %6418 = vmatpush1.msra.mxu0 0.0
    %6419 = vmatprep.subr.mxu0 0.0
    %6420 = vmatpush1.msra.mxu0 0.0
    %6421 = vmatprep.subr.mxu0 0.0
    %6422 = vmatpush1.msra.mxu0 0.0
    %6423 = vmatprep.subr.mxu0 0.0
    %6424 = vmatpush1.msra.mxu0 0.0
    %6425 = vmatprep.subr.mxu0 0.0
    %6426 = vmatpush1.msra.mxu0 0.0
    %6427 = vmatprep.subr.mxu0 0.0
    %6428 = vmatpush1.msra.mxu0 0.0
    %6429 = vmatprep.subr.mxu0 0.0
    %6430 = vmatpush1.msra.mxu0 0.0
    %6431 = vmatprep.subr.mxu0 0.0
    %6432 = vmatpush1.msra.mxu0 0.0
    %6433 = vmatprep.subr.mxu0 0.0
    %6434 = vmatpush1.msra.mxu0 0.0
    %6435 = vmatprep.subr.mxu0 0.0
    %6436 = vmatpush1.msra.mxu0 %v2979
    %6437 = vmatprep.subr.mxu0 0.0
    %6438 = vmatpush1.msra.mxu0 %v2978
    %6439 = vmatprep.subr.mxu0 0.0
    %6440 = vmatpush1.msra.mxu0 %v2977
    %6441 = vmatprep.subr.mxu0 0.0
    %6442 = vmatpush1.msra.mxu0 %v2976
    %6443 = vmatprep.subr.mxu0 0.0
    %6444 = vmatpush2.msra.mxu0 0.0
    %6445 = vmatprep.subr.mxu0 0.0
    %6446 = vmatpush2.msra.mxu0 0.0
    %6447 = vmatprep.subr.mxu0 0.0
    %6448 = vmatpush2.msra.mxu0 0.0
    %6449 = vmatprep.subr.mxu0 0.0
    %6450 = vmatpush2.msra.mxu0 0.0
    %6451 = vmatprep.subr.mxu0 0.0
    %6452 = vmatpush2.msra.mxu0 0.0
    %6453 = vmatprep.subr.mxu0 0.0
    %6454 = vmatpush2.msra.mxu0 0.0
    %6455 = vmatprep.subr.mxu0 0.0
    %6456 = vmatpush2.msra.mxu0 0.0
    %6457 = vmatprep.subr.mxu0 0.0
    %6458 = vmatpush2.msra.mxu0 0.0
    %6459 = vmatprep.subr.mxu0 0.0
    %6460 = vmatpush2.msra.mxu0 0.0
    %6461 = vmatprep.subr.mxu0 0.0
    %6462 = vmatpush2.msra.mxu0 0.0
    %6463 = vmatprep.subr.mxu0 0.0
    %6464 = vmatpush2.msra.mxu0 0.0
    %6465 = vmatprep.subr.mxu0 0.0
    %6466 = vmatpush2.msra.mxu0 0.0
    %6467 = vmatprep.subr.mxu0 0.0
    %6468 = vmatpush2.msra.mxu0 0.0
    %6469 = vmatprep.subr.mxu0 0.0
    %6470 = vmatpush2.msra.mxu0 0.0
    %6471 = vmatprep.subr.mxu0 0.0
    %6472 = vmatpush2.msra.mxu0 0.0
    %6473 = vmatprep.subr.mxu0 0.0
    %6474 = vmatpush2.msra.mxu0 0.0
    %6475 = vmatprep.mubr.f32.mxu0 0.0
    %6476 = vmatmul.mubr.f32.gmra.mxu0 %v6409
    %v6477 = vpop.f32.mrf.mxu0
    %v6478 = vadd.f32 %v2988, %v6477
    %v6479 = vpop.f32.mrf.mxu0
    %6480 = vdwg.mxu0
    %v6481 = vmax.f32 %v6478, 0.0
    %v6483 = vsel %vm3072, %v6481, 0
    %6485 = vmatprep.subr.mxu0 0.0
    %6486 = vmatpush1.msra.mxu0 0.0
    %6487 = vmatprep.subr.mxu0 0.0
    %6488 = vmatpush1.msra.mxu0 0.0
    %6489 = vmatprep.subr.mxu0 0.0
    %6490 = vmatpush1.msra.mxu0 0.0
    %6491 = vmatprep.subr.mxu0 0.0
    %6492 = vmatpush1.msra.mxu0 0.0
    %6493 = vmatprep.subr.mxu0 0.0
    %6494 = vmatpush1.msra.mxu0 0.0
    %6495 = vmatprep.subr.mxu0 0.0
    %6496 = vmatpush1.msra.mxu0 0.0
    %6497 = vmatprep.subr.mxu0 0.0
    %6498 = vmatpush1.msra.mxu0 0.0
    %6499 = vmatprep.subr.mxu0 0.0
    %6500 = vmatpush1.msra.mxu0 0.0
    %6501 = vmatprep.subr.mxu0 0.0
    %6502 = vmatpush1.msra.mxu0 0.0
    %6503 = vmatprep.subr.mxu0 0.0
    %6504 = vmatpush1.msra.mxu0 0.0
    %6505 = vmatprep.subr.mxu0 0.0
    %6506 = vmatpush1.msra.mxu0 0.0
    %6507 = vmatprep.subr.mxu0 0.0
    %6508 = vmatpush1.msra.mxu0 0.0
    %6509 = vmatprep.subr.mxu0 0.0
    %6510 = vmatpush1.msra.mxu0 0.0
    %6511 = vmatprep.subr.mxu0 0.0
    %6512 = vmatpush1.msra.mxu0 0.0
    %6513 = vmatprep.subr.mxu0 0.0
    %6514 = vmatpush1.msra.mxu0 %v2982
    %6515 = vmatprep.subr.mxu0 0.0
    %6516 = vmatpush1.msra.mxu0 %v2981
    %6517 = vmatprep.subr.mxu0 0.0
    %6518 = vmatpush2.msra.mxu0 0.0
    %6519 = vmatprep.subr.mxu0 0.0
    %6520 = vmatpush2.msra.mxu0 0.0
    %6521 = vmatprep.subr.mxu0 0.0
    %6522 = vmatpush2.msra.mxu0 0.0
    %6523 = vmatprep.subr.mxu0 0.0
    %6524 = vmatpush2.msra.mxu0 0.0
    %6525 = vmatprep.subr.mxu0 0.0
    %6526 = vmatpush2.msra.mxu0 0.0
    %6527 = vmatprep.subr.mxu0 0.0
    %6528 = vmatpush2.msra.mxu0 0.0
    %6529 = vmatprep.subr.mxu0 0.0
    %6530 = vmatpush2.msra.mxu0 0.0
    %6531 = vmatprep.subr.mxu0 0.0
    %6532 = vmatpush2.msra.mxu0 0.0
    %6533 = vmatprep.subr.mxu0 0.0
    %6534 = vmatpush2.msra.mxu0 0.0
    %6535 = vmatprep.subr.mxu0 0.0
    %6536 = vmatpush2.msra.mxu0 0.0
    %6537 = vmatprep.subr.mxu0 0.0
    %6538 = vmatpush2.msra.mxu0 0.0
    %6539 = vmatprep.subr.mxu0 0.0
    %6540 = vmatpush2.msra.mxu0 0.0
    %6541 = vmatprep.subr.mxu0 0.0
    %6542 = vmatpush2.msra.mxu0 0.0
    %6543 = vmatprep.subr.mxu0 0.0
    %6544 = vmatpush2.msra.mxu0 0.0
    %6545 = vmatprep.subr.mxu0 0.0
    %6546 = vmatpush2.msra.mxu0 0.0
    %6547 = vmatprep.subr.mxu0 0.0
    %6548 = vmatpush2.msra.mxu0 0.0
    %6549 = vmatprep.mubr.f32.mxu0 0.0
    %6550 = vmatmul.mubr.f32.gmra.mxu0 %v6483
    %v6551 = vpop.f32.mrf.mxu0
    %v6552 = vadd.f32 %v3070, %v6551
    %v6553 = vpop.f32.mrf.mxu0
    %6554 = vdwg.mxu0
    %v6555 = vadd.f32 %v6068, %v6552
    %6557 = vrot.lane.b32.xlu0 %v3633, 2
    %v6558 = vpop.permute.xlu0 %6557
    %6561 = vrot.lane.b32.xlu0 %v4120, 4
    %v6562 = vpop.permute.xlu0 %6561
    %6565 = vrot.lane.b32.xlu0 %v4607, 6
    %v6566 = vpop.permute.xlu0 %6565
    %6569 = vrot.lane.b32.xlu0 %v5094, 8
    %v6570 = vpop.permute.xlu0 %6569
    %6573 = vrot.lane.b32.xlu0 %v5581, 10
    %v6574 = vpop.permute.xlu0 %6573
    %6577 = vrot.lane.b32.xlu0 %v6068, 12
    %v6578 = vpop.permute.xlu0 %6577
    %6581 = vrot.lane.b32.xlu0 %v6555, 14
    %v6582 = vpop.permute.xlu0 %6581
    %vm6584 = vcmask 15360
    %v6585 = vsel %vm6584, %v3146, %v6558
    %vm6586 = vcmask 31744
    %v6587 = vsel %vm6586, %v6585, %v6562
    %vm6588 = vcmask 48128
    %v6589 = vsel %vm6588, %v6587, %v6566
    %vm6590 = vcmask 64512
    %v6591 = vsel %vm6590, %v6589, %v6570
    %vm6592 = vcmask 80896
    %v6593 = vsel %vm6592, %v6591, %v6574
    %vm6594 = vcmask 97280
    %v6595 = vsel %vm6594, %v6593, %v6578
    %vm6596 = vcmask 113664
    %v6597 = vsel %vm6596, %v6595, %v6582
    %vm6598 = vcmask 123904
    %6599 = vst.msk [vmem:[%s22] sm:$0x3] %vm6598, %v6597
    // Predicated region
    $region138: #{_lambda_.1} parent=1 // pred_check
      _
    $region139: #{_lambda_.1} parent=1 // pred_check_branch
      %6601 = sbr.rel (0) target = $region141
    $region140: #{_lambda_.1} parent=1 // pred_region
      _
    $region141: #{_lambda_.1} parent=1 // pred_fallthru
      _
    // Predicated region
    $region142: #{_lambda_.1} parent=1 // pred_check
      _
    $region143: #{_lambda_.1} parent=1 // pred_check_branch
      %6603 = sbr.rel (0) target = $region145
    $region144: #{_lambda_.1} parent=1 // pred_region
      _
    $region145: #{_lambda_.1} parent=1 // pred_fallthru
      _
    %6604 = vsyncpa [#allocation3], 1
    %6605 = vsyncpa [#allocation5], 1
    %6606 = vsyncpa [#allocation8], 1
    %6607 = vsyncpa [#allocation11], 1
    %6608 = vsyncpa [#allocation14], 1
    %6609 = vsyncpa [#allocation17], 1
    %6610 = vsyncpa [#allocation20], 1

</llo_original>
